<compile_context>
chip_gen: v7x
topology: tpu7x:2x2x1
jax: 0.10.0
libtpu: 0.0.40
codegen_flags: <defaults>
</compile_context>

<pallas_src>
import math
import functools
import numpy as np

import jax
import jax.numpy as jnp
from jax import lax
from jax.experimental import pallas as pl
from jax.experimental.pallas import tpu as pltpu


_VMEM_LIMIT = 32 * 1024 * 1024  # safe on v5e/v6e/v7x; raises v5e's 16MiB default


# ----------------------------------------------------------------------------
# tiling helpers
# ----------------------------------------------------------------------------
def _row_tile(m):
    # Cap at 512 rows: amortizes per-step overhead yet stays inside v7x's
    # 64 MiB physical VMEM at production Swin dims.
    for t in (512, 256, 128, 64, 32, 16, 8):
        if m % t == 0:
            return t
    return m  # full-extent block bypasses the (8,128) rule


def _col_tile(n):
    if n <= 512:
        return n
    for t in (512, 256, 128):
        if n % t == 0:
            return t
    return n


def _window_block(nw_img, num_heads, n_tok):
    """Largest divisor of nW_img keeping the per-step score tensor modest."""
    best = 1
    for cand in range(1, nw_img + 1):
        if nw_img % cand == 0 and cand * num_heads * n_tok * n_tok * 4 <= 8 * 1024 * 1024:
            best = cand
    return best


def _gelu(x):
    # exact (erf-based) GELU, matching torch.nn.GELU default
    return 0.5 * x * (1.0 + lax.erf(x * (1.0 / math.sqrt(2.0))))


# ----------------------------------------------------------------------------
# Pallas kernels
# ----------------------------------------------------------------------------
def _ln_linear_kernel(x_ref, g_ref, b_ref, w_ref, bias_ref, o_ref, *, eps, act):
    """Fused LayerNorm -> x @ W + b [-> GELU]."""
    x = x_ref[...].astype(jnp.float32)
    mu = jnp.mean(x, axis=-1, keepdims=True)
    var = jnp.mean((x - mu) ** 2, axis=-1, keepdims=True)
    xn = (x - mu) * lax.rsqrt(var + eps)
    xn = xn * g_ref[...].astype(jnp.float32) + b_ref[...].astype(jnp.float32)
    acc = jnp.dot(xn.astype(w_ref.dtype), w_ref[...],
                  preferred_element_type=jnp.float32)
    acc = acc + bias_ref[...].astype(jnp.float32)
    if act == "gelu":
        acc = _gelu(acc)
    o_ref[...] = acc.astype(o_ref.dtype)


def ln_linear(x2d, gamma, beta, w, b=None, act=None, eps=1e-5):
    """x2d: (M, K); gamma/beta: (1, K); w: (K, N) pre-transposed; b: (N,) or None."""
    M, K = x2d.shape
    Nout = w.shape[1]
    if b is None:
        b = jnp.zeros((Nout,), w.dtype)
    b2 = b.reshape(1, Nout)
    g2 = gamma.reshape(1, K)
    be2 = beta.reshape(1, K)
    tm, tn = _row_tile(M), _col_tile(Nout)
    kernel = functools.partial(_ln_linear_kernel, eps=eps, act=act)
    itm = x2d.dtype.itemsize
    cost = pl.CostEstimate(
        flops=int(2 * M * K * Nout + 8 * M * K),
        transcendentals=int(M * Nout if act == "gelu" else M),
        bytes_accessed=int((M * K + K * Nout + M * Nout) * itm))
    return pl.pallas_call(
        kernel,
        out_shape=jax.ShapeDtypeStruct((M, Nout), x2d.dtype),
        grid=(M // tm, Nout // tn),
        in_specs=[
            pl.BlockSpec((tm, K), lambda i, j: (i, 0)),
            pl.BlockSpec((1, K), lambda i, j: (0, 0)),
            pl.BlockSpec((1, K), lambda i, j: (0, 0)),
            pl.BlockSpec((K, tn), lambda i, j: (0, j)),
            pl.BlockSpec((1, tn), lambda i, j: (0, j)),
        ],
        out_specs=pl.BlockSpec((tm, tn), lambda i, j: (i, j)),
        compiler_params=pltpu.CompilerParams(
            dimension_semantics=("parallel", "parallel"),
            vmem_limit_bytes=_VMEM_LIMIT),
        cost_estimate=cost,
    )(x2d, g2, be2, w, b2)


def _linear_kernel(x_ref, w_ref, b_ref, o_ref, *, act):
    acc = jnp.dot(x_ref[...], w_ref[...], preferred_element_type=jnp.float32)
    acc = acc + b_ref[...].astype(jnp.float32)
    if act == "gelu":
        acc = _gelu(acc)
    o_ref[...] = acc.astype(o_ref.dtype)


def linear(x2d, w, b=None, act=None):
    """x2d: (M, K); w: (K, N) pre-transposed; b: (N,) or None."""
    M, K = x2d.shape
    Nout = w.shape[1]
    if b is None:
        b = jnp.zeros((Nout,), w.dtype)
    b2 = b.reshape(1, Nout)
    tm, tn = _row_tile(M), _col_tile(Nout)
    kernel = functools.partial(_linear_kernel, act=act)
    itm = x2d.dtype.itemsize
    cost = pl.CostEstimate(
        flops=int(2 * M * K * Nout),
        transcendentals=int(M * Nout if act == "gelu" else 0),
        bytes_accessed=int((M * K + K * Nout + M * Nout) * itm))
    return pl.pallas_call(
        kernel,
        out_shape=jax.ShapeDtypeStruct((M, Nout), x2d.dtype),
        grid=(M // tm, Nout // tn),
        in_specs=[
            pl.BlockSpec((tm, K), lambda i, j: (i, 0)),
            pl.BlockSpec((K, tn), lambda i, j: (0, j)),
            pl.BlockSpec((1, tn), lambda i, j: (0, j)),
        ],
        out_specs=pl.BlockSpec((tm, tn), lambda i, j: (i, j)),
        compiler_params=pltpu.CompilerParams(
            dimension_semantics=("parallel", "parallel"),
            vmem_limit_bytes=_VMEM_LIMIT),
        cost_estimate=cost,
    )(x2d, w, b2)


def _ln_mlp_kernel(x_ref, g_ref, b_ref, w1_ref, b1_ref, w2_ref, b2_ref, o_ref,
                   *, eps):
    """Fused LayerNorm -> fc1 + GELU -> fc2 -> + residual(x)."""
    x = x_ref[...].astype(jnp.float32)
    mu = jnp.mean(x, axis=-1, keepdims=True)
    var = jnp.mean((x - mu) ** 2, axis=-1, keepdims=True)
    xn = (x - mu) * lax.rsqrt(var + eps)
    xn = xn * g_ref[...].astype(jnp.float32) + b_ref[...].astype(jnp.float32)
    h = jnp.dot(xn.astype(w1_ref.dtype), w1_ref[...],
                preferred_element_type=jnp.float32)
    h = _gelu(h + b1_ref[...].astype(jnp.float32))
    y = jnp.dot(h.astype(w2_ref.dtype), w2_ref[...],
                preferred_element_type=jnp.float32)
    y = y + b2_ref[...].astype(jnp.float32)
    o_ref[...] = (x + y).astype(o_ref.dtype)


def ln_mlp(x2d, gamma, beta, w1, b1, w2, b2, eps=1e-5):
    """Fused norm2 + MLP + residual. w1: (C, mlp), w2: (mlp, C)."""
    M, C = x2d.shape
    Dh = w1.shape[1]
    tm = _row_tile(M)
    # TODO(synk): tile the hidden (mlp) dim with an f32 VMEM accumulator for
    # very large mlp_dim on v7x (64 MiB VMEM); full-weight blocks are fine at
    # typical Swin dims.
    kernel = functools.partial(_ln_mlp_kernel, eps=eps)
    itm = x2d.dtype.itemsize
    cost = pl.CostEstimate(
        flops=int(4 * M * C * Dh + 8 * M * C),
        transcendentals=int(M * Dh + M),
        bytes_accessed=int((2 * M * C + C * Dh * 2) * itm))
    return pl.pallas_call(
        kernel,
        out_shape=jax.ShapeDtypeStruct((M, C), x2d.dtype),
        grid=(M // tm,),
        in_specs=[
            pl.BlockSpec((tm, C), lambda i: (i, 0)),
            pl.BlockSpec((1, C), lambda i: (0, 0)),
            pl.BlockSpec((1, C), lambda i: (0, 0)),
            pl.BlockSpec((C, Dh), lambda i: (0, 0)),
            pl.BlockSpec((1, Dh), lambda i: (0, 0)),
            pl.BlockSpec((Dh, C), lambda i: (0, 0)),
            pl.BlockSpec((1, C), lambda i: (0, 0)),
        ],
        out_specs=pl.BlockSpec((tm, C), lambda i: (i, 0)),
        compiler_params=pltpu.CompilerParams(
            dimension_semantics=("parallel",),
            vmem_limit_bytes=_VMEM_LIMIT),
        cost_estimate=cost,
    )(x2d, gamma.reshape(1, C), beta.reshape(1, C),
      w1, b1.reshape(1, Dh), w2, b2.reshape(1, C))


def _attn_kernel(qkv_ref, bias_ref, o_ref, *, scale, num_heads, head_dim,
                 per_window_bias):
    """All heads of W_BLK windows per grid step, reading the fused qkv buffer."""
    C = num_heads * head_dim
    qkv = qkv_ref[...]                              # (Wb, N, 3C) native dtype
    bias = bias_ref[...].astype(jnp.float32)        # (Wb,nH,N,N) or (nH,N,N)
    for h in range(num_heads):
        q = qkv[:, :, h * head_dim:(h + 1) * head_dim]
        k = qkv[:, :, C + h * head_dim:C + (h + 1) * head_dim]
        v = qkv[:, :, 2 * C + h * head_dim:2 * C + (h + 1) * head_dim]
        s = jnp.einsum("wnd,wmd->wnm", q, k,
                       preferred_element_type=jnp.float32) * scale
        if per_window_bias:
            s = s + bias[:, h]                      # rel-pos bias + shift mask
        else:
            s = s + bias[h][None]                   # rel-pos bias only
        m = jnp.max(s, axis=-1, keepdims=True)
        p = jnp.exp(s - m)
        l = jnp.sum(p, axis=-1, keepdims=True)
        p = p * pl.reciprocal(l, approx=True)       # EUP reciprocal
        pv = jnp.einsum("wnm,wmd->wnd", p.astype(v.dtype), v,
                        preferred_element_type=jnp.float32)
        o_ref[:, h, :, :] = pv.astype(o_ref.dtype)


def window_attention(qkv, bias, scale, num_heads, *, nw_img, per_window_bias):
    """qkv: (Wt, N, 3C); bias: (nH,N,N) or (nW_img,nH,N,N) (mask pre-folded)."""
    Wt, N, C3 = qkv.shape
    C = C3 // 3
    hd = C // num_heads
    wblk = _window_block(nw_img, num_heads, N)
    kernel = functools.partial(_attn_kernel, scale=scale, num_heads=num_heads,
                               head_dim=hd, per_window_bias=per_window_bias)
    if per_window_bias:
        n_bias_blocks = nw_img // wblk
        bias_spec = pl.BlockSpec((wblk, num_heads, N, N),
                                 lambda i: (i % n_bias_blocks, 0, 0, 0))
    else:
        bias_spec = pl.BlockSpec((num_heads, N, N), lambda i: (0, 0, 0))
    itm = qkv.dtype.itemsize
    cost = pl.CostEstimate(
        flops=int(4 * Wt * num_heads * N * N * hd),
        transcendentals=int(Wt * num_heads * N * N),
        bytes_accessed=int((Wt * N * 4 * C) * itm + bias.size * 4))
    return pl.pallas_call(
        kernel,
        out_shape=jax.ShapeDtypeStruct((Wt, num_heads, N, hd), qkv.dtype),
        grid=(Wt // wblk,),
        in_specs=[pl.BlockSpec((wblk, N, C3), lambda i: (i, 0, 0)), bias_spec],
        out_specs=pl.BlockSpec((wblk, num_heads, N, hd),
                               lambda i: (i, 0, 0, 0)),
        compiler_params=pltpu.CompilerParams(
            dimension_semantics=("parallel",),
            vmem_limit_bytes=_VMEM_LIMIT),
        cost_estimate=cost,
    )(qkv, bias)


# ----------------------------------------------------------------------------
# Swin glue (plain JAX)
# ----------------------------------------------------------------------------
def window_partition(x, ws):
    B, H, W, C = x.shape
    x = x.reshape(B, H // ws, ws, W // ws, ws, C)
    return x.transpose(0, 1, 3, 2, 4, 5).reshape(-1, ws * ws, C)


def window_reverse(windows, ws, B, H, W):
    C = windows.shape[-1]
    x = windows.reshape(B, H // ws, W // ws, ws, ws, C)
    return x.transpose(0, 1, 3, 2, 4, 5).reshape(B, H, W, C)


def build_relative_position_index(ws):
    coords = np.stack(np.meshgrid(np.arange(ws), np.arange(ws), indexing="ij"))
    coords_flat = coords.reshape(2, -1)
    rel = coords_flat[:, :, None] - coords_flat[:, None, :]
    rel = rel.transpose(1, 2, 0).astype(np.int64)
    rel[:, :, 0] += ws - 1
    rel[:, :, 1] += ws - 1
    rel[:, :, 0] *= 2 * ws - 1
    return rel.sum(-1)  # (N, N)


def build_shift_mask(H, W, ws, shift):
    N = ws * ws
    img_mask = np.zeros((1, H, W, 1), np.float32)
    cnt = 0
    for hs in (slice(0, -ws), slice(-ws, -shift), slice(-shift, None)):
        for wsl in (slice(0, -ws), slice(-ws, -shift), slice(-shift, None)):
            img_mask[:, hs, wsl, :] = cnt
            cnt += 1
    mw = img_mask.reshape(1, H // ws, ws, W // ws, ws, 1)
    mw = mw.transpose(0, 1, 3, 2, 4, 5).reshape(-1, N)
    am = mw[:, None, :] - mw[:, :, None]
    return np.where(am != 0, -100.0, 0.0).astype(np.float32)  # (nW_img, N, N)


# ----------------------------------------------------------------------------
# SwinTransformerBlock / BasicLayer forward
# ----------------------------------------------------------------------------
def swin_block(x, p, H, W, num_heads, window_size, shift_size, nw_img):
    B, L, C = x.shape
    ws = window_size
    N = ws * ws
    hd = C // num_heads
    scale = hd ** -0.5

    shortcut = x
    xh = x.reshape(B, H, W, C)
    if shift_size > 0:
        xh = jnp.roll(xh, shift=(-shift_size, -shift_size), axis=(1, 2))
    xw = window_partition(xh, ws)                      # (Wt, N, C)
    Wt = xw.shape[0]

    # fused LayerNorm(norm1) + qkv projection (LN commutes with the row
    # permutation done by roll/window_partition, so fusing here is exact)
    qkv = ln_linear(xw.reshape(Wt * N, C), p["norm1_g"], p["norm1_b"],
                    p["qkv_w"], p["qkv_b"]).reshape(Wt, N, 3 * C)

    ao = window_attention(qkv, p["attn_bias"], scale, num_heads,
                          nw_img=nw_img, per_window_bias=(shift_size > 0))
    # (Wt, nH, N, hd) -> (Wt*N, C); small head-merge relayout kept in JAX.
    ao = ao.transpose(0, 2, 1, 3).reshape(Wt * N, C)
    ao = linear(ao, p["proj_w"], p["proj_b"]).reshape(Wt, N, C)

    xh = window_reverse(ao, ws, B, H, W)
    if shift_size > 0:
        xh = jnp.roll(xh, shift=(shift_size, shift_size), axis=(1, 2))
    x = shortcut + xh.reshape(B, L, C)

    # fused LayerNorm(norm2) + fc1(GELU) + fc2 + residual (dropout p=0.0)
    x = ln_mlp(x.reshape(B * L, C), p["norm2_g"], p["norm2_b"],
               p["fc1_w"], p["fc1_b"], p["fc2_w"], p["fc2_b"]).reshape(B, L, C)
    return x


def basic_layer(x, params, H, W, num_heads, window_size, patch_merging=True):
    nw_img = (H // window_size) * (W // window_size)
    for i, bp in enumerate(params["blocks"]):
        shift = 0 if i % 2 == 0 else window_size // 2
        x = swin_block(x, bp, H, W, num_heads, window_size, shift, nw_img)
    if patch_merging:
        B, L, C = x.shape
        h, w = H // 2, W // 2
        # Rearrange 'b (h hs w ws) c -> b (h w) (ws hs c)', hs=2, ws=2
        xr = x.reshape(B, h, 2, w, 2, C)
        xr = xr.transpose(0, 1, 3, 4, 2, 5).reshape(B * h * w, 4 * C)
        y = ln_linear(xr, params["pm_norm_g"], params["pm_norm_b"],
                      params["pm_w"], None)            # Linear(4C->2C, no bias)
        x = y.reshape(B, h * w, 2 * C)
    return x


# ----------------------------------------------------------------------------
# deterministic parameter init (shapes follow the PyTorch module __init__);
# weights stored pre-transposed as (in, out); rel-pos bias gather and shift
# mask folding hoisted to init.
# ----------------------------------------------------------------------------
def init_params(key, dim, depth, num_heads, window_size, mlp_dim, H, W,
                patch_merging=True, dtype=jnp.float32):
    ws = window_size
    N = ws * ws
    rel_index = build_relative_position_index(ws)
    blocks = []
    for i in range(depth):
        key, k0, k1, k2, k3, k4 = jax.random.split(key, 6)
        rpb = 0.02 * jax.random.normal(k1, ((2 * ws - 1) ** 2, num_heads),
                                       jnp.float32)
        rel_bias = rpb[rel_index.reshape(-1)].reshape(N, N, num_heads)
        rel_bias = rel_bias.transpose(2, 0, 1)                  # (nH, N, N) f32
        shift = 0 if i % 2 == 0 else ws // 2
        if shift > 0:
            mask = jnp.asarray(build_shift_mask(H, W, ws, shift))   # (nW,N,N)
            attn_bias = rel_bias[None, :, :, :] + mask[:, None, :, :]
        else:
            attn_bias = rel_bias
        blocks.append(dict(
            norm1_g=jnp.ones((1, dim), dtype),
            norm1_b=jnp.zeros((1, dim), dtype),
            qkv_w=(0.02 * jax.random.normal(k0, (dim, 3 * dim), jnp.float32)).astype(dtype),
            qkv_b=jnp.zeros((3 * dim,), dtype),
            attn_bias=attn_bias.astype(jnp.float32),
            proj_w=(0.02 * jax.random.normal(k2, (dim, dim), jnp.float32)).astype(dtype),
            proj_b=jnp.zeros((dim,), dtype),
            norm2_g=jnp.ones((1, dim), dtype),
            norm2_b=jnp.zeros((1, dim), dtype),
            fc1_w=(0.02 * jax.random.normal(k3, (dim, mlp_dim), jnp.float32)).astype(dtype),
            fc1_b=jnp.zeros((mlp_dim,), dtype),
            fc2_w=(0.02 * jax.random.normal(k4, (mlp_dim, dim), jnp.float32)).astype(dtype),
            fc2_b=jnp.zeros((dim,), dtype),
        ))
    params = dict(blocks=blocks)
    if patch_merging:
        key, kpm = jax.random.split(key)
        params["pm_norm_g"] = jnp.ones((1, 4 * dim), dtype)
        params["pm_norm_b"] = jnp.zeros((1, 4 * dim), dtype)
        params["pm_w"] = (0.02 * jax.random.normal(
            kpm, (4 * dim, 2 * dim), jnp.float32)).astype(dtype)
    return params


# ----------------------------------------------------------------------------
if __name__ == "__main__":
    B = 2
    dim = 32
    H = W = 8                       # input_resolution = (8, 8) -> L = 64
    depth = 2
    num_heads = 4
    window_size = 4
    mlp_ratio = 2.0
    mlp_dim = int(dim * mlp_ratio)

    # bf16 storage / MXU inputs with f32 LN stats, softmax and accumulation
    # (set to jnp.float32 for bit-for-bit f32 semantics).
    DTYPE = jnp.bfloat16

    key = jax.random.PRNGKey(0)
    kx, kp = jax.random.split(key)
    x = jax.random.normal(kx, (B, H * W, dim), jnp.float32).astype(DTYPE)

    params = init_params(kp, dim, depth, num_heads, window_size, mlp_dim, H, W,
                         patch_merging=True, dtype=DTYPE)

    fwd = jax.jit(functools.partial(
        basic_layer, H=H, W=W, num_heads=num_heads,
        window_size=window_size, patch_merging=True))
    y = fwd(x, params)
    jax.block_until_ready(y)

    assert y.shape == (B, (H * W) // 4, 2 * dim), y.shape
    assert bool(jnp.all(jnp.isfinite(y.astype(jnp.float32))))
    print("KERNEL_OK")
</pallas_src>

<mosaic_0001>
module attributes {stable_mosaic.version = 11 : i64} {
  func.func @_ln_linear_kernel(%arg0: i32, %arg1: i32, %arg2: memref<128x32xbf16, #tpu.memory_space<vmem>>, %arg3: memref<1x32xbf16, #tpu.memory_space<vmem>>, %arg4: memref<1x32xbf16, #tpu.memory_space<vmem>>, %arg5: memref<32x96xbf16, #tpu.memory_space<vmem>>, %arg6: memref<1x96xbf16, #tpu.memory_space<vmem>>, %arg7: memref<128x96xbf16, #tpu.memory_space<vmem>>) attributes {dimension_semantics = [#tpu.dimension_semantics<parallel>, #tpu.dimension_semantics<parallel>], iteration_bounds = array<i64: 1, 1>, scalar_prefetch = 0 : i64, scratch_operands = 0 : i64, tpu.core_type = #tpu.core_type<tc>, window_params = [{transform_indices = @transform_0, window_bounds = array<i64: 128, 32>}, {pipeline_mode = #tpu.pipeline_mode<synchronous>, transform_indices = @transform_1, window_bounds = array<i64: 1, 32>}, {pipeline_mode = #tpu.pipeline_mode<synchronous>, transform_indices = @transform_2, window_bounds = array<i64: 1, 32>}, {transform_indices = @transform_3, window_bounds = array<i64: 32, 96>}, {transform_indices = @transform_4, window_bounds = array<i64: 1, 96>}, {transform_indices = @transform_5, window_bounds = array<i64: 128, 96>}]} {
    %c0 = arith.constant 0 : index
    %c0_0 = arith.constant 0 : index
    %0 = vector.load %arg2[%c0, %c0_0] : memref<128x32xbf16, #tpu.memory_space<vmem>>, vector<128x32xbf16>
    %1 = arith.extf %0 : vector<128x32xbf16> to vector<128x32xf32>
    %cst = arith.constant dense<0.000000e+00> : vector<128xf32>
    %2 = vector.multi_reduction <add>, %1, %cst [1] : vector<128x32xf32> to vector<128xf32>
    %3 = vector.shape_cast %2 : vector<128xf32> to vector<128x1xf32>
    %cst_1 = arith.constant 3.200000e+01 : f32
    %4 = vector.broadcast %cst_1 : f32 to vector<128x1xf32>
    %5 = arith.divf %3, %4 : vector<128x1xf32>
    %6 = vector.broadcast %5 : vector<128x1xf32> to vector<128x32xf32>
    %7 = arith.subf %1, %6 : vector<128x32xf32>
    %8 = arith.mulf %7, %7 : vector<128x32xf32>
    %cst_2 = arith.constant dense<0.000000e+00> : vector<128xf32>
    %9 = vector.multi_reduction <add>, %8, %cst_2 [1] : vector<128x32xf32> to vector<128xf32>
    %10 = vector.shape_cast %9 : vector<128xf32> to vector<128x1xf32>
    %cst_3 = arith.constant 3.200000e+01 : f32
    %11 = vector.broadcast %cst_3 : f32 to vector<128x1xf32>
    %12 = arith.divf %10, %11 : vector<128x1xf32>
    %13 = vector.broadcast %5 : vector<128x1xf32> to vector<128x32xf32>
    %14 = arith.subf %1, %13 : vector<128x32xf32>
    %cst_4 = arith.constant 9.99999974E-6 : f32
    %15 = vector.broadcast %cst_4 : f32 to vector<128x1xf32>
    %16 = arith.addf %12, %15 : vector<128x1xf32>
    %17 = math.rsqrt %16 : vector<128x1xf32>
    %18 = vector.broadcast %17 : vector<128x1xf32> to vector<128x32xf32>
    %19 = arith.mulf %14, %18 : vector<128x32xf32>
    %c0_5 = arith.constant 0 : index
    %c0_6 = arith.constant 0 : index
    %20 = vector.load %arg3[%c0_5, %c0_6] : memref<1x32xbf16, #tpu.memory_space<vmem>>, vector<1x32xbf16>
    %21 = arith.extf %20 : vector<1x32xbf16> to vector<1x32xf32>
    %22 = vector.broadcast %21 : vector<1x32xf32> to vector<128x32xf32>
    %23 = arith.mulf %19, %22 : vector<128x32xf32>
    %c0_7 = arith.constant 0 : index
    %c0_8 = arith.constant 0 : index
    %24 = vector.load %arg4[%c0_7, %c0_8] : memref<1x32xbf16, #tpu.memory_space<vmem>>, vector<1x32xbf16>
    %25 = arith.extf %24 : vector<1x32xbf16> to vector<1x32xf32>
    %26 = vector.broadcast %25 : vector<1x32xf32> to vector<128x32xf32>
    %27 = arith.addf %23, %26 : vector<128x32xf32>
    %28 = arith.truncf %27 : vector<128x32xf32> to vector<128x32xbf16>
    %c0_9 = arith.constant 0 : index
    %c0_10 = arith.constant 0 : index
    %29 = vector.load %arg5[%c0_9, %c0_10] : memref<32x96xbf16, #tpu.memory_space<vmem>>, vector<32x96xbf16>
    %cst_11 = arith.constant dense<0.000000e+00> : vector<128x96xf32>
    %30 = tpu.matmul %28, %29, %cst_11 {dimension_numbers = #tpu.dot_dimension_numbers<[1], [0], [0], [1], [0, 0, 1, 1], [], []>} : vector<128x32xbf16>, vector<32x96xbf16>, vector<128x96xf32> -> vector<128x96xf32>
    %c0_12 = arith.constant 0 : index
    %c0_13 = arith.constant 0 : index
    %31 = vector.load %arg6[%c0_12, %c0_13] : memref<1x96xbf16, #tpu.memory_space<vmem>>, vector<1x96xbf16>
    %32 = arith.extf %31 : vector<1x96xbf16> to vector<1x96xf32>
    %33 = vector.broadcast %32 : vector<1x96xf32> to vector<128x96xf32>
    %34 = arith.addf %30, %33 : vector<128x96xf32>
    %35 = arith.truncf %34 : vector<128x96xf32> to vector<128x96xbf16>
    %c0_14 = arith.constant 0 : index
    %c0_15 = arith.constant 0 : index
    %36 = vector.load %arg7[%c0_14, %c0_15] : memref<128x96xbf16, #tpu.memory_space<vmem>>, vector<128x96xbf16>
    tpu.vector_store %arg7[%c0_14, %c0_15], %35 {strides = array<i32>} : memref<128x96xbf16, #tpu.memory_space<vmem>>, vector<128x96xbf16>,
    return
  }
  func.func @transform_0(%arg0: i32, %arg1: i32) -> (i32, i32) {
    %c0_i32 = arith.constant 0 : i32
    %c0_i32_0 = arith.constant 0 : i32
    return %arg0, %c0_i32 : i32, i32
  }
  func.func @transform_1(%arg0: i32, %arg1: i32) -> (i32, i32) {
    %c0_i32 = arith.constant 0 : i32
    %c0_i32_0 = arith.constant 0 : i32
    %c0_i32_1 = arith.constant 0 : i32
    return %c0_i32, %c0_i32_0 : i32, i32
  }
  func.func @transform_2(%arg0: i32, %arg1: i32) -> (i32, i32) {
    %c0_i32 = arith.constant 0 : i32
    %c0_i32_0 = arith.constant 0 : i32
    %c0_i32_1 = arith.constant 0 : i32
    return %c0_i32, %c0_i32_0 : i32, i32
  }
  func.func @transform_3(%arg0: i32, %arg1: i32) -> (i32, i32) {
    %c0_i32 = arith.constant 0 : i32
    %c0_i32_0 = arith.constant 0 : i32
    return %c0_i32, %arg1 : i32, i32
  }
  func.func @transform_4(%arg0: i32, %arg1: i32) -> (i32, i32) {
    %c0_i32 = arith.constant 0 : i32
    %c0_i32_0 = arith.constant 0 : i32
    return %c0_i32, %arg1 : i32, i32
  }
  func.func @transform_5(%arg0: i32, %arg1: i32) -> (i32, i32) {
    %c0_i32 = arith.constant 0 : i32
    return %arg0, %arg1 : i32, i32
  }
}

module attributes {stable_mosaic.version = 11 : i64} {
  func.func @_attn_kernel(%arg0: i32, %arg1: memref<4x16x96xbf16, #tpu.memory_space<vmem>>, %arg2: memref<4x16x16xf32, #tpu.memory_space<vmem>>, %arg3: memref<4x4x16x8xbf16, #tpu.memory_space<vmem>>) attributes {dimension_semantics = [#tpu.dimension_semantics<parallel>], iteration_bounds = array<i64: 2>, scalar_prefetch = 0 : i64, scratch_operands = 0 : i64, tpu.core_type = #tpu.core_type<tc>, window_params = [{transform_indices = @transform_0, window_bounds = array<i64: 4, 16, 96>}, {pipeline_mode = #tpu.pipeline_mode<synchronous>, transform_indices = @transform_1, window_bounds = array<i64: 4, 16, 16>}, {transform_indices = @transform_2, window_bounds = array<i64: 4, 4, 16, 8>}]} {
    %c0 = arith.constant 0 : index
    %c0_0 = arith.constant 0 : index
    %c0_1 = arith.constant 0 : index
    %0 = vector.load %arg1[%c0, %c0_0, %c0_1] : memref<4x16x96xbf16, #tpu.memory_space<vmem>>, vector<4x16x96xbf16>
    %c0_2 = arith.constant 0 : index
    %c0_3 = arith.constant 0 : index
    %c0_4 = arith.constant 0 : index
    %1 = vector.load %arg2[%c0_2, %c0_3, %c0_4] : memref<4x16x16xf32, #tpu.memory_space<vmem>>, vector<4x16x16xf32>
    %2 = vector.extract_strided_slice %0 {offsets = [0, 0, 0], sizes = [4, 16, 8], strides = [1, 1, 1]} : vector<4x16x96xbf16> to vector<4x16x8xbf16>
    %3 = vector.extract_strided_slice %0 {offsets = [0, 0, 32], sizes = [4, 16, 8], strides = [1, 1, 1]} : vector<4x16x96xbf16> to vector<4x16x8xbf16>
    %4 = vector.extract_strided_slice %0 {offsets = [0, 0, 64], sizes = [4, 16, 8], strides = [1, 1, 1]} : vector<4x16x96xbf16> to vector<4x16x8xbf16>
    "tpu.trace_start"() <{level = 10 : i32, message = "wnd,wmd->wnm"}> : () -> ()
    %cst = arith.constant dense<0.000000e+00> : vector<4x16x16xf32>
    %5 = tpu.matmul %2, %3, %cst {dimension_numbers = #tpu.dot_dimension_numbers<[2], [2], [1], [1], [0, 0, 0, 1, 1, 1], [0], [0]>} : vector<4x16x8xbf16>, vector<4x16x8xbf16>, vector<4x16x16xf32> -> vector<4x16x16xf32>
    "tpu.trace_stop"() : () -> ()
    %cst_5 = arith.constant 0.353553385 : f32
    %6 = vector.broadcast %cst_5 : f32 to vector<4x16x16xf32>
    %7 = arith.mulf %5, %6 : vector<4x16x16xf32>
    %8 = vector.extract_strided_slice %1 {offsets = [0, 0, 0], sizes = [1, 16, 16], strides = [1, 1, 1]} : vector<4x16x16xf32> to vector<1x16x16xf32>
    %9 = vector.shape_cast %8 : vector<1x16x16xf32> to vector<16x16xf32>
    %10 = vector.shape_cast %9 : vector<16x16xf32> to vector<1x16x16xf32>
    %11 = vector.broadcast %10 : vector<1x16x16xf32> to vector<4x16x16xf32>
    %12 = arith.addf %7, %11 : vector<4x16x16xf32>
    %cst_6 = arith.constant dense<0xFF800000> : vector<4x16xf32>
    %13 = vector.multi_reduction <maximumf>, %12, %cst_6 [2] : vector<4x16x16xf32> to vector<4x16xf32>
    %14 = vector.shape_cast %13 : vector<4x16xf32> to vector<4x16x1xf32>
    %15 = vector.broadcast %14 : vector<4x16x1xf32> to vector<4x16x16xf32>
    %16 = arith.subf %12, %15 : vector<4x16x16xf32>
    %17 = math.exp %16 : vector<4x16x16xf32>
    %cst_7 = arith.constant dense<0.000000e+00> : vector<4x16xf32>
    %18 = vector.multi_reduction <add>, %17, %cst_7 [2] : vector<4x16x16xf32> to vector<4x16xf32>
    %19 = vector.shape_cast %18 : vector<4x16xf32> to vector<4x16x1xf32>
    %20 = tpu.reciprocal %19 {approx = true} : vector<4x16x1xf32> -> vector<4x16x1xf32>
    %21 = vector.broadcast %20 : vector<4x16x1xf32> to vector<4x16x16xf32>
    %22 = arith.mulf %17, %21 : vector<4x16x16xf32>
    %23 = arith.truncf %22 : vector<4x16x16xf32> to vector<4x16x16xbf16>
    "tpu.trace_start"() <{level = 10 : i32, message = "wnm,wmd->wnd"}> : () -> ()
    %cst_8 = arith.constant dense<0.000000e+00> : vector<4x16x8xf32>
    %24 = tpu.matmul %23, %4, %cst_8 {dimension_numbers = #tpu.dot_dimension_numbers<[2], [1], [1], [2], [0, 0, 0, 1, 1, 2], [0], [0]>} : vector<4x16x16xbf16>, vector<4x16x8xbf16>, vector<4x16x8xf32> -> vector<4x16x8xf32>
    "tpu.trace_stop"() : () -> ()
    %25 = arith.truncf %24 : vector<4x16x8xf32> to vector<4x16x8xbf16>
    %c0_9 = arith.constant 0 : index
    %c0_10 = arith.constant 0 : index
    %c0_11 = arith.constant 0 : index
    %c0_12 = arith.constant 0 : index
    %26 = vector.load %arg3[%c0_9, %c0_10, %c0_11, %c0_12] : memref<4x4x16x8xbf16, #tpu.memory_space<vmem>>, vector<4x1x16x8xbf16>
    %27 = vector.shape_cast %26 : vector<4x1x16x8xbf16> to vector<4x16x8xbf16>
    %28 = vector.shape_cast %25 : vector<4x16x8xbf16> to vector<4x1x16x8xbf16>
    tpu.vector_store %arg3[%c0_9, %c0_10, %c0_11, %c0_12], %28 {strides = array<i32>} : memref<4x4x16x8xbf16, #tpu.memory_space<vmem>>, vector<4x1x16x8xbf16>,
    %29 = vector.extract_strided_slice %0 {offsets = [0, 0, 8], sizes = [4, 16, 8], strides = [1, 1, 1]} : vector<4x16x96xbf16> to vector<4x16x8xbf16>
    %30 = vector.extract_strided_slice %0 {offsets = [0, 0, 40], sizes = [4, 16, 8], strides = [1, 1, 1]} : vector<4x16x96xbf16> to vector<4x16x8xbf16>
    %31 = vector.extract_strided_slice %0 {offsets = [0, 0, 72], sizes = [4, 16, 8], strides = [1, 1, 1]} : vector<4x16x96xbf16> to vector<4x16x8xbf16>
    "tpu.trace_start"() <{level = 10 : i32, message = "wnd,wmd->wnm"}> : () -> ()
    %cst_13 = arith.constant dense<0.000000e+00> : vector<4x16x16xf32>
    %32 = tpu.matmul %29, %30, %cst_13 {dimension_numbers = #tpu.dot_dimension_numbers<[2], [2], [1], [1], [0, 0, 0, 1, 1, 1], [0], [0]>} : vector<4x16x8xbf16>, vector<4x16x8xbf16>, vector<4x16x16xf32> -> vector<4x16x16xf32>
    "tpu.trace_stop"() : () -> ()
    %cst_14 = arith.constant 0.353553385 : f32
    %33 = vector.broadcast %cst_14 : f32 to vector<4x16x16xf32>
    %34 = arith.mulf %32, %33 : vector<4x16x16xf32>
    %35 = vector.extract_strided_slice %1 {offsets = [1, 0, 0], sizes = [1, 16, 16], strides = [1, 1, 1]} : vector<4x16x16xf32> to vector<1x16x16xf32>
    %36 = vector.shape_cast %35 : vector<1x16x16xf32> to vector<16x16xf32>
    %37 = vector.shape_cast %36 : vector<16x16xf32> to vector<1x16x16xf32>
    %38 = vector.broadcast %37 : vector<1x16x16xf32> to vector<4x16x16xf32>
    %39 = arith.addf %34, %38 : vector<4x16x16xf32>
    %cst_15 = arith.constant dense<0xFF800000> : vector<4x16xf32>
    %40 = vector.multi_reduction <maximumf>, %39, %cst_15 [2] : vector<4x16x16xf32> to vector<4x16xf32>
    %41 = vector.shape_cast %40 : vector<4x16xf32> to vector<4x16x1xf32>
    %42 = vector.broadcast %41 : vector<4x16x1xf32> to vector<4x16x16xf32>
    %43 = arith.subf %39, %42 : vector<4x16x16xf32>
    %44 = math.exp %43 : vector<4x16x16xf32>
    %cst_16 = arith.constant dense<0.000000e+00> : vector<4x16xf32>
    %45 = vector.multi_reduction <add>, %44, %cst_16 [2] : vector<4x16x16xf32> to vector<4x16xf32>
    %46 = vector.shape_cast %45 : vector<4x16xf32> to vector<4x16x1xf32>
    %47 = tpu.reciprocal %46 {approx = true} : vector<4x16x1xf32> -> vector<4x16x1xf32>
    %48 = vector.broadcast %47 : vector<4x16x1xf32> to vector<4x16x16xf32>
    %49 = arith.mulf %44, %48 : vector<4x16x16xf32>
    %50 = arith.truncf %49 : vector<4x16x16xf32> to vector<4x16x16xbf16>
    "tpu.trace_start"() <{level = 10 : i32, message = "wnm,wmd->wnd"}> : () -> ()
    %cst_17 = arith.constant dense<0.000000e+00> : vector<4x16x8xf32>
    %51 = tpu.matmul %50, %31, %cst_17 {dimension_numbers = #tpu.dot_dimension_numbers<[2], [1], [1], [2], [0, 0, 0, 1, 1, 2], [0], [0]>} : vector<4x16x16xbf16>, vector<4x16x8xbf16>, vector<4x16x8xf32> -> vector<4x16x8xf32>
    "tpu.trace_stop"() : () -> ()
    %52 = arith.truncf %51 : vector<4x16x8xf32> to vector<4x16x8xbf16>
    %c0_18 = arith.constant 0 : index
    %c1 = arith.constant 1 : index
    %c0_19 = arith.constant 0 : index
    %c0_20 = arith.constant 0 : index
    %53 = vector.load %arg3[%c0_18, %c1, %c0_19, %c0_20] : memref<4x4x16x8xbf16, #tpu.memory_space<vmem>>, vector<4x1x16x8xbf16>
    %54 = vector.shape_cast %53 : vector<4x1x16x8xbf16> to vector<4x16x8xbf16>
    %55 = vector.shape_cast %52 : vector<4x16x8xbf16> to vector<4x1x16x8xbf16>
    tpu.vector_store %arg3[%c0_18, %c1, %c0_19, %c0_20], %55 {strides = array<i32>} : memref<4x4x16x8xbf16, #tpu.memory_space<vmem>>, vector<4x1x16x8xbf16>,
    %56 = vector.extract_strided_slice %0 {offsets = [0, 0, 16], sizes = [4, 16, 8], strides = [1, 1, 1]} : vector<4x16x96xbf16> to vector<4x16x8xbf16>
    %57 = vector.extract_strided_slice %0 {offsets = [0, 0, 48], sizes = [4, 16, 8], strides = [1, 1, 1]} : vector<4x16x96xbf16> to vector<4x16x8xbf16>
    %58 = vector.extract_strided_slice %0 {offsets = [0, 0, 80], sizes = [4, 16, 8], strides = [1, 1, 1]} : vector<4x16x96xbf16> to vector<4x16x8xbf16>
    "tpu.trace_start"() <{level = 10 : i32, message = "wnd,wmd->wnm"}> : () -> ()
    %cst_21 = arith.constant dense<0.000000e+00> : vector<4x16x16xf32>
    %59 = tpu.matmul %56, %57, %cst_21 {dimension_numbers = #tpu.dot_dimension_numbers<[2], [2], [1], [1], [0, 0, 0, 1, 1, 1], [0], [0]>} : vector<4x16x8xbf16>, vector<4x16x8xbf16>, vector<4x16x16xf32> -> vector<4x16x16xf32>
    "tpu.trace_stop"() : () -> ()
    %cst_22 = arith.constant 0.353553385 : f32
    %60 = vector.broadcast %cst_22 : f32 to vector<4x16x16xf32>
    %61 = arith.mulf %59, %60 : vector<4x16x16xf32>
    %62 = vector.extract_strided_slice %1 {offsets = [2, 0, 0], sizes = [1, 16, 16], strides = [1, 1, 1]} : vector<4x16x16xf32> to vector<1x16x16xf32>
    %63 = vector.shape_cast %62 : vector<1x16x16xf32> to vector<16x16xf32>
    %64 = vector.shape_cast %63 : vector<16x16xf32> to vector<1x16x16xf32>
    %65 = vector.broadcast %64 : vector<1x16x16xf32> to vector<4x16x16xf32>
    %66 = arith.addf %61, %65 : vector<4x16x16xf32>
    %cst_23 = arith.constant dense<0xFF800000> : vector<4x16xf32>
    %67 = vector.multi_reduction <maximumf>, %66, %cst_23 [2] : vector<4x16x16xf32> to vector<4x16xf32>
    %68 = vector.shape_cast %67 : vector<4x16xf32> to vector<4x16x1xf32>
    %69 = vector.broadcast %68 : vector<4x16x1xf32> to vector<4x16x16xf32>
    %70 = arith.subf %66, %69 : vector<4x16x16xf32>
    %71 = math.exp %70 : vector<4x16x16xf32>
    %cst_24 = arith.constant dense<0.000000e+00> : vector<4x16xf32>
    %72 = vector.multi_reduction <add>, %71, %cst_24 [2] : vector<4x16x16xf32> to vector<4x16xf32>
    %73 = vector.shape_cast %72 : vector<4x16xf32> to vector<4x16x1xf32>
    %74 = tpu.reciprocal %73 {approx = true} : vector<4x16x1xf32> -> vector<4x16x1xf32>
    %75 = vector.broadcast %74 : vector<4x16x1xf32> to vector<4x16x16xf32>
    %76 = arith.mulf %71, %75 : vector<4x16x16xf32>
    %77 = arith.truncf %76 : vector<4x16x16xf32> to vector<4x16x16xbf16>
    "tpu.trace_start"() <{level = 10 : i32, message = "wnm,wmd->wnd"}> : () -> ()
    %cst_25 = arith.constant dense<0.000000e+00> : vector<4x16x8xf32>
    %78 = tpu.matmul %77, %58, %cst_25 {dimension_numbers = #tpu.dot_dimension_numbers<[2], [1], [1], [2], [0, 0, 0, 1, 1, 2], [0], [0]>} : vector<4x16x16xbf16>, vector<4x16x8xbf16>, vector<4x16x8xf32> -> vector<4x16x8xf32>
    "tpu.trace_stop"() : () -> ()
    %79 = arith.truncf %78 : vector<4x16x8xf32> to vector<4x16x8xbf16>
    %c0_26 = arith.constant 0 : index
    %c2 = arith.constant 2 : index
    %c0_27 = arith.constant 0 : index
    %c0_28 = arith.constant 0 : index
    %80 = vector.load %arg3[%c0_26, %c2, %c0_27, %c0_28] : memref<4x4x16x8xbf16, #tpu.memory_space<vmem>>, vector<4x1x16x8xbf16>
    %81 = vector.shape_cast %80 : vector<4x1x16x8xbf16> to vector<4x16x8xbf16>
    %82 = vector.shape_cast %79 : vector<4x16x8xbf16> to vector<4x1x16x8xbf16>
    tpu.vector_store %arg3[%c0_26, %c2, %c0_27, %c0_28], %82 {strides = array<i32>} : memref<4x4x16x8xbf16, #tpu.memory_space<vmem>>, vector<4x1x16x8xbf16>,
    %83 = vector.extract_strided_slice %0 {offsets = [0, 0, 24], sizes = [4, 16, 8], strides = [1, 1, 1]} : vector<4x16x96xbf16> to vector<4x16x8xbf16>
    %84 = vector.extract_strided_slice %0 {offsets = [0, 0, 56], sizes = [4, 16, 8], strides = [1, 1, 1]} : vector<4x16x96xbf16> to vector<4x16x8xbf16>
    %85 = vector.extract_strided_slice %0 {offsets = [0, 0, 88], sizes = [4, 16, 8], strides = [1, 1, 1]} : vector<4x16x96xbf16> to vector<4x16x8xbf16>
    "tpu.trace_start"() <{level = 10 : i32, message = "wnd,wmd->wnm"}> : () -> ()
    %cst_29 = arith.constant dense<0.000000e+00> : vector<4x16x16xf32>
    %86 = tpu.matmul %83, %84, %cst_29 {dimension_numbers = #tpu.dot_dimension_numbers<[2], [2], [1], [1], [0, 0, 0, 1, 1, 1], [0], [0]>} : vector<4x16x8xbf16>, vector<4x16x8xbf16>, vector<4x16x16xf32> -> vector<4x16x16xf32>
    "tpu.trace_stop"() : () -> ()
    %cst_30 = arith.constant 0.353553385 : f32
    %87 = vector.broadcast %cst_30 : f32 to vector<4x16x16xf32>
    %88 = arith.mulf %86, %87 : vector<4x16x16xf32>
    %89 = vector.extract_strided_slice %1 {offsets = [3, 0, 0], sizes = [1, 16, 16], strides = [1, 1, 1]} : vector<4x16x16xf32> to vector<1x16x16xf32>
    %90 = vector.shape_cast %89 : vector<1x16x16xf32> to vector<16x16xf32>
    %91 = vector.shape_cast %90 : vector<16x16xf32> to vector<1x16x16xf32>
    %92 = vector.broadcast %91 : vector<1x16x16xf32> to vector<4x16x16xf32>
    %93 = arith.addf %88, %92 : vector<4x16x16xf32>
    %cst_31 = arith.constant dense<0xFF800000> : vector<4x16xf32>
    %94 = vector.multi_reduction <maximumf>, %93, %cst_31 [2] : vector<4x16x16xf32> to vector<4x16xf32>
    %95 = vector.shape_cast %94 : vector<4x16xf32> to vector<4x16x1xf32>
    %96 = vector.broadcast %95 : vector<4x16x1xf32> to vector<4x16x16xf32>
    %97 = arith.subf %93, %96 : vector<4x16x16xf32>
    %98 = math.exp %97 : vector<4x16x16xf32>
    %cst_32 = arith.constant dense<0.000000e+00> : vector<4x16xf32>
    %99 = vector.multi_reduction <add>, %98, %cst_32 [2] : vector<4x16x16xf32> to vector<4x16xf32>
    %100 = vector.shape_cast %99 : vector<4x16xf32> to vector<4x16x1xf32>
    %101 = tpu.reciprocal %100 {approx = true} : vector<4x16x1xf32> -> vector<4x16x1xf32>
    %102 = vector.broadcast %101 : vector<4x16x1xf32> to vector<4x16x16xf32>
    %103 = arith.mulf %98, %102 : vector<4x16x16xf32>
    %104 = arith.truncf %103 : vector<4x16x16xf32> to vector<4x16x16xbf16>
    "tpu.trace_start"() <{level = 10 : i32, message = "wnm,wmd->wnd"}> : () -> ()
    %cst_33 = arith.constant dense<0.000000e+00> : vector<4x16x8xf32>
    %105 = tpu.matmul %104, %85, %cst_33 {dimension_numbers = #tpu.dot_dimension_numbers<[2], [1], [1], [2], [0, 0, 0, 1, 1, 2], [0], [0]>} : vector<4x16x16xbf16>, vector<4x16x8xbf16>, vector<4x16x8xf32> -> vector<4x16x8xf32>
    "tpu.trace_stop"() : () -> ()
    %106 = arith.truncf %105 : vector<4x16x8xf32> to vector<4x16x8xbf16>
    %c0_34 = arith.constant 0 : index
    %c3 = arith.constant 3 : index
    %c0_35 = arith.constant 0 : index
    %c0_36 = arith.constant 0 : index
    %107 = vector.load %arg3[%c0_34, %c3, %c0_35, %c0_36] : memref<4x4x16x8xbf16, #tpu.memory_space<vmem>>, vector<4x1x16x8xbf16>
    %108 = vector.shape_cast %107 : vector<4x1x16x8xbf16> to vector<4x16x8xbf16>
    %109 = vector.shape_cast %106 : vector<4x16x8xbf16> to vector<4x1x16x8xbf16>
    tpu.vector_store %arg3[%c0_34, %c3, %c0_35, %c0_36], %109 {strides = array<i32>} : memref<4x4x16x8xbf16, #tpu.memory_space<vmem>>, vector<4x1x16x8xbf16>,
    return
  }
  func.func @transform_0(%arg0: i32) -> (i32, i32, i32) {
    %c0_i32 = arith.constant 0 : i32
    %c0_i32_0 = arith.constant 0 : i32
    %c0_i32_1 = arith.constant 0 : i32
    return %arg0, %c0_i32, %c0_i32_0 : i32, i32, i32
  }
  func.func @transform_1(%arg0: i32) -> (i32, i32, i32) {
    %c0_i32 = arith.constant 0 : i32
    %c0_i32_0 = arith.constant 0 : i32
    %c0_i32_1 = arith.constant 0 : i32
    %c0_i32_2 = arith.constant 0 : i32
    return %c0_i32, %c0_i32_0, %c0_i32_1 : i32, i32, i32
  }
  func.func @transform_2(%arg0: i32) -> (i32, i32, i32, i32) {
    %c0_i32 = arith.constant 0 : i32
    %c0_i32_0 = arith.constant 0 : i32
    %c0_i32_1 = arith.constant 0 : i32
    %c0_i32_2 = arith.constant 0 : i32
    return %arg0, %c0_i32, %c0_i32_0, %c0_i32_1 : i32, i32, i32, i32
  }
}

module attributes {stable_mosaic.version = 11 : i64} {
  func.func @_linear_kernel(%arg0: i32, %arg1: i32, %arg2: memref<128x32xbf16, #tpu.memory_space<vmem>>, %arg3: memref<32x32xbf16, #tpu.memory_space<vmem>>, %arg4: memref<1x32xbf16, #tpu.memory_space<vmem>>, %arg5: memref<128x32xbf16, #tpu.memory_space<vmem>>) attributes {dimension_semantics = [#tpu.dimension_semantics<parallel>, #tpu.dimension_semantics<parallel>], iteration_bounds = array<i64: 1, 1>, scalar_prefetch = 0 : i64, scratch_operands = 0 : i64, tpu.core_type = #tpu.core_type<tc>, window_params = [{transform_indices = @transform_0, window_bounds = array<i64: 128, 32>}, {transform_indices = @transform_1, window_bounds = array<i64: 32, 32>}, {transform_indices = @transform_2, window_bounds = array<i64: 1, 32>}, {transform_indices = @transform_3, window_bounds = array<i64: 128, 32>}]} {
    %c0 = arith.constant 0 : index
    %c0_0 = arith.constant 0 : index
    %0 = vector.load %arg2[%c0, %c0_0] : memref<128x32xbf16, #tpu.memory_space<vmem>>, vector<128x32xbf16>
    %c0_1 = arith.constant 0 : index
    %c0_2 = arith.constant 0 : index
    %1 = vector.load %arg3[%c0_1, %c0_2] : memref<32x32xbf16, #tpu.memory_space<vmem>>, vector<32x32xbf16>
    %cst = arith.constant dense<0.000000e+00> : vector<128x32xf32>
    %2 = tpu.matmul %0, %1, %cst {dimension_numbers = #tpu.dot_dimension_numbers<[1], [0], [0], [1], [0, 0, 1, 1], [], []>} : vector<128x32xbf16>, vector<32x32xbf16>, vector<128x32xf32> -> vector<128x32xf32>
    %c0_3 = arith.constant 0 : index
    %c0_4 = arith.constant 0 : index
    %3 = vector.load %arg4[%c0_3, %c0_4] : memref<1x32xbf16, #tpu.memory_space<vmem>>, vector<1x32xbf16>
    %4 = arith.extf %3 : vector<1x32xbf16> to vector<1x32xf32>
    %5 = vector.broadcast %4 : vector<1x32xf32> to vector<128x32xf32>
    %6 = arith.addf %2, %5 : vector<128x32xf32>
    %7 = arith.truncf %6 : vector<128x32xf32> to vector<128x32xbf16>
    %c0_5 = arith.constant 0 : index
    %c0_6 = arith.constant 0 : index
    %8 = vector.load %arg5[%c0_5, %c0_6] : memref<128x32xbf16, #tpu.memory_space<vmem>>, vector<128x32xbf16>
    tpu.vector_store %arg5[%c0_5, %c0_6], %7 {strides = array<i32>} : memref<128x32xbf16, #tpu.memory_space<vmem>>, vector<128x32xbf16>,
    return
  }
  func.func @transform_0(%arg0: i32, %arg1: i32) -> (i32, i32) {
    %c0_i32 = arith.constant 0 : i32
    %c0_i32_0 = arith.constant 0 : i32
    return %arg0, %c0_i32 : i32, i32
  }
  func.func @transform_1(%arg0: i32, %arg1: i32) -> (i32, i32) {
    %c0_i32 = arith.constant 0 : i32
    %c0_i32_0 = arith.constant 0 : i32
    return %c0_i32, %arg1 : i32, i32
  }
  func.func @transform_2(%arg0: i32, %arg1: i32) -> (i32, i32) {
    %c0_i32 = arith.constant 0 : i32
    %c0_i32_0 = arith.constant 0 : i32
    return %c0_i32, %arg1 : i32, i32
  }
  func.func @transform_3(%arg0: i32, %arg1: i32) -> (i32, i32) {
    %c0_i32 = arith.constant 0 : i32
    return %arg0, %arg1 : i32, i32
  }
}

module attributes {stable_mosaic.version = 11 : i64} {
  func.func @_ln_mlp_kernel(%arg0: i32, %arg1: memref<128x32xbf16, #tpu.memory_space<vmem>>, %arg2: memref<1x32xbf16, #tpu.memory_space<vmem>>, %arg3: memref<1x32xbf16, #tpu.memory_space<vmem>>, %arg4: memref<32x64xbf16, #tpu.memory_space<vmem>>, %arg5: memref<1x64xbf16, #tpu.memory_space<vmem>>, %arg6: memref<64x32xbf16, #tpu.memory_space<vmem>>, %arg7: memref<1x32xbf16, #tpu.memory_space<vmem>>, %arg8: memref<128x32xbf16, #tpu.memory_space<vmem>>) attributes {dimension_semantics = [#tpu.dimension_semantics<parallel>], iteration_bounds = array<i64: 1>, scalar_prefetch = 0 : i64, scratch_operands = 0 : i64, tpu.core_type = #tpu.core_type<tc>, window_params = [{transform_indices = @transform_0, window_bounds = array<i64: 128, 32>}, {pipeline_mode = #tpu.pipeline_mode<synchronous>, transform_indices = @transform_1, window_bounds = array<i64: 1, 32>}, {pipeline_mode = #tpu.pipeline_mode<synchronous>, transform_indices = @transform_2, window_bounds = array<i64: 1, 32>}, {pipeline_mode = #tpu.pipeline_mode<synchronous>, transform_indices = @transform_3, window_bounds = array<i64: 32, 64>}, {pipeline_mode = #tpu.pipeline_mode<synchronous>, transform_indices = @transform_4, window_bounds = array<i64: 1, 64>}, {pipeline_mode = #tpu.pipeline_mode<synchronous>, transform_indices = @transform_5, window_bounds = array<i64: 64, 32>}, {pipeline_mode = #tpu.pipeline_mode<synchronous>, transform_indices = @transform_6, window_bounds = array<i64: 1, 32>}, {transform_indices = @transform_7, window_bounds = array<i64: 128, 32>}]} {
    %c0 = arith.constant 0 : index
    %c0_0 = arith.constant 0 : index
    %0 = vector.load %arg1[%c0, %c0_0] : memref<128x32xbf16, #tpu.memory_space<vmem>>, vector<128x32xbf16>
    %1 = arith.extf %0 : vector<128x32xbf16> to vector<128x32xf32>
    %cst = arith.constant dense<0.000000e+00> : vector<128xf32>
    %2 = vector.multi_reduction <add>, %1, %cst [1] : vector<128x32xf32> to vector<128xf32>
    %3 = vector.shape_cast %2 : vector<128xf32> to vector<128x1xf32>
    %cst_1 = arith.constant 3.200000e+01 : f32
    %4 = vector.broadcast %cst_1 : f32 to vector<128x1xf32>
    %5 = arith.divf %3, %4 : vector<128x1xf32>
    %6 = vector.broadcast %5 : vector<128x1xf32> to vector<128x32xf32>
    %7 = arith.subf %1, %6 : vector<128x32xf32>
    %8 = arith.mulf %7, %7 : vector<128x32xf32>
    %cst_2 = arith.constant dense<0.000000e+00> : vector<128xf32>
    %9 = vector.multi_reduction <add>, %8, %cst_2 [1] : vector<128x32xf32> to vector<128xf32>
    %10 = vector.shape_cast %9 : vector<128xf32> to vector<128x1xf32>
    %cst_3 = arith.constant 3.200000e+01 : f32
    %11 = vector.broadcast %cst_3 : f32 to vector<128x1xf32>
    %12 = arith.divf %10, %11 : vector<128x1xf32>
    %13 = vector.broadcast %5 : vector<128x1xf32> to vector<128x32xf32>
    %14 = arith.subf %1, %13 : vector<128x32xf32>
    %cst_4 = arith.constant 9.99999974E-6 : f32
    %15 = vector.broadcast %cst_4 : f32 to vector<128x1xf32>
    %16 = arith.addf %12, %15 : vector<128x1xf32>
    %17 = math.rsqrt %16 : vector<128x1xf32>
    %18 = vector.broadcast %17 : vector<128x1xf32> to vector<128x32xf32>
    %19 = arith.mulf %14, %18 : vector<128x32xf32>
    %c0_5 = arith.constant 0 : index
    %c0_6 = arith.constant 0 : index
    %20 = vector.load %arg2[%c0_5, %c0_6] : memref<1x32xbf16, #tpu.memory_space<vmem>>, vector<1x32xbf16>
    %21 = arith.extf %20 : vector<1x32xbf16> to vector<1x32xf32>
    %22 = vector.broadcast %21 : vector<1x32xf32> to vector<128x32xf32>
    %23 = arith.mulf %19, %22 : vector<128x32xf32>
    %c0_7 = arith.constant 0 : index
    %c0_8 = arith.constant 0 : index
    %24 = vector.load %arg3[%c0_7, %c0_8] : memref<1x32xbf16, #tpu.memory_space<vmem>>, vector<1x32xbf16>
    %25 = arith.extf %24 : vector<1x32xbf16> to vector<1x32xf32>
    %26 = vector.broadcast %25 : vector<1x32xf32> to vector<128x32xf32>
    %27 = arith.addf %23, %26 : vector<128x32xf32>
    %28 = arith.truncf %27 : vector<128x32xf32> to vector<128x32xbf16>
    %c0_9 = arith.constant 0 : index
    %c0_10 = arith.constant 0 : index
    %29 = vector.load %arg4[%c0_9, %c0_10] : memref<32x64xbf16, #tpu.memory_space<vmem>>, vector<32x64xbf16>
    %cst_11 = arith.constant dense<0.000000e+00> : vector<128x64xf32>
    %30 = tpu.matmul %28, %29, %cst_11 {dimension_numbers = #tpu.dot_dimension_numbers<[1], [0], [0], [1], [0, 0, 1, 1], [], []>} : vector<128x32xbf16>, vector<32x64xbf16>, vector<128x64xf32> -> vector<128x64xf32>
    %c0_12 = arith.constant 0 : index
    %c0_13 = arith.constant 0 : index
    %31 = vector.load %arg5[%c0_12, %c0_13] : memref<1x64xbf16, #tpu.memory_space<vmem>>, vector<1x64xbf16>
    %32 = arith.extf %31 : vector<1x64xbf16> to vector<1x64xf32>
    %33 = vector.broadcast %32 : vector<1x64xf32> to vector<128x64xf32>
    %34 = arith.addf %30, %33 : vector<128x64xf32>
    %cst_14 = arith.constant 5.000000e-01 : f32
    %35 = vector.broadcast %cst_14 : f32 to vector<128x64xf32>
    %36 = arith.mulf %35, %34 : vector<128x64xf32>
    %cst_15 = arith.constant 0.707106769 : f32
    %37 = vector.broadcast %cst_15 : f32 to vector<128x64xf32>
    %38 = arith.mulf %34, %37 : vector<128x64xf32>
    %39 = math.erf %38 : vector<128x64xf32>
    %cst_16 = arith.constant 1.000000e+00 : f32
    %40 = vector.broadcast %cst_16 : f32 to vector<128x64xf32>
    %41 = arith.addf %40, %39 : vector<128x64xf32>
    %42 = arith.mulf %36, %41 : vector<128x64xf32>
    %43 = arith.truncf %42 : vector<128x64xf32> to vector<128x64xbf16>
    %c0_17 = arith.constant 0 : index
    %c0_18 = arith.constant 0 : index
    %44 = vector.load %arg6[%c0_17, %c0_18] : memref<64x32xbf16, #tpu.memory_space<vmem>>, vector<64x32xbf16>
    %cst_19 = arith.constant dense<0.000000e+00> : vector<128x32xf32>
    %45 = tpu.matmul %43, %44, %cst_19 {dimension_numbers = #tpu.dot_dimension_numbers<[1], [0], [0], [1], [0, 0, 1, 1], [], []>} : vector<128x64xbf16>, vector<64x32xbf16>, vector<128x32xf32> -> vector<128x32xf32>
    %c0_20 = arith.constant 0 : index
    %c0_21 = arith.constant 0 : index
    %46 = vector.load %arg7[%c0_20, %c0_21] : memref<1x32xbf16, #tpu.memory_space<vmem>>, vector<1x32xbf16>
    %47 = arith.extf %46 : vector<1x32xbf16> to vector<1x32xf32>
    %48 = vector.broadcast %47 : vector<1x32xf32> to vector<128x32xf32>
    %49 = arith.addf %45, %48 : vector<128x32xf32>
    %50 = arith.addf %1, %49 : vector<128x32xf32>
    %51 = arith.truncf %50 : vector<128x32xf32> to vector<128x32xbf16>
    %c0_22 = arith.constant 0 : index
    %c0_23 = arith.constant 0 : index
    %52 = vector.load %arg8[%c0_22, %c0_23] : memref<128x32xbf16, #tpu.memory_space<vmem>>, vector<128x32xbf16>
    tpu.vector_store %arg8[%c0_22, %c0_23], %51 {strides = array<i32>} : memref<128x32xbf16, #tpu.memory_space<vmem>>, vector<128x32xbf16>,
    return
  }
  func.func @transform_0(%arg0: i32) -> (i32, i32) {
    %c0_i32 = arith.constant 0 : i32
    %c0_i32_0 = arith.constant 0 : i32
    return %arg0, %c0_i32 : i32, i32
  }
  func.func @transform_1(%arg0: i32) -> (i32, i32) {
    %c0_i32 = arith.constant 0 : i32
    %c0_i32_0 = arith.constant 0 : i32
    %c0_i32_1 = arith.constant 0 : i32
    return %c0_i32, %c0_i32_0 : i32, i32
  }
  func.func @transform_2(%arg0: i32) -> (i32, i32) {
    %c0_i32 = arith.constant 0 : i32
    %c0_i32_0 = arith.constant 0 : i32
    %c0_i32_1 = arith.constant 0 : i32
    return %c0_i32, %c0_i32_0 : i32, i32
  }
  func.func @transform_3(%arg0: i32) -> (i32, i32) {
    %c0_i32 = arith.constant 0 : i32
    %c0_i32_0 = arith.constant 0 : i32
    %c0_i32_1 = arith.constant 0 : i32
    return %c0_i32, %c0_i32_0 : i32, i32
  }
  func.func @transform_4(%arg0: i32) -> (i32, i32) {
    %c0_i32 = arith.constant 0 : i32
    %c0_i32_0 = arith.constant 0 : i32
    %c0_i32_1 = arith.constant 0 : i32
    return %c0_i32, %c0_i32_0 : i32, i32
  }
  func.func @transform_5(%arg0: i32) -> (i32, i32) {
    %c0_i32 = arith.constant 0 : i32
    %c0_i32_0 = arith.constant 0 : i32
    %c0_i32_1 = arith.constant 0 : i32
    return %c0_i32, %c0_i32_0 : i32, i32
  }
  func.func @transform_6(%arg0: i32) -> (i32, i32) {
    %c0_i32 = arith.constant 0 : i32
    %c0_i32_0 = arith.constant 0 : i32
    %c0_i32_1 = arith.constant 0 : i32
    return %c0_i32, %c0_i32_0 : i32, i32
  }
  func.func @transform_7(%arg0: i32) -> (i32, i32) {
    %c0_i32 = arith.constant 0 : i32
    %c0_i32_0 = arith.constant 0 : i32
    return %arg0, %c0_i32 : i32, i32
  }
}

module attributes {stable_mosaic.version = 11 : i64} {
  func.func @_attn_kernel(%arg0: i32, %arg1: memref<4x16x96xbf16, #tpu.memory_space<vmem>>, %arg2: memref<4x4x16x16xf32, #tpu.memory_space<vmem>>, %arg3: memref<4x4x16x8xbf16, #tpu.memory_space<vmem>>) attributes {dimension_semantics = [#tpu.dimension_semantics<parallel>], iteration_bounds = array<i64: 2>, scalar_prefetch = 0 : i64, scratch_operands = 0 : i64, tpu.core_type = #tpu.core_type<tc>, window_params = [{transform_indices = @transform_0, window_bounds = array<i64: 4, 16, 96>}, {transform_indices = @transform_1, window_bounds = array<i64: 4, 4, 16, 16>}, {transform_indices = @transform_2, window_bounds = array<i64: 4, 4, 16, 8>}]} {
    %c0 = arith.constant 0 : index
    %c0_0 = arith.constant 0 : index
    %c0_1 = arith.constant 0 : index
    %0 = vector.load %arg1[%c0, %c0_0, %c0_1] : memref<4x16x96xbf16, #tpu.memory_space<vmem>>, vector<4x16x96xbf16>
    %c0_2 = arith.constant 0 : index
    %c0_3 = arith.constant 0 : index
    %c0_4 = arith.constant 0 : index
    %c0_5 = arith.constant 0 : index
    %1 = vector.load %arg2[%c0_2, %c0_3, %c0_4, %c0_5] : memref<4x4x16x16xf32, #tpu.memory_space<vmem>>, vector<4x4x16x16xf32>
    %2 = vector.extract_strided_slice %0 {offsets = [0, 0, 0], sizes = [4, 16, 8], strides = [1, 1, 1]} : vector<4x16x96xbf16> to vector<4x16x8xbf16>
    %3 = vector.extract_strided_slice %0 {offsets = [0, 0, 32], sizes = [4, 16, 8], strides = [1, 1, 1]} : vector<4x16x96xbf16> to vector<4x16x8xbf16>
    %4 = vector.extract_strided_slice %0 {offsets = [0, 0, 64], sizes = [4, 16, 8], strides = [1, 1, 1]} : vector<4x16x96xbf16> to vector<4x16x8xbf16>
    "tpu.trace_start"() <{level = 10 : i32, message = "wnd,wmd->wnm"}> : () -> ()
    %cst = arith.constant dense<0.000000e+00> : vector<4x16x16xf32>
    %5 = tpu.matmul %2, %3, %cst {dimension_numbers = #tpu.dot_dimension_numbers<[2], [2], [1], [1], [0, 0, 0, 1, 1, 1], [0], [0]>} : vector<4x16x8xbf16>, vector<4x16x8xbf16>, vector<4x16x16xf32> -> vector<4x16x16xf32>
    "tpu.trace_stop"() : () -> ()
    %cst_6 = arith.constant 0.353553385 : f32
    %6 = vector.broadcast %cst_6 : f32 to vector<4x16x16xf32>
    %7 = arith.mulf %5, %6 : vector<4x16x16xf32>
    %8 = vector.extract_strided_slice %1 {offsets = [0, 0, 0, 0], sizes = [4, 1, 16, 16], strides = [1, 1, 1, 1]} : vector<4x4x16x16xf32> to vector<4x1x16x16xf32>
    %9 = vector.shape_cast %8 : vector<4x1x16x16xf32> to vector<4x16x16xf32>
    %10 = arith.addf %7, %9 : vector<4x16x16xf32>
    %cst_7 = arith.constant dense<0xFF800000> : vector<4x16xf32>
    %11 = vector.multi_reduction <maximumf>, %10, %cst_7 [2] : vector<4x16x16xf32> to vector<4x16xf32>
    %12 = vector.shape_cast %11 : vector<4x16xf32> to vector<4x16x1xf32>
    %13 = vector.broadcast %12 : vector<4x16x1xf32> to vector<4x16x16xf32>
    %14 = arith.subf %10, %13 : vector<4x16x16xf32>
    %15 = math.exp %14 : vector<4x16x16xf32>
    %cst_8 = arith.constant dense<0.000000e+00> : vector<4x16xf32>
    %16 = vector.multi_reduction <add>, %15, %cst_8 [2] : vector<4x16x16xf32> to vector<4x16xf32>
    %17 = vector.shape_cast %16 : vector<4x16xf32> to vector<4x16x1xf32>
    %18 = tpu.reciprocal %17 {approx = true} : vector<4x16x1xf32> -> vector<4x16x1xf32>
    %19 = vector.broadcast %18 : vector<4x16x1xf32> to vector<4x16x16xf32>
    %20 = arith.mulf %15, %19 : vector<4x16x16xf32>
    %21 = arith.truncf %20 : vector<4x16x16xf32> to vector<4x16x16xbf16>
    "tpu.trace_start"() <{level = 10 : i32, message = "wnm,wmd->wnd"}> : () -> ()
    %cst_9 = arith.constant dense<0.000000e+00> : vector<4x16x8xf32>
    %22 = tpu.matmul %21, %4, %cst_9 {dimension_numbers = #tpu.dot_dimension_numbers<[2], [1], [1], [2], [0, 0, 0, 1, 1, 2], [0], [0]>} : vector<4x16x16xbf16>, vector<4x16x8xbf16>, vector<4x16x8xf32> -> vector<4x16x8xf32>
    "tpu.trace_stop"() : () -> ()
    %23 = arith.truncf %22 : vector<4x16x8xf32> to vector<4x16x8xbf16>
    %c0_10 = arith.constant 0 : index
    %c0_11 = arith.constant 0 : index
    %c0_12 = arith.constant 0 : index
    %c0_13 = arith.constant 0 : index
    %24 = vector.load %arg3[%c0_10, %c0_11, %c0_12, %c0_13] : memref<4x4x16x8xbf16, #tpu.memory_space<vmem>>, vector<4x1x16x8xbf16>
    %25 = vector.shape_cast %24 : vector<4x1x16x8xbf16> to vector<4x16x8xbf16>
    %26 = vector.shape_cast %23 : vector<4x16x8xbf16> to vector<4x1x16x8xbf16>
    tpu.vector_store %arg3[%c0_10, %c0_11, %c0_12, %c0_13], %26 {strides = array<i32>} : memref<4x4x16x8xbf16, #tpu.memory_space<vmem>>, vector<4x1x16x8xbf16>,
    %27 = vector.extract_strided_slice %0 {offsets = [0, 0, 8], sizes = [4, 16, 8], strides = [1, 1, 1]} : vector<4x16x96xbf16> to vector<4x16x8xbf16>
    %28 = vector.extract_strided_slice %0 {offsets = [0, 0, 40], sizes = [4, 16, 8], strides = [1, 1, 1]} : vector<4x16x96xbf16> to vector<4x16x8xbf16>
    %29 = vector.extract_strided_slice %0 {offsets = [0, 0, 72], sizes = [4, 16, 8], strides = [1, 1, 1]} : vector<4x16x96xbf16> to vector<4x16x8xbf16>
    "tpu.trace_start"() <{level = 10 : i32, message = "wnd,wmd->wnm"}> : () -> ()
    %cst_14 = arith.constant dense<0.000000e+00> : vector<4x16x16xf32>
    %30 = tpu.matmul %27, %28, %cst_14 {dimension_numbers = #tpu.dot_dimension_numbers<[2], [2], [1], [1], [0, 0, 0, 1, 1, 1], [0], [0]>} : vector<4x16x8xbf16>, vector<4x16x8xbf16>, vector<4x16x16xf32> -> vector<4x16x16xf32>
    "tpu.trace_stop"() : () -> ()
    %cst_15 = arith.constant 0.353553385 : f32
    %31 = vector.broadcast %cst_15 : f32 to vector<4x16x16xf32>
    %32 = arith.mulf %30, %31 : vector<4x16x16xf32>
    %33 = vector.extract_strided_slice %1 {offsets = [0, 1, 0, 0], sizes = [4, 1, 16, 16], strides = [1, 1, 1, 1]} : vector<4x4x16x16xf32> to vector<4x1x16x16xf32>
    %34 = vector.shape_cast %33 : vector<4x1x16x16xf32> to vector<4x16x16xf32>
    %35 = arith.addf %32, %34 : vector<4x16x16xf32>
    %cst_16 = arith.constant dense<0xFF800000> : vector<4x16xf32>
    %36 = vector.multi_reduction <maximumf>, %35, %cst_16 [2] : vector<4x16x16xf32> to vector<4x16xf32>
    %37 = vector.shape_cast %36 : vector<4x16xf32> to vector<4x16x1xf32>
    %38 = vector.broadcast %37 : vector<4x16x1xf32> to vector<4x16x16xf32>
    %39 = arith.subf %35, %38 : vector<4x16x16xf32>
    %40 = math.exp %39 : vector<4x16x16xf32>
    %cst_17 = arith.constant dense<0.000000e+00> : vector<4x16xf32>
    %41 = vector.multi_reduction <add>, %40, %cst_17 [2] : vector<4x16x16xf32> to vector<4x16xf32>
    %42 = vector.shape_cast %41 : vector<4x16xf32> to vector<4x16x1xf32>
    %43 = tpu.reciprocal %42 {approx = true} : vector<4x16x1xf32> -> vector<4x16x1xf32>
    %44 = vector.broadcast %43 : vector<4x16x1xf32> to vector<4x16x16xf32>
    %45 = arith.mulf %40, %44 : vector<4x16x16xf32>
    %46 = arith.truncf %45 : vector<4x16x16xf32> to vector<4x16x16xbf16>
    "tpu.trace_start"() <{level = 10 : i32, message = "wnm,wmd->wnd"}> : () -> ()
    %cst_18 = arith.constant dense<0.000000e+00> : vector<4x16x8xf32>
    %47 = tpu.matmul %46, %29, %cst_18 {dimension_numbers = #tpu.dot_dimension_numbers<[2], [1], [1], [2], [0, 0, 0, 1, 1, 2], [0], [0]>} : vector<4x16x16xbf16>, vector<4x16x8xbf16>, vector<4x16x8xf32> -> vector<4x16x8xf32>
    "tpu.trace_stop"() : () -> ()
    %48 = arith.truncf %47 : vector<4x16x8xf32> to vector<4x16x8xbf16>
    %c0_19 = arith.constant 0 : index
    %c1 = arith.constant 1 : index
    %c0_20 = arith.constant 0 : index
    %c0_21 = arith.constant 0 : index
    %49 = vector.load %arg3[%c0_19, %c1, %c0_20, %c0_21] : memref<4x4x16x8xbf16, #tpu.memory_space<vmem>>, vector<4x1x16x8xbf16>
    %50 = vector.shape_cast %49 : vector<4x1x16x8xbf16> to vector<4x16x8xbf16>
    %51 = vector.shape_cast %48 : vector<4x16x8xbf16> to vector<4x1x16x8xbf16>
    tpu.vector_store %arg3[%c0_19, %c1, %c0_20, %c0_21], %51 {strides = array<i32>} : memref<4x4x16x8xbf16, #tpu.memory_space<vmem>>, vector<4x1x16x8xbf16>,
    %52 = vector.extract_strided_slice %0 {offsets = [0, 0, 16], sizes = [4, 16, 8], strides = [1, 1, 1]} : vector<4x16x96xbf16> to vector<4x16x8xbf16>
    %53 = vector.extract_strided_slice %0 {offsets = [0, 0, 48], sizes = [4, 16, 8], strides = [1, 1, 1]} : vector<4x16x96xbf16> to vector<4x16x8xbf16>
    %54 = vector.extract_strided_slice %0 {offsets = [0, 0, 80], sizes = [4, 16, 8], strides = [1, 1, 1]} : vector<4x16x96xbf16> to vector<4x16x8xbf16>
    "tpu.trace_start"() <{level = 10 : i32, message = "wnd,wmd->wnm"}> : () -> ()
    %cst_22 = arith.constant dense<0.000000e+00> : vector<4x16x16xf32>
    %55 = tpu.matmul %52, %53, %cst_22 {dimension_numbers = #tpu.dot_dimension_numbers<[2], [2], [1], [1], [0, 0, 0, 1, 1, 1], [0], [0]>} : vector<4x16x8xbf16>, vector<4x16x8xbf16>, vector<4x16x16xf32> -> vector<4x16x16xf32>
    "tpu.trace_stop"() : () -> ()
    %cst_23 = arith.constant 0.353553385 : f32
    %56 = vector.broadcast %cst_23 : f32 to vector<4x16x16xf32>
    %57 = arith.mulf %55, %56 : vector<4x16x16xf32>
    %58 = vector.extract_strided_slice %1 {offsets = [0, 2, 0, 0], sizes = [4, 1, 16, 16], strides = [1, 1, 1, 1]} : vector<4x4x16x16xf32> to vector<4x1x16x16xf32>
    %59 = vector.shape_cast %58 : vector<4x1x16x16xf32> to vector<4x16x16xf32>
    %60 = arith.addf %57, %59 : vector<4x16x16xf32>
    %cst_24 = arith.constant dense<0xFF800000> : vector<4x16xf32>
    %61 = vector.multi_reduction <maximumf>, %60, %cst_24 [2] : vector<4x16x16xf32> to vector<4x16xf32>
    %62 = vector.shape_cast %61 : vector<4x16xf32> to vector<4x16x1xf32>
    %63 = vector.broadcast %62 : vector<4x16x1xf32> to vector<4x16x16xf32>
    %64 = arith.subf %60, %63 : vector<4x16x16xf32>
    %65 = math.exp %64 : vector<4x16x16xf32>
    %cst_25 = arith.constant dense<0.000000e+00> : vector<4x16xf32>
    %66 = vector.multi_reduction <add>, %65, %cst_25 [2] : vector<4x16x16xf32> to vector<4x16xf32>
    %67 = vector.shape_cast %66 : vector<4x16xf32> to vector<4x16x1xf32>
    %68 = tpu.reciprocal %67 {approx = true} : vector<4x16x1xf32> -> vector<4x16x1xf32>
    %69 = vector.broadcast %68 : vector<4x16x1xf32> to vector<4x16x16xf32>
    %70 = arith.mulf %65, %69 : vector<4x16x16xf32>
    %71 = arith.truncf %70 : vector<4x16x16xf32> to vector<4x16x16xbf16>
    "tpu.trace_start"() <{level = 10 : i32, message = "wnm,wmd->wnd"}> : () -> ()
    %cst_26 = arith.constant dense<0.000000e+00> : vector<4x16x8xf32>
    %72 = tpu.matmul %71, %54, %cst_26 {dimension_numbers = #tpu.dot_dimension_numbers<[2], [1], [1], [2], [0, 0, 0, 1, 1, 2], [0], [0]>} : vector<4x16x16xbf16>, vector<4x16x8xbf16>, vector<4x16x8xf32> -> vector<4x16x8xf32>
    "tpu.trace_stop"() : () -> ()
    %73 = arith.truncf %72 : vector<4x16x8xf32> to vector<4x16x8xbf16>
    %c0_27 = arith.constant 0 : index
    %c2 = arith.constant 2 : index
    %c0_28 = arith.constant 0 : index
    %c0_29 = arith.constant 0 : index
    %74 = vector.load %arg3[%c0_27, %c2, %c0_28, %c0_29] : memref<4x4x16x8xbf16, #tpu.memory_space<vmem>>, vector<4x1x16x8xbf16>
    %75 = vector.shape_cast %74 : vector<4x1x16x8xbf16> to vector<4x16x8xbf16>
    %76 = vector.shape_cast %73 : vector<4x16x8xbf16> to vector<4x1x16x8xbf16>
    tpu.vector_store %arg3[%c0_27, %c2, %c0_28, %c0_29], %76 {strides = array<i32>} : memref<4x4x16x8xbf16, #tpu.memory_space<vmem>>, vector<4x1x16x8xbf16>,
    %77 = vector.extract_strided_slice %0 {offsets = [0, 0, 24], sizes = [4, 16, 8], strides = [1, 1, 1]} : vector<4x16x96xbf16> to vector<4x16x8xbf16>
    %78 = vector.extract_strided_slice %0 {offsets = [0, 0, 56], sizes = [4, 16, 8], strides = [1, 1, 1]} : vector<4x16x96xbf16> to vector<4x16x8xbf16>
    %79 = vector.extract_strided_slice %0 {offsets = [0, 0, 88], sizes = [4, 16, 8], strides = [1, 1, 1]} : vector<4x16x96xbf16> to vector<4x16x8xbf16>
    "tpu.trace_start"() <{level = 10 : i32, message = "wnd,wmd->wnm"}> : () -> ()
    %cst_30 = arith.constant dense<0.000000e+00> : vector<4x16x16xf32>
    %80 = tpu.matmul %77, %78, %cst_30 {dimension_numbers = #tpu.dot_dimension_numbers<[2], [2], [1], [1], [0, 0, 0, 1, 1, 1], [0], [0]>} : vector<4x16x8xbf16>, vector<4x16x8xbf16>, vector<4x16x16xf32> -> vector<4x16x16xf32>
    "tpu.trace_stop"() : () -> ()
    %cst_31 = arith.constant 0.353553385 : f32
    %81 = vector.broadcast %cst_31 : f32 to vector<4x16x16xf32>
    %82 = arith.mulf %80, %81 : vector<4x16x16xf32>
    %83 = vector.extract_strided_slice %1 {offsets = [0, 3, 0, 0], sizes = [4, 1, 16, 16], strides = [1, 1, 1, 1]} : vector<4x4x16x16xf32> to vector<4x1x16x16xf32>
    %84 = vector.shape_cast %83 : vector<4x1x16x16xf32> to vector<4x16x16xf32>
    %85 = arith.addf %82, %84 : vector<4x16x16xf32>
    %cst_32 = arith.constant dense<0xFF800000> : vector<4x16xf32>
    %86 = vector.multi_reduction <maximumf>, %85, %cst_32 [2] : vector<4x16x16xf32> to vector<4x16xf32>
    %87 = vector.shape_cast %86 : vector<4x16xf32> to vector<4x16x1xf32>
    %88 = vector.broadcast %87 : vector<4x16x1xf32> to vector<4x16x16xf32>
    %89 = arith.subf %85, %88 : vector<4x16x16xf32>
    %90 = math.exp %89 : vector<4x16x16xf32>
    %cst_33 = arith.constant dense<0.000000e+00> : vector<4x16xf32>
    %91 = vector.multi_reduction <add>, %90, %cst_33 [2] : vector<4x16x16xf32> to vector<4x16xf32>
    %92 = vector.shape_cast %91 : vector<4x16xf32> to vector<4x16x1xf32>
    %93 = tpu.reciprocal %92 {approx = true} : vector<4x16x1xf32> -> vector<4x16x1xf32>
    %94 = vector.broadcast %93 : vector<4x16x1xf32> to vector<4x16x16xf32>
    %95 = arith.mulf %90, %94 : vector<4x16x16xf32>
    %96 = arith.truncf %95 : vector<4x16x16xf32> to vector<4x16x16xbf16>
    "tpu.trace_start"() <{level = 10 : i32, message = "wnm,wmd->wnd"}> : () -> ()
    %cst_34 = arith.constant dense<0.000000e+00> : vector<4x16x8xf32>
    %97 = tpu.matmul %96, %79, %cst_34 {dimension_numbers = #tpu.dot_dimension_numbers<[2], [1], [1], [2], [0, 0, 0, 1, 1, 2], [0], [0]>} : vector<4x16x16xbf16>, vector<4x16x8xbf16>, vector<4x16x8xf32> -> vector<4x16x8xf32>
    "tpu.trace_stop"() : () -> ()
    %98 = arith.truncf %97 : vector<4x16x8xf32> to vector<4x16x8xbf16>
    %c0_35 = arith.constant 0 : index
    %c3 = arith.constant 3 : index
    %c0_36 = arith.constant 0 : index
    %c0_37 = arith.constant 0 : index
    %99 = vector.load %arg3[%c0_35, %c3, %c0_36, %c0_37] : memref<4x4x16x8xbf16, #tpu.memory_space<vmem>>, vector<4x1x16x8xbf16>
    %100 = vector.shape_cast %99 : vector<4x1x16x8xbf16> to vector<4x16x8xbf16>
    %101 = vector.shape_cast %98 : vector<4x16x8xbf16> to vector<4x1x16x8xbf16>
    tpu.vector_store %arg3[%c0_35, %c3, %c0_36, %c0_37], %101 {strides = array<i32>} : memref<4x4x16x8xbf16, #tpu.memory_space<vmem>>, vector<4x1x16x8xbf16>,
    return
  }
  func.func @transform_0(%arg0: i32) -> (i32, i32, i32) {
    %c0_i32 = arith.constant 0 : i32
    %c0_i32_0 = arith.constant 0 : i32
    %c0_i32_1 = arith.constant 0 : i32
    return %arg0, %c0_i32, %c0_i32_0 : i32, i32, i32
  }
  func.func @transform_1(%arg0: i32) -> (i32, i32, i32, i32) {
    %c1_i32 = arith.constant 1 : i32
    %c0_i32 = arith.constant 0 : i32
    %0 = arith.cmpi eq, %c1_i32, %c0_i32 : i32
    %c1_i32_0 = arith.constant 1 : i32
    %1 = arith.select %0, %c1_i32_0, %c1_i32 : i32
    %2 = arith.remsi %arg0, %1 : i32
    %c0_i32_1 = arith.constant 0 : i32
    %3 = arith.cmpi ne, %2, %c0_i32_1 : i32
    %c0_i32_2 = arith.constant 0 : i32
    %4 = arith.cmpi slt, %2, %c0_i32_2 : i32
    %c0_i32_3 = arith.constant 0 : i32
    %5 = arith.cmpi slt, %1, %c0_i32_3 : i32
    %6 = arith.xori %4, %5 : i1
    %7 = arith.andi %6, %3 : i1
    %8 = arith.addi %2, %1 : i32
    %9 = arith.select %7, %8, %2 : i32
    %c0_i32_4 = arith.constant 0 : i32
    %c0_i32_5 = arith.constant 0 : i32
    %c0_i32_6 = arith.constant 0 : i32
    %c0_i32_7 = arith.constant 0 : i32
    return %9, %c0_i32_4, %c0_i32_5, %c0_i32_6 : i32, i32, i32, i32
  }
  func.func @transform_2(%arg0: i32) -> (i32, i32, i32, i32) {
    %c0_i32 = arith.constant 0 : i32
    %c0_i32_0 = arith.constant 0 : i32
    %c0_i32_1 = arith.constant 0 : i32
    %c0_i32_2 = arith.constant 0 : i32
    return %arg0, %c0_i32, %c0_i32_0, %c0_i32_1 : i32, i32, i32, i32
  }
}

module attributes {stable_mosaic.version = 11 : i64} {
  func.func @_ln_linear_kernel(%arg0: i32, %arg1: i32, %arg2: memref<32x128xbf16, #tpu.memory_space<vmem>>, %arg3: memref<1x128xbf16, #tpu.memory_space<vmem>>, %arg4: memref<1x128xbf16, #tpu.memory_space<vmem>>, %arg5: memref<128x64xbf16, #tpu.memory_space<vmem>>, %arg6: memref<1x64xbf16, #tpu.memory_space<vmem>>, %arg7: memref<32x64xbf16, #tpu.memory_space<vmem>>) attributes {dimension_semantics = [#tpu.dimension_semantics<parallel>, #tpu.dimension_semantics<parallel>], iteration_bounds = array<i64: 1, 1>, scalar_prefetch = 0 : i64, scratch_operands = 0 : i64, tpu.core_type = #tpu.core_type<tc>, window_params = [{transform_indices = @transform_0, window_bounds = array<i64: 32, 128>}, {pipeline_mode = #tpu.pipeline_mode<synchronous>, transform_indices = @transform_1, window_bounds = array<i64: 1, 128>}, {pipeline_mode = #tpu.pipeline_mode<synchronous>, transform_indices = @transform_2, window_bounds = array<i64: 1, 128>}, {transform_indices = @transform_3, window_bounds = array<i64: 128, 64>}, {transform_indices = @transform_4, window_bounds = array<i64: 1, 64>}, {transform_indices = @transform_5, window_bounds = array<i64: 32, 64>}]} {
    %c0 = arith.constant 0 : index
    %c0_0 = arith.constant 0 : index
    %0 = vector.load %arg2[%c0, %c0_0] : memref<32x128xbf16, #tpu.memory_space<vmem>>, vector<32x128xbf16>
    %1 = arith.extf %0 : vector<32x128xbf16> to vector<32x128xf32>
    %cst = arith.constant dense<0.000000e+00> : vector<32xf32>
    %2 = vector.multi_reduction <add>, %1, %cst [1] : vector<32x128xf32> to vector<32xf32>
    %3 = vector.shape_cast %2 : vector<32xf32> to vector<32x1xf32>
    %cst_1 = arith.constant 1.280000e+02 : f32
    %4 = vector.broadcast %cst_1 : f32 to vector<32x1xf32>
    %5 = arith.divf %3, %4 : vector<32x1xf32>
    %6 = vector.broadcast %5 : vector<32x1xf32> to vector<32x128xf32>
    %7 = arith.subf %1, %6 : vector<32x128xf32>
    %8 = arith.mulf %7, %7 : vector<32x128xf32>
    %cst_2 = arith.constant dense<0.000000e+00> : vector<32xf32>
    %9 = vector.multi_reduction <add>, %8, %cst_2 [1] : vector<32x128xf32> to vector<32xf32>
    %10 = vector.shape_cast %9 : vector<32xf32> to vector<32x1xf32>
    %cst_3 = arith.constant 1.280000e+02 : f32
    %11 = vector.broadcast %cst_3 : f32 to vector<32x1xf32>
    %12 = arith.divf %10, %11 : vector<32x1xf32>
    %13 = vector.broadcast %5 : vector<32x1xf32> to vector<32x128xf32>
    %14 = arith.subf %1, %13 : vector<32x128xf32>
    %cst_4 = arith.constant 9.99999974E-6 : f32
    %15 = vector.broadcast %cst_4 : f32 to vector<32x1xf32>
    %16 = arith.addf %12, %15 : vector<32x1xf32>
    %17 = math.rsqrt %16 : vector<32x1xf32>
    %18 = vector.broadcast %17 : vector<32x1xf32> to vector<32x128xf32>
    %19 = arith.mulf %14, %18 : vector<32x128xf32>
    %c0_5 = arith.constant 0 : index
    %c0_6 = arith.constant 0 : index
    %20 = vector.load %arg3[%c0_5, %c0_6] : memref<1x128xbf16, #tpu.memory_space<vmem>>, vector<1x128xbf16>
    %21 = arith.extf %20 : vector<1x128xbf16> to vector<1x128xf32>
    %22 = vector.broadcast %21 : vector<1x128xf32> to vector<32x128xf32>
    %23 = arith.mulf %19, %22 : vector<32x128xf32>
    %c0_7 = arith.constant 0 : index
    %c0_8 = arith.constant 0 : index
    %24 = vector.load %arg4[%c0_7, %c0_8] : memref<1x128xbf16, #tpu.memory_space<vmem>>, vector<1x128xbf16>
    %25 = arith.extf %24 : vector<1x128xbf16> to vector<1x128xf32>
    %26 = vector.broadcast %25 : vector<1x128xf32> to vector<32x128xf32>
    %27 = arith.addf %23, %26 : vector<32x128xf32>
    %28 = arith.truncf %27 : vector<32x128xf32> to vector<32x128xbf16>
    %c0_9 = arith.constant 0 : index
    %c0_10 = arith.constant 0 : index
    %29 = vector.load %arg5[%c0_9, %c0_10] : memref<128x64xbf16, #tpu.memory_space<vmem>>, vector<128x64xbf16>
    %cst_11 = arith.constant dense<0.000000e+00> : vector<32x64xf32>
    %30 = tpu.matmul %28, %29, %cst_11 {dimension_numbers = #tpu.dot_dimension_numbers<[1], [0], [0], [1], [0, 0, 1, 1], [], []>} : vector<32x128xbf16>, vector<128x64xbf16>, vector<32x64xf32> -> vector<32x64xf32>
    %c0_12 = arith.constant 0 : index
    %c0_13 = arith.constant 0 : index
    %31 = vector.load %arg6[%c0_12, %c0_13] : memref<1x64xbf16, #tpu.memory_space<vmem>>, vector<1x64xbf16>
    %32 = arith.extf %31 : vector<1x64xbf16> to vector<1x64xf32>
    %33 = vector.broadcast %32 : vector<1x64xf32> to vector<32x64xf32>
    %34 = arith.addf %30, %33 : vector<32x64xf32>
    %35 = arith.truncf %34 : vector<32x64xf32> to vector<32x64xbf16>
    %c0_14 = arith.constant 0 : index
    %c0_15 = arith.constant 0 : index
    %36 = vector.load %arg7[%c0_14, %c0_15] : memref<32x64xbf16, #tpu.memory_space<vmem>>, vector<32x64xbf16>
    tpu.vector_store %arg7[%c0_14, %c0_15], %35 {strides = array<i32>} : memref<32x64xbf16, #tpu.memory_space<vmem>>, vector<32x64xbf16>,
    return
  }
  func.func @transform_0(%arg0: i32, %arg1: i32) -> (i32, i32) {
    %c0_i32 = arith.constant 0 : i32
    %c0_i32_0 = arith.constant 0 : i32
    return %arg0, %c0_i32 : i32, i32
  }
  func.func @transform_1(%arg0: i32, %arg1: i32) -> (i32, i32) {
    %c0_i32 = arith.constant 0 : i32
    %c0_i32_0 = arith.constant 0 : i32
    %c0_i32_1 = arith.constant 0 : i32
    return %c0_i32, %c0_i32_0 : i32, i32
  }
  func.func @transform_2(%arg0: i32, %arg1: i32) -> (i32, i32) {
    %c0_i32 = arith.constant 0 : i32
    %c0_i32_0 = arith.constant 0 : i32
    %c0_i32_1 = arith.constant 0 : i32
    return %c0_i32, %c0_i32_0 : i32, i32
  }
  func.func @transform_3(%arg0: i32, %arg1: i32) -> (i32, i32) {
    %c0_i32 = arith.constant 0 : i32
    %c0_i32_0 = arith.constant 0 : i32
    return %c0_i32, %arg1 : i32, i32
  }
  func.func @transform_4(%arg0: i32, %arg1: i32) -> (i32, i32) {
    %c0_i32 = arith.constant 0 : i32
    %c0_i32_0 = arith.constant 0 : i32
    return %c0_i32, %arg1 : i32, i32
  }
  func.func @transform_5(%arg0: i32, %arg1: i32) -> (i32, i32) {
    %c0_i32 = arith.constant 0 : i32
    return %arg0, %arg1 : i32, i32
  }
}

</mosaic_0001>

<llo_original>
// kernel: basic_layer.9
$region0: #{basic_layer.9}
  #allocation0 [shape = 'u32[]', space=smem, size = 0x4, offset = 0x4, fixed_abs, tag = 'smem constant byte address 0x4 - core index']
  #allocation1 [shape = 'u32[144,128]{1,0:T(1,128)}', space=vmem, size = 0x12000, scoped, tag = 'internal scratch']
  %s0 = inlined_call_operand.vmem [shape: bf16[128,32], index: 0, kind: input, shape index: {}]
  %s1 = inlined_call_operand.vmem [shape: bf16[1,32], index: 1, kind: input, shape index: {}]
  %s2 = inlined_call_operand.vmem [shape: bf16[1,32], index: 2, kind: input, shape index: {}]
  %s3 = inlined_call_operand.vmem [shape: bf16[32,96], index: 3, kind: input, shape index: {}]
  %s4 = inlined_call_operand.vmem [shape: bf16[1,96], index: 4, kind: input, shape index: {}]
  %s5 = inlined_call_operand.vmem [shape: bf16[128,96], index: 5, kind: output, shape index: {}]
  %s6 = sld [smem:[#allocation0]]
  $region30: #{basic_layer.9} parent=0
    _
  %s8 = ssub.s32 1, %s6
  %s9 = scalar_select 0, %s8, %s6
  // Predicated region
  $region2: #{basic_layer.9} parent=0 // pred_check
    _
  $region3: #{basic_layer.9} parent=0 // pred_check_branch
    %11 = sbr.rel (0) target = $region5
  $region4: #{basic_layer.9} parent=0 // pred_region
    _
  $region5: #{basic_layer.9} parent=0 // pred_fallthru
    _
  // Predicated region
  $region6: #{basic_layer.9} parent=0 // pred_check
    _
  $region7: #{basic_layer.9} parent=0 // pred_check_branch
    %13 = sbr.rel (0) target = $region9
  $region8: #{basic_layer.9} parent=0 // pred_region
    _
  $region9: #{basic_layer.9} parent=0 // pred_fallthru
    _
  // Predicated region
  $region10: #{basic_layer.9} parent=0 // pred_check
    _
  $region11: #{basic_layer.9} parent=0 // pred_check_branch
    %15 = sbr.rel (0) target = $region13
  $region12: #{basic_layer.9} parent=0 // pred_region
    _
  $region13: #{basic_layer.9} parent=0 // pred_fallthru
    _
  // Predicated region
  $region14: #{basic_layer.9} parent=0 // pred_check
    _
  $region15: #{basic_layer.9} parent=0 // pred_check_branch
    %17 = sbr.rel (0) target = $region17
  $region16: #{basic_layer.9} parent=0 // pred_region
    _
  $region17: #{basic_layer.9} parent=0 // pred_fallthru
    _
  // Predicated region
  $region18: #{basic_layer.9} parent=0 // pred_check
    _
  $region19: #{basic_layer.9} parent=0 // pred_check_branch
    %19 = sbr.rel (0) target = $region21
  $region20: #{basic_layer.9} parent=0 // pred_region
    _
  $region21: #{basic_layer.9} parent=0 // pred_fallthru
    _
  %v21 = vld [vmem:[%s0] sm:$0xf]
  %v22 = vld [vmem:[%s0 + $0x4] sm:$0xf]
  %v23 = vld [vmem:[%s0 + $0x8] sm:$0xf]
  %v24 = vld [vmem:[%s0 + $0xc] sm:$0xf]
  %v25 = vld [vmem:[%s0 + $0x10] sm:$0xf]
  %v26 = vld [vmem:[%s0 + $0x14] sm:$0xf]
  %v27 = vld [vmem:[%s0 + $0x18] sm:$0xf]
  %v28 = vld [vmem:[%s0 + $0x1c] sm:$0xf]
  %v29 = vld [vmem:[%s0 + $0x20] sm:$0xf]
  %v30 = vld [vmem:[%s0 + $0x24] sm:$0xf]
  %v31 = vld [vmem:[%s0 + $0x28] sm:$0xf]
  %v32 = vld [vmem:[%s0 + $0x2c] sm:$0xf]
  %v33 = vld [vmem:[%s0 + $0x30] sm:$0xf]
  %v34 = vld [vmem:[%s0 + $0x34] sm:$0xf]
  %v35 = vld [vmem:[%s0 + $0x38] sm:$0xf]
  %v36 = vld [vmem:[%s0 + $0x3c] sm:$0xf]
  %v37 = vunpack.c.l.bf16 %v21
  %v38 = vunpack.c.l.bf16 %v22
  %v39 = vunpack.c.l.bf16 %v23
  %v40 = vunpack.c.l.bf16 %v24
  %v41 = vunpack.c.l.bf16 %v25
  %v42 = vunpack.c.l.bf16 %v26
  %v43 = vunpack.c.l.bf16 %v27
  %v44 = vunpack.c.l.bf16 %v28
  %v45 = vunpack.c.l.bf16 %v29
  %v46 = vunpack.c.l.bf16 %v30
  %v47 = vunpack.c.l.bf16 %v31
  %v48 = vunpack.c.l.bf16 %v32
  %v49 = vunpack.c.l.bf16 %v33
  %v50 = vunpack.c.l.bf16 %v34
  %v51 = vunpack.c.l.bf16 %v35
  %v52 = vunpack.c.l.bf16 %v36
  %vm53 = vcmask 261120
  %v54 = vsel %vm53, %v37, 0.0
  %55 = vadd.xlane.f32.xlu0 %v54
  %v56 = vpop.xlane.xlu0 %55
  %v57 = vsel %vm53, %v38, 0.0
  %58 = vadd.xlane.f32.xlu0 %v57
  %v59 = vpop.xlane.xlu0 %58
  %v60 = vsel %vm53, %v39, 0.0
  %61 = vadd.xlane.f32.xlu0 %v60
  %v62 = vpop.xlane.xlu0 %61
  %v63 = vsel %vm53, %v40, 0.0
  %64 = vadd.xlane.f32.xlu0 %v63
  %v65 = vpop.xlane.xlu0 %64
  %v66 = vsel %vm53, %v41, 0.0
  %67 = vadd.xlane.f32.xlu0 %v66
  %v68 = vpop.xlane.xlu0 %67
  %v69 = vsel %vm53, %v42, 0.0
  %70 = vadd.xlane.f32.xlu0 %v69
  %v71 = vpop.xlane.xlu0 %70
  %v72 = vsel %vm53, %v43, 0.0
  %73 = vadd.xlane.f32.xlu0 %v72
  %v74 = vpop.xlane.xlu0 %73
  %v75 = vsel %vm53, %v44, 0.0
  %76 = vadd.xlane.f32.xlu0 %v75
  %v77 = vpop.xlane.xlu0 %76
  %v78 = vsel %vm53, %v45, 0.0
  %79 = vadd.xlane.f32.xlu0 %v78
  %v80 = vpop.xlane.xlu0 %79
  %v81 = vsel %vm53, %v46, 0.0
  %82 = vadd.xlane.f32.xlu0 %v81
  %v83 = vpop.xlane.xlu0 %82
  %v84 = vsel %vm53, %v47, 0.0
  %85 = vadd.xlane.f32.xlu0 %v84
  %v86 = vpop.xlane.xlu0 %85
  %v87 = vsel %vm53, %v48, 0.0
  %88 = vadd.xlane.f32.xlu0 %v87
  %v89 = vpop.xlane.xlu0 %88
  %v90 = vsel %vm53, %v49, 0.0
  %91 = vadd.xlane.f32.xlu0 %v90
  %v92 = vpop.xlane.xlu0 %91
  %v93 = vsel %vm53, %v50, 0.0
  %94 = vadd.xlane.f32.xlu0 %v93
  %v95 = vpop.xlane.xlu0 %94
  %v96 = vsel %vm53, %v51, 0.0
  %97 = vadd.xlane.f32.xlu0 %v96
  %v98 = vpop.xlane.xlu0 %97
  %v99 = vsel %vm53, %v52, 0.0
  %100 = vadd.xlane.f32.xlu0 %v99
  %v101 = vpop.xlane.xlu0 %100
  %v102 = vrcp.pop 32.0
  %v103 = vmul.f32 %v56, %v102
  %v104 = vmul.f32 %v59, %v102
  %v105 = vmul.f32 %v62, %v102
  %v106 = vmul.f32 %v65, %v102
  %v107 = vmul.f32 %v68, %v102
  %v108 = vmul.f32 %v71, %v102
  %v109 = vmul.f32 %v74, %v102
  %v110 = vmul.f32 %v77, %v102
  %v111 = vmul.f32 %v80, %v102
  %v112 = vmul.f32 %v83, %v102
  %v113 = vmul.f32 %v86, %v102
  %v114 = vmul.f32 %v89, %v102
  %v115 = vmul.f32 %v92, %v102
  %v116 = vmul.f32 %v95, %v102
  %v117 = vmul.f32 %v98, %v102
  %v118 = vmul.f32 %v101, %v102
  %v119 = vsub.f32 %v37, %v103
  %v120 = vsub.f32 %v38, %v104
  %v121 = vsub.f32 %v39, %v105
  %v122 = vsub.f32 %v40, %v106
  %v123 = vsub.f32 %v41, %v107
  %v124 = vsub.f32 %v42, %v108
  %v125 = vsub.f32 %v43, %v109
  %v126 = vsub.f32 %v44, %v110
  %v127 = vsub.f32 %v45, %v111
  %v128 = vsub.f32 %v46, %v112
  %v129 = vsub.f32 %v47, %v113
  %v130 = vsub.f32 %v48, %v114
  %v131 = vsub.f32 %v49, %v115
  %v132 = vsub.f32 %v50, %v116
  %v133 = vsub.f32 %v51, %v117
  %v134 = vsub.f32 %v52, %v118
  %v135 = vmul.f32 %v119, %v119
  %v136 = vmul.f32 %v120, %v120
  %v137 = vmul.f32 %v121, %v121
  %v138 = vmul.f32 %v122, %v122
  %v139 = vmul.f32 %v123, %v123
  %v140 = vmul.f32 %v124, %v124
  %v141 = vmul.f32 %v125, %v125
  %v142 = vmul.f32 %v126, %v126
  %v143 = vmul.f32 %v127, %v127
  %v144 = vmul.f32 %v128, %v128
  %v145 = vmul.f32 %v129, %v129
  %v146 = vmul.f32 %v130, %v130
  %v147 = vmul.f32 %v131, %v131
  %v148 = vmul.f32 %v132, %v132
  %v149 = vmul.f32 %v133, %v133
  %v150 = vmul.f32 %v134, %v134
  %v151 = vsel %vm53, %v135, 0.0
  %152 = vadd.xlane.f32.xlu0 %v151
  %v153 = vpop.xlane.xlu0 %152
  %v154 = vsel %vm53, %v136, 0.0
  %155 = vadd.xlane.f32.xlu0 %v154
  %v156 = vpop.xlane.xlu0 %155
  %v157 = vsel %vm53, %v137, 0.0
  %158 = vadd.xlane.f32.xlu0 %v157
  %v159 = vpop.xlane.xlu0 %158
  %v160 = vsel %vm53, %v138, 0.0
  %161 = vadd.xlane.f32.xlu0 %v160
  %v162 = vpop.xlane.xlu0 %161
  %v163 = vsel %vm53, %v139, 0.0
  %164 = vadd.xlane.f32.xlu0 %v163
  %v165 = vpop.xlane.xlu0 %164
  %v166 = vsel %vm53, %v140, 0.0
  %167 = vadd.xlane.f32.xlu0 %v166
  %v168 = vpop.xlane.xlu0 %167
  %v169 = vsel %vm53, %v141, 0.0
  %170 = vadd.xlane.f32.xlu0 %v169
  %v171 = vpop.xlane.xlu0 %170
  %v172 = vsel %vm53, %v142, 0.0
  %173 = vadd.xlane.f32.xlu0 %v172
  %v174 = vpop.xlane.xlu0 %173
  %v175 = vsel %vm53, %v143, 0.0
  %176 = vadd.xlane.f32.xlu0 %v175
  %v177 = vpop.xlane.xlu0 %176
  %v178 = vsel %vm53, %v144, 0.0
  %179 = vadd.xlane.f32.xlu0 %v178
  %v180 = vpop.xlane.xlu0 %179
  %v181 = vsel %vm53, %v145, 0.0
  %182 = vadd.xlane.f32.xlu0 %v181
  %v183 = vpop.xlane.xlu0 %182
  %v184 = vsel %vm53, %v146, 0.0
  %185 = vadd.xlane.f32.xlu0 %v184
  %v186 = vpop.xlane.xlu0 %185
  %v187 = vsel %vm53, %v147, 0.0
  %188 = vadd.xlane.f32.xlu0 %v187
  %v189 = vpop.xlane.xlu0 %188
  %v190 = vsel %vm53, %v148, 0.0
  %191 = vadd.xlane.f32.xlu0 %v190
  %v192 = vpop.xlane.xlu0 %191
  %v193 = vsel %vm53, %v149, 0.0
  %194 = vadd.xlane.f32.xlu0 %v193
  %v195 = vpop.xlane.xlu0 %194
  %v196 = vsel %vm53, %v150, 0.0
  %197 = vadd.xlane.f32.xlu0 %v196
  %v198 = vpop.xlane.xlu0 %197
  %v199 = vmul.f32 %v153, %v102
  %v200 = vmul.f32 %v156, %v102
  %v201 = vmul.f32 %v159, %v102
  %v202 = vmul.f32 %v162, %v102
  %v203 = vmul.f32 %v165, %v102
  %v204 = vmul.f32 %v168, %v102
  %v205 = vmul.f32 %v171, %v102
  %v206 = vmul.f32 %v174, %v102
  %v207 = vmul.f32 %v177, %v102
  %v208 = vmul.f32 %v180, %v102
  %v209 = vmul.f32 %v183, %v102
  %v210 = vmul.f32 %v186, %v102
  %v211 = vmul.f32 %v189, %v102
  %v212 = vmul.f32 %v192, %v102
  %v213 = vmul.f32 %v195, %v102
  %v214 = vmul.f32 %v198, %v102
  %v215 = vadd.f32 %v199, 1e-05
  %v216 = vadd.f32 %v200, 1e-05
  %v217 = vadd.f32 %v201, 1e-05
  %v218 = vadd.f32 %v202, 1e-05
  %v219 = vadd.f32 %v203, 1e-05
  %v220 = vadd.f32 %v204, 1e-05
  %v221 = vadd.f32 %v205, 1e-05
  %v222 = vadd.f32 %v206, 1e-05
  %v223 = vadd.f32 %v207, 1e-05
  %v224 = vadd.f32 %v208, 1e-05
  %v225 = vadd.f32 %v209, 1e-05
  %v226 = vadd.f32 %v210, 1e-05
  %v227 = vadd.f32 %v211, 1e-05
  %v228 = vadd.f32 %v212, 1e-05
  %v229 = vadd.f32 %v213, 1e-05
  %v230 = vadd.f32 %v214, 1e-05
  %v231 = vrsqrt.pop %v215
  %v232 = vrsqrt.pop %v216
  %v233 = vrsqrt.pop %v217
  %v234 = vrsqrt.pop %v218
  %v235 = vrsqrt.pop %v219
  %v236 = vrsqrt.pop %v220
  %v237 = vrsqrt.pop %v221
  %v238 = vrsqrt.pop %v222
  %v239 = vrsqrt.pop %v223
  %v240 = vrsqrt.pop %v224
  %v241 = vrsqrt.pop %v225
  %v242 = vrsqrt.pop %v226
  %v243 = vrsqrt.pop %v227
  %v244 = vrsqrt.pop %v228
  %v245 = vrsqrt.pop %v229
  %v246 = vrsqrt.pop %v230
  %v247 = vmul.f32 %v119, %v231
  %v248 = vmul.f32 %v120, %v232
  %v249 = vmul.f32 %v121, %v233
  %v250 = vmul.f32 %v122, %v234
  %v251 = vmul.f32 %v123, %v235
  %v252 = vmul.f32 %v124, %v236
  %v253 = vmul.f32 %v125, %v237
  %v254 = vmul.f32 %v126, %v238
  %v255 = vmul.f32 %v127, %v239
  %v256 = vmul.f32 %v128, %v240
  %v257 = vmul.f32 %v129, %v241
  %v258 = vmul.f32 %v130, %v242
  %v259 = vmul.f32 %v131, %v243
  %v260 = vmul.f32 %v132, %v244
  %v261 = vmul.f32 %v133, %v245
  %v262 = vmul.f32 %v134, %v246
  %v263 = vld [vmem:[%s1] sm:$0x1]
  %v264 = vunpack.c.l.bf16 %v263
  %v265 = vlaneseq
  %v266 = vshrl.u32 %v265, 7
  %v267 = vsub.s32 0, %v266
  %v268 = vrot.slane %v264, %v267
  %v269 = vmul.f32 %v247, %v268
  %v270 = vmul.f32 %v248, %v268
  %v271 = vmul.f32 %v249, %v268
  %v272 = vmul.f32 %v250, %v268
  %v273 = vmul.f32 %v251, %v268
  %v274 = vmul.f32 %v252, %v268
  %v275 = vmul.f32 %v253, %v268
  %v276 = vmul.f32 %v254, %v268
  %v277 = vmul.f32 %v255, %v268
  %v278 = vmul.f32 %v256, %v268
  %v279 = vmul.f32 %v257, %v268
  %v280 = vmul.f32 %v258, %v268
  %v281 = vmul.f32 %v259, %v268
  %v282 = vmul.f32 %v260, %v268
  %v283 = vmul.f32 %v261, %v268
  %v284 = vmul.f32 %v262, %v268
  %v285 = vld [vmem:[%s2] sm:$0x1]
  %v286 = vunpack.c.l.bf16 %v285
  %v287 = vlaneseq
  %v288 = vshrl.u32 %v287, 7
  %v289 = vsub.s32 0, %v288
  %v290 = vrot.slane %v286, %v289
  %v291 = vadd.f32 %v269, %v290
  %v292 = vadd.f32 %v270, %v290
  %v293 = vadd.f32 %v271, %v290
  %v294 = vadd.f32 %v272, %v290
  %v295 = vadd.f32 %v273, %v290
  %v296 = vadd.f32 %v274, %v290
  %v297 = vadd.f32 %v275, %v290
  %v298 = vadd.f32 %v276, %v290
  %v299 = vadd.f32 %v277, %v290
  %v300 = vadd.f32 %v278, %v290
  %v301 = vadd.f32 %v279, %v290
  %v302 = vadd.f32 %v280, %v290
  %v303 = vadd.f32 %v281, %v290
  %v304 = vadd.f32 %v282, %v290
  %v305 = vadd.f32 %v283, %v290
  %v306 = vadd.f32 %v284, %v290
  %v307 = vpack.c.bf16 %v292, %v291
  %v308 = vpack.c.bf16 %v294, %v293
  %v309 = vpack.c.bf16 %v296, %v295
  %v310 = vpack.c.bf16 %v298, %v297
  %v311 = vpack.c.bf16 %v300, %v299
  %v312 = vpack.c.bf16 %v302, %v301
  %v313 = vpack.c.bf16 %v304, %v303
  %v314 = vpack.c.bf16 %v306, %v305
  %v315 = vld [vmem:[%s3] sm:$0xf]
  %v316 = vld [vmem:[%s3 + $0x4] sm:$0xf]
  %v317 = vld [vmem:[%s3 + $0x8] sm:$0xf]
  %v318 = vld [vmem:[%s3 + $0xc] sm:$0xf]
  %v319 = vld [vmem:[%s4] sm:$0x1]
  %v320 = vunpack.c.l.bf16 %v319
  %v321 = vlaneseq
  %v322 = vshrl.u32 %v321, 7
  %v323 = vsub.s32 0, %v322
  %v324 = vrot.slane %v320, %v323
  %v329 = vunpack.c.l.b16 %v315
  %v330 = vunpack.c.l.b16 %v316
  %v331 = vunpack.c.l.b16 %v317
  %v332 = vunpack.c.l.b16 %v318
  %v333 = vpack.c.b16 %v330, %v329
  %v334 = vpack.c.b16 %v332, %v331
  %v338 = vsel %vm53, %v307, 0
  %v341 = vsel %vm53, %v308, 0
  %v344 = vsel %vm53, %v309, 0
  %v347 = vsel %vm53, %v310, 0
  %v350 = vsel %vm53, %v311, 0
  %v353 = vsel %vm53, %v312, 0
  %v356 = vsel %vm53, %v313, 0
  %v359 = vsel %vm53, %v314, 0
  %361 = vmatprep.subr.bf16.mxu0 0
  %362 = vmatpush1.bf16.msra.mxu0 %v333
  %363 = vmatprep.subr.bf16.mxu0 0
  %364 = vmatpush1.bf16.msra.mxu0 %v334
  %365 = vmatprep.subr.bf16.mxu0 0
  %366 = vmatpush1.bf16.msra.mxu0 0
  %367 = vmatprep.subr.bf16.mxu0 0
  %368 = vmatpush1.bf16.msra.mxu0 0
  %369 = vmatprep.subr.bf16.mxu0 0
  %370 = vmatpush1.bf16.msra.mxu0 0
  %371 = vmatprep.subr.bf16.mxu0 0
  %372 = vmatpush1.bf16.msra.mxu0 0
  %373 = vmatprep.subr.bf16.mxu0 0
  %374 = vmatpush1.bf16.msra.mxu0 0
  %375 = vmatprep.subr.bf16.mxu0 0
  %376 = vmatpush1.bf16.msra.mxu0 0
  %377 = vmatprep.subr.bf16.mxu0 0
  %378 = vmatpush1.bf16.msra.mxu0 0
  %379 = vmatprep.subr.bf16.mxu0 0
  %380 = vmatpush1.bf16.msra.mxu0 0
  %381 = vmatprep.subr.bf16.mxu0 0
  %382 = vmatpush1.bf16.msra.mxu0 0
  %383 = vmatprep.subr.bf16.mxu0 0
  %384 = vmatpush1.bf16.msra.mxu0 0
  %385 = vmatprep.subr.bf16.mxu0 0
  %386 = vmatpush1.bf16.msra.mxu0 0
  %387 = vmatprep.subr.bf16.mxu0 0
  %388 = vmatpush1.bf16.msra.mxu0 0
  %389 = vmatprep.subr.bf16.mxu0 0
  %390 = vmatpush1.bf16.msra.mxu0 0
  %391 = vmatprep.subr.bf16.mxu0 0
  %392 = vmatpush1.bf16.msra.mxu0 0
  %393 = vmatprep.mubr.bf16.mxu0 0
  %394 = vmatmul.mubr.bf16.gmra.mrb[0].mxu0 %v338
  %v395 = vpop.f32.mrb[0].mxu0
  %v396 = vadd.f32 %v324, %v395
  %v397 = vpop.f32.mrb[0].mxu0
  %v398 = vpop.f32.mrb[0].mxu0
  %v399 = vadd.f32 %v324, %v398
  %v400 = vpop.f32.mrb[0].mxu0
  %401 = vmatprep.mubr.bf16.mxu0 0
  %402 = vmatmul.mubr.bf16.gmra.mrb[0].mxu0 %v341
  %v403 = vpop.f32.mrb[0].mxu0
  %v404 = vadd.f32 %v324, %v403
  %v405 = vpop.f32.mrb[0].mxu0
  %v406 = vpop.f32.mrb[0].mxu0
  %v407 = vadd.f32 %v324, %v406
  %v408 = vpop.f32.mrb[0].mxu0
  %409 = vmatprep.mubr.bf16.mxu0 0
  %410 = vmatmul.mubr.bf16.gmra.mrb[0].mxu0 %v344
  %v411 = vpop.f32.mrb[0].mxu0
  %v412 = vadd.f32 %v324, %v411
  %v413 = vpop.f32.mrb[0].mxu0
  %v414 = vpop.f32.mrb[0].mxu0
  %v415 = vadd.f32 %v324, %v414
  %v416 = vpop.f32.mrb[0].mxu0
  %417 = vmatprep.mubr.bf16.mxu0 0
  %418 = vmatmul.mubr.bf16.gmra.mrb[0].mxu0 %v347
  %v419 = vpop.f32.mrb[0].mxu0
  %v420 = vadd.f32 %v324, %v419
  %v421 = vpop.f32.mrb[0].mxu0
  %v422 = vpop.f32.mrb[0].mxu0
  %v423 = vadd.f32 %v324, %v422
  %v424 = vpop.f32.mrb[0].mxu0
  %425 = vmatprep.mubr.bf16.mxu0 0
  %426 = vmatmul.mubr.bf16.gmra.mrb[0].mxu0 %v350
  %v427 = vpop.f32.mrb[0].mxu0
  %v428 = vadd.f32 %v324, %v427
  %v429 = vpop.f32.mrb[0].mxu0
  %v430 = vpop.f32.mrb[0].mxu0
  %v431 = vadd.f32 %v324, %v430
  %v432 = vpop.f32.mrb[0].mxu0
  %433 = vmatprep.mubr.bf16.mxu0 0
  %434 = vmatmul.mubr.bf16.gmra.mrb[0].mxu0 %v353
  %v435 = vpop.f32.mrb[0].mxu0
  %v436 = vadd.f32 %v324, %v435
  %v437 = vpop.f32.mrb[0].mxu0
  %v438 = vpop.f32.mrb[0].mxu0
  %v439 = vadd.f32 %v324, %v438
  %v440 = vpop.f32.mrb[0].mxu0
  %441 = vmatprep.mubr.bf16.mxu0 0
  %442 = vmatmul.mubr.bf16.gmra.mrb[0].mxu0 %v356
  %v443 = vpop.f32.mrb[0].mxu0
  %v444 = vadd.f32 %v324, %v443
  %v445 = vpop.f32.mrb[0].mxu0
  %v446 = vpop.f32.mrb[0].mxu0
  %v447 = vadd.f32 %v324, %v446
  %v448 = vpop.f32.mrb[0].mxu0
  %449 = vmatprep.mubr.bf16.mxu0 0
  %450 = vmatmul.mubr.bf16.gmra.mrb[0].mxu0 %v359
  %v451 = vpop.f32.mrb[0].mxu0
  %v452 = vadd.f32 %v324, %v451
  %v453 = vpop.f32.mrb[0].mxu0
  %v454 = vpop.f32.mrb[0].mxu0
  %v455 = vadd.f32 %v324, %v454
  %v456 = vpop.f32.mrb[0].mxu0
  %457 = vdwg.mxu0
  %v458 = vpack.c.bf16 %v399, %v396
  %v459 = vpack.c.bf16 %v407, %v404
  %v460 = vpack.c.bf16 %v415, %v412
  %v461 = vpack.c.bf16 %v423, %v420
  %v462 = vpack.c.bf16 %v431, %v428
  %v463 = vpack.c.bf16 %v439, %v436
  %v464 = vpack.c.bf16 %v447, %v444
  %v465 = vpack.c.bf16 %v455, %v452
  %v474 = vunpack.c.l.b16 %v458
  %v475 = vunpack.c.h.b16 %v458
  %v476 = vunpack.c.l.b16 %v459
  %v477 = vunpack.c.h.b16 %v459
  %v478 = vunpack.c.l.b16 %v460
  %v479 = vunpack.c.h.b16 %v460
  %v480 = vunpack.c.l.b16 %v461
  %v481 = vunpack.c.h.b16 %v461
  %v482 = vunpack.c.l.b16 %v462
  %v483 = vunpack.c.h.b16 %v462
  %v484 = vunpack.c.l.b16 %v463
  %v485 = vunpack.c.h.b16 %v463
  %v486 = vunpack.c.l.b16 %v464
  %v487 = vunpack.c.h.b16 %v464
  %v488 = vunpack.c.l.b16 %v465
  %v489 = vunpack.c.h.b16 %v465
  %v490 = vpack.c.b16 %v474, %v474
  %v491 = vpack.c.b16 %v475, %v475
  %v492 = vpack.c.b16 %v476, %v476
  %v493 = vpack.c.b16 %v477, %v477
  %v494 = vpack.c.b16 %v478, %v478
  %v495 = vpack.c.b16 %v479, %v479
  %v496 = vpack.c.b16 %v480, %v480
  %v497 = vpack.c.b16 %v481, %v481
  %v498 = vpack.c.b16 %v482, %v482
  %v499 = vpack.c.b16 %v483, %v483
  %v500 = vpack.c.b16 %v484, %v484
  %v501 = vpack.c.b16 %v485, %v485
  %v502 = vpack.c.b16 %v486, %v486
  %v503 = vpack.c.b16 %v487, %v487
  %v504 = vpack.c.b16 %v488, %v488
  %v505 = vpack.c.b16 %v489, %v489
  %vm522 = vcmask 781312
  %523 = vst.msk [vmem:[%s5] sm:$0xf] %vm522, %v490
  %524 = vst.msk [vmem:[%s5 + $0x4] sm:$0xf] %vm522, %v491
  %525 = vst.msk [vmem:[%s5 + $0x8] sm:$0xf] %vm522, %v492
  %526 = vst.msk [vmem:[%s5 + $0xc] sm:$0xf] %vm522, %v493
  %527 = vst.msk [vmem:[%s5 + $0x10] sm:$0xf] %vm522, %v494
  %528 = vst.msk [vmem:[%s5 + $0x14] sm:$0xf] %vm522, %v495
  %529 = vst.msk [vmem:[%s5 + $0x18] sm:$0xf] %vm522, %v496
  %530 = vst.msk [vmem:[%s5 + $0x1c] sm:$0xf] %vm522, %v497
  %531 = vst.msk [vmem:[%s5 + $0x20] sm:$0xf] %vm522, %v498
  %532 = vst.msk [vmem:[%s5 + $0x24] sm:$0xf] %vm522, %v499
  %533 = vst.msk [vmem:[%s5 + $0x28] sm:$0xf] %vm522, %v500
  %534 = vst.msk [vmem:[%s5 + $0x2c] sm:$0xf] %vm522, %v501
  %535 = vst.msk [vmem:[%s5 + $0x30] sm:$0xf] %vm522, %v502
  %536 = vst.msk [vmem:[%s5 + $0x34] sm:$0xf] %vm522, %v503
  %537 = vst.msk [vmem:[%s5 + $0x38] sm:$0xf] %vm522, %v504
  %538 = vst.msk [vmem:[%s5 + $0x3c] sm:$0xf] %vm522, %v505
  // Predicated region
  $region22: #{basic_layer.9} parent=0 // pred_check
    _
  $region23: #{basic_layer.9} parent=0 // pred_check_branch
    %540 = sbr.rel (0) target = $region25
  $region24: #{basic_layer.9} parent=0 // pred_region
    _
  $region25: #{basic_layer.9} parent=0 // pred_fallthru
    _
  // Predicated region
  $region26: #{basic_layer.9} parent=0 // pred_check
    _
  $region27: #{basic_layer.9} parent=0 // pred_check_branch
    %542 = sbr.rel (0) target = $region29
  $region28: #{basic_layer.9} parent=0 // pred_region
    _
  $region29: #{basic_layer.9} parent=0 // pred_fallthru
    _

// kernel: basic_layer.11
$region0: #{basic_layer.11}
  #allocation0 [shape = 'u32[]', space=smem, size = 0x4, offset = 0x4, fixed_abs, tag = 'smem constant byte address 0x4 - core index']
  #allocation1 [shape = 'u32[144,128]{1,0:T(1,128)}', space=vmem, size = 0x12000, scoped, tag = 'internal scratch']
  %s0 = inlined_call_operand.vmem [shape: bf16[128,32], index: 0, kind: input, shape index: {}]
  %s1 = inlined_call_operand.vmem [shape: bf16[32,32], index: 1, kind: input, shape index: {}]
  %s2 = inlined_call_operand.vmem [shape: bf16[1,32], index: 2, kind: input, shape index: {}]
  %s3 = inlined_call_operand.vmem [shape: bf16[128,32], index: 3, kind: output, shape index: {}]
  %s4 = sld [smem:[#allocation0]]
  $region22: #{basic_layer.11} parent=0
    _
  %s6 = ssub.s32 1, %s4
  %s7 = scalar_select 0, %s6, %s4
  // Predicated region
  $region2: #{basic_layer.11} parent=0 // pred_check
    _
  $region3: #{basic_layer.11} parent=0 // pred_check_branch
    %9 = sbr.rel (0) target = $region5
  $region4: #{basic_layer.11} parent=0 // pred_region
    _
  $region5: #{basic_layer.11} parent=0 // pred_fallthru
    _
  // Predicated region
  $region6: #{basic_layer.11} parent=0 // pred_check
    _
  $region7: #{basic_layer.11} parent=0 // pred_check_branch
    %11 = sbr.rel (0) target = $region9
  $region8: #{basic_layer.11} parent=0 // pred_region
    _
  $region9: #{basic_layer.11} parent=0 // pred_fallthru
    _
  // Predicated region
  $region10: #{basic_layer.11} parent=0 // pred_check
    _
  $region11: #{basic_layer.11} parent=0 // pred_check_branch
    %13 = sbr.rel (0) target = $region13
  $region12: #{basic_layer.11} parent=0 // pred_region
    _
  $region13: #{basic_layer.11} parent=0 // pred_fallthru
    _
  %v15 = vld [vmem:[%s0] sm:$0xf]
  %v16 = vld [vmem:[%s0 + $0x4] sm:$0xf]
  %v17 = vld [vmem:[%s0 + $0x8] sm:$0xf]
  %v18 = vld [vmem:[%s0 + $0xc] sm:$0xf]
  %v19 = vld [vmem:[%s0 + $0x10] sm:$0xf]
  %v20 = vld [vmem:[%s0 + $0x14] sm:$0xf]
  %v21 = vld [vmem:[%s0 + $0x18] sm:$0xf]
  %v22 = vld [vmem:[%s0 + $0x1c] sm:$0xf]
  %v23 = vld [vmem:[%s0 + $0x20] sm:$0xf]
  %v24 = vld [vmem:[%s0 + $0x24] sm:$0xf]
  %v25 = vld [vmem:[%s0 + $0x28] sm:$0xf]
  %v26 = vld [vmem:[%s0 + $0x2c] sm:$0xf]
  %v27 = vld [vmem:[%s0 + $0x30] sm:$0xf]
  %v28 = vld [vmem:[%s0 + $0x34] sm:$0xf]
  %v29 = vld [vmem:[%s0 + $0x38] sm:$0xf]
  %v30 = vld [vmem:[%s0 + $0x3c] sm:$0xf]
  %v31 = vld [vmem:[%s1] sm:$0xf]
  %v32 = vld [vmem:[%s1 + $0x4] sm:$0xf]
  %v33 = vld [vmem:[%s1 + $0x8] sm:$0xf]
  %v34 = vld [vmem:[%s1 + $0xc] sm:$0xf]
  %v35 = vld [vmem:[%s2] sm:$0x1]
  %v36 = vunpack.c.l.bf16 %v35
  %v37 = vlaneseq
  %v38 = vshrl.u32 %v37, 7
  %v39 = vsub.s32 0, %v38
  %v40 = vrot.slane %v36, %v39
  %v57 = vunpack.c.l.b16 %v15
  %v58 = vunpack.c.l.b16 %v16
  %v59 = vunpack.c.l.b16 %v17
  %v60 = vunpack.c.l.b16 %v18
  %v61 = vunpack.c.l.b16 %v19
  %v62 = vunpack.c.l.b16 %v20
  %v63 = vunpack.c.l.b16 %v21
  %v64 = vunpack.c.l.b16 %v22
  %v65 = vunpack.c.l.b16 %v23
  %v66 = vunpack.c.l.b16 %v24
  %v67 = vunpack.c.l.b16 %v25
  %v68 = vunpack.c.l.b16 %v26
  %v69 = vunpack.c.l.b16 %v27
  %v70 = vunpack.c.l.b16 %v28
  %v71 = vunpack.c.l.b16 %v29
  %v72 = vunpack.c.l.b16 %v30
  %v73 = vpack.c.b16 %v58, %v57
  %v74 = vpack.c.b16 %v60, %v59
  %v75 = vpack.c.b16 %v62, %v61
  %v76 = vpack.c.b16 %v64, %v63
  %v77 = vpack.c.b16 %v66, %v65
  %v78 = vpack.c.b16 %v68, %v67
  %v79 = vpack.c.b16 %v70, %v69
  %v80 = vpack.c.b16 %v72, %v71
  %v85 = vunpack.c.l.b16 %v31
  %v86 = vunpack.c.l.b16 %v32
  %v87 = vunpack.c.l.b16 %v33
  %v88 = vunpack.c.l.b16 %v34
  %v89 = vpack.c.b16 %v86, %v85
  %v90 = vpack.c.b16 %v88, %v87
  %vm93 = vcmask 261120
  %v95 = vsel %vm93, %v73, 0
  %v98 = vsel %vm93, %v74, 0
  %v101 = vsel %vm93, %v75, 0
  %v104 = vsel %vm93, %v76, 0
  %v107 = vsel %vm93, %v77, 0
  %v110 = vsel %vm93, %v78, 0
  %v113 = vsel %vm93, %v79, 0
  %v116 = vsel %vm93, %v80, 0
  %118 = vmatprep.subr.bf16.mxu0 0
  %119 = vmatpush1.bf16.msra.mxu0 %v89
  %120 = vmatprep.subr.bf16.mxu0 0
  %121 = vmatpush1.bf16.msra.mxu0 %v90
  %122 = vmatprep.subr.bf16.mxu0 0
  %123 = vmatpush1.bf16.msra.mxu0 0
  %124 = vmatprep.subr.bf16.mxu0 0
  %125 = vmatpush1.bf16.msra.mxu0 0
  %126 = vmatprep.subr.bf16.mxu0 0
  %127 = vmatpush1.bf16.msra.mxu0 0
  %128 = vmatprep.subr.bf16.mxu0 0
  %129 = vmatpush1.bf16.msra.mxu0 0
  %130 = vmatprep.subr.bf16.mxu0 0
  %131 = vmatpush1.bf16.msra.mxu0 0
  %132 = vmatprep.subr.bf16.mxu0 0
  %133 = vmatpush1.bf16.msra.mxu0 0
  %134 = vmatprep.subr.bf16.mxu0 0
  %135 = vmatpush1.bf16.msra.mxu0 0
  %136 = vmatprep.subr.bf16.mxu0 0
  %137 = vmatpush1.bf16.msra.mxu0 0
  %138 = vmatprep.subr.bf16.mxu0 0
  %139 = vmatpush1.bf16.msra.mxu0 0
  %140 = vmatprep.subr.bf16.mxu0 0
  %141 = vmatpush1.bf16.msra.mxu0 0
  %142 = vmatprep.subr.bf16.mxu0 0
  %143 = vmatpush1.bf16.msra.mxu0 0
  %144 = vmatprep.subr.bf16.mxu0 0
  %145 = vmatpush1.bf16.msra.mxu0 0
  %146 = vmatprep.subr.bf16.mxu0 0
  %147 = vmatpush1.bf16.msra.mxu0 0
  %148 = vmatprep.subr.bf16.mxu0 0
  %149 = vmatpush1.bf16.msra.mxu0 0
  %150 = vmatprep.mubr.bf16.mxu0 0
  %151 = vmatmul.mubr.bf16.gmra.mrb[0].mxu0 %v95
  %v152 = vpop.f32.mrb[0].mxu0
  %v153 = vadd.f32 %v40, %v152
  %v154 = vpop.f32.mrb[0].mxu0
  %v155 = vpop.f32.mrb[0].mxu0
  %v156 = vadd.f32 %v40, %v155
  %v157 = vpop.f32.mrb[0].mxu0
  %158 = vmatprep.mubr.bf16.mxu0 0
  %159 = vmatmul.mubr.bf16.gmra.mrb[0].mxu0 %v98
  %v160 = vpop.f32.mrb[0].mxu0
  %v161 = vadd.f32 %v40, %v160
  %v162 = vpop.f32.mrb[0].mxu0
  %v163 = vpop.f32.mrb[0].mxu0
  %v164 = vadd.f32 %v40, %v163
  %v165 = vpop.f32.mrb[0].mxu0
  %166 = vmatprep.mubr.bf16.mxu0 0
  %167 = vmatmul.mubr.bf16.gmra.mrb[0].mxu0 %v101
  %v168 = vpop.f32.mrb[0].mxu0
  %v169 = vadd.f32 %v40, %v168
  %v170 = vpop.f32.mrb[0].mxu0
  %v171 = vpop.f32.mrb[0].mxu0
  %v172 = vadd.f32 %v40, %v171
  %v173 = vpop.f32.mrb[0].mxu0
  %174 = vmatprep.mubr.bf16.mxu0 0
  %175 = vmatmul.mubr.bf16.gmra.mrb[0].mxu0 %v104
  %v176 = vpop.f32.mrb[0].mxu0
  %v177 = vadd.f32 %v40, %v176
  %v178 = vpop.f32.mrb[0].mxu0
  %v179 = vpop.f32.mrb[0].mxu0
  %v180 = vadd.f32 %v40, %v179
  %v181 = vpop.f32.mrb[0].mxu0
  %182 = vmatprep.mubr.bf16.mxu0 0
  %183 = vmatmul.mubr.bf16.gmra.mrb[0].mxu0 %v107
  %v184 = vpop.f32.mrb[0].mxu0
  %v185 = vadd.f32 %v40, %v184
  %v186 = vpop.f32.mrb[0].mxu0
  %v187 = vpop.f32.mrb[0].mxu0
  %v188 = vadd.f32 %v40, %v187
  %v189 = vpop.f32.mrb[0].mxu0
  %190 = vmatprep.mubr.bf16.mxu0 0
  %191 = vmatmul.mubr.bf16.gmra.mrb[0].mxu0 %v110
  %v192 = vpop.f32.mrb[0].mxu0
  %v193 = vadd.f32 %v40, %v192
  %v194 = vpop.f32.mrb[0].mxu0
  %v195 = vpop.f32.mrb[0].mxu0
  %v196 = vadd.f32 %v40, %v195
  %v197 = vpop.f32.mrb[0].mxu0
  %198 = vmatprep.mubr.bf16.mxu0 0
  %199 = vmatmul.mubr.bf16.gmra.mrb[0].mxu0 %v113
  %v200 = vpop.f32.mrb[0].mxu0
  %v201 = vadd.f32 %v40, %v200
  %v202 = vpop.f32.mrb[0].mxu0
  %v203 = vpop.f32.mrb[0].mxu0
  %v204 = vadd.f32 %v40, %v203
  %v205 = vpop.f32.mrb[0].mxu0
  %206 = vmatprep.mubr.bf16.mxu0 0
  %207 = vmatmul.mubr.bf16.gmra.mrb[0].mxu0 %v116
  %v208 = vpop.f32.mrb[0].mxu0
  %v209 = vadd.f32 %v40, %v208
  %v210 = vpop.f32.mrb[0].mxu0
  %v211 = vpop.f32.mrb[0].mxu0
  %v212 = vadd.f32 %v40, %v211
  %v213 = vpop.f32.mrb[0].mxu0
  %214 = vdwg.mxu0
  %v215 = vpack.c.bf16 %v156, %v153
  %v216 = vpack.c.bf16 %v164, %v161
  %v217 = vpack.c.bf16 %v172, %v169
  %v218 = vpack.c.bf16 %v180, %v177
  %v219 = vpack.c.bf16 %v188, %v185
  %v220 = vpack.c.bf16 %v196, %v193
  %v221 = vpack.c.bf16 %v204, %v201
  %v222 = vpack.c.bf16 %v212, %v209
  %v231 = vunpack.c.l.b16 %v215
  %v232 = vunpack.c.h.b16 %v215
  %v233 = vunpack.c.l.b16 %v216
  %v234 = vunpack.c.h.b16 %v216
  %v235 = vunpack.c.l.b16 %v217
  %v236 = vunpack.c.h.b16 %v217
  %v237 = vunpack.c.l.b16 %v218
  %v238 = vunpack.c.h.b16 %v218
  %v239 = vunpack.c.l.b16 %v219
  %v240 = vunpack.c.h.b16 %v219
  %v241 = vunpack.c.l.b16 %v220
  %v242 = vunpack.c.h.b16 %v220
  %v243 = vunpack.c.l.b16 %v221
  %v244 = vunpack.c.h.b16 %v221
  %v245 = vunpack.c.l.b16 %v222
  %v246 = vunpack.c.h.b16 %v222
  %v247 = vpack.c.b16 %v231, %v231
  %v248 = vpack.c.b16 %v232, %v232
  %v249 = vpack.c.b16 %v233, %v233
  %v250 = vpack.c.b16 %v234, %v234
  %v251 = vpack.c.b16 %v235, %v235
  %v252 = vpack.c.b16 %v236, %v236
  %v253 = vpack.c.b16 %v237, %v237
  %v254 = vpack.c.b16 %v238, %v238
  %v255 = vpack.c.b16 %v239, %v239
  %v256 = vpack.c.b16 %v240, %v240
  %v257 = vpack.c.b16 %v241, %v241
  %v258 = vpack.c.b16 %v242, %v242
  %v259 = vpack.c.b16 %v243, %v243
  %v260 = vpack.c.b16 %v244, %v244
  %v261 = vpack.c.b16 %v245, %v245
  %v262 = vpack.c.b16 %v246, %v246
  %vm279 = vcmask 257024
  %280 = vst.msk [vmem:[%s3] sm:$0xf] %vm279, %v247
  %281 = vst.msk [vmem:[%s3 + $0x4] sm:$0xf] %vm279, %v248
  %282 = vst.msk [vmem:[%s3 + $0x8] sm:$0xf] %vm279, %v249
  %283 = vst.msk [vmem:[%s3 + $0xc] sm:$0xf] %vm279, %v250
  %284 = vst.msk [vmem:[%s3 + $0x10] sm:$0xf] %vm279, %v251
  %285 = vst.msk [vmem:[%s3 + $0x14] sm:$0xf] %vm279, %v252
  %286 = vst.msk [vmem:[%s3 + $0x18] sm:$0xf] %vm279, %v253
  %287 = vst.msk [vmem:[%s3 + $0x1c] sm:$0xf] %vm279, %v254
  %288 = vst.msk [vmem:[%s3 + $0x20] sm:$0xf] %vm279, %v255
  %289 = vst.msk [vmem:[%s3 + $0x24] sm:$0xf] %vm279, %v256
  %290 = vst.msk [vmem:[%s3 + $0x28] sm:$0xf] %vm279, %v257
  %291 = vst.msk [vmem:[%s3 + $0x2c] sm:$0xf] %vm279, %v258
  %292 = vst.msk [vmem:[%s3 + $0x30] sm:$0xf] %vm279, %v259
  %293 = vst.msk [vmem:[%s3 + $0x34] sm:$0xf] %vm279, %v260
  %294 = vst.msk [vmem:[%s3 + $0x38] sm:$0xf] %vm279, %v261
  %295 = vst.msk [vmem:[%s3 + $0x3c] sm:$0xf] %vm279, %v262
  // Predicated region
  $region14: #{basic_layer.11} parent=0 // pred_check
    _
  $region15: #{basic_layer.11} parent=0 // pred_check_branch
    %297 = sbr.rel (0) target = $region17
  $region16: #{basic_layer.11} parent=0 // pred_region
    _
  $region17: #{basic_layer.11} parent=0 // pred_fallthru
    _
  // Predicated region
  $region18: #{basic_layer.11} parent=0 // pred_check
    _
  $region19: #{basic_layer.11} parent=0 // pred_check_branch
    %299 = sbr.rel (0) target = $region21
  $region20: #{basic_layer.11} parent=0 // pred_region
    _
  $region21: #{basic_layer.11} parent=0 // pred_fallthru
    _

// kernel: basic_layer.10
$region0: #{basic_layer.10}
  #allocation0 [shape = 'u32[]', space=smem, size = 0x4, offset = 0x4, fixed_abs, tag = 'smem constant byte address 0x4 - core index']
  #allocation1 [shape = 'u32[144,128]{1,0:T(1,128)}', space=vmem, size = 0x12000, scoped, tag = 'internal scratch']
  %s0 = inlined_call_operand.vmem [shape: bf16[8,16,96], index: 0, kind: input, shape index: {}]
  %s1 = inlined_call_operand.vmem [shape: f32[4,16,16], index: 1, kind: input, shape index: {}]
  %s2 = inlined_call_operand.vmem [shape: bf16[8,4,16,8], index: 2, kind: output, shape index: {}]
  %s3 = sld [smem:[#allocation0]]
  $region41: #{basic_layer.10} parent=0
    _
  %s5 = ssub.s32 1, %s3
  %s6 = scalar_select 0, %s5, %s3
  loop: start=0, step=1, limit=4
  $region2: #{basic_layer.10} parent=0 // loop_pre_header
    _
  $region3: #{basic_layer.10} parent=0 // loop_header
    %s8 = sphi 0, %s12
    %p9 = scmp.ge.s32.totalorder %s8, 4
    %s18 = sphi 0, %s20
    %s21 = sphi 0, %s18
    %s22 = sphi 0, %s21
    %s38 = sphi 0, %s22
    %s42 = sphi 0, %s42
    %s44 = sphi 0, %s42
    %s45 = sphi 0, %s44
    %s59 = sphi 0, %s45
    %s65 = sphi 0, %s67
    %s68 = sphi 0, %s65
    %s69 = sphi 0, %s68
    %s85 = sphi 0, %s69
  $region4: #{basic_layer.10} parent=0 // loop_header_branch
    %11 = sbr.rel (%p9) target = $region8
  $region5: #{basic_layer.10} parent=0 // loop_body
    %s13 = ssub.s32 %s8, 1
    %s14 = ssub.s32 %s8, 2
    %s15 = sadd.s32 %s8, 1
    %s16 = ssub.s32 %s8, %s15
    %p17 = scmp.eq.s32.totalorder %s16, 0
    %s19 = sadd.s32 %s18, 1
    %s20 = scalar_select %p17, %s18, %s19
    %p23 = pneg %p17
    %p24 = scmp.eq.s32.totalorder %s8, 1
    %p25 = por %p23, %p24
    %p26 = scmp.ne.s32.totalorder %s18, %s21
    %p27 = scmp.eq.s32.totalorder %s8, 0
    %p28 = por %p26, %p27
    %p29 = scmp.ne.s32.totalorder %s18, %s21
    %p30 = scmp.eq.s32.totalorder %s13, 1
    %p31 = por %p29, %p30
    %p32 = scmp.ne.s32.totalorder %s21, %s22
    %p33 = scmp.eq.s32.totalorder %s13, 0
    %p34 = por %p32, %p33
    %p35 = scmp.ne.s32.totalorder %s21, %s22
    %p36 = scmp.eq.s32.totalorder %s14, 1
    %p37 = por %p35, %p36
    %p39 = scmp.ne.s32.totalorder %s22, %s38
    %p40 = scmp.eq.s32.totalorder %s14, 0
    %p41 = por %p39, %p40
    %s43 = sadd.s32 %s42, 1
    %p46 = scmp.eq.s32.totalorder %s8, 1
    %p47 = scmp.ne.s32.totalorder %s42, %s44
    %p48 = scmp.eq.s32.totalorder %s8, 0
    %p49 = por %p47, %p48
    %p50 = scmp.ne.s32.totalorder %s42, %s44
    %p51 = scmp.eq.s32.totalorder %s13, 1
    %p52 = por %p50, %p51
    %p53 = scmp.ne.s32.totalorder %s44, %s45
    %p54 = scmp.eq.s32.totalorder %s13, 0
    %p55 = por %p53, %p54
    %p56 = scmp.ne.s32.totalorder %s44, %s45
    %p57 = scmp.eq.s32.totalorder %s14, 1
    %p58 = por %p56, %p57
    %p60 = scmp.ne.s32.totalorder %s45, %s59
    %p61 = scmp.eq.s32.totalorder %s14, 0
    %p62 = por %p60, %p61
    %s63 = ssub.s32 %s8, %s15
    %p64 = scmp.eq.s32.totalorder %s63, 0
    %s66 = sadd.s32 %s65, 1
    %s67 = scalar_select %p64, %s65, %s66
    %p70 = pneg %p64
    %p71 = scmp.eq.s32.totalorder %s8, 1
    %p72 = por %p70, %p71
    %p73 = scmp.ne.s32.totalorder %s65, %s68
    %p74 = scmp.eq.s32.totalorder %s8, 0
    %p75 = por %p73, %p74
    %p76 = scmp.ne.s32.totalorder %s65, %s68
    %p77 = scmp.eq.s32.totalorder %s13, 1
    %p78 = por %p76, %p77
    %p79 = scmp.ne.s32.totalorder %s68, %s69
    %p80 = scmp.eq.s32.totalorder %s13, 0
    %p81 = por %p79, %p80
    %p82 = scmp.ne.s32.totalorder %s68, %s69
    %p83 = scmp.eq.s32.totalorder %s14, 1
    %p84 = por %p82, %p83
    %p86 = scmp.ne.s32.totalorder %s69, %s85
    %p87 = scmp.eq.s32.totalorder %s14, 0
    %p88 = por %p86, %p87
    %p89 = scmp.le.s32.totalorder 1, %s8
    %p90 = scmp.lt.s32.totalorder %s8, 3
    %p91 = pnand %p89, %p90
    %p92 = pneg %p91
    // Predicated region
    $region9: #{basic_layer.10} parent=5 // pred_check
      _
    $region10: #{basic_layer.10} parent=5 // pred_check_branch
      %94 = sbr.rel (%p91) target = $region12
    $region11: #{basic_layer.10} parent=5 // pred_region
      %s95 = ssub.s32 %s8, 1
      // Predicated region
      $region13: #{basic_layer.10} parent=11 // pred_check
        %p96 = pneg %p55
      $region14: #{basic_layer.10} parent=11 // pred_check_branch
        %98 = sbr.rel (%p96) target = $region16
      $region15: #{basic_layer.10} parent=11 // pred_region
        _
      $region16: #{basic_layer.10} parent=11 // pred_fallthru
        _
    $region12: #{basic_layer.10} parent=5 // pred_fallthru
      _
    %p99 = scmp.lt.s32.totalorder %s8, 2
    // Predicated region
    $region17: #{basic_layer.10} parent=5 // pred_check
      %p100 = pneg %p99
    $region18: #{basic_layer.10} parent=5 // pred_check_branch
      %102 = sbr.rel (%p100) target = $region20
    $region19: #{basic_layer.10} parent=5 // pred_region
      // Predicated region
      $region21: #{basic_layer.10} parent=19 // pred_check
        %p103 = pneg %p28
      $region22: #{basic_layer.10} parent=19 // pred_check_branch
        %105 = sbr.rel (%p103) target = $region24
      $region23: #{basic_layer.10} parent=19 // pred_region
        %s106 = smul.u32 4, %s8
        %p107 = scmp.lt.s32.totalorder %s106, 7
        %s108 = scalar_select %p107, %s106, 7
        %s109 = smul.addr %s108, 2
        %s110 = smul.addr %s109, 4
        %s111 = scalar_lea.vmem %s0, %s110
        %s112 = smul.u32 4, %s8
      $region24: #{basic_layer.10} parent=19 // pred_fallthru
        _
    $region20: #{basic_layer.10} parent=5 // pred_fallthru
      _
    %p113 = scmp.le.s32.totalorder 1, %s8
    %p114 = scmp.lt.s32.totalorder %s8, 3
    %p115 = pnand %p113, %p114
    %p116 = pneg %p115
    // Predicated region
    $region25: #{basic_layer.10} parent=5 // pred_check
      _
    $region26: #{basic_layer.10} parent=5 // pred_check_branch
      %118 = sbr.rel (%p115) target = $region28
    $region27: #{basic_layer.10} parent=5 // pred_region
      %s119 = ssub.s32 %s8, 1
      %s120 = smul.u32 4, %s13
      %p121 = scmp.lt.s32.totalorder %s120, 7
      %s122 = scalar_select %p121, %s120, 7
      %s123 = smul.addr %s122, 2
      %s124 = smul.addr %s123, 4
      %s125 = scalar_lea.vmem %s0, %s124
      %p126 = pneg %p34
      %p127 = pneg %p31
      %p128 = pneg %p55
      %p129 = pneg %p52
      %p130 = pneg %p81
      %p131 = pneg %p78
      %s132 = smul.u32 4, %s13
      %p133 = scmp.lt.s32.totalorder %s132, 7
      %s134 = scalar_select %p133, %s132, 7
      %s135 = smul.addr %s134, 8
      %s136 = smul.addr %s135, 4
      %s137 = scalar_lea.vmem %s2, %s136
      %s138 = smul.u32 4, %s13
      %p139 = scmp.lt.s32.totalorder %s138, 7
      %s140 = scalar_select %p139, %s138, 7
      %s141 = smul.addr %s140, 2
      %s142 = smul.addr %s141, 4
      %s143 = scalar_lea.vmem %s0, %s142
      %s144 = smul.u32 4, %s13
      %s145 = smul.u32 4, %s13
      %p146 = scmp.lt.s32.totalorder %s145, 7
      %s147 = scalar_select %p146, %s145, 7
      %s148 = smul.addr %s147, 8
      %s149 = smul.addr %s148, 4
      %s150 = scalar_lea.vmem %s2, %s149
      %s151 = smul.u32 4, %s13
      %v153 = vld [vmem:[%s143] sm:$0xf]
      %v154 = vld [vmem:[%s143 + $0x4] sm:$0xf]
      %v155 = vld [vmem:[%s143 + $0x8] sm:$0xf]
      %v156 = vld [vmem:[%s143 + $0xc] sm:$0xf]
      %v157 = vld [vmem:[%s143 + $0x10] sm:$0xf]
      %v158 = vld [vmem:[%s143 + $0x14] sm:$0xf]
      %v159 = vld [vmem:[%s143 + $0x18] sm:$0xf]
      %v160 = vld [vmem:[%s143 + $0x1c] sm:$0xf]
      %v161 = vld [vmem:[%s1] sm:$0xff]
      %v162 = vld [vmem:[%s1 + $0x8] sm:$0xff]
      %v163 = vld [vmem:[%s1 + $0x10] sm:$0xff]
      %v164 = vld [vmem:[%s1 + $0x18] sm:$0xff]
      %v165 = vld [vmem:[%s1 + $0x20] sm:$0xff]
      %v166 = vld [vmem:[%s1 + $0x28] sm:$0xff]
      %v167 = vld [vmem:[%s1 + $0x30] sm:$0xff]
      %v168 = vld [vmem:[%s1 + $0x38] sm:$0xff]
      %v171 = vunpack.c.l.b16 %v153
      %v172 = vunpack.c.l.b16 %v154
      %v173 = vpack.c.b16 %v172, %v171
      %174 = vrot.lane.b32.xlu0 %v173, 96
      %v175 = vpop.permute.xlu0 %174
      %vm176 = vcmask 64512
      %v178 = vsel %vm176, %v173, 0
      %v181 = vsel %vm176, %v175, 0
      %183 = vmatprep.subr.bf16.mxu0 0
      %184 = vmatpush1.bf16.xpose.msra.mxu0 %v181
      %185 = vmatprep.subr.bf16.mxu0 0
      %186 = vmatpush1.bf16.xpose.msra.mxu0 0
      %187 = vmatprep.subr.bf16.mxu0 0
      %188 = vmatpush1.bf16.xpose.msra.mxu0 0
      %189 = vmatprep.subr.bf16.mxu0 0
      %190 = vmatpush1.bf16.xpose.msra.mxu0 0
      %191 = vmatprep.subr.bf16.mxu0 0
      %192 = vmatpush1.bf16.xpose.msra.mxu0 0
      %193 = vmatprep.subr.bf16.mxu0 0
      %194 = vmatpush1.bf16.xpose.msra.mxu0 0
      %195 = vmatprep.subr.bf16.mxu0 0
      %196 = vmatpush1.bf16.xpose.msra.mxu0 0
      %197 = vmatprep.subr.bf16.mxu0 0
      %198 = vmatpush1.bf16.xpose.msra.mxu0 0
      %199 = vmatprep.subr.bf16.mxu0 0
      %200 = vmatpush1.bf16.xpose.msra.mxu0 0
      %201 = vmatprep.subr.bf16.mxu0 0
      %202 = vmatpush1.bf16.xpose.msra.mxu0 0
      %203 = vmatprep.subr.bf16.mxu0 0
      %204 = vmatpush1.bf16.xpose.msra.mxu0 0
      %205 = vmatprep.subr.bf16.mxu0 0
      %206 = vmatpush1.bf16.xpose.msra.mxu0 0
      %207 = vmatprep.subr.bf16.mxu0 0
      %208 = vmatpush1.bf16.xpose.msra.mxu0 0
      %209 = vmatprep.subr.bf16.mxu0 0
      %210 = vmatpush1.bf16.xpose.msra.mxu0 0
      %211 = vmatprep.subr.bf16.mxu0 0
      %212 = vmatpush1.bf16.xpose.msra.mxu0 0
      %213 = vmatprep.subr.bf16.mxu0 0
      %214 = vmatpush1.bf16.xpose.msra.mxu0 0
      %215 = vmatprep.mubr.bf16.mxu0 0
      %216 = vmatmul.mubr.bf16.gmra.mrb[0].mxu0 %v178
      %v217 = vpop.f32.mrb[0].mxu0
      %v218 = vadd.f32 0.0, %v217
      %v219 = vpop.f32.mrb[0].mxu0
      %v220 = vpop.f32.mrb[0].mxu0
      %v221 = vadd.f32 0.0, %v220
      %v222 = vpop.f32.mrb[0].mxu0
      %223 = vdwg.mxu0
      %v226 = vunpack.c.l.b16 %v155
      %v227 = vunpack.c.l.b16 %v156
      %v228 = vpack.c.b16 %v227, %v226
      %229 = vrot.lane.b32.xlu0 %v228, 96
      %v230 = vpop.permute.xlu0 %229
      %v232 = vsel %vm176, %v228, 0
      %v235 = vsel %vm176, %v230, 0
      %237 = vmatprep.subr.bf16.mxu0 0
      %238 = vmatpush1.bf16.xpose.msra.mxu0 %v235
      %239 = vmatprep.subr.bf16.mxu0 0
      %240 = vmatpush1.bf16.xpose.msra.mxu0 0
      %241 = vmatprep.subr.bf16.mxu0 0
      %242 = vmatpush1.bf16.xpose.msra.mxu0 0
      %243 = vmatprep.subr.bf16.mxu0 0
      %244 = vmatpush1.bf16.xpose.msra.mxu0 0
      %245 = vmatprep.subr.bf16.mxu0 0
      %246 = vmatpush1.bf16.xpose.msra.mxu0 0
      %247 = vmatprep.subr.bf16.mxu0 0
      %248 = vmatpush1.bf16.xpose.msra.mxu0 0
      %249 = vmatprep.subr.bf16.mxu0 0
      %250 = vmatpush1.bf16.xpose.msra.mxu0 0
      %251 = vmatprep.subr.bf16.mxu0 0
      %252 = vmatpush1.bf16.xpose.msra.mxu0 0
      %253 = vmatprep.subr.bf16.mxu0 0
      %254 = vmatpush1.bf16.xpose.msra.mxu0 0
      %255 = vmatprep.subr.bf16.mxu0 0
      %256 = vmatpush1.bf16.xpose.msra.mxu0 0
      %257 = vmatprep.subr.bf16.mxu0 0
      %258 = vmatpush1.bf16.xpose.msra.mxu0 0
      %259 = vmatprep.subr.bf16.mxu0 0
      %260 = vmatpush1.bf16.xpose.msra.mxu0 0
      %261 = vmatprep.subr.bf16.mxu0 0
      %262 = vmatpush1.bf16.xpose.msra.mxu0 0
      %263 = vmatprep.subr.bf16.mxu0 0
      %264 = vmatpush1.bf16.xpose.msra.mxu0 0
      %265 = vmatprep.subr.bf16.mxu0 0
      %266 = vmatpush1.bf16.xpose.msra.mxu0 0
      %267 = vmatprep.subr.bf16.mxu0 0
      %268 = vmatpush1.bf16.xpose.msra.mxu0 0
      %269 = vmatprep.mubr.bf16.mxu0 0
      %270 = vmatmul.mubr.bf16.gmra.mrb[0].mxu0 %v232
      %v271 = vpop.f32.mrb[0].mxu0
      %v272 = vadd.f32 0.0, %v271
      %v273 = vpop.f32.mrb[0].mxu0
      %v274 = vpop.f32.mrb[0].mxu0
      %v275 = vadd.f32 0.0, %v274
      %v276 = vpop.f32.mrb[0].mxu0
      %277 = vdwg.mxu0
      %v280 = vunpack.c.l.b16 %v157
      %v281 = vunpack.c.l.b16 %v158
      %v282 = vpack.c.b16 %v281, %v280
      %283 = vrot.lane.b32.xlu0 %v282, 96
      %v284 = vpop.permute.xlu0 %283
      %v286 = vsel %vm176, %v282, 0
      %v289 = vsel %vm176, %v284, 0
      %291 = vmatprep.subr.bf16.mxu0 0
      %292 = vmatpush1.bf16.xpose.msra.mxu0 %v289
      %293 = vmatprep.subr.bf16.mxu0 0
      %294 = vmatpush1.bf16.xpose.msra.mxu0 0
      %295 = vmatprep.subr.bf16.mxu0 0
      %296 = vmatpush1.bf16.xpose.msra.mxu0 0
      %297 = vmatprep.subr.bf16.mxu0 0
      %298 = vmatpush1.bf16.xpose.msra.mxu0 0
      %299 = vmatprep.subr.bf16.mxu0 0
      %300 = vmatpush1.bf16.xpose.msra.mxu0 0
      %301 = vmatprep.subr.bf16.mxu0 0
      %302 = vmatpush1.bf16.xpose.msra.mxu0 0
      %303 = vmatprep.subr.bf16.mxu0 0
      %304 = vmatpush1.bf16.xpose.msra.mxu0 0
      %305 = vmatprep.subr.bf16.mxu0 0
      %306 = vmatpush1.bf16.xpose.msra.mxu0 0
      %307 = vmatprep.subr.bf16.mxu0 0
      %308 = vmatpush1.bf16.xpose.msra.mxu0 0
      %309 = vmatprep.subr.bf16.mxu0 0
      %310 = vmatpush1.bf16.xpose.msra.mxu0 0
      %311 = vmatprep.subr.bf16.mxu0 0
      %312 = vmatpush1.bf16.xpose.msra.mxu0 0
      %313 = vmatprep.subr.bf16.mxu0 0
      %314 = vmatpush1.bf16.xpose.msra.mxu0 0
      %315 = vmatprep.subr.bf16.mxu0 0
      %316 = vmatpush1.bf16.xpose.msra.mxu0 0
      %317 = vmatprep.subr.bf16.mxu0 0
      %318 = vmatpush1.bf16.xpose.msra.mxu0 0
      %319 = vmatprep.subr.bf16.mxu0 0
      %320 = vmatpush1.bf16.xpose.msra.mxu0 0
      %321 = vmatprep.subr.bf16.mxu0 0
      %322 = vmatpush1.bf16.xpose.msra.mxu0 0
      %323 = vmatprep.mubr.bf16.mxu0 0
      %324 = vmatmul.mubr.bf16.gmra.mrb[0].mxu0 %v286
      %v325 = vpop.f32.mrb[0].mxu0
      %v326 = vadd.f32 0.0, %v325
      %v327 = vpop.f32.mrb[0].mxu0
      %v328 = vpop.f32.mrb[0].mxu0
      %v329 = vadd.f32 0.0, %v328
      %v330 = vpop.f32.mrb[0].mxu0
      %331 = vdwg.mxu0
      %v334 = vunpack.c.l.b16 %v159
      %v335 = vunpack.c.l.b16 %v160
      %v336 = vpack.c.b16 %v335, %v334
      %337 = vrot.lane.b32.xlu0 %v336, 96
      %v338 = vpop.permute.xlu0 %337
      %v340 = vsel %vm176, %v336, 0
      %v343 = vsel %vm176, %v338, 0
      %345 = vmatprep.subr.bf16.mxu0 0
      %346 = vmatpush1.bf16.xpose.msra.mxu0 %v343
      %347 = vmatprep.subr.bf16.mxu0 0
      %348 = vmatpush1.bf16.xpose.msra.mxu0 0
      %349 = vmatprep.subr.bf16.mxu0 0
      %350 = vmatpush1.bf16.xpose.msra.mxu0 0
      %351 = vmatprep.subr.bf16.mxu0 0
      %352 = vmatpush1.bf16.xpose.msra.mxu0 0
      %353 = vmatprep.subr.bf16.mxu0 0
      %354 = vmatpush1.bf16.xpose.msra.mxu0 0
      %355 = vmatprep.subr.bf16.mxu0 0
      %356 = vmatpush1.bf16.xpose.msra.mxu0 0
      %357 = vmatprep.subr.bf16.mxu0 0
      %358 = vmatpush1.bf16.xpose.msra.mxu0 0
      %359 = vmatprep.subr.bf16.mxu0 0
      %360 = vmatpush1.bf16.xpose.msra.mxu0 0
      %361 = vmatprep.subr.bf16.mxu0 0
      %362 = vmatpush1.bf16.xpose.msra.mxu0 0
      %363 = vmatprep.subr.bf16.mxu0 0
      %364 = vmatpush1.bf16.xpose.msra.mxu0 0
      %365 = vmatprep.subr.bf16.mxu0 0
      %366 = vmatpush1.bf16.xpose.msra.mxu0 0
      %367 = vmatprep.subr.bf16.mxu0 0
      %368 = vmatpush1.bf16.xpose.msra.mxu0 0
      %369 = vmatprep.subr.bf16.mxu0 0
      %370 = vmatpush1.bf16.xpose.msra.mxu0 0
      %371 = vmatprep.subr.bf16.mxu0 0
      %372 = vmatpush1.bf16.xpose.msra.mxu0 0
      %373 = vmatprep.subr.bf16.mxu0 0
      %374 = vmatpush1.bf16.xpose.msra.mxu0 0
      %375 = vmatprep.subr.bf16.mxu0 0
      %376 = vmatpush1.bf16.xpose.msra.mxu0 0
      %377 = vmatprep.mubr.bf16.mxu0 0
      %378 = vmatmul.mubr.bf16.gmra.mrb[0].mxu0 %v340
      %v379 = vpop.f32.mrb[0].mxu0
      %v380 = vadd.f32 0.0, %v379
      %v381 = vpop.f32.mrb[0].mxu0
      %v382 = vpop.f32.mrb[0].mxu0
      %v383 = vadd.f32 0.0, %v382
      %v384 = vpop.f32.mrb[0].mxu0
      %385 = vdwg.mxu0
      %v386 = vmul.f32 %v218, 0.35355338
      %v387 = vmul.f32 %v221, 0.35355338
      %v388 = vmul.f32 %v272, 0.35355338
      %v389 = vmul.f32 %v275, 0.35355338
      %v390 = vmul.f32 %v326, 0.35355338
      %v391 = vmul.f32 %v329, 0.35355338
      %v392 = vmul.f32 %v380, 0.35355338
      %v393 = vmul.f32 %v383, 0.35355338
      %v394 = vadd.f32 %v386, %v161
      %v395 = vadd.f32 %v387, %v162
      %v396 = vadd.f32 %v388, %v161
      %v397 = vadd.f32 %v389, %v162
      %v398 = vadd.f32 %v390, %v161
      %v399 = vadd.f32 %v391, %v162
      %v400 = vadd.f32 %v392, %v161
      %v401 = vadd.f32 %v393, %v162
      %vm402 = vcmask 130048
      %v403 = vsel %vm402, %v394, -inf
      %404 = vmax.xlane.f32.xlu0 %v403
      %v405 = vpop.xlane.xlu0 %404
      %v406 = vsel %vm402, %v395, -inf
      %407 = vmax.xlane.f32.xlu0 %v406
      %v408 = vpop.xlane.xlu0 %407
      %v409 = vsel %vm402, %v396, -inf
      %410 = vmax.xlane.f32.xlu0 %v409
      %v411 = vpop.xlane.xlu0 %410
      %v412 = vsel %vm402, %v397, -inf
      %413 = vmax.xlane.f32.xlu0 %v412
      %v414 = vpop.xlane.xlu0 %413
      %v415 = vsel %vm402, %v398, -inf
      %416 = vmax.xlane.f32.xlu0 %v415
      %v417 = vpop.xlane.xlu0 %416
      %v418 = vsel %vm402, %v399, -inf
      %419 = vmax.xlane.f32.xlu0 %v418
      %v420 = vpop.xlane.xlu0 %419
      %v421 = vsel %vm402, %v400, -inf
      %422 = vmax.xlane.f32.xlu0 %v421
      %v423 = vpop.xlane.xlu0 %422
      %v424 = vsel %vm402, %v401, -inf
      %425 = vmax.xlane.f32.xlu0 %v424
      %v426 = vpop.xlane.xlu0 %425
      %v427 = vsub.f32 %v394, %v405
      %v428 = vsub.f32 %v395, %v408
      %v429 = vsub.f32 %v396, %v411
      %v430 = vsub.f32 %v397, %v414
      %v431 = vsub.f32 %v398, %v417
      %v432 = vsub.f32 %v399, %v420
      %v433 = vsub.f32 %v400, %v423
      %v434 = vsub.f32 %v401, %v426
      %v435 = vmul.f32 %v427, 1.442695
      %v436 = vpow.pop %v435
      %v437 = vmul.f32 %v428, 1.442695
      %v438 = vpow.pop %v437
      %v439 = vmul.f32 %v429, 1.442695
      %v440 = vpow.pop %v439
      %v441 = vmul.f32 %v430, 1.442695
      %v442 = vpow.pop %v441
      %v443 = vmul.f32 %v431, 1.442695
      %v444 = vpow.pop %v443
      %v445 = vmul.f32 %v432, 1.442695
      %v446 = vpow.pop %v445
      %v447 = vmul.f32 %v433, 1.442695
      %v448 = vpow.pop %v447
      %v449 = vmul.f32 %v434, 1.442695
      %v450 = vpow.pop %v449
      %v451 = vsel %vm402, %v436, 0.0
      %452 = vadd.xlane.f32.xlu0 %v451
      %v453 = vpop.xlane.xlu0 %452
      %v454 = vsel %vm402, %v438, 0.0
      %455 = vadd.xlane.f32.xlu0 %v454
      %v456 = vpop.xlane.xlu0 %455
      %v457 = vsel %vm402, %v440, 0.0
      %458 = vadd.xlane.f32.xlu0 %v457
      %v459 = vpop.xlane.xlu0 %458
      %v460 = vsel %vm402, %v442, 0.0
      %461 = vadd.xlane.f32.xlu0 %v460
      %v462 = vpop.xlane.xlu0 %461
      %v463 = vsel %vm402, %v444, 0.0
      %464 = vadd.xlane.f32.xlu0 %v463
      %v465 = vpop.xlane.xlu0 %464
      %v466 = vsel %vm402, %v446, 0.0
      %467 = vadd.xlane.f32.xlu0 %v466
      %v468 = vpop.xlane.xlu0 %467
      %v469 = vsel %vm402, %v448, 0.0
      %470 = vadd.xlane.f32.xlu0 %v469
      %v471 = vpop.xlane.xlu0 %470
      %v472 = vsel %vm402, %v450, 0.0
      %473 = vadd.xlane.f32.xlu0 %v472
      %v474 = vpop.xlane.xlu0 %473
      %v475 = vrcp.pop %v453
      %v476 = vrcp.pop %v456
      %v477 = vrcp.pop %v459
      %v478 = vrcp.pop %v462
      %v479 = vrcp.pop %v465
      %v480 = vrcp.pop %v468
      %v481 = vrcp.pop %v471
      %v482 = vrcp.pop %v474
      %v483 = vmul.f32 %v436, %v475
      %v484 = vmul.f32 %v438, %v476
      %v485 = vmul.f32 %v440, %v477
      %v486 = vmul.f32 %v442, %v478
      %v487 = vmul.f32 %v444, %v479
      %v488 = vmul.f32 %v446, %v480
      %v489 = vmul.f32 %v448, %v481
      %v490 = vmul.f32 %v450, %v482
      %v491 = vpack.c.bf16 %v484, %v483
      %v492 = vpack.c.bf16 %v486, %v485
      %v493 = vpack.c.bf16 %v488, %v487
      %v494 = vpack.c.bf16 %v490, %v489
      %495 = vrot.lane.b32.xlu0 %v173, 64
      %v496 = vpop.permute.xlu0 %495
      %v499 = vsel %vm402, %v491, 0
      %501 = vmatprep.subr.bf16.mxu0 0
      %502 = vmatpush1.bf16.msra.mxu0 %v496
      %503 = vmatprep.subr.bf16.mxu0 0
      %504 = vmatpush1.bf16.msra.mxu0 0
      %505 = vmatprep.subr.bf16.mxu0 0
      %506 = vmatpush1.bf16.msra.mxu0 0
      %507 = vmatprep.subr.bf16.mxu0 0
      %508 = vmatpush1.bf16.msra.mxu0 0
      %509 = vmatprep.subr.bf16.mxu0 0
      %510 = vmatpush1.bf16.msra.mxu0 0
      %511 = vmatprep.subr.bf16.mxu0 0
      %512 = vmatpush1.bf16.msra.mxu0 0
      %513 = vmatprep.subr.bf16.mxu0 0
      %514 = vmatpush1.bf16.msra.mxu0 0
      %515 = vmatprep.subr.bf16.mxu0 0
      %516 = vmatpush1.bf16.msra.mxu0 0
      %517 = vmatprep.subr.bf16.mxu0 0
      %518 = vmatpush1.bf16.msra.mxu0 0
      %519 = vmatprep.subr.bf16.mxu0 0
      %520 = vmatpush1.bf16.msra.mxu0 0
      %521 = vmatprep.subr.bf16.mxu0 0
      %522 = vmatpush1.bf16.msra.mxu0 0
      %523 = vmatprep.subr.bf16.mxu0 0
      %524 = vmatpush1.bf16.msra.mxu0 0
      %525 = vmatprep.subr.bf16.mxu0 0
      %526 = vmatpush1.bf16.msra.mxu0 0
      %527 = vmatprep.subr.bf16.mxu0 0
      %528 = vmatpush1.bf16.msra.mxu0 0
      %529 = vmatprep.subr.bf16.mxu0 0
      %530 = vmatpush1.bf16.msra.mxu0 0
      %531 = vmatprep.subr.bf16.mxu0 0
      %532 = vmatpush1.bf16.msra.mxu0 0
      %533 = vmatprep.mubr.bf16.mxu0 0
      %534 = vmatmul.mubr.bf16.gmra.mrb[0].mxu0 %v499
      %v535 = vpop.f32.mrb[0].mxu0
      %v536 = vadd.f32 0.0, %v535
      %v537 = vpop.f32.mrb[0].mxu0
      %v538 = vpop.f32.mrb[0].mxu0
      %v539 = vadd.f32 0.0, %v538
      %v540 = vpop.f32.mrb[0].mxu0
      %541 = vdwg.mxu0
      %542 = vrot.lane.b32.xlu0 %v228, 64
      %v543 = vpop.permute.xlu0 %542
      %v546 = vsel %vm402, %v492, 0
      %548 = vmatprep.subr.bf16.mxu0 0
      %549 = vmatpush1.bf16.msra.mxu0 %v543
      %550 = vmatprep.subr.bf16.mxu0 0
      %551 = vmatpush1.bf16.msra.mxu0 0
      %552 = vmatprep.subr.bf16.mxu0 0
      %553 = vmatpush1.bf16.msra.mxu0 0
      %554 = vmatprep.subr.bf16.mxu0 0
      %555 = vmatpush1.bf16.msra.mxu0 0
      %556 = vmatprep.subr.bf16.mxu0 0
      %557 = vmatpush1.bf16.msra.mxu0 0
      %558 = vmatprep.subr.bf16.mxu0 0
      %559 = vmatpush1.bf16.msra.mxu0 0
      %560 = vmatprep.subr.bf16.mxu0 0
      %561 = vmatpush1.bf16.msra.mxu0 0
      %562 = vmatprep.subr.bf16.mxu0 0
      %563 = vmatpush1.bf16.msra.mxu0 0
      %564 = vmatprep.subr.bf16.mxu0 0
      %565 = vmatpush1.bf16.msra.mxu0 0
      %566 = vmatprep.subr.bf16.mxu0 0
      %567 = vmatpush1.bf16.msra.mxu0 0
      %568 = vmatprep.subr.bf16.mxu0 0
      %569 = vmatpush1.bf16.msra.mxu0 0
      %570 = vmatprep.subr.bf16.mxu0 0
      %571 = vmatpush1.bf16.msra.mxu0 0
      %572 = vmatprep.subr.bf16.mxu0 0
      %573 = vmatpush1.bf16.msra.mxu0 0
      %574 = vmatprep.subr.bf16.mxu0 0
      %575 = vmatpush1.bf16.msra.mxu0 0
      %576 = vmatprep.subr.bf16.mxu0 0
      %577 = vmatpush1.bf16.msra.mxu0 0
      %578 = vmatprep.subr.bf16.mxu0 0
      %579 = vmatpush1.bf16.msra.mxu0 0
      %580 = vmatprep.mubr.bf16.mxu0 0
      %581 = vmatmul.mubr.bf16.gmra.mrb[0].mxu0 %v546
      %v582 = vpop.f32.mrb[0].mxu0
      %v583 = vadd.f32 0.0, %v582
      %v584 = vpop.f32.mrb[0].mxu0
      %v585 = vpop.f32.mrb[0].mxu0
      %v586 = vadd.f32 0.0, %v585
      %v587 = vpop.f32.mrb[0].mxu0
      %588 = vdwg.mxu0
      %589 = vrot.lane.b32.xlu0 %v282, 64
      %v590 = vpop.permute.xlu0 %589
      %v593 = vsel %vm402, %v493, 0
      %595 = vmatprep.subr.bf16.mxu0 0
      %596 = vmatpush1.bf16.msra.mxu0 %v590
      %597 = vmatprep.subr.bf16.mxu0 0
      %598 = vmatpush1.bf16.msra.mxu0 0
      %599 = vmatprep.subr.bf16.mxu0 0
      %600 = vmatpush1.bf16.msra.mxu0 0
      %601 = vmatprep.subr.bf16.mxu0 0
      %602 = vmatpush1.bf16.msra.mxu0 0
      %603 = vmatprep.subr.bf16.mxu0 0
      %604 = vmatpush1.bf16.msra.mxu0 0
      %605 = vmatprep.subr.bf16.mxu0 0
      %606 = vmatpush1.bf16.msra.mxu0 0
      %607 = vmatprep.subr.bf16.mxu0 0
      %608 = vmatpush1.bf16.msra.mxu0 0
      %609 = vmatprep.subr.bf16.mxu0 0
      %610 = vmatpush1.bf16.msra.mxu0 0
      %611 = vmatprep.subr.bf16.mxu0 0
      %612 = vmatpush1.bf16.msra.mxu0 0
      %613 = vmatprep.subr.bf16.mxu0 0
      %614 = vmatpush1.bf16.msra.mxu0 0
      %615 = vmatprep.subr.bf16.mxu0 0
      %616 = vmatpush1.bf16.msra.mxu0 0
      %617 = vmatprep.subr.bf16.mxu0 0
      %618 = vmatpush1.bf16.msra.mxu0 0
      %619 = vmatprep.subr.bf16.mxu0 0
      %620 = vmatpush1.bf16.msra.mxu0 0
      %621 = vmatprep.subr.bf16.mxu0 0
      %622 = vmatpush1.bf16.msra.mxu0 0
      %623 = vmatprep.subr.bf16.mxu0 0
      %624 = vmatpush1.bf16.msra.mxu0 0
      %625 = vmatprep.subr.bf16.mxu0 0
      %626 = vmatpush1.bf16.msra.mxu0 0
      %627 = vmatprep.mubr.bf16.mxu0 0
      %628 = vmatmul.mubr.bf16.gmra.mrb[0].mxu0 %v593
      %v629 = vpop.f32.mrb[0].mxu0
      %v630 = vadd.f32 0.0, %v629
      %v631 = vpop.f32.mrb[0].mxu0
      %v632 = vpop.f32.mrb[0].mxu0
      %v633 = vadd.f32 0.0, %v632
      %v634 = vpop.f32.mrb[0].mxu0
      %635 = vdwg.mxu0
      %636 = vrot.lane.b32.xlu0 %v336, 64
      %v637 = vpop.permute.xlu0 %636
      %v640 = vsel %vm402, %v494, 0
      %642 = vmatprep.subr.bf16.mxu0 0
      %643 = vmatpush1.bf16.msra.mxu0 %v637
      %644 = vmatprep.subr.bf16.mxu0 0
      %645 = vmatpush1.bf16.msra.mxu0 0
      %646 = vmatprep.subr.bf16.mxu0 0
      %647 = vmatpush1.bf16.msra.mxu0 0
      %648 = vmatprep.subr.bf16.mxu0 0
      %649 = vmatpush1.bf16.msra.mxu0 0
      %650 = vmatprep.subr.bf16.mxu0 0
      %651 = vmatpush1.bf16.msra.mxu0 0
      %652 = vmatprep.subr.bf16.mxu0 0
      %653 = vmatpush1.bf16.msra.mxu0 0
      %654 = vmatprep.subr.bf16.mxu0 0
      %655 = vmatpush1.bf16.msra.mxu0 0
      %656 = vmatprep.subr.bf16.mxu0 0
      %657 = vmatpush1.bf16.msra.mxu0 0
      %658 = vmatprep.subr.bf16.mxu0 0
      %659 = vmatpush1.bf16.msra.mxu0 0
      %660 = vmatprep.subr.bf16.mxu0 0
      %661 = vmatpush1.bf16.msra.mxu0 0
      %662 = vmatprep.subr.bf16.mxu0 0
      %663 = vmatpush1.bf16.msra.mxu0 0
      %664 = vmatprep.subr.bf16.mxu0 0
      %665 = vmatpush1.bf16.msra.mxu0 0
      %666 = vmatprep.subr.bf16.mxu0 0
      %667 = vmatpush1.bf16.msra.mxu0 0
      %668 = vmatprep.subr.bf16.mxu0 0
      %669 = vmatpush1.bf16.msra.mxu0 0
      %670 = vmatprep.subr.bf16.mxu0 0
      %671 = vmatpush1.bf16.msra.mxu0 0
      %672 = vmatprep.subr.bf16.mxu0 0
      %673 = vmatpush1.bf16.msra.mxu0 0
      %674 = vmatprep.mubr.bf16.mxu0 0
      %675 = vmatmul.mubr.bf16.gmra.mrb[0].mxu0 %v640
      %v676 = vpop.f32.mrb[0].mxu0
      %v677 = vadd.f32 0.0, %v676
      %v678 = vpop.f32.mrb[0].mxu0
      %v679 = vpop.f32.mrb[0].mxu0
      %v680 = vadd.f32 0.0, %v679
      %v681 = vpop.f32.mrb[0].mxu0
      %682 = vdwg.mxu0
      %v683 = vpack.c.bf16 %v539, %v536
      %v684 = vpack.c.bf16 %v586, %v583
      %v685 = vpack.c.bf16 %v633, %v630
      %v686 = vpack.c.bf16 %v680, %v677
      %v691 = vunpack.c.l.b16 %v683
      %v692 = vunpack.c.h.b16 %v683
      %v693 = vunpack.c.l.b16 %v684
      %v694 = vunpack.c.h.b16 %v684
      %v695 = vunpack.c.l.b16 %v685
      %v696 = vunpack.c.h.b16 %v685
      %v697 = vunpack.c.l.b16 %v686
      %v698 = vunpack.c.h.b16 %v686
      %v699 = vpack.c.b16 %v691, %v691
      %v700 = vpack.c.b16 %v692, %v692
      %v701 = vpack.c.b16 %v693, %v693
      %v702 = vpack.c.b16 %v694, %v694
      %v703 = vpack.c.b16 %v695, %v695
      %v704 = vpack.c.b16 %v696, %v696
      %v705 = vpack.c.b16 %v697, %v697
      %v706 = vpack.c.b16 %v698, %v698
      %vm715 = vcmask 60416
      %716 = vst.msk [vmem:[%s150] sm:$0xf] %vm715, %v699
      %717 = vst.msk [vmem:[%s150 + $0x4] sm:$0xf] %vm715, %v700
      %718 = vst.msk [vmem:[%s150 + $0x20] sm:$0xf] %vm715, %v701
      %719 = vst.msk [vmem:[%s150 + $0x24] sm:$0xf] %vm715, %v702
      %720 = vst.msk [vmem:[%s150 + $0x40] sm:$0xf] %vm715, %v703
      %721 = vst.msk [vmem:[%s150 + $0x44] sm:$0xf] %vm715, %v704
      %722 = vst.msk [vmem:[%s150 + $0x60] sm:$0xf] %vm715, %v705
      %723 = vst.msk [vmem:[%s150 + $0x64] sm:$0xf] %vm715, %v706
      %724 = vrot.lane.b32.xlu0 %v173, 120
      %v725 = vpop.permute.xlu0 %724
      %726 = vrot.lane.b32.xlu0 %v173, 88
      %v727 = vpop.permute.xlu0 %726
      %v729 = vsel %vm176, %v725, 0
      %v732 = vsel %vm176, %v727, 0
      %734 = vmatprep.subr.bf16.mxu0 0
      %735 = vmatpush1.bf16.xpose.msra.mxu0 %v732
      %736 = vmatprep.subr.bf16.mxu0 0
      %737 = vmatpush1.bf16.xpose.msra.mxu0 0
      %738 = vmatprep.subr.bf16.mxu0 0
      %739 = vmatpush1.bf16.xpose.msra.mxu0 0
      %740 = vmatprep.subr.bf16.mxu0 0
      %741 = vmatpush1.bf16.xpose.msra.mxu0 0
      %742 = vmatprep.subr.bf16.mxu0 0
      %743 = vmatpush1.bf16.xpose.msra.mxu0 0
      %744 = vmatprep.subr.bf16.mxu0 0
      %745 = vmatpush1.bf16.xpose.msra.mxu0 0
      %746 = vmatprep.subr.bf16.mxu0 0
      %747 = vmatpush1.bf16.xpose.msra.mxu0 0
      %748 = vmatprep.subr.bf16.mxu0 0
      %749 = vmatpush1.bf16.xpose.msra.mxu0 0
      %750 = vmatprep.subr.bf16.mxu0 0
      %751 = vmatpush1.bf16.xpose.msra.mxu0 0
      %752 = vmatprep.subr.bf16.mxu0 0
      %753 = vmatpush1.bf16.xpose.msra.mxu0 0
      %754 = vmatprep.subr.bf16.mxu0 0
      %755 = vmatpush1.bf16.xpose.msra.mxu0 0
      %756 = vmatprep.subr.bf16.mxu0 0
      %757 = vmatpush1.bf16.xpose.msra.mxu0 0
      %758 = vmatprep.subr.bf16.mxu0 0
      %759 = vmatpush1.bf16.xpose.msra.mxu0 0
      %760 = vmatprep.subr.bf16.mxu0 0
      %761 = vmatpush1.bf16.xpose.msra.mxu0 0
      %762 = vmatprep.subr.bf16.mxu0 0
      %763 = vmatpush1.bf16.xpose.msra.mxu0 0
      %764 = vmatprep.subr.bf16.mxu0 0
      %765 = vmatpush1.bf16.xpose.msra.mxu0 0
      %766 = vmatprep.mubr.bf16.mxu0 0
      %767 = vmatmul.mubr.bf16.gmra.mrb[0].mxu0 %v729
      %v768 = vpop.f32.mrb[0].mxu0
      %v769 = vadd.f32 0.0, %v768
      %v770 = vpop.f32.mrb[0].mxu0
      %v771 = vpop.f32.mrb[0].mxu0
      %v772 = vadd.f32 0.0, %v771
      %v773 = vpop.f32.mrb[0].mxu0
      %774 = vdwg.mxu0
      %775 = vrot.lane.b32.xlu0 %v228, 120
      %v776 = vpop.permute.xlu0 %775
      %777 = vrot.lane.b32.xlu0 %v228, 88
      %v778 = vpop.permute.xlu0 %777
      %v780 = vsel %vm176, %v776, 0
      %v783 = vsel %vm176, %v778, 0
      %785 = vmatprep.subr.bf16.mxu0 0
      %786 = vmatpush1.bf16.xpose.msra.mxu0 %v783
      %787 = vmatprep.subr.bf16.mxu0 0
      %788 = vmatpush1.bf16.xpose.msra.mxu0 0
      %789 = vmatprep.subr.bf16.mxu0 0
      %790 = vmatpush1.bf16.xpose.msra.mxu0 0
      %791 = vmatprep.subr.bf16.mxu0 0
      %792 = vmatpush1.bf16.xpose.msra.mxu0 0
      %793 = vmatprep.subr.bf16.mxu0 0
      %794 = vmatpush1.bf16.xpose.msra.mxu0 0
      %795 = vmatprep.subr.bf16.mxu0 0
      %796 = vmatpush1.bf16.xpose.msra.mxu0 0
      %797 = vmatprep.subr.bf16.mxu0 0
      %798 = vmatpush1.bf16.xpose.msra.mxu0 0
      %799 = vmatprep.subr.bf16.mxu0 0
      %800 = vmatpush1.bf16.xpose.msra.mxu0 0
      %801 = vmatprep.subr.bf16.mxu0 0
      %802 = vmatpush1.bf16.xpose.msra.mxu0 0
      %803 = vmatprep.subr.bf16.mxu0 0
      %804 = vmatpush1.bf16.xpose.msra.mxu0 0
      %805 = vmatprep.subr.bf16.mxu0 0
      %806 = vmatpush1.bf16.xpose.msra.mxu0 0
      %807 = vmatprep.subr.bf16.mxu0 0
      %808 = vmatpush1.bf16.xpose.msra.mxu0 0
      %809 = vmatprep.subr.bf16.mxu0 0
      %810 = vmatpush1.bf16.xpose.msra.mxu0 0
      %811 = vmatprep.subr.bf16.mxu0 0
      %812 = vmatpush1.bf16.xpose.msra.mxu0 0
      %813 = vmatprep.subr.bf16.mxu0 0
      %814 = vmatpush1.bf16.xpose.msra.mxu0 0
      %815 = vmatprep.subr.bf16.mxu0 0
      %816 = vmatpush1.bf16.xpose.msra.mxu0 0
      %817 = vmatprep.mubr.bf16.mxu0 0
      %818 = vmatmul.mubr.bf16.gmra.mrb[0].mxu0 %v780
      %v819 = vpop.f32.mrb[0].mxu0
      %v820 = vadd.f32 0.0, %v819
      %v821 = vpop.f32.mrb[0].mxu0
      %v822 = vpop.f32.mrb[0].mxu0
      %v823 = vadd.f32 0.0, %v822
      %v824 = vpop.f32.mrb[0].mxu0
      %825 = vdwg.mxu0
      %826 = vrot.lane.b32.xlu0 %v282, 120
      %v827 = vpop.permute.xlu0 %826
      %828 = vrot.lane.b32.xlu0 %v282, 88
      %v829 = vpop.permute.xlu0 %828
      %v831 = vsel %vm176, %v827, 0
      %v834 = vsel %vm176, %v829, 0
      %836 = vmatprep.subr.bf16.mxu0 0
      %837 = vmatpush1.bf16.xpose.msra.mxu0 %v834
      %838 = vmatprep.subr.bf16.mxu0 0
      %839 = vmatpush1.bf16.xpose.msra.mxu0 0
      %840 = vmatprep.subr.bf16.mxu0 0
      %841 = vmatpush1.bf16.xpose.msra.mxu0 0
      %842 = vmatprep.subr.bf16.mxu0 0
      %843 = vmatpush1.bf16.xpose.msra.mxu0 0
      %844 = vmatprep.subr.bf16.mxu0 0
      %845 = vmatpush1.bf16.xpose.msra.mxu0 0
      %846 = vmatprep.subr.bf16.mxu0 0
      %847 = vmatpush1.bf16.xpose.msra.mxu0 0
      %848 = vmatprep.subr.bf16.mxu0 0
      %849 = vmatpush1.bf16.xpose.msra.mxu0 0
      %850 = vmatprep.subr.bf16.mxu0 0
      %851 = vmatpush1.bf16.xpose.msra.mxu0 0
      %852 = vmatprep.subr.bf16.mxu0 0
      %853 = vmatpush1.bf16.xpose.msra.mxu0 0
      %854 = vmatprep.subr.bf16.mxu0 0
      %855 = vmatpush1.bf16.xpose.msra.mxu0 0
      %856 = vmatprep.subr.bf16.mxu0 0
      %857 = vmatpush1.bf16.xpose.msra.mxu0 0
      %858 = vmatprep.subr.bf16.mxu0 0
      %859 = vmatpush1.bf16.xpose.msra.mxu0 0
      %860 = vmatprep.subr.bf16.mxu0 0
      %861 = vmatpush1.bf16.xpose.msra.mxu0 0
      %862 = vmatprep.subr.bf16.mxu0 0
      %863 = vmatpush1.bf16.xpose.msra.mxu0 0
      %864 = vmatprep.subr.bf16.mxu0 0
      %865 = vmatpush1.bf16.xpose.msra.mxu0 0
      %866 = vmatprep.subr.bf16.mxu0 0
      %867 = vmatpush1.bf16.xpose.msra.mxu0 0
      %868 = vmatprep.mubr.bf16.mxu0 0
      %869 = vmatmul.mubr.bf16.gmra.mrb[0].mxu0 %v831
      %v870 = vpop.f32.mrb[0].mxu0
      %v871 = vadd.f32 0.0, %v870
      %v872 = vpop.f32.mrb[0].mxu0
      %v873 = vpop.f32.mrb[0].mxu0
      %v874 = vadd.f32 0.0, %v873
      %v875 = vpop.f32.mrb[0].mxu0
      %876 = vdwg.mxu0
      %877 = vrot.lane.b32.xlu0 %v336, 120
      %v878 = vpop.permute.xlu0 %877
      %879 = vrot.lane.b32.xlu0 %v336, 88
      %v880 = vpop.permute.xlu0 %879
      %v882 = vsel %vm176, %v878, 0
      %v885 = vsel %vm176, %v880, 0
      %887 = vmatprep.subr.bf16.mxu0 0
      %888 = vmatpush1.bf16.xpose.msra.mxu0 %v885
      %889 = vmatprep.subr.bf16.mxu0 0
      %890 = vmatpush1.bf16.xpose.msra.mxu0 0
      %891 = vmatprep.subr.bf16.mxu0 0
      %892 = vmatpush1.bf16.xpose.msra.mxu0 0
      %893 = vmatprep.subr.bf16.mxu0 0
      %894 = vmatpush1.bf16.xpose.msra.mxu0 0
      %895 = vmatprep.subr.bf16.mxu0 0
      %896 = vmatpush1.bf16.xpose.msra.mxu0 0
      %897 = vmatprep.subr.bf16.mxu0 0
      %898 = vmatpush1.bf16.xpose.msra.mxu0 0
      %899 = vmatprep.subr.bf16.mxu0 0
      %900 = vmatpush1.bf16.xpose.msra.mxu0 0
      %901 = vmatprep.subr.bf16.mxu0 0
      %902 = vmatpush1.bf16.xpose.msra.mxu0 0
      %903 = vmatprep.subr.bf16.mxu0 0
      %904 = vmatpush1.bf16.xpose.msra.mxu0 0
      %905 = vmatprep.subr.bf16.mxu0 0
      %906 = vmatpush1.bf16.xpose.msra.mxu0 0
      %907 = vmatprep.subr.bf16.mxu0 0
      %908 = vmatpush1.bf16.xpose.msra.mxu0 0
      %909 = vmatprep.subr.bf16.mxu0 0
      %910 = vmatpush1.bf16.xpose.msra.mxu0 0
      %911 = vmatprep.subr.bf16.mxu0 0
      %912 = vmatpush1.bf16.xpose.msra.mxu0 0
      %913 = vmatprep.subr.bf16.mxu0 0
      %914 = vmatpush1.bf16.xpose.msra.mxu0 0
      %915 = vmatprep.subr.bf16.mxu0 0
      %916 = vmatpush1.bf16.xpose.msra.mxu0 0
      %917 = vmatprep.subr.bf16.mxu0 0
      %918 = vmatpush1.bf16.xpose.msra.mxu0 0
      %919 = vmatprep.mubr.bf16.mxu0 0
      %920 = vmatmul.mubr.bf16.gmra.mrb[0].mxu0 %v882
      %v921 = vpop.f32.mrb[0].mxu0
      %v922 = vadd.f32 0.0, %v921
      %v923 = vpop.f32.mrb[0].mxu0
      %v924 = vpop.f32.mrb[0].mxu0
      %v925 = vadd.f32 0.0, %v924
      %v926 = vpop.f32.mrb[0].mxu0
      %927 = vdwg.mxu0
      %v928 = vmul.f32 %v769, 0.35355338
      %v929 = vmul.f32 %v772, 0.35355338
      %v930 = vmul.f32 %v820, 0.35355338
      %v931 = vmul.f32 %v823, 0.35355338
      %v932 = vmul.f32 %v871, 0.35355338
      %v933 = vmul.f32 %v874, 0.35355338
      %v934 = vmul.f32 %v922, 0.35355338
      %v935 = vmul.f32 %v925, 0.35355338
      %v936 = vadd.f32 %v928, %v163
      %v937 = vadd.f32 %v929, %v164
      %v938 = vadd.f32 %v930, %v163
      %v939 = vadd.f32 %v931, %v164
      %v940 = vadd.f32 %v932, %v163
      %v941 = vadd.f32 %v933, %v164
      %v942 = vadd.f32 %v934, %v163
      %v943 = vadd.f32 %v935, %v164
      %v944 = vsel %vm402, %v936, -inf
      %945 = vmax.xlane.f32.xlu0 %v944
      %v946 = vpop.xlane.xlu0 %945
      %v947 = vsel %vm402, %v937, -inf
      %948 = vmax.xlane.f32.xlu0 %v947
      %v949 = vpop.xlane.xlu0 %948
      %v950 = vsel %vm402, %v938, -inf
      %951 = vmax.xlane.f32.xlu0 %v950
      %v952 = vpop.xlane.xlu0 %951
      %v953 = vsel %vm402, %v939, -inf
      %954 = vmax.xlane.f32.xlu0 %v953
      %v955 = vpop.xlane.xlu0 %954
      %v956 = vsel %vm402, %v940, -inf
      %957 = vmax.xlane.f32.xlu0 %v956
      %v958 = vpop.xlane.xlu0 %957
      %v959 = vsel %vm402, %v941, -inf
      %960 = vmax.xlane.f32.xlu0 %v959
      %v961 = vpop.xlane.xlu0 %960
      %v962 = vsel %vm402, %v942, -inf
      %963 = vmax.xlane.f32.xlu0 %v962
      %v964 = vpop.xlane.xlu0 %963
      %v965 = vsel %vm402, %v943, -inf
      %966 = vmax.xlane.f32.xlu0 %v965
      %v967 = vpop.xlane.xlu0 %966
      %v968 = vsub.f32 %v936, %v946
      %v969 = vsub.f32 %v937, %v949
      %v970 = vsub.f32 %v938, %v952
      %v971 = vsub.f32 %v939, %v955
      %v972 = vsub.f32 %v940, %v958
      %v973 = vsub.f32 %v941, %v961
      %v974 = vsub.f32 %v942, %v964
      %v975 = vsub.f32 %v943, %v967
      %v976 = vmul.f32 %v968, 1.442695
      %v977 = vpow.pop %v976
      %v978 = vmul.f32 %v969, 1.442695
      %v979 = vpow.pop %v978
      %v980 = vmul.f32 %v970, 1.442695
      %v981 = vpow.pop %v980
      %v982 = vmul.f32 %v971, 1.442695
      %v983 = vpow.pop %v982
      %v984 = vmul.f32 %v972, 1.442695
      %v985 = vpow.pop %v984
      %v986 = vmul.f32 %v973, 1.442695
      %v987 = vpow.pop %v986
      %v988 = vmul.f32 %v974, 1.442695
      %v989 = vpow.pop %v988
      %v990 = vmul.f32 %v975, 1.442695
      %v991 = vpow.pop %v990
      %v992 = vsel %vm402, %v977, 0.0
      %993 = vadd.xlane.f32.xlu0 %v992
      %v994 = vpop.xlane.xlu0 %993
      %v995 = vsel %vm402, %v979, 0.0
      %996 = vadd.xlane.f32.xlu0 %v995
      %v997 = vpop.xlane.xlu0 %996
      %v998 = vsel %vm402, %v981, 0.0
      %999 = vadd.xlane.f32.xlu0 %v998
      %v1000 = vpop.xlane.xlu0 %999
      %v1001 = vsel %vm402, %v983, 0.0
      %1002 = vadd.xlane.f32.xlu0 %v1001
      %v1003 = vpop.xlane.xlu0 %1002
      %v1004 = vsel %vm402, %v985, 0.0
      %1005 = vadd.xlane.f32.xlu0 %v1004
      %v1006 = vpop.xlane.xlu0 %1005
      %v1007 = vsel %vm402, %v987, 0.0
      %1008 = vadd.xlane.f32.xlu0 %v1007
      %v1009 = vpop.xlane.xlu0 %1008
      %v1010 = vsel %vm402, %v989, 0.0
      %1011 = vadd.xlane.f32.xlu0 %v1010
      %v1012 = vpop.xlane.xlu0 %1011
      %v1013 = vsel %vm402, %v991, 0.0
      %1014 = vadd.xlane.f32.xlu0 %v1013
      %v1015 = vpop.xlane.xlu0 %1014
      %v1016 = vrcp.pop %v994
      %v1017 = vrcp.pop %v997
      %v1018 = vrcp.pop %v1000
      %v1019 = vrcp.pop %v1003
      %v1020 = vrcp.pop %v1006
      %v1021 = vrcp.pop %v1009
      %v1022 = vrcp.pop %v1012
      %v1023 = vrcp.pop %v1015
      %v1024 = vmul.f32 %v977, %v1016
      %v1025 = vmul.f32 %v979, %v1017
      %v1026 = vmul.f32 %v981, %v1018
      %v1027 = vmul.f32 %v983, %v1019
      %v1028 = vmul.f32 %v985, %v1020
      %v1029 = vmul.f32 %v987, %v1021
      %v1030 = vmul.f32 %v989, %v1022
      %v1031 = vmul.f32 %v991, %v1023
      %v1032 = vpack.c.bf16 %v1025, %v1024
      %v1033 = vpack.c.bf16 %v1027, %v1026
      %v1034 = vpack.c.bf16 %v1029, %v1028
      %v1035 = vpack.c.bf16 %v1031, %v1030
      %1036 = vrot.lane.b32.xlu0 %v173, 56
      %v1037 = vpop.permute.xlu0 %1036
      %v1040 = vsel %vm402, %v1032, 0
      %1042 = vmatprep.subr.bf16.mxu0 0
      %1043 = vmatpush1.bf16.msra.mxu0 %v1037
      %1044 = vmatprep.subr.bf16.mxu0 0
      %1045 = vmatpush1.bf16.msra.mxu0 0
      %1046 = vmatprep.subr.bf16.mxu0 0
      %1047 = vmatpush1.bf16.msra.mxu0 0
      %1048 = vmatprep.subr.bf16.mxu0 0
      %1049 = vmatpush1.bf16.msra.mxu0 0
      %1050 = vmatprep.subr.bf16.mxu0 0
      %1051 = vmatpush1.bf16.msra.mxu0 0
      %1052 = vmatprep.subr.bf16.mxu0 0
      %1053 = vmatpush1.bf16.msra.mxu0 0
      %1054 = vmatprep.subr.bf16.mxu0 0
      %1055 = vmatpush1.bf16.msra.mxu0 0
      %1056 = vmatprep.subr.bf16.mxu0 0
      %1057 = vmatpush1.bf16.msra.mxu0 0
      %1058 = vmatprep.subr.bf16.mxu0 0
      %1059 = vmatpush1.bf16.msra.mxu0 0
      %1060 = vmatprep.subr.bf16.mxu0 0
      %1061 = vmatpush1.bf16.msra.mxu0 0
      %1062 = vmatprep.subr.bf16.mxu0 0
      %1063 = vmatpush1.bf16.msra.mxu0 0
      %1064 = vmatprep.subr.bf16.mxu0 0
      %1065 = vmatpush1.bf16.msra.mxu0 0
      %1066 = vmatprep.subr.bf16.mxu0 0
      %1067 = vmatpush1.bf16.msra.mxu0 0
      %1068 = vmatprep.subr.bf16.mxu0 0
      %1069 = vmatpush1.bf16.msra.mxu0 0
      %1070 = vmatprep.subr.bf16.mxu0 0
      %1071 = vmatpush1.bf16.msra.mxu0 0
      %1072 = vmatprep.subr.bf16.mxu0 0
      %1073 = vmatpush1.bf16.msra.mxu0 0
      %1074 = vmatprep.mubr.bf16.mxu0 0
      %1075 = vmatmul.mubr.bf16.gmra.mrb[0].mxu0 %v1040
      %v1076 = vpop.f32.mrb[0].mxu0
      %v1077 = vadd.f32 0.0, %v1076
      %v1078 = vpop.f32.mrb[0].mxu0
      %v1079 = vpop.f32.mrb[0].mxu0
      %v1080 = vadd.f32 0.0, %v1079
      %v1081 = vpop.f32.mrb[0].mxu0
      %1082 = vdwg.mxu0
      %1083 = vrot.lane.b32.xlu0 %v228, 56
      %v1084 = vpop.permute.xlu0 %1083
      %v1087 = vsel %vm402, %v1033, 0
      %1089 = vmatprep.subr.bf16.mxu0 0
      %1090 = vmatpush1.bf16.msra.mxu0 %v1084
      %1091 = vmatprep.subr.bf16.mxu0 0
      %1092 = vmatpush1.bf16.msra.mxu0 0
      %1093 = vmatprep.subr.bf16.mxu0 0
      %1094 = vmatpush1.bf16.msra.mxu0 0
      %1095 = vmatprep.subr.bf16.mxu0 0
      %1096 = vmatpush1.bf16.msra.mxu0 0
      %1097 = vmatprep.subr.bf16.mxu0 0
      %1098 = vmatpush1.bf16.msra.mxu0 0
      %1099 = vmatprep.subr.bf16.mxu0 0
      %1100 = vmatpush1.bf16.msra.mxu0 0
      %1101 = vmatprep.subr.bf16.mxu0 0
      %1102 = vmatpush1.bf16.msra.mxu0 0
      %1103 = vmatprep.subr.bf16.mxu0 0
      %1104 = vmatpush1.bf16.msra.mxu0 0
      %1105 = vmatprep.subr.bf16.mxu0 0
      %1106 = vmatpush1.bf16.msra.mxu0 0
      %1107 = vmatprep.subr.bf16.mxu0 0
      %1108 = vmatpush1.bf16.msra.mxu0 0
      %1109 = vmatprep.subr.bf16.mxu0 0
      %1110 = vmatpush1.bf16.msra.mxu0 0
      %1111 = vmatprep.subr.bf16.mxu0 0
      %1112 = vmatpush1.bf16.msra.mxu0 0
      %1113 = vmatprep.subr.bf16.mxu0 0
      %1114 = vmatpush1.bf16.msra.mxu0 0
      %1115 = vmatprep.subr.bf16.mxu0 0
      %1116 = vmatpush1.bf16.msra.mxu0 0
      %1117 = vmatprep.subr.bf16.mxu0 0
      %1118 = vmatpush1.bf16.msra.mxu0 0
      %1119 = vmatprep.subr.bf16.mxu0 0
      %1120 = vmatpush1.bf16.msra.mxu0 0
      %1121 = vmatprep.mubr.bf16.mxu0 0
      %1122 = vmatmul.mubr.bf16.gmra.mrb[0].mxu0 %v1087
      %v1123 = vpop.f32.mrb[0].mxu0
      %v1124 = vadd.f32 0.0, %v1123
      %v1125 = vpop.f32.mrb[0].mxu0
      %v1126 = vpop.f32.mrb[0].mxu0
      %v1127 = vadd.f32 0.0, %v1126
      %v1128 = vpop.f32.mrb[0].mxu0
      %1129 = vdwg.mxu0
      %1130 = vrot.lane.b32.xlu0 %v282, 56
      %v1131 = vpop.permute.xlu0 %1130
      %v1134 = vsel %vm402, %v1034, 0
      %1136 = vmatprep.subr.bf16.mxu0 0
      %1137 = vmatpush1.bf16.msra.mxu0 %v1131
      %1138 = vmatprep.subr.bf16.mxu0 0
      %1139 = vmatpush1.bf16.msra.mxu0 0
      %1140 = vmatprep.subr.bf16.mxu0 0
      %1141 = vmatpush1.bf16.msra.mxu0 0
      %1142 = vmatprep.subr.bf16.mxu0 0
      %1143 = vmatpush1.bf16.msra.mxu0 0
      %1144 = vmatprep.subr.bf16.mxu0 0
      %1145 = vmatpush1.bf16.msra.mxu0 0
      %1146 = vmatprep.subr.bf16.mxu0 0
      %1147 = vmatpush1.bf16.msra.mxu0 0
      %1148 = vmatprep.subr.bf16.mxu0 0
      %1149 = vmatpush1.bf16.msra.mxu0 0
      %1150 = vmatprep.subr.bf16.mxu0 0
      %1151 = vmatpush1.bf16.msra.mxu0 0
      %1152 = vmatprep.subr.bf16.mxu0 0
      %1153 = vmatpush1.bf16.msra.mxu0 0
      %1154 = vmatprep.subr.bf16.mxu0 0
      %1155 = vmatpush1.bf16.msra.mxu0 0
      %1156 = vmatprep.subr.bf16.mxu0 0
      %1157 = vmatpush1.bf16.msra.mxu0 0
      %1158 = vmatprep.subr.bf16.mxu0 0
      %1159 = vmatpush1.bf16.msra.mxu0 0
      %1160 = vmatprep.subr.bf16.mxu0 0
      %1161 = vmatpush1.bf16.msra.mxu0 0
      %1162 = vmatprep.subr.bf16.mxu0 0
      %1163 = vmatpush1.bf16.msra.mxu0 0
      %1164 = vmatprep.subr.bf16.mxu0 0
      %1165 = vmatpush1.bf16.msra.mxu0 0
      %1166 = vmatprep.subr.bf16.mxu0 0
      %1167 = vmatpush1.bf16.msra.mxu0 0
      %1168 = vmatprep.mubr.bf16.mxu0 0
      %1169 = vmatmul.mubr.bf16.gmra.mrb[0].mxu0 %v1134
      %v1170 = vpop.f32.mrb[0].mxu0
      %v1171 = vadd.f32 0.0, %v1170
      %v1172 = vpop.f32.mrb[0].mxu0
      %v1173 = vpop.f32.mrb[0].mxu0
      %v1174 = vadd.f32 0.0, %v1173
      %v1175 = vpop.f32.mrb[0].mxu0
      %1176 = vdwg.mxu0
      %1177 = vrot.lane.b32.xlu0 %v336, 56
      %v1178 = vpop.permute.xlu0 %1177
      %v1181 = vsel %vm402, %v1035, 0
      %1183 = vmatprep.subr.bf16.mxu0 0
      %1184 = vmatpush1.bf16.msra.mxu0 %v1178
      %1185 = vmatprep.subr.bf16.mxu0 0
      %1186 = vmatpush1.bf16.msra.mxu0 0
      %1187 = vmatprep.subr.bf16.mxu0 0
      %1188 = vmatpush1.bf16.msra.mxu0 0
      %1189 = vmatprep.subr.bf16.mxu0 0
      %1190 = vmatpush1.bf16.msra.mxu0 0
      %1191 = vmatprep.subr.bf16.mxu0 0
      %1192 = vmatpush1.bf16.msra.mxu0 0
      %1193 = vmatprep.subr.bf16.mxu0 0
      %1194 = vmatpush1.bf16.msra.mxu0 0
      %1195 = vmatprep.subr.bf16.mxu0 0
      %1196 = vmatpush1.bf16.msra.mxu0 0
      %1197 = vmatprep.subr.bf16.mxu0 0
      %1198 = vmatpush1.bf16.msra.mxu0 0
      %1199 = vmatprep.subr.bf16.mxu0 0
      %1200 = vmatpush1.bf16.msra.mxu0 0
      %1201 = vmatprep.subr.bf16.mxu0 0
      %1202 = vmatpush1.bf16.msra.mxu0 0
      %1203 = vmatprep.subr.bf16.mxu0 0
      %1204 = vmatpush1.bf16.msra.mxu0 0
      %1205 = vmatprep.subr.bf16.mxu0 0
      %1206 = vmatpush1.bf16.msra.mxu0 0
      %1207 = vmatprep.subr.bf16.mxu0 0
      %1208 = vmatpush1.bf16.msra.mxu0 0
      %1209 = vmatprep.subr.bf16.mxu0 0
      %1210 = vmatpush1.bf16.msra.mxu0 0
      %1211 = vmatprep.subr.bf16.mxu0 0
      %1212 = vmatpush1.bf16.msra.mxu0 0
      %1213 = vmatprep.subr.bf16.mxu0 0
      %1214 = vmatpush1.bf16.msra.mxu0 0
      %1215 = vmatprep.mubr.bf16.mxu0 0
      %1216 = vmatmul.mubr.bf16.gmra.mrb[0].mxu0 %v1181
      %v1217 = vpop.f32.mrb[0].mxu0
      %v1218 = vadd.f32 0.0, %v1217
      %v1219 = vpop.f32.mrb[0].mxu0
      %v1220 = vpop.f32.mrb[0].mxu0
      %v1221 = vadd.f32 0.0, %v1220
      %v1222 = vpop.f32.mrb[0].mxu0
      %1223 = vdwg.mxu0
      %v1224 = vpack.c.bf16 %v1080, %v1077
      %v1225 = vpack.c.bf16 %v1127, %v1124
      %v1226 = vpack.c.bf16 %v1174, %v1171
      %v1227 = vpack.c.bf16 %v1221, %v1218
      %v1232 = vunpack.c.l.b16 %v1224
      %v1233 = vunpack.c.h.b16 %v1224
      %v1234 = vunpack.c.l.b16 %v1225
      %v1235 = vunpack.c.h.b16 %v1225
      %v1236 = vunpack.c.l.b16 %v1226
      %v1237 = vunpack.c.h.b16 %v1226
      %v1238 = vunpack.c.l.b16 %v1227
      %v1239 = vunpack.c.h.b16 %v1227
      %v1240 = vpack.c.b16 %v1232, %v1232
      %v1241 = vpack.c.b16 %v1233, %v1233
      %v1242 = vpack.c.b16 %v1234, %v1234
      %v1243 = vpack.c.b16 %v1235, %v1235
      %v1244 = vpack.c.b16 %v1236, %v1236
      %v1245 = vpack.c.b16 %v1237, %v1237
      %v1246 = vpack.c.b16 %v1238, %v1238
      %v1247 = vpack.c.b16 %v1239, %v1239
      %s1256 = scalar_lea.vmem %s150, 8
      %1257 = vst.msk [vmem:[%s1256] sm:$0xf] %vm715, %v1240
      %1258 = vst.msk [vmem:[%s1256 + $0x4] sm:$0xf] %vm715, %v1241
      %1259 = vst.msk [vmem:[%s1256 + $0x20] sm:$0xf] %vm715, %v1242
      %1260 = vst.msk [vmem:[%s1256 + $0x24] sm:$0xf] %vm715, %v1243
      %1261 = vst.msk [vmem:[%s1256 + $0x40] sm:$0xf] %vm715, %v1244
      %1262 = vst.msk [vmem:[%s1256 + $0x44] sm:$0xf] %vm715, %v1245
      %1263 = vst.msk [vmem:[%s1256 + $0x60] sm:$0xf] %vm715, %v1246
      %1264 = vst.msk [vmem:[%s1256 + $0x64] sm:$0xf] %vm715, %v1247
      %1265 = vrot.lane.b32.xlu0 %v173, 112
      %v1266 = vpop.permute.xlu0 %1265
      %1267 = vrot.lane.b32.xlu0 %v173, 80
      %v1268 = vpop.permute.xlu0 %1267
      %v1270 = vsel %vm176, %v1266, 0
      %v1273 = vsel %vm176, %v1268, 0
      %1275 = vmatprep.subr.bf16.mxu0 0
      %1276 = vmatpush1.bf16.xpose.msra.mxu0 %v1273
      %1277 = vmatprep.subr.bf16.mxu0 0
      %1278 = vmatpush1.bf16.xpose.msra.mxu0 0
      %1279 = vmatprep.subr.bf16.mxu0 0
      %1280 = vmatpush1.bf16.xpose.msra.mxu0 0
      %1281 = vmatprep.subr.bf16.mxu0 0
      %1282 = vmatpush1.bf16.xpose.msra.mxu0 0
      %1283 = vmatprep.subr.bf16.mxu0 0
      %1284 = vmatpush1.bf16.xpose.msra.mxu0 0
      %1285 = vmatprep.subr.bf16.mxu0 0
      %1286 = vmatpush1.bf16.xpose.msra.mxu0 0
      %1287 = vmatprep.subr.bf16.mxu0 0
      %1288 = vmatpush1.bf16.xpose.msra.mxu0 0
      %1289 = vmatprep.subr.bf16.mxu0 0
      %1290 = vmatpush1.bf16.xpose.msra.mxu0 0
      %1291 = vmatprep.subr.bf16.mxu0 0
      %1292 = vmatpush1.bf16.xpose.msra.mxu0 0
      %1293 = vmatprep.subr.bf16.mxu0 0
      %1294 = vmatpush1.bf16.xpose.msra.mxu0 0
      %1295 = vmatprep.subr.bf16.mxu0 0
      %1296 = vmatpush1.bf16.xpose.msra.mxu0 0
      %1297 = vmatprep.subr.bf16.mxu0 0
      %1298 = vmatpush1.bf16.xpose.msra.mxu0 0
      %1299 = vmatprep.subr.bf16.mxu0 0
      %1300 = vmatpush1.bf16.xpose.msra.mxu0 0
      %1301 = vmatprep.subr.bf16.mxu0 0
      %1302 = vmatpush1.bf16.xpose.msra.mxu0 0
      %1303 = vmatprep.subr.bf16.mxu0 0
      %1304 = vmatpush1.bf16.xpose.msra.mxu0 0
      %1305 = vmatprep.subr.bf16.mxu0 0
      %1306 = vmatpush1.bf16.xpose.msra.mxu0 0
      %1307 = vmatprep.mubr.bf16.mxu0 0
      %1308 = vmatmul.mubr.bf16.gmra.mrb[0].mxu0 %v1270
      %v1309 = vpop.f32.mrb[0].mxu0
      %v1310 = vadd.f32 0.0, %v1309
      %v1311 = vpop.f32.mrb[0].mxu0
      %v1312 = vpop.f32.mrb[0].mxu0
      %v1313 = vadd.f32 0.0, %v1312
      %v1314 = vpop.f32.mrb[0].mxu0
      %1315 = vdwg.mxu0
      %1316 = vrot.lane.b32.xlu0 %v228, 112
      %v1317 = vpop.permute.xlu0 %1316
      %1318 = vrot.lane.b32.xlu0 %v228, 80
      %v1319 = vpop.permute.xlu0 %1318
      %v1321 = vsel %vm176, %v1317, 0
      %v1324 = vsel %vm176, %v1319, 0
      %1326 = vmatprep.subr.bf16.mxu0 0
      %1327 = vmatpush1.bf16.xpose.msra.mxu0 %v1324
      %1328 = vmatprep.subr.bf16.mxu0 0
      %1329 = vmatpush1.bf16.xpose.msra.mxu0 0
      %1330 = vmatprep.subr.bf16.mxu0 0
      %1331 = vmatpush1.bf16.xpose.msra.mxu0 0
      %1332 = vmatprep.subr.bf16.mxu0 0
      %1333 = vmatpush1.bf16.xpose.msra.mxu0 0
      %1334 = vmatprep.subr.bf16.mxu0 0
      %1335 = vmatpush1.bf16.xpose.msra.mxu0 0
      %1336 = vmatprep.subr.bf16.mxu0 0
      %1337 = vmatpush1.bf16.xpose.msra.mxu0 0
      %1338 = vmatprep.subr.bf16.mxu0 0
      %1339 = vmatpush1.bf16.xpose.msra.mxu0 0
      %1340 = vmatprep.subr.bf16.mxu0 0
      %1341 = vmatpush1.bf16.xpose.msra.mxu0 0
      %1342 = vmatprep.subr.bf16.mxu0 0
      %1343 = vmatpush1.bf16.xpose.msra.mxu0 0
      %1344 = vmatprep.subr.bf16.mxu0 0
      %1345 = vmatpush1.bf16.xpose.msra.mxu0 0
      %1346 = vmatprep.subr.bf16.mxu0 0
      %1347 = vmatpush1.bf16.xpose.msra.mxu0 0
      %1348 = vmatprep.subr.bf16.mxu0 0
      %1349 = vmatpush1.bf16.xpose.msra.mxu0 0
      %1350 = vmatprep.subr.bf16.mxu0 0
      %1351 = vmatpush1.bf16.xpose.msra.mxu0 0
      %1352 = vmatprep.subr.bf16.mxu0 0
      %1353 = vmatpush1.bf16.xpose.msra.mxu0 0
      %1354 = vmatprep.subr.bf16.mxu0 0
      %1355 = vmatpush1.bf16.xpose.msra.mxu0 0
      %1356 = vmatprep.subr.bf16.mxu0 0
      %1357 = vmatpush1.bf16.xpose.msra.mxu0 0
      %1358 = vmatprep.mubr.bf16.mxu0 0
      %1359 = vmatmul.mubr.bf16.gmra.mrb[0].mxu0 %v1321
      %v1360 = vpop.f32.mrb[0].mxu0
      %v1361 = vadd.f32 0.0, %v1360
      %v1362 = vpop.f32.mrb[0].mxu0
      %v1363 = vpop.f32.mrb[0].mxu0
      %v1364 = vadd.f32 0.0, %v1363
      %v1365 = vpop.f32.mrb[0].mxu0
      %1366 = vdwg.mxu0
      %1367 = vrot.lane.b32.xlu0 %v282, 112
      %v1368 = vpop.permute.xlu0 %1367
      %1369 = vrot.lane.b32.xlu0 %v282, 80
      %v1370 = vpop.permute.xlu0 %1369
      %v1372 = vsel %vm176, %v1368, 0
      %v1375 = vsel %vm176, %v1370, 0
      %1377 = vmatprep.subr.bf16.mxu0 0
      %1378 = vmatpush1.bf16.xpose.msra.mxu0 %v1375
      %1379 = vmatprep.subr.bf16.mxu0 0
      %1380 = vmatpush1.bf16.xpose.msra.mxu0 0
      %1381 = vmatprep.subr.bf16.mxu0 0
      %1382 = vmatpush1.bf16.xpose.msra.mxu0 0
      %1383 = vmatprep.subr.bf16.mxu0 0
      %1384 = vmatpush1.bf16.xpose.msra.mxu0 0
      %1385 = vmatprep.subr.bf16.mxu0 0
      %1386 = vmatpush1.bf16.xpose.msra.mxu0 0
      %1387 = vmatprep.subr.bf16.mxu0 0
      %1388 = vmatpush1.bf16.xpose.msra.mxu0 0
      %1389 = vmatprep.subr.bf16.mxu0 0
      %1390 = vmatpush1.bf16.xpose.msra.mxu0 0
      %1391 = vmatprep.subr.bf16.mxu0 0
      %1392 = vmatpush1.bf16.xpose.msra.mxu0 0
      %1393 = vmatprep.subr.bf16.mxu0 0
      %1394 = vmatpush1.bf16.xpose.msra.mxu0 0
      %1395 = vmatprep.subr.bf16.mxu0 0
      %1396 = vmatpush1.bf16.xpose.msra.mxu0 0
      %1397 = vmatprep.subr.bf16.mxu0 0
      %1398 = vmatpush1.bf16.xpose.msra.mxu0 0
      %1399 = vmatprep.subr.bf16.mxu0 0
      %1400 = vmatpush1.bf16.xpose.msra.mxu0 0
      %1401 = vmatprep.subr.bf16.mxu0 0
      %1402 = vmatpush1.bf16.xpose.msra.mxu0 0
      %1403 = vmatprep.subr.bf16.mxu0 0
      %1404 = vmatpush1.bf16.xpose.msra.mxu0 0
      %1405 = vmatprep.subr.bf16.mxu0 0
      %1406 = vmatpush1.bf16.xpose.msra.mxu0 0
      %1407 = vmatprep.subr.bf16.mxu0 0
      %1408 = vmatpush1.bf16.xpose.msra.mxu0 0
      %1409 = vmatprep.mubr.bf16.mxu0 0
      %1410 = vmatmul.mubr.bf16.gmra.mrb[0].mxu0 %v1372
      %v1411 = vpop.f32.mrb[0].mxu0
      %v1412 = vadd.f32 0.0, %v1411
      %v1413 = vpop.f32.mrb[0].mxu0
      %v1414 = vpop.f32.mrb[0].mxu0
      %v1415 = vadd.f32 0.0, %v1414
      %v1416 = vpop.f32.mrb[0].mxu0
      %1417 = vdwg.mxu0
      %1418 = vrot.lane.b32.xlu0 %v336, 112
      %v1419 = vpop.permute.xlu0 %1418
      %1420 = vrot.lane.b32.xlu0 %v336, 80
      %v1421 = vpop.permute.xlu0 %1420
      %v1423 = vsel %vm176, %v1419, 0
      %v1426 = vsel %vm176, %v1421, 0
      %1428 = vmatprep.subr.bf16.mxu0 0
      %1429 = vmatpush1.bf16.xpose.msra.mxu0 %v1426
      %1430 = vmatprep.subr.bf16.mxu0 0
      %1431 = vmatpush1.bf16.xpose.msra.mxu0 0
      %1432 = vmatprep.subr.bf16.mxu0 0
      %1433 = vmatpush1.bf16.xpose.msra.mxu0 0
      %1434 = vmatprep.subr.bf16.mxu0 0
      %1435 = vmatpush1.bf16.xpose.msra.mxu0 0
      %1436 = vmatprep.subr.bf16.mxu0 0
      %1437 = vmatpush1.bf16.xpose.msra.mxu0 0
      %1438 = vmatprep.subr.bf16.mxu0 0
      %1439 = vmatpush1.bf16.xpose.msra.mxu0 0
      %1440 = vmatprep.subr.bf16.mxu0 0
      %1441 = vmatpush1.bf16.xpose.msra.mxu0 0
      %1442 = vmatprep.subr.bf16.mxu0 0
      %1443 = vmatpush1.bf16.xpose.msra.mxu0 0
      %1444 = vmatprep.subr.bf16.mxu0 0
      %1445 = vmatpush1.bf16.xpose.msra.mxu0 0
      %1446 = vmatprep.subr.bf16.mxu0 0
      %1447 = vmatpush1.bf16.xpose.msra.mxu0 0
      %1448 = vmatprep.subr.bf16.mxu0 0
      %1449 = vmatpush1.bf16.xpose.msra.mxu0 0
      %1450 = vmatprep.subr.bf16.mxu0 0
      %1451 = vmatpush1.bf16.xpose.msra.mxu0 0
      %1452 = vmatprep.subr.bf16.mxu0 0
      %1453 = vmatpush1.bf16.xpose.msra.mxu0 0
      %1454 = vmatprep.subr.bf16.mxu0 0
      %1455 = vmatpush1.bf16.xpose.msra.mxu0 0
      %1456 = vmatprep.subr.bf16.mxu0 0
      %1457 = vmatpush1.bf16.xpose.msra.mxu0 0
      %1458 = vmatprep.subr.bf16.mxu0 0
      %1459 = vmatpush1.bf16.xpose.msra.mxu0 0
      %1460 = vmatprep.mubr.bf16.mxu0 0
      %1461 = vmatmul.mubr.bf16.gmra.mrb[0].mxu0 %v1423
      %v1462 = vpop.f32.mrb[0].mxu0
      %v1463 = vadd.f32 0.0, %v1462
      %v1464 = vpop.f32.mrb[0].mxu0
      %v1465 = vpop.f32.mrb[0].mxu0
      %v1466 = vadd.f32 0.0, %v1465
      %v1467 = vpop.f32.mrb[0].mxu0
      %1468 = vdwg.mxu0
      %v1469 = vmul.f32 %v1310, 0.35355338
      %v1470 = vmul.f32 %v1313, 0.35355338
      %v1471 = vmul.f32 %v1361, 0.35355338
      %v1472 = vmul.f32 %v1364, 0.35355338
      %v1473 = vmul.f32 %v1412, 0.35355338
      %v1474 = vmul.f32 %v1415, 0.35355338
      %v1475 = vmul.f32 %v1463, 0.35355338
      %v1476 = vmul.f32 %v1466, 0.35355338
      %v1477 = vadd.f32 %v1469, %v165
      %v1478 = vadd.f32 %v1470, %v166
      %v1479 = vadd.f32 %v1471, %v165
      %v1480 = vadd.f32 %v1472, %v166
      %v1481 = vadd.f32 %v1473, %v165
      %v1482 = vadd.f32 %v1474, %v166
      %v1483 = vadd.f32 %v1475, %v165
      %v1484 = vadd.f32 %v1476, %v166
      %v1485 = vsel %vm402, %v1477, -inf
      %1486 = vmax.xlane.f32.xlu0 %v1485
      %v1487 = vpop.xlane.xlu0 %1486
      %v1488 = vsel %vm402, %v1478, -inf
      %1489 = vmax.xlane.f32.xlu0 %v1488
      %v1490 = vpop.xlane.xlu0 %1489
      %v1491 = vsel %vm402, %v1479, -inf
      %1492 = vmax.xlane.f32.xlu0 %v1491
      %v1493 = vpop.xlane.xlu0 %1492
      %v1494 = vsel %vm402, %v1480, -inf
      %1495 = vmax.xlane.f32.xlu0 %v1494
      %v1496 = vpop.xlane.xlu0 %1495
      %v1497 = vsel %vm402, %v1481, -inf
      %1498 = vmax.xlane.f32.xlu0 %v1497
      %v1499 = vpop.xlane.xlu0 %1498
      %v1500 = vsel %vm402, %v1482, -inf
      %1501 = vmax.xlane.f32.xlu0 %v1500
      %v1502 = vpop.xlane.xlu0 %1501
      %v1503 = vsel %vm402, %v1483, -inf
      %1504 = vmax.xlane.f32.xlu0 %v1503
      %v1505 = vpop.xlane.xlu0 %1504
      %v1506 = vsel %vm402, %v1484, -inf
      %1507 = vmax.xlane.f32.xlu0 %v1506
      %v1508 = vpop.xlane.xlu0 %1507
      %v1509 = vsub.f32 %v1477, %v1487
      %v1510 = vsub.f32 %v1478, %v1490
      %v1511 = vsub.f32 %v1479, %v1493
      %v1512 = vsub.f32 %v1480, %v1496
      %v1513 = vsub.f32 %v1481, %v1499
      %v1514 = vsub.f32 %v1482, %v1502
      %v1515 = vsub.f32 %v1483, %v1505
      %v1516 = vsub.f32 %v1484, %v1508
      %v1517 = vmul.f32 %v1509, 1.442695
      %v1518 = vpow.pop %v1517
      %v1519 = vmul.f32 %v1510, 1.442695
      %v1520 = vpow.pop %v1519
      %v1521 = vmul.f32 %v1511, 1.442695
      %v1522 = vpow.pop %v1521
      %v1523 = vmul.f32 %v1512, 1.442695
      %v1524 = vpow.pop %v1523
      %v1525 = vmul.f32 %v1513, 1.442695
      %v1526 = vpow.pop %v1525
      %v1527 = vmul.f32 %v1514, 1.442695
      %v1528 = vpow.pop %v1527
      %v1529 = vmul.f32 %v1515, 1.442695
      %v1530 = vpow.pop %v1529
      %v1531 = vmul.f32 %v1516, 1.442695
      %v1532 = vpow.pop %v1531
      %v1533 = vsel %vm402, %v1518, 0.0
      %1534 = vadd.xlane.f32.xlu0 %v1533
      %v1535 = vpop.xlane.xlu0 %1534
      %v1536 = vsel %vm402, %v1520, 0.0
      %1537 = vadd.xlane.f32.xlu0 %v1536
      %v1538 = vpop.xlane.xlu0 %1537
      %v1539 = vsel %vm402, %v1522, 0.0
      %1540 = vadd.xlane.f32.xlu0 %v1539
      %v1541 = vpop.xlane.xlu0 %1540
      %v1542 = vsel %vm402, %v1524, 0.0
      %1543 = vadd.xlane.f32.xlu0 %v1542
      %v1544 = vpop.xlane.xlu0 %1543
      %v1545 = vsel %vm402, %v1526, 0.0
      %1546 = vadd.xlane.f32.xlu0 %v1545
      %v1547 = vpop.xlane.xlu0 %1546
      %v1548 = vsel %vm402, %v1528, 0.0
      %1549 = vadd.xlane.f32.xlu0 %v1548
      %v1550 = vpop.xlane.xlu0 %1549
      %v1551 = vsel %vm402, %v1530, 0.0
      %1552 = vadd.xlane.f32.xlu0 %v1551
      %v1553 = vpop.xlane.xlu0 %1552
      %v1554 = vsel %vm402, %v1532, 0.0
      %1555 = vadd.xlane.f32.xlu0 %v1554
      %v1556 = vpop.xlane.xlu0 %1555
      %v1557 = vrcp.pop %v1535
      %v1558 = vrcp.pop %v1538
      %v1559 = vrcp.pop %v1541
      %v1560 = vrcp.pop %v1544
      %v1561 = vrcp.pop %v1547
      %v1562 = vrcp.pop %v1550
      %v1563 = vrcp.pop %v1553
      %v1564 = vrcp.pop %v1556
      %v1565 = vmul.f32 %v1518, %v1557
      %v1566 = vmul.f32 %v1520, %v1558
      %v1567 = vmul.f32 %v1522, %v1559
      %v1568 = vmul.f32 %v1524, %v1560
      %v1569 = vmul.f32 %v1526, %v1561
      %v1570 = vmul.f32 %v1528, %v1562
      %v1571 = vmul.f32 %v1530, %v1563
      %v1572 = vmul.f32 %v1532, %v1564
      %v1573 = vpack.c.bf16 %v1566, %v1565
      %v1574 = vpack.c.bf16 %v1568, %v1567
      %v1575 = vpack.c.bf16 %v1570, %v1569
      %v1576 = vpack.c.bf16 %v1572, %v1571
      %1577 = vrot.lane.b32.xlu0 %v173, 48
      %v1578 = vpop.permute.xlu0 %1577
      %v1581 = vsel %vm402, %v1573, 0
      %1583 = vmatprep.subr.bf16.mxu0 0
      %1584 = vmatpush1.bf16.msra.mxu0 %v1578
      %1585 = vmatprep.subr.bf16.mxu0 0
      %1586 = vmatpush1.bf16.msra.mxu0 0
      %1587 = vmatprep.subr.bf16.mxu0 0
      %1588 = vmatpush1.bf16.msra.mxu0 0
      %1589 = vmatprep.subr.bf16.mxu0 0
      %1590 = vmatpush1.bf16.msra.mxu0 0
      %1591 = vmatprep.subr.bf16.mxu0 0
      %1592 = vmatpush1.bf16.msra.mxu0 0
      %1593 = vmatprep.subr.bf16.mxu0 0
      %1594 = vmatpush1.bf16.msra.mxu0 0
      %1595 = vmatprep.subr.bf16.mxu0 0
      %1596 = vmatpush1.bf16.msra.mxu0 0
      %1597 = vmatprep.subr.bf16.mxu0 0
      %1598 = vmatpush1.bf16.msra.mxu0 0
      %1599 = vmatprep.subr.bf16.mxu0 0
      %1600 = vmatpush1.bf16.msra.mxu0 0
      %1601 = vmatprep.subr.bf16.mxu0 0
      %1602 = vmatpush1.bf16.msra.mxu0 0
      %1603 = vmatprep.subr.bf16.mxu0 0
      %1604 = vmatpush1.bf16.msra.mxu0 0
      %1605 = vmatprep.subr.bf16.mxu0 0
      %1606 = vmatpush1.bf16.msra.mxu0 0
      %1607 = vmatprep.subr.bf16.mxu0 0
      %1608 = vmatpush1.bf16.msra.mxu0 0
      %1609 = vmatprep.subr.bf16.mxu0 0
      %1610 = vmatpush1.bf16.msra.mxu0 0
      %1611 = vmatprep.subr.bf16.mxu0 0
      %1612 = vmatpush1.bf16.msra.mxu0 0
      %1613 = vmatprep.subr.bf16.mxu0 0
      %1614 = vmatpush1.bf16.msra.mxu0 0
      %1615 = vmatprep.mubr.bf16.mxu0 0
      %1616 = vmatmul.mubr.bf16.gmra.mrb[0].mxu0 %v1581
      %v1617 = vpop.f32.mrb[0].mxu0
      %v1618 = vadd.f32 0.0, %v1617
      %v1619 = vpop.f32.mrb[0].mxu0
      %v1620 = vpop.f32.mrb[0].mxu0
      %v1621 = vadd.f32 0.0, %v1620
      %v1622 = vpop.f32.mrb[0].mxu0
      %1623 = vdwg.mxu0
      %1624 = vrot.lane.b32.xlu0 %v228, 48
      %v1625 = vpop.permute.xlu0 %1624
      %v1628 = vsel %vm402, %v1574, 0
      %1630 = vmatprep.subr.bf16.mxu0 0
      %1631 = vmatpush1.bf16.msra.mxu0 %v1625
      %1632 = vmatprep.subr.bf16.mxu0 0
      %1633 = vmatpush1.bf16.msra.mxu0 0
      %1634 = vmatprep.subr.bf16.mxu0 0
      %1635 = vmatpush1.bf16.msra.mxu0 0
      %1636 = vmatprep.subr.bf16.mxu0 0
      %1637 = vmatpush1.bf16.msra.mxu0 0
      %1638 = vmatprep.subr.bf16.mxu0 0
      %1639 = vmatpush1.bf16.msra.mxu0 0
      %1640 = vmatprep.subr.bf16.mxu0 0
      %1641 = vmatpush1.bf16.msra.mxu0 0
      %1642 = vmatprep.subr.bf16.mxu0 0
      %1643 = vmatpush1.bf16.msra.mxu0 0
      %1644 = vmatprep.subr.bf16.mxu0 0
      %1645 = vmatpush1.bf16.msra.mxu0 0
      %1646 = vmatprep.subr.bf16.mxu0 0
      %1647 = vmatpush1.bf16.msra.mxu0 0
      %1648 = vmatprep.subr.bf16.mxu0 0
      %1649 = vmatpush1.bf16.msra.mxu0 0
      %1650 = vmatprep.subr.bf16.mxu0 0
      %1651 = vmatpush1.bf16.msra.mxu0 0
      %1652 = vmatprep.subr.bf16.mxu0 0
      %1653 = vmatpush1.bf16.msra.mxu0 0
      %1654 = vmatprep.subr.bf16.mxu0 0
      %1655 = vmatpush1.bf16.msra.mxu0 0
      %1656 = vmatprep.subr.bf16.mxu0 0
      %1657 = vmatpush1.bf16.msra.mxu0 0
      %1658 = vmatprep.subr.bf16.mxu0 0
      %1659 = vmatpush1.bf16.msra.mxu0 0
      %1660 = vmatprep.subr.bf16.mxu0 0
      %1661 = vmatpush1.bf16.msra.mxu0 0
      %1662 = vmatprep.mubr.bf16.mxu0 0
      %1663 = vmatmul.mubr.bf16.gmra.mrb[0].mxu0 %v1628
      %v1664 = vpop.f32.mrb[0].mxu0
      %v1665 = vadd.f32 0.0, %v1664
      %v1666 = vpop.f32.mrb[0].mxu0
      %v1667 = vpop.f32.mrb[0].mxu0
      %v1668 = vadd.f32 0.0, %v1667
      %v1669 = vpop.f32.mrb[0].mxu0
      %1670 = vdwg.mxu0
      %1671 = vrot.lane.b32.xlu0 %v282, 48
      %v1672 = vpop.permute.xlu0 %1671
      %v1675 = vsel %vm402, %v1575, 0
      %1677 = vmatprep.subr.bf16.mxu0 0
      %1678 = vmatpush1.bf16.msra.mxu0 %v1672
      %1679 = vmatprep.subr.bf16.mxu0 0
      %1680 = vmatpush1.bf16.msra.mxu0 0
      %1681 = vmatprep.subr.bf16.mxu0 0
      %1682 = vmatpush1.bf16.msra.mxu0 0
      %1683 = vmatprep.subr.bf16.mxu0 0
      %1684 = vmatpush1.bf16.msra.mxu0 0
      %1685 = vmatprep.subr.bf16.mxu0 0
      %1686 = vmatpush1.bf16.msra.mxu0 0
      %1687 = vmatprep.subr.bf16.mxu0 0
      %1688 = vmatpush1.bf16.msra.mxu0 0
      %1689 = vmatprep.subr.bf16.mxu0 0
      %1690 = vmatpush1.bf16.msra.mxu0 0
      %1691 = vmatprep.subr.bf16.mxu0 0
      %1692 = vmatpush1.bf16.msra.mxu0 0
      %1693 = vmatprep.subr.bf16.mxu0 0
      %1694 = vmatpush1.bf16.msra.mxu0 0
      %1695 = vmatprep.subr.bf16.mxu0 0
      %1696 = vmatpush1.bf16.msra.mxu0 0
      %1697 = vmatprep.subr.bf16.mxu0 0
      %1698 = vmatpush1.bf16.msra.mxu0 0
      %1699 = vmatprep.subr.bf16.mxu0 0
      %1700 = vmatpush1.bf16.msra.mxu0 0
      %1701 = vmatprep.subr.bf16.mxu0 0
      %1702 = vmatpush1.bf16.msra.mxu0 0
      %1703 = vmatprep.subr.bf16.mxu0 0
      %1704 = vmatpush1.bf16.msra.mxu0 0
      %1705 = vmatprep.subr.bf16.mxu0 0
      %1706 = vmatpush1.bf16.msra.mxu0 0
      %1707 = vmatprep.subr.bf16.mxu0 0
      %1708 = vmatpush1.bf16.msra.mxu0 0
      %1709 = vmatprep.mubr.bf16.mxu0 0
      %1710 = vmatmul.mubr.bf16.gmra.mrb[0].mxu0 %v1675
      %v1711 = vpop.f32.mrb[0].mxu0
      %v1712 = vadd.f32 0.0, %v1711
      %v1713 = vpop.f32.mrb[0].mxu0
      %v1714 = vpop.f32.mrb[0].mxu0
      %v1715 = vadd.f32 0.0, %v1714
      %v1716 = vpop.f32.mrb[0].mxu0
      %1717 = vdwg.mxu0
      %1718 = vrot.lane.b32.xlu0 %v336, 48
      %v1719 = vpop.permute.xlu0 %1718
      %v1722 = vsel %vm402, %v1576, 0
      %1724 = vmatprep.subr.bf16.mxu0 0
      %1725 = vmatpush1.bf16.msra.mxu0 %v1719
      %1726 = vmatprep.subr.bf16.mxu0 0
      %1727 = vmatpush1.bf16.msra.mxu0 0
      %1728 = vmatprep.subr.bf16.mxu0 0
      %1729 = vmatpush1.bf16.msra.mxu0 0
      %1730 = vmatprep.subr.bf16.mxu0 0
      %1731 = vmatpush1.bf16.msra.mxu0 0
      %1732 = vmatprep.subr.bf16.mxu0 0
      %1733 = vmatpush1.bf16.msra.mxu0 0
      %1734 = vmatprep.subr.bf16.mxu0 0
      %1735 = vmatpush1.bf16.msra.mxu0 0
      %1736 = vmatprep.subr.bf16.mxu0 0
      %1737 = vmatpush1.bf16.msra.mxu0 0
      %1738 = vmatprep.subr.bf16.mxu0 0
      %1739 = vmatpush1.bf16.msra.mxu0 0
      %1740 = vmatprep.subr.bf16.mxu0 0
      %1741 = vmatpush1.bf16.msra.mxu0 0
      %1742 = vmatprep.subr.bf16.mxu0 0
      %1743 = vmatpush1.bf16.msra.mxu0 0
      %1744 = vmatprep.subr.bf16.mxu0 0
      %1745 = vmatpush1.bf16.msra.mxu0 0
      %1746 = vmatprep.subr.bf16.mxu0 0
      %1747 = vmatpush1.bf16.msra.mxu0 0
      %1748 = vmatprep.subr.bf16.mxu0 0
      %1749 = vmatpush1.bf16.msra.mxu0 0
      %1750 = vmatprep.subr.bf16.mxu0 0
      %1751 = vmatpush1.bf16.msra.mxu0 0
      %1752 = vmatprep.subr.bf16.mxu0 0
      %1753 = vmatpush1.bf16.msra.mxu0 0
      %1754 = vmatprep.subr.bf16.mxu0 0
      %1755 = vmatpush1.bf16.msra.mxu0 0
      %1756 = vmatprep.mubr.bf16.mxu0 0
      %1757 = vmatmul.mubr.bf16.gmra.mrb[0].mxu0 %v1722
      %v1758 = vpop.f32.mrb[0].mxu0
      %v1759 = vadd.f32 0.0, %v1758
      %v1760 = vpop.f32.mrb[0].mxu0
      %v1761 = vpop.f32.mrb[0].mxu0
      %v1762 = vadd.f32 0.0, %v1761
      %v1763 = vpop.f32.mrb[0].mxu0
      %1764 = vdwg.mxu0
      %v1765 = vpack.c.bf16 %v1621, %v1618
      %v1766 = vpack.c.bf16 %v1668, %v1665
      %v1767 = vpack.c.bf16 %v1715, %v1712
      %v1768 = vpack.c.bf16 %v1762, %v1759
      %v1773 = vunpack.c.l.b16 %v1765
      %v1774 = vunpack.c.h.b16 %v1765
      %v1775 = vunpack.c.l.b16 %v1766
      %v1776 = vunpack.c.h.b16 %v1766
      %v1777 = vunpack.c.l.b16 %v1767
      %v1778 = vunpack.c.h.b16 %v1767
      %v1779 = vunpack.c.l.b16 %v1768
      %v1780 = vunpack.c.h.b16 %v1768
      %v1781 = vpack.c.b16 %v1773, %v1773
      %v1782 = vpack.c.b16 %v1774, %v1774
      %v1783 = vpack.c.b16 %v1775, %v1775
      %v1784 = vpack.c.b16 %v1776, %v1776
      %v1785 = vpack.c.b16 %v1777, %v1777
      %v1786 = vpack.c.b16 %v1778, %v1778
      %v1787 = vpack.c.b16 %v1779, %v1779
      %v1788 = vpack.c.b16 %v1780, %v1780
      %s1797 = scalar_lea.vmem %s150, 16
      %1798 = vst.msk [vmem:[%s1797] sm:$0xf] %vm715, %v1781
      %1799 = vst.msk [vmem:[%s1797 + $0x4] sm:$0xf] %vm715, %v1782
      %1800 = vst.msk [vmem:[%s1797 + $0x20] sm:$0xf] %vm715, %v1783
      %1801 = vst.msk [vmem:[%s1797 + $0x24] sm:$0xf] %vm715, %v1784
      %1802 = vst.msk [vmem:[%s1797 + $0x40] sm:$0xf] %vm715, %v1785
      %1803 = vst.msk [vmem:[%s1797 + $0x44] sm:$0xf] %vm715, %v1786
      %1804 = vst.msk [vmem:[%s1797 + $0x60] sm:$0xf] %vm715, %v1787
      %1805 = vst.msk [vmem:[%s1797 + $0x64] sm:$0xf] %vm715, %v1788
      %1806 = vrot.lane.b32.xlu0 %v173, 104
      %v1807 = vpop.permute.xlu0 %1806
      %1808 = vrot.lane.b32.xlu0 %v173, 72
      %v1809 = vpop.permute.xlu0 %1808
      %v1811 = vsel %vm176, %v1807, 0
      %v1814 = vsel %vm176, %v1809, 0
      %1816 = vmatprep.subr.bf16.mxu0 0
      %1817 = vmatpush1.bf16.xpose.msra.mxu0 %v1814
      %1818 = vmatprep.subr.bf16.mxu0 0
      %1819 = vmatpush1.bf16.xpose.msra.mxu0 0
      %1820 = vmatprep.subr.bf16.mxu0 0
      %1821 = vmatpush1.bf16.xpose.msra.mxu0 0
      %1822 = vmatprep.subr.bf16.mxu0 0
      %1823 = vmatpush1.bf16.xpose.msra.mxu0 0
      %1824 = vmatprep.subr.bf16.mxu0 0
      %1825 = vmatpush1.bf16.xpose.msra.mxu0 0
      %1826 = vmatprep.subr.bf16.mxu0 0
      %1827 = vmatpush1.bf16.xpose.msra.mxu0 0
      %1828 = vmatprep.subr.bf16.mxu0 0
      %1829 = vmatpush1.bf16.xpose.msra.mxu0 0
      %1830 = vmatprep.subr.bf16.mxu0 0
      %1831 = vmatpush1.bf16.xpose.msra.mxu0 0
      %1832 = vmatprep.subr.bf16.mxu0 0
      %1833 = vmatpush1.bf16.xpose.msra.mxu0 0
      %1834 = vmatprep.subr.bf16.mxu0 0
      %1835 = vmatpush1.bf16.xpose.msra.mxu0 0
      %1836 = vmatprep.subr.bf16.mxu0 0
      %1837 = vmatpush1.bf16.xpose.msra.mxu0 0
      %1838 = vmatprep.subr.bf16.mxu0 0
      %1839 = vmatpush1.bf16.xpose.msra.mxu0 0
      %1840 = vmatprep.subr.bf16.mxu0 0
      %1841 = vmatpush1.bf16.xpose.msra.mxu0 0
      %1842 = vmatprep.subr.bf16.mxu0 0
      %1843 = vmatpush1.bf16.xpose.msra.mxu0 0
      %1844 = vmatprep.subr.bf16.mxu0 0
      %1845 = vmatpush1.bf16.xpose.msra.mxu0 0
      %1846 = vmatprep.subr.bf16.mxu0 0
      %1847 = vmatpush1.bf16.xpose.msra.mxu0 0
      %1848 = vmatprep.mubr.bf16.mxu0 0
      %1849 = vmatmul.mubr.bf16.gmra.mrb[0].mxu0 %v1811
      %v1850 = vpop.f32.mrb[0].mxu0
      %v1851 = vadd.f32 0.0, %v1850
      %v1852 = vpop.f32.mrb[0].mxu0
      %v1853 = vpop.f32.mrb[0].mxu0
      %v1854 = vadd.f32 0.0, %v1853
      %v1855 = vpop.f32.mrb[0].mxu0
      %1856 = vdwg.mxu0
      %1857 = vrot.lane.b32.xlu0 %v228, 104
      %v1858 = vpop.permute.xlu0 %1857
      %1859 = vrot.lane.b32.xlu0 %v228, 72
      %v1860 = vpop.permute.xlu0 %1859
      %v1862 = vsel %vm176, %v1858, 0
      %v1865 = vsel %vm176, %v1860, 0
      %1867 = vmatprep.subr.bf16.mxu0 0
      %1868 = vmatpush1.bf16.xpose.msra.mxu0 %v1865
      %1869 = vmatprep.subr.bf16.mxu0 0
      %1870 = vmatpush1.bf16.xpose.msra.mxu0 0
      %1871 = vmatprep.subr.bf16.mxu0 0
      %1872 = vmatpush1.bf16.xpose.msra.mxu0 0
      %1873 = vmatprep.subr.bf16.mxu0 0
      %1874 = vmatpush1.bf16.xpose.msra.mxu0 0
      %1875 = vmatprep.subr.bf16.mxu0 0
      %1876 = vmatpush1.bf16.xpose.msra.mxu0 0
      %1877 = vmatprep.subr.bf16.mxu0 0
      %1878 = vmatpush1.bf16.xpose.msra.mxu0 0
      %1879 = vmatprep.subr.bf16.mxu0 0
      %1880 = vmatpush1.bf16.xpose.msra.mxu0 0
      %1881 = vmatprep.subr.bf16.mxu0 0
      %1882 = vmatpush1.bf16.xpose.msra.mxu0 0
      %1883 = vmatprep.subr.bf16.mxu0 0
      %1884 = vmatpush1.bf16.xpose.msra.mxu0 0
      %1885 = vmatprep.subr.bf16.mxu0 0
      %1886 = vmatpush1.bf16.xpose.msra.mxu0 0
      %1887 = vmatprep.subr.bf16.mxu0 0
      %1888 = vmatpush1.bf16.xpose.msra.mxu0 0
      %1889 = vmatprep.subr.bf16.mxu0 0
      %1890 = vmatpush1.bf16.xpose.msra.mxu0 0
      %1891 = vmatprep.subr.bf16.mxu0 0
      %1892 = vmatpush1.bf16.xpose.msra.mxu0 0
      %1893 = vmatprep.subr.bf16.mxu0 0
      %1894 = vmatpush1.bf16.xpose.msra.mxu0 0
      %1895 = vmatprep.subr.bf16.mxu0 0
      %1896 = vmatpush1.bf16.xpose.msra.mxu0 0
      %1897 = vmatprep.subr.bf16.mxu0 0
      %1898 = vmatpush1.bf16.xpose.msra.mxu0 0
      %1899 = vmatprep.mubr.bf16.mxu0 0
      %1900 = vmatmul.mubr.bf16.gmra.mrb[0].mxu0 %v1862
      %v1901 = vpop.f32.mrb[0].mxu0
      %v1902 = vadd.f32 0.0, %v1901
      %v1903 = vpop.f32.mrb[0].mxu0
      %v1904 = vpop.f32.mrb[0].mxu0
      %v1905 = vadd.f32 0.0, %v1904
      %v1906 = vpop.f32.mrb[0].mxu0
      %1907 = vdwg.mxu0
      %1908 = vrot.lane.b32.xlu0 %v282, 104
      %v1909 = vpop.permute.xlu0 %1908
      %1910 = vrot.lane.b32.xlu0 %v282, 72
      %v1911 = vpop.permute.xlu0 %1910
      %v1913 = vsel %vm176, %v1909, 0
      %v1916 = vsel %vm176, %v1911, 0
      %1918 = vmatprep.subr.bf16.mxu0 0
      %1919 = vmatpush1.bf16.xpose.msra.mxu0 %v1916
      %1920 = vmatprep.subr.bf16.mxu0 0
      %1921 = vmatpush1.bf16.xpose.msra.mxu0 0
      %1922 = vmatprep.subr.bf16.mxu0 0
      %1923 = vmatpush1.bf16.xpose.msra.mxu0 0
      %1924 = vmatprep.subr.bf16.mxu0 0
      %1925 = vmatpush1.bf16.xpose.msra.mxu0 0
      %1926 = vmatprep.subr.bf16.mxu0 0
      %1927 = vmatpush1.bf16.xpose.msra.mxu0 0
      %1928 = vmatprep.subr.bf16.mxu0 0
      %1929 = vmatpush1.bf16.xpose.msra.mxu0 0
      %1930 = vmatprep.subr.bf16.mxu0 0
      %1931 = vmatpush1.bf16.xpose.msra.mxu0 0
      %1932 = vmatprep.subr.bf16.mxu0 0
      %1933 = vmatpush1.bf16.xpose.msra.mxu0 0
      %1934 = vmatprep.subr.bf16.mxu0 0
      %1935 = vmatpush1.bf16.xpose.msra.mxu0 0
      %1936 = vmatprep.subr.bf16.mxu0 0
      %1937 = vmatpush1.bf16.xpose.msra.mxu0 0
      %1938 = vmatprep.subr.bf16.mxu0 0
      %1939 = vmatpush1.bf16.xpose.msra.mxu0 0
      %1940 = vmatprep.subr.bf16.mxu0 0
      %1941 = vmatpush1.bf16.xpose.msra.mxu0 0
      %1942 = vmatprep.subr.bf16.mxu0 0
      %1943 = vmatpush1.bf16.xpose.msra.mxu0 0
      %1944 = vmatprep.subr.bf16.mxu0 0
      %1945 = vmatpush1.bf16.xpose.msra.mxu0 0
      %1946 = vmatprep.subr.bf16.mxu0 0
      %1947 = vmatpush1.bf16.xpose.msra.mxu0 0
      %1948 = vmatprep.subr.bf16.mxu0 0
      %1949 = vmatpush1.bf16.xpose.msra.mxu0 0
      %1950 = vmatprep.mubr.bf16.mxu0 0
      %1951 = vmatmul.mubr.bf16.gmra.mrb[0].mxu0 %v1913
      %v1952 = vpop.f32.mrb[0].mxu0
      %v1953 = vadd.f32 0.0, %v1952
      %v1954 = vpop.f32.mrb[0].mxu0
      %v1955 = vpop.f32.mrb[0].mxu0
      %v1956 = vadd.f32 0.0, %v1955
      %v1957 = vpop.f32.mrb[0].mxu0
      %1958 = vdwg.mxu0
      %1959 = vrot.lane.b32.xlu0 %v336, 104
      %v1960 = vpop.permute.xlu0 %1959
      %1961 = vrot.lane.b32.xlu0 %v336, 72
      %v1962 = vpop.permute.xlu0 %1961
      %v1964 = vsel %vm176, %v1960, 0
      %v1967 = vsel %vm176, %v1962, 0
      %1969 = vmatprep.subr.bf16.mxu0 0
      %1970 = vmatpush1.bf16.xpose.msra.mxu0 %v1967
      %1971 = vmatprep.subr.bf16.mxu0 0
      %1972 = vmatpush1.bf16.xpose.msra.mxu0 0
      %1973 = vmatprep.subr.bf16.mxu0 0
      %1974 = vmatpush1.bf16.xpose.msra.mxu0 0
      %1975 = vmatprep.subr.bf16.mxu0 0
      %1976 = vmatpush1.bf16.xpose.msra.mxu0 0
      %1977 = vmatprep.subr.bf16.mxu0 0
      %1978 = vmatpush1.bf16.xpose.msra.mxu0 0
      %1979 = vmatprep.subr.bf16.mxu0 0
      %1980 = vmatpush1.bf16.xpose.msra.mxu0 0
      %1981 = vmatprep.subr.bf16.mxu0 0
      %1982 = vmatpush1.bf16.xpose.msra.mxu0 0
      %1983 = vmatprep.subr.bf16.mxu0 0
      %1984 = vmatpush1.bf16.xpose.msra.mxu0 0
      %1985 = vmatprep.subr.bf16.mxu0 0
      %1986 = vmatpush1.bf16.xpose.msra.mxu0 0
      %1987 = vmatprep.subr.bf16.mxu0 0
      %1988 = vmatpush1.bf16.xpose.msra.mxu0 0
      %1989 = vmatprep.subr.bf16.mxu0 0
      %1990 = vmatpush1.bf16.xpose.msra.mxu0 0
      %1991 = vmatprep.subr.bf16.mxu0 0
      %1992 = vmatpush1.bf16.xpose.msra.mxu0 0
      %1993 = vmatprep.subr.bf16.mxu0 0
      %1994 = vmatpush1.bf16.xpose.msra.mxu0 0
      %1995 = vmatprep.subr.bf16.mxu0 0
      %1996 = vmatpush1.bf16.xpose.msra.mxu0 0
      %1997 = vmatprep.subr.bf16.mxu0 0
      %1998 = vmatpush1.bf16.xpose.msra.mxu0 0
      %1999 = vmatprep.subr.bf16.mxu0 0
      %2000 = vmatpush1.bf16.xpose.msra.mxu0 0
      %2001 = vmatprep.mubr.bf16.mxu0 0
      %2002 = vmatmul.mubr.bf16.gmra.mrb[0].mxu0 %v1964
      %v2003 = vpop.f32.mrb[0].mxu0
      %v2004 = vadd.f32 0.0, %v2003
      %v2005 = vpop.f32.mrb[0].mxu0
      %v2006 = vpop.f32.mrb[0].mxu0
      %v2007 = vadd.f32 0.0, %v2006
      %v2008 = vpop.f32.mrb[0].mxu0
      %2009 = vdwg.mxu0
      %v2010 = vmul.f32 %v1851, 0.35355338
      %v2011 = vmul.f32 %v1854, 0.35355338
      %v2012 = vmul.f32 %v1902, 0.35355338
      %v2013 = vmul.f32 %v1905, 0.35355338
      %v2014 = vmul.f32 %v1953, 0.35355338
      %v2015 = vmul.f32 %v1956, 0.35355338
      %v2016 = vmul.f32 %v2004, 0.35355338
      %v2017 = vmul.f32 %v2007, 0.35355338
      %v2018 = vadd.f32 %v2010, %v167
      %v2019 = vadd.f32 %v2011, %v168
      %v2020 = vadd.f32 %v2012, %v167
      %v2021 = vadd.f32 %v2013, %v168
      %v2022 = vadd.f32 %v2014, %v167
      %v2023 = vadd.f32 %v2015, %v168
      %v2024 = vadd.f32 %v2016, %v167
      %v2025 = vadd.f32 %v2017, %v168
      %v2026 = vsel %vm402, %v2018, -inf
      %2027 = vmax.xlane.f32.xlu0 %v2026
      %v2028 = vpop.xlane.xlu0 %2027
      %v2029 = vsel %vm402, %v2019, -inf
      %2030 = vmax.xlane.f32.xlu0 %v2029
      %v2031 = vpop.xlane.xlu0 %2030
      %v2032 = vsel %vm402, %v2020, -inf
      %2033 = vmax.xlane.f32.xlu0 %v2032
      %v2034 = vpop.xlane.xlu0 %2033
      %v2035 = vsel %vm402, %v2021, -inf
      %2036 = vmax.xlane.f32.xlu0 %v2035
      %v2037 = vpop.xlane.xlu0 %2036
      %v2038 = vsel %vm402, %v2022, -inf
      %2039 = vmax.xlane.f32.xlu0 %v2038
      %v2040 = vpop.xlane.xlu0 %2039
      %v2041 = vsel %vm402, %v2023, -inf
      %2042 = vmax.xlane.f32.xlu0 %v2041
      %v2043 = vpop.xlane.xlu0 %2042
      %v2044 = vsel %vm402, %v2024, -inf
      %2045 = vmax.xlane.f32.xlu0 %v2044
      %v2046 = vpop.xlane.xlu0 %2045
      %v2047 = vsel %vm402, %v2025, -inf
      %2048 = vmax.xlane.f32.xlu0 %v2047
      %v2049 = vpop.xlane.xlu0 %2048
      %v2050 = vsub.f32 %v2018, %v2028
      %v2051 = vsub.f32 %v2019, %v2031
      %v2052 = vsub.f32 %v2020, %v2034
      %v2053 = vsub.f32 %v2021, %v2037
      %v2054 = vsub.f32 %v2022, %v2040
      %v2055 = vsub.f32 %v2023, %v2043
      %v2056 = vsub.f32 %v2024, %v2046
      %v2057 = vsub.f32 %v2025, %v2049
      %v2058 = vmul.f32 %v2050, 1.442695
      %v2059 = vpow.pop %v2058
      %v2060 = vmul.f32 %v2051, 1.442695
      %v2061 = vpow.pop %v2060
      %v2062 = vmul.f32 %v2052, 1.442695
      %v2063 = vpow.pop %v2062
      %v2064 = vmul.f32 %v2053, 1.442695
      %v2065 = vpow.pop %v2064
      %v2066 = vmul.f32 %v2054, 1.442695
      %v2067 = vpow.pop %v2066
      %v2068 = vmul.f32 %v2055, 1.442695
      %v2069 = vpow.pop %v2068
      %v2070 = vmul.f32 %v2056, 1.442695
      %v2071 = vpow.pop %v2070
      %v2072 = vmul.f32 %v2057, 1.442695
      %v2073 = vpow.pop %v2072
      %v2074 = vsel %vm402, %v2059, 0.0
      %2075 = vadd.xlane.f32.xlu0 %v2074
      %v2076 = vpop.xlane.xlu0 %2075
      %v2077 = vsel %vm402, %v2061, 0.0
      %2078 = vadd.xlane.f32.xlu0 %v2077
      %v2079 = vpop.xlane.xlu0 %2078
      %v2080 = vsel %vm402, %v2063, 0.0
      %2081 = vadd.xlane.f32.xlu0 %v2080
      %v2082 = vpop.xlane.xlu0 %2081
      %v2083 = vsel %vm402, %v2065, 0.0
      %2084 = vadd.xlane.f32.xlu0 %v2083
      %v2085 = vpop.xlane.xlu0 %2084
      %v2086 = vsel %vm402, %v2067, 0.0
      %2087 = vadd.xlane.f32.xlu0 %v2086
      %v2088 = vpop.xlane.xlu0 %2087
      %v2089 = vsel %vm402, %v2069, 0.0
      %2090 = vadd.xlane.f32.xlu0 %v2089
      %v2091 = vpop.xlane.xlu0 %2090
      %v2092 = vsel %vm402, %v2071, 0.0
      %2093 = vadd.xlane.f32.xlu0 %v2092
      %v2094 = vpop.xlane.xlu0 %2093
      %v2095 = vsel %vm402, %v2073, 0.0
      %2096 = vadd.xlane.f32.xlu0 %v2095
      %v2097 = vpop.xlane.xlu0 %2096
      %v2098 = vrcp.pop %v2076
      %v2099 = vrcp.pop %v2079
      %v2100 = vrcp.pop %v2082
      %v2101 = vrcp.pop %v2085
      %v2102 = vrcp.pop %v2088
      %v2103 = vrcp.pop %v2091
      %v2104 = vrcp.pop %v2094
      %v2105 = vrcp.pop %v2097
      %v2106 = vmul.f32 %v2059, %v2098
      %v2107 = vmul.f32 %v2061, %v2099
      %v2108 = vmul.f32 %v2063, %v2100
      %v2109 = vmul.f32 %v2065, %v2101
      %v2110 = vmul.f32 %v2067, %v2102
      %v2111 = vmul.f32 %v2069, %v2103
      %v2112 = vmul.f32 %v2071, %v2104
      %v2113 = vmul.f32 %v2073, %v2105
      %v2114 = vpack.c.bf16 %v2107, %v2106
      %v2115 = vpack.c.bf16 %v2109, %v2108
      %v2116 = vpack.c.bf16 %v2111, %v2110
      %v2117 = vpack.c.bf16 %v2113, %v2112
      %2118 = vrot.lane.b32.xlu0 %v173, 40
      %v2119 = vpop.permute.xlu0 %2118
      %v2122 = vsel %vm402, %v2114, 0
      %2124 = vmatprep.subr.bf16.mxu0 0
      %2125 = vmatpush1.bf16.msra.mxu0 %v2119
      %2126 = vmatprep.subr.bf16.mxu0 0
      %2127 = vmatpush1.bf16.msra.mxu0 0
      %2128 = vmatprep.subr.bf16.mxu0 0
      %2129 = vmatpush1.bf16.msra.mxu0 0
      %2130 = vmatprep.subr.bf16.mxu0 0
      %2131 = vmatpush1.bf16.msra.mxu0 0
      %2132 = vmatprep.subr.bf16.mxu0 0
      %2133 = vmatpush1.bf16.msra.mxu0 0
      %2134 = vmatprep.subr.bf16.mxu0 0
      %2135 = vmatpush1.bf16.msra.mxu0 0
      %2136 = vmatprep.subr.bf16.mxu0 0
      %2137 = vmatpush1.bf16.msra.mxu0 0
      %2138 = vmatprep.subr.bf16.mxu0 0
      %2139 = vmatpush1.bf16.msra.mxu0 0
      %2140 = vmatprep.subr.bf16.mxu0 0
      %2141 = vmatpush1.bf16.msra.mxu0 0
      %2142 = vmatprep.subr.bf16.mxu0 0
      %2143 = vmatpush1.bf16.msra.mxu0 0
      %2144 = vmatprep.subr.bf16.mxu0 0
      %2145 = vmatpush1.bf16.msra.mxu0 0
      %2146 = vmatprep.subr.bf16.mxu0 0
      %2147 = vmatpush1.bf16.msra.mxu0 0
      %2148 = vmatprep.subr.bf16.mxu0 0
      %2149 = vmatpush1.bf16.msra.mxu0 0
      %2150 = vmatprep.subr.bf16.mxu0 0
      %2151 = vmatpush1.bf16.msra.mxu0 0
      %2152 = vmatprep.subr.bf16.mxu0 0
      %2153 = vmatpush1.bf16.msra.mxu0 0
      %2154 = vmatprep.subr.bf16.mxu0 0
      %2155 = vmatpush1.bf16.msra.mxu0 0
      %2156 = vmatprep.mubr.bf16.mxu0 0
      %2157 = vmatmul.mubr.bf16.gmra.mrb[0].mxu0 %v2122
      %v2158 = vpop.f32.mrb[0].mxu0
      %v2159 = vadd.f32 0.0, %v2158
      %v2160 = vpop.f32.mrb[0].mxu0
      %v2161 = vpop.f32.mrb[0].mxu0
      %v2162 = vadd.f32 0.0, %v2161
      %v2163 = vpop.f32.mrb[0].mxu0
      %2164 = vdwg.mxu0
      %2165 = vrot.lane.b32.xlu0 %v228, 40
      %v2166 = vpop.permute.xlu0 %2165
      %v2169 = vsel %vm402, %v2115, 0
      %2171 = vmatprep.subr.bf16.mxu0 0
      %2172 = vmatpush1.bf16.msra.mxu0 %v2166
      %2173 = vmatprep.subr.bf16.mxu0 0
      %2174 = vmatpush1.bf16.msra.mxu0 0
      %2175 = vmatprep.subr.bf16.mxu0 0
      %2176 = vmatpush1.bf16.msra.mxu0 0
      %2177 = vmatprep.subr.bf16.mxu0 0
      %2178 = vmatpush1.bf16.msra.mxu0 0
      %2179 = vmatprep.subr.bf16.mxu0 0
      %2180 = vmatpush1.bf16.msra.mxu0 0
      %2181 = vmatprep.subr.bf16.mxu0 0
      %2182 = vmatpush1.bf16.msra.mxu0 0
      %2183 = vmatprep.subr.bf16.mxu0 0
      %2184 = vmatpush1.bf16.msra.mxu0 0
      %2185 = vmatprep.subr.bf16.mxu0 0
      %2186 = vmatpush1.bf16.msra.mxu0 0
      %2187 = vmatprep.subr.bf16.mxu0 0
      %2188 = vmatpush1.bf16.msra.mxu0 0
      %2189 = vmatprep.subr.bf16.mxu0 0
      %2190 = vmatpush1.bf16.msra.mxu0 0
      %2191 = vmatprep.subr.bf16.mxu0 0
      %2192 = vmatpush1.bf16.msra.mxu0 0
      %2193 = vmatprep.subr.bf16.mxu0 0
      %2194 = vmatpush1.bf16.msra.mxu0 0
      %2195 = vmatprep.subr.bf16.mxu0 0
      %2196 = vmatpush1.bf16.msra.mxu0 0
      %2197 = vmatprep.subr.bf16.mxu0 0
      %2198 = vmatpush1.bf16.msra.mxu0 0
      %2199 = vmatprep.subr.bf16.mxu0 0
      %2200 = vmatpush1.bf16.msra.mxu0 0
      %2201 = vmatprep.subr.bf16.mxu0 0
      %2202 = vmatpush1.bf16.msra.mxu0 0
      %2203 = vmatprep.mubr.bf16.mxu0 0
      %2204 = vmatmul.mubr.bf16.gmra.mrb[0].mxu0 %v2169
      %v2205 = vpop.f32.mrb[0].mxu0
      %v2206 = vadd.f32 0.0, %v2205
      %v2207 = vpop.f32.mrb[0].mxu0
      %v2208 = vpop.f32.mrb[0].mxu0
      %v2209 = vadd.f32 0.0, %v2208
      %v2210 = vpop.f32.mrb[0].mxu0
      %2211 = vdwg.mxu0
      %2212 = vrot.lane.b32.xlu0 %v282, 40
      %v2213 = vpop.permute.xlu0 %2212
      %v2216 = vsel %vm402, %v2116, 0
      %2218 = vmatprep.subr.bf16.mxu0 0
      %2219 = vmatpush1.bf16.msra.mxu0 %v2213
      %2220 = vmatprep.subr.bf16.mxu0 0
      %2221 = vmatpush1.bf16.msra.mxu0 0
      %2222 = vmatprep.subr.bf16.mxu0 0
      %2223 = vmatpush1.bf16.msra.mxu0 0
      %2224 = vmatprep.subr.bf16.mxu0 0
      %2225 = vmatpush1.bf16.msra.mxu0 0
      %2226 = vmatprep.subr.bf16.mxu0 0
      %2227 = vmatpush1.bf16.msra.mxu0 0
      %2228 = vmatprep.subr.bf16.mxu0 0
      %2229 = vmatpush1.bf16.msra.mxu0 0
      %2230 = vmatprep.subr.bf16.mxu0 0
      %2231 = vmatpush1.bf16.msra.mxu0 0
      %2232 = vmatprep.subr.bf16.mxu0 0
      %2233 = vmatpush1.bf16.msra.mxu0 0
      %2234 = vmatprep.subr.bf16.mxu0 0
      %2235 = vmatpush1.bf16.msra.mxu0 0
      %2236 = vmatprep.subr.bf16.mxu0 0
      %2237 = vmatpush1.bf16.msra.mxu0 0
      %2238 = vmatprep.subr.bf16.mxu0 0
      %2239 = vmatpush1.bf16.msra.mxu0 0
      %2240 = vmatprep.subr.bf16.mxu0 0
      %2241 = vmatpush1.bf16.msra.mxu0 0
      %2242 = vmatprep.subr.bf16.mxu0 0
      %2243 = vmatpush1.bf16.msra.mxu0 0
      %2244 = vmatprep.subr.bf16.mxu0 0
      %2245 = vmatpush1.bf16.msra.mxu0 0
      %2246 = vmatprep.subr.bf16.mxu0 0
      %2247 = vmatpush1.bf16.msra.mxu0 0
      %2248 = vmatprep.subr.bf16.mxu0 0
      %2249 = vmatpush1.bf16.msra.mxu0 0
      %2250 = vmatprep.mubr.bf16.mxu0 0
      %2251 = vmatmul.mubr.bf16.gmra.mrb[0].mxu0 %v2216
      %v2252 = vpop.f32.mrb[0].mxu0
      %v2253 = vadd.f32 0.0, %v2252
      %v2254 = vpop.f32.mrb[0].mxu0
      %v2255 = vpop.f32.mrb[0].mxu0
      %v2256 = vadd.f32 0.0, %v2255
      %v2257 = vpop.f32.mrb[0].mxu0
      %2258 = vdwg.mxu0
      %2259 = vrot.lane.b32.xlu0 %v336, 40
      %v2260 = vpop.permute.xlu0 %2259
      %v2263 = vsel %vm402, %v2117, 0
      %2265 = vmatprep.subr.bf16.mxu0 0
      %2266 = vmatpush1.bf16.msra.mxu0 %v2260
      %2267 = vmatprep.subr.bf16.mxu0 0
      %2268 = vmatpush1.bf16.msra.mxu0 0
      %2269 = vmatprep.subr.bf16.mxu0 0
      %2270 = vmatpush1.bf16.msra.mxu0 0
      %2271 = vmatprep.subr.bf16.mxu0 0
      %2272 = vmatpush1.bf16.msra.mxu0 0
      %2273 = vmatprep.subr.bf16.mxu0 0
      %2274 = vmatpush1.bf16.msra.mxu0 0
      %2275 = vmatprep.subr.bf16.mxu0 0
      %2276 = vmatpush1.bf16.msra.mxu0 0
      %2277 = vmatprep.subr.bf16.mxu0 0
      %2278 = vmatpush1.bf16.msra.mxu0 0
      %2279 = vmatprep.subr.bf16.mxu0 0
      %2280 = vmatpush1.bf16.msra.mxu0 0
      %2281 = vmatprep.subr.bf16.mxu0 0
      %2282 = vmatpush1.bf16.msra.mxu0 0
      %2283 = vmatprep.subr.bf16.mxu0 0
      %2284 = vmatpush1.bf16.msra.mxu0 0
      %2285 = vmatprep.subr.bf16.mxu0 0
      %2286 = vmatpush1.bf16.msra.mxu0 0
      %2287 = vmatprep.subr.bf16.mxu0 0
      %2288 = vmatpush1.bf16.msra.mxu0 0
      %2289 = vmatprep.subr.bf16.mxu0 0
      %2290 = vmatpush1.bf16.msra.mxu0 0
      %2291 = vmatprep.subr.bf16.mxu0 0
      %2292 = vmatpush1.bf16.msra.mxu0 0
      %2293 = vmatprep.subr.bf16.mxu0 0
      %2294 = vmatpush1.bf16.msra.mxu0 0
      %2295 = vmatprep.subr.bf16.mxu0 0
      %2296 = vmatpush1.bf16.msra.mxu0 0
      %2297 = vmatprep.mubr.bf16.mxu0 0
      %2298 = vmatmul.mubr.bf16.gmra.mrb[0].mxu0 %v2263
      %v2299 = vpop.f32.mrb[0].mxu0
      %v2300 = vadd.f32 0.0, %v2299
      %v2301 = vpop.f32.mrb[0].mxu0
      %v2302 = vpop.f32.mrb[0].mxu0
      %v2303 = vadd.f32 0.0, %v2302
      %v2304 = vpop.f32.mrb[0].mxu0
      %2305 = vdwg.mxu0
      %v2306 = vpack.c.bf16 %v2162, %v2159
      %v2307 = vpack.c.bf16 %v2209, %v2206
      %v2308 = vpack.c.bf16 %v2256, %v2253
      %v2309 = vpack.c.bf16 %v2303, %v2300
      %v2314 = vunpack.c.l.b16 %v2306
      %v2315 = vunpack.c.h.b16 %v2306
      %v2316 = vunpack.c.l.b16 %v2307
      %v2317 = vunpack.c.h.b16 %v2307
      %v2318 = vunpack.c.l.b16 %v2308
      %v2319 = vunpack.c.h.b16 %v2308
      %v2320 = vunpack.c.l.b16 %v2309
      %v2321 = vunpack.c.h.b16 %v2309
      %v2322 = vpack.c.b16 %v2314, %v2314
      %v2323 = vpack.c.b16 %v2315, %v2315
      %v2324 = vpack.c.b16 %v2316, %v2316
      %v2325 = vpack.c.b16 %v2317, %v2317
      %v2326 = vpack.c.b16 %v2318, %v2318
      %v2327 = vpack.c.b16 %v2319, %v2319
      %v2328 = vpack.c.b16 %v2320, %v2320
      %v2329 = vpack.c.b16 %v2321, %v2321
      %s2338 = scalar_lea.vmem %s150, 24
      %2339 = vst.msk [vmem:[%s2338] sm:$0xf] %vm715, %v2322
      %2340 = vst.msk [vmem:[%s2338 + $0x4] sm:$0xf] %vm715, %v2323
      %2341 = vst.msk [vmem:[%s2338 + $0x20] sm:$0xf] %vm715, %v2324
      %2342 = vst.msk [vmem:[%s2338 + $0x24] sm:$0xf] %vm715, %v2325
      %2343 = vst.msk [vmem:[%s2338 + $0x40] sm:$0xf] %vm715, %v2326
      %2344 = vst.msk [vmem:[%s2338 + $0x44] sm:$0xf] %vm715, %v2327
      %2345 = vst.msk [vmem:[%s2338 + $0x60] sm:$0xf] %vm715, %v2328
      %2346 = vst.msk [vmem:[%s2338 + $0x64] sm:$0xf] %vm715, %v2329
      %s2347 = smul.u32 4, %s13
      %p2348 = scmp.lt.s32.totalorder %s2347, 7
      %s2349 = scalar_select %p2348, %s2347, 7
      %s2350 = smul.addr %s2349, 8
      %s2351 = smul.addr %s2350, 4
      %s2352 = scalar_lea.vmem %s2, %s2351
      // Predicated region
      $region29: #{basic_layer.10} parent=27 // pred_check
        %p2353 = pneg %p78
      $region30: #{basic_layer.10} parent=27 // pred_check_branch
        %2355 = sbr.rel (%p2353) target = $region32
      $region31: #{basic_layer.10} parent=27 // pred_region
        %s2356 = smul.u32 4, %s13
      $region32: #{basic_layer.10} parent=27 // pred_fallthru
        _
    $region28: #{basic_layer.10} parent=5 // pred_fallthru
      _
    %p2357 = scmp.le.s32.totalorder 2, %s8
    // Predicated region
    $region33: #{basic_layer.10} parent=5 // pred_check
      %p2358 = pneg %p2357
    $region34: #{basic_layer.10} parent=5 // pred_check_branch
      %2360 = sbr.rel (%p2358) target = $region36
    $region35: #{basic_layer.10} parent=5 // pred_region
      %s2361 = ssub.s32 %s8, 2
      // Predicated region
      $region37: #{basic_layer.10} parent=35 // pred_check
        %p2362 = pneg %p84
      $region38: #{basic_layer.10} parent=35 // pred_check_branch
        %2364 = sbr.rel (%p2362) target = $region40
      $region39: #{basic_layer.10} parent=35 // pred_region
        %s2365 = smul.u32 4, %s14
        %p2366 = scmp.lt.s32.totalorder %s2365, 7
        %s2367 = scalar_select %p2366, %s2365, 7
        %s2368 = smul.addr %s2367, 8
        %s2369 = smul.addr %s2368, 4
        %s2370 = scalar_lea.vmem %s2, %s2369
      $region40: #{basic_layer.10} parent=35 // pred_fallthru
        _
    $region36: #{basic_layer.10} parent=5 // pred_fallthru
      _
  $region6: #{basic_layer.10} parent=0 // loop_footer
    %s12 = sadd.s32 1, %s8
  $region7: #{basic_layer.10} parent=0 // loop_footer_branch
    %7 = sbr.rel target = $region3
  $region8: #{basic_layer.10} parent=0 // loop_exit
    _

// kernel: basic_layer.12
$region0: #{basic_layer.12}
  #allocation0 [shape = 'u32[]', space=smem, size = 0x4, offset = 0x4, fixed_abs, tag = 'smem constant byte address 0x4 - core index']
  #allocation1 [shape = 'u32[144,128]{1,0:T(1,128)}', space=vmem, size = 0x12000, scoped, tag = 'internal scratch']
  %s0 = inlined_call_operand.vmem [shape: bf16[128,32], index: 0, kind: input, shape index: {}]
  %s1 = inlined_call_operand.vmem [shape: bf16[1,32], index: 1, kind: input, shape index: {}]
  %s2 = inlined_call_operand.vmem [shape: bf16[1,32], index: 2, kind: input, shape index: {}]
  %s3 = inlined_call_operand.vmem [shape: bf16[32,64], index: 3, kind: input, shape index: {}]
  %s4 = inlined_call_operand.vmem [shape: bf16[1,64], index: 4, kind: input, shape index: {}]
  %s5 = inlined_call_operand.vmem [shape: bf16[64,32], index: 5, kind: input, shape index: {}]
  %s6 = inlined_call_operand.vmem [shape: bf16[1,32], index: 6, kind: input, shape index: {}]
  %s7 = inlined_call_operand.vmem [shape: bf16[128,32], index: 7, kind: output, shape index: {}]
  %s8 = sld [smem:[#allocation0]]
  $region38: #{basic_layer.12} parent=0
    _
  %s10 = ssub.s32 1, %s8
  %s11 = scalar_select 0, %s10, %s8
  // Predicated region
  $region2: #{basic_layer.12} parent=0 // pred_check
    _
  $region3: #{basic_layer.12} parent=0 // pred_check_branch
    %13 = sbr.rel (0) target = $region5
  $region4: #{basic_layer.12} parent=0 // pred_region
    _
  $region5: #{basic_layer.12} parent=0 // pred_fallthru
    _
  // Predicated region
  $region6: #{basic_layer.12} parent=0 // pred_check
    _
  $region7: #{basic_layer.12} parent=0 // pred_check_branch
    %15 = sbr.rel (0) target = $region9
  $region8: #{basic_layer.12} parent=0 // pred_region
    _
  $region9: #{basic_layer.12} parent=0 // pred_fallthru
    _
  // Predicated region
  $region10: #{basic_layer.12} parent=0 // pred_check
    _
  $region11: #{basic_layer.12} parent=0 // pred_check_branch
    %17 = sbr.rel (0) target = $region13
  $region12: #{basic_layer.12} parent=0 // pred_region
    _
  $region13: #{basic_layer.12} parent=0 // pred_fallthru
    _
  // Predicated region
  $region14: #{basic_layer.12} parent=0 // pred_check
    _
  $region15: #{basic_layer.12} parent=0 // pred_check_branch
    %19 = sbr.rel (0) target = $region17
  $region16: #{basic_layer.12} parent=0 // pred_region
    _
  $region17: #{basic_layer.12} parent=0 // pred_fallthru
    _
  // Predicated region
  $region18: #{basic_layer.12} parent=0 // pred_check
    _
  $region19: #{basic_layer.12} parent=0 // pred_check_branch
    %21 = sbr.rel (0) target = $region21
  $region20: #{basic_layer.12} parent=0 // pred_region
    _
  $region21: #{basic_layer.12} parent=0 // pred_fallthru
    _
  // Predicated region
  $region22: #{basic_layer.12} parent=0 // pred_check
    _
  $region23: #{basic_layer.12} parent=0 // pred_check_branch
    %23 = sbr.rel (0) target = $region25
  $region24: #{basic_layer.12} parent=0 // pred_region
    _
  $region25: #{basic_layer.12} parent=0 // pred_fallthru
    _
  // Predicated region
  $region26: #{basic_layer.12} parent=0 // pred_check
    _
  $region27: #{basic_layer.12} parent=0 // pred_check_branch
    %25 = sbr.rel (0) target = $region29
  $region28: #{basic_layer.12} parent=0 // pred_region
    _
  $region29: #{basic_layer.12} parent=0 // pred_fallthru
    _
  %v27 = vld [vmem:[%s0] sm:$0xf]
  %v28 = vld [vmem:[%s0 + $0x4] sm:$0xf]
  %v29 = vld [vmem:[%s0 + $0x8] sm:$0xf]
  %v30 = vld [vmem:[%s0 + $0xc] sm:$0xf]
  %v31 = vld [vmem:[%s0 + $0x10] sm:$0xf]
  %v32 = vld [vmem:[%s0 + $0x14] sm:$0xf]
  %v33 = vld [vmem:[%s0 + $0x18] sm:$0xf]
  %v34 = vld [vmem:[%s0 + $0x1c] sm:$0xf]
  %v35 = vld [vmem:[%s0 + $0x20] sm:$0xf]
  %v36 = vld [vmem:[%s0 + $0x24] sm:$0xf]
  %v37 = vld [vmem:[%s0 + $0x28] sm:$0xf]
  %v38 = vld [vmem:[%s0 + $0x2c] sm:$0xf]
  %v39 = vld [vmem:[%s0 + $0x30] sm:$0xf]
  %v40 = vld [vmem:[%s0 + $0x34] sm:$0xf]
  %v41 = vld [vmem:[%s0 + $0x38] sm:$0xf]
  %v42 = vld [vmem:[%s0 + $0x3c] sm:$0xf]
  %v43 = vunpack.c.l.bf16 %v27
  %v44 = vunpack.c.l.bf16 %v28
  %v45 = vunpack.c.l.bf16 %v29
  %v46 = vunpack.c.l.bf16 %v30
  %v47 = vunpack.c.l.bf16 %v31
  %v48 = vunpack.c.l.bf16 %v32
  %v49 = vunpack.c.l.bf16 %v33
  %v50 = vunpack.c.l.bf16 %v34
  %v51 = vunpack.c.l.bf16 %v35
  %v52 = vunpack.c.l.bf16 %v36
  %v53 = vunpack.c.l.bf16 %v37
  %v54 = vunpack.c.l.bf16 %v38
  %v55 = vunpack.c.l.bf16 %v39
  %v56 = vunpack.c.l.bf16 %v40
  %v57 = vunpack.c.l.bf16 %v41
  %v58 = vunpack.c.l.bf16 %v42
  %vm59 = vcmask 261120
  %v60 = vsel %vm59, %v43, 0.0
  %61 = vadd.xlane.f32.xlu0 %v60
  %v62 = vpop.xlane.xlu0 %61
  %v63 = vsel %vm59, %v44, 0.0
  %64 = vadd.xlane.f32.xlu0 %v63
  %v65 = vpop.xlane.xlu0 %64
  %v66 = vsel %vm59, %v45, 0.0
  %67 = vadd.xlane.f32.xlu0 %v66
  %v68 = vpop.xlane.xlu0 %67
  %v69 = vsel %vm59, %v46, 0.0
  %70 = vadd.xlane.f32.xlu0 %v69
  %v71 = vpop.xlane.xlu0 %70
  %v72 = vsel %vm59, %v47, 0.0
  %73 = vadd.xlane.f32.xlu0 %v72
  %v74 = vpop.xlane.xlu0 %73
  %v75 = vsel %vm59, %v48, 0.0
  %76 = vadd.xlane.f32.xlu0 %v75
  %v77 = vpop.xlane.xlu0 %76
  %v78 = vsel %vm59, %v49, 0.0
  %79 = vadd.xlane.f32.xlu0 %v78
  %v80 = vpop.xlane.xlu0 %79
  %v81 = vsel %vm59, %v50, 0.0
  %82 = vadd.xlane.f32.xlu0 %v81
  %v83 = vpop.xlane.xlu0 %82
  %v84 = vsel %vm59, %v51, 0.0
  %85 = vadd.xlane.f32.xlu0 %v84
  %v86 = vpop.xlane.xlu0 %85
  %v87 = vsel %vm59, %v52, 0.0
  %88 = vadd.xlane.f32.xlu0 %v87
  %v89 = vpop.xlane.xlu0 %88
  %v90 = vsel %vm59, %v53, 0.0
  %91 = vadd.xlane.f32.xlu0 %v90
  %v92 = vpop.xlane.xlu0 %91
  %v93 = vsel %vm59, %v54, 0.0
  %94 = vadd.xlane.f32.xlu0 %v93
  %v95 = vpop.xlane.xlu0 %94
  %v96 = vsel %vm59, %v55, 0.0
  %97 = vadd.xlane.f32.xlu0 %v96
  %v98 = vpop.xlane.xlu0 %97
  %v99 = vsel %vm59, %v56, 0.0
  %100 = vadd.xlane.f32.xlu0 %v99
  %v101 = vpop.xlane.xlu0 %100
  %v102 = vsel %vm59, %v57, 0.0
  %103 = vadd.xlane.f32.xlu0 %v102
  %v104 = vpop.xlane.xlu0 %103
  %v105 = vsel %vm59, %v58, 0.0
  %106 = vadd.xlane.f32.xlu0 %v105
  %v107 = vpop.xlane.xlu0 %106
  %v108 = vrcp.pop 32.0
  %v109 = vmul.f32 %v62, %v108
  %v110 = vmul.f32 %v65, %v108
  %v111 = vmul.f32 %v68, %v108
  %v112 = vmul.f32 %v71, %v108
  %v113 = vmul.f32 %v74, %v108
  %v114 = vmul.f32 %v77, %v108
  %v115 = vmul.f32 %v80, %v108
  %v116 = vmul.f32 %v83, %v108
  %v117 = vmul.f32 %v86, %v108
  %v118 = vmul.f32 %v89, %v108
  %v119 = vmul.f32 %v92, %v108
  %v120 = vmul.f32 %v95, %v108
  %v121 = vmul.f32 %v98, %v108
  %v122 = vmul.f32 %v101, %v108
  %v123 = vmul.f32 %v104, %v108
  %v124 = vmul.f32 %v107, %v108
  %v125 = vsub.f32 %v43, %v109
  %v126 = vsub.f32 %v44, %v110
  %v127 = vsub.f32 %v45, %v111
  %v128 = vsub.f32 %v46, %v112
  %v129 = vsub.f32 %v47, %v113
  %v130 = vsub.f32 %v48, %v114
  %v131 = vsub.f32 %v49, %v115
  %v132 = vsub.f32 %v50, %v116
  %v133 = vsub.f32 %v51, %v117
  %v134 = vsub.f32 %v52, %v118
  %v135 = vsub.f32 %v53, %v119
  %v136 = vsub.f32 %v54, %v120
  %v137 = vsub.f32 %v55, %v121
  %v138 = vsub.f32 %v56, %v122
  %v139 = vsub.f32 %v57, %v123
  %v140 = vsub.f32 %v58, %v124
  %v141 = vmul.f32 %v125, %v125
  %v142 = vmul.f32 %v126, %v126
  %v143 = vmul.f32 %v127, %v127
  %v144 = vmul.f32 %v128, %v128
  %v145 = vmul.f32 %v129, %v129
  %v146 = vmul.f32 %v130, %v130
  %v147 = vmul.f32 %v131, %v131
  %v148 = vmul.f32 %v132, %v132
  %v149 = vmul.f32 %v133, %v133
  %v150 = vmul.f32 %v134, %v134
  %v151 = vmul.f32 %v135, %v135
  %v152 = vmul.f32 %v136, %v136
  %v153 = vmul.f32 %v137, %v137
  %v154 = vmul.f32 %v138, %v138
  %v155 = vmul.f32 %v139, %v139
  %v156 = vmul.f32 %v140, %v140
  %v157 = vsel %vm59, %v141, 0.0
  %158 = vadd.xlane.f32.xlu0 %v157
  %v159 = vpop.xlane.xlu0 %158
  %v160 = vsel %vm59, %v142, 0.0
  %161 = vadd.xlane.f32.xlu0 %v160
  %v162 = vpop.xlane.xlu0 %161
  %v163 = vsel %vm59, %v143, 0.0
  %164 = vadd.xlane.f32.xlu0 %v163
  %v165 = vpop.xlane.xlu0 %164
  %v166 = vsel %vm59, %v144, 0.0
  %167 = vadd.xlane.f32.xlu0 %v166
  %v168 = vpop.xlane.xlu0 %167
  %v169 = vsel %vm59, %v145, 0.0
  %170 = vadd.xlane.f32.xlu0 %v169
  %v171 = vpop.xlane.xlu0 %170
  %v172 = vsel %vm59, %v146, 0.0
  %173 = vadd.xlane.f32.xlu0 %v172
  %v174 = vpop.xlane.xlu0 %173
  %v175 = vsel %vm59, %v147, 0.0
  %176 = vadd.xlane.f32.xlu0 %v175
  %v177 = vpop.xlane.xlu0 %176
  %v178 = vsel %vm59, %v148, 0.0
  %179 = vadd.xlane.f32.xlu0 %v178
  %v180 = vpop.xlane.xlu0 %179
  %v181 = vsel %vm59, %v149, 0.0
  %182 = vadd.xlane.f32.xlu0 %v181
  %v183 = vpop.xlane.xlu0 %182
  %v184 = vsel %vm59, %v150, 0.0
  %185 = vadd.xlane.f32.xlu0 %v184
  %v186 = vpop.xlane.xlu0 %185
  %v187 = vsel %vm59, %v151, 0.0
  %188 = vadd.xlane.f32.xlu0 %v187
  %v189 = vpop.xlane.xlu0 %188
  %v190 = vsel %vm59, %v152, 0.0
  %191 = vadd.xlane.f32.xlu0 %v190
  %v192 = vpop.xlane.xlu0 %191
  %v193 = vsel %vm59, %v153, 0.0
  %194 = vadd.xlane.f32.xlu0 %v193
  %v195 = vpop.xlane.xlu0 %194
  %v196 = vsel %vm59, %v154, 0.0
  %197 = vadd.xlane.f32.xlu0 %v196
  %v198 = vpop.xlane.xlu0 %197
  %v199 = vsel %vm59, %v155, 0.0
  %200 = vadd.xlane.f32.xlu0 %v199
  %v201 = vpop.xlane.xlu0 %200
  %v202 = vsel %vm59, %v156, 0.0
  %203 = vadd.xlane.f32.xlu0 %v202
  %v204 = vpop.xlane.xlu0 %203
  %v205 = vmul.f32 %v159, %v108
  %v206 = vmul.f32 %v162, %v108
  %v207 = vmul.f32 %v165, %v108
  %v208 = vmul.f32 %v168, %v108
  %v209 = vmul.f32 %v171, %v108
  %v210 = vmul.f32 %v174, %v108
  %v211 = vmul.f32 %v177, %v108
  %v212 = vmul.f32 %v180, %v108
  %v213 = vmul.f32 %v183, %v108
  %v214 = vmul.f32 %v186, %v108
  %v215 = vmul.f32 %v189, %v108
  %v216 = vmul.f32 %v192, %v108
  %v217 = vmul.f32 %v195, %v108
  %v218 = vmul.f32 %v198, %v108
  %v219 = vmul.f32 %v201, %v108
  %v220 = vmul.f32 %v204, %v108
  %v221 = vadd.f32 %v205, 1e-05
  %v222 = vadd.f32 %v206, 1e-05
  %v223 = vadd.f32 %v207, 1e-05
  %v224 = vadd.f32 %v208, 1e-05
  %v225 = vadd.f32 %v209, 1e-05
  %v226 = vadd.f32 %v210, 1e-05
  %v227 = vadd.f32 %v211, 1e-05
  %v228 = vadd.f32 %v212, 1e-05
  %v229 = vadd.f32 %v213, 1e-05
  %v230 = vadd.f32 %v214, 1e-05
  %v231 = vadd.f32 %v215, 1e-05
  %v232 = vadd.f32 %v216, 1e-05
  %v233 = vadd.f32 %v217, 1e-05
  %v234 = vadd.f32 %v218, 1e-05
  %v235 = vadd.f32 %v219, 1e-05
  %v236 = vadd.f32 %v220, 1e-05
  %v237 = vrsqrt.pop %v221
  %v238 = vrsqrt.pop %v222
  %v239 = vrsqrt.pop %v223
  %v240 = vrsqrt.pop %v224
  %v241 = vrsqrt.pop %v225
  %v242 = vrsqrt.pop %v226
  %v243 = vrsqrt.pop %v227
  %v244 = vrsqrt.pop %v228
  %v245 = vrsqrt.pop %v229
  %v246 = vrsqrt.pop %v230
  %v247 = vrsqrt.pop %v231
  %v248 = vrsqrt.pop %v232
  %v249 = vrsqrt.pop %v233
  %v250 = vrsqrt.pop %v234
  %v251 = vrsqrt.pop %v235
  %v252 = vrsqrt.pop %v236
  %v253 = vmul.f32 %v125, %v237
  %v254 = vmul.f32 %v126, %v238
  %v255 = vmul.f32 %v127, %v239
  %v256 = vmul.f32 %v128, %v240
  %v257 = vmul.f32 %v129, %v241
  %v258 = vmul.f32 %v130, %v242
  %v259 = vmul.f32 %v131, %v243
  %v260 = vmul.f32 %v132, %v244
  %v261 = vmul.f32 %v133, %v245
  %v262 = vmul.f32 %v134, %v246
  %v263 = vmul.f32 %v135, %v247
  %v264 = vmul.f32 %v136, %v248
  %v265 = vmul.f32 %v137, %v249
  %v266 = vmul.f32 %v138, %v250
  %v267 = vmul.f32 %v139, %v251
  %v268 = vmul.f32 %v140, %v252
  %v269 = vld [vmem:[%s1] sm:$0x1]
  %v270 = vunpack.c.l.bf16 %v269
  %v271 = vlaneseq
  %v272 = vshrl.u32 %v271, 7
  %v273 = vsub.s32 0, %v272
  %v274 = vrot.slane %v270, %v273
  %v275 = vmul.f32 %v253, %v274
  %v276 = vmul.f32 %v254, %v274
  %v277 = vmul.f32 %v255, %v274
  %v278 = vmul.f32 %v256, %v274
  %v279 = vmul.f32 %v257, %v274
  %v280 = vmul.f32 %v258, %v274
  %v281 = vmul.f32 %v259, %v274
  %v282 = vmul.f32 %v260, %v274
  %v283 = vmul.f32 %v261, %v274
  %v284 = vmul.f32 %v262, %v274
  %v285 = vmul.f32 %v263, %v274
  %v286 = vmul.f32 %v264, %v274
  %v287 = vmul.f32 %v265, %v274
  %v288 = vmul.f32 %v266, %v274
  %v289 = vmul.f32 %v267, %v274
  %v290 = vmul.f32 %v268, %v274
  %v291 = vld [vmem:[%s2] sm:$0x1]
  %v292 = vunpack.c.l.bf16 %v291
  %v293 = vlaneseq
  %v294 = vshrl.u32 %v293, 7
  %v295 = vsub.s32 0, %v294
  %v296 = vrot.slane %v292, %v295
  %v297 = vadd.f32 %v275, %v296
  %v298 = vadd.f32 %v276, %v296
  %v299 = vadd.f32 %v277, %v296
  %v300 = vadd.f32 %v278, %v296
  %v301 = vadd.f32 %v279, %v296
  %v302 = vadd.f32 %v280, %v296
  %v303 = vadd.f32 %v281, %v296
  %v304 = vadd.f32 %v282, %v296
  %v305 = vadd.f32 %v283, %v296
  %v306 = vadd.f32 %v284, %v296
  %v307 = vadd.f32 %v285, %v296
  %v308 = vadd.f32 %v286, %v296
  %v309 = vadd.f32 %v287, %v296
  %v310 = vadd.f32 %v288, %v296
  %v311 = vadd.f32 %v289, %v296
  %v312 = vadd.f32 %v290, %v296
  %v313 = vpack.c.bf16 %v298, %v297
  %v314 = vpack.c.bf16 %v300, %v299
  %v315 = vpack.c.bf16 %v302, %v301
  %v316 = vpack.c.bf16 %v304, %v303
  %v317 = vpack.c.bf16 %v306, %v305
  %v318 = vpack.c.bf16 %v308, %v307
  %v319 = vpack.c.bf16 %v310, %v309
  %v320 = vpack.c.bf16 %v312, %v311
  %v321 = vld [vmem:[%s3] sm:$0xf]
  %v322 = vld [vmem:[%s3 + $0x4] sm:$0xf]
  %v323 = vld [vmem:[%s3 + $0x8] sm:$0xf]
  %v324 = vld [vmem:[%s3 + $0xc] sm:$0xf]
  %v325 = vld [vmem:[%s4] sm:$0x1]
  %v326 = vunpack.c.l.bf16 %v325
  %v327 = vlaneseq
  %v328 = vshrl.u32 %v327, 7
  %v329 = vsub.s32 0, %v328
  %v330 = vrot.slane %v326, %v329
  %v335 = vunpack.c.l.b16 %v321
  %v336 = vunpack.c.l.b16 %v322
  %v337 = vunpack.c.l.b16 %v323
  %v338 = vunpack.c.l.b16 %v324
  %v339 = vpack.c.b16 %v336, %v335
  %v340 = vpack.c.b16 %v338, %v337
  %v344 = vsel %vm59, %v313, 0
  %v347 = vsel %vm59, %v314, 0
  %v350 = vsel %vm59, %v315, 0
  %v353 = vsel %vm59, %v316, 0
  %v356 = vsel %vm59, %v317, 0
  %v359 = vsel %vm59, %v318, 0
  %v362 = vsel %vm59, %v319, 0
  %v365 = vsel %vm59, %v320, 0
  %367 = vmatprep.subr.bf16.mxu0 0
  %368 = vmatpush1.bf16.msra.mxu0 %v339
  %369 = vmatprep.subr.bf16.mxu0 0
  %370 = vmatpush1.bf16.msra.mxu0 %v340
  %371 = vmatprep.subr.bf16.mxu0 0
  %372 = vmatpush1.bf16.msra.mxu0 0
  %373 = vmatprep.subr.bf16.mxu0 0
  %374 = vmatpush1.bf16.msra.mxu0 0
  %375 = vmatprep.subr.bf16.mxu0 0
  %376 = vmatpush1.bf16.msra.mxu0 0
  %377 = vmatprep.subr.bf16.mxu0 0
  %378 = vmatpush1.bf16.msra.mxu0 0
  %379 = vmatprep.subr.bf16.mxu0 0
  %380 = vmatpush1.bf16.msra.mxu0 0
  %381 = vmatprep.subr.bf16.mxu0 0
  %382 = vmatpush1.bf16.msra.mxu0 0
  %383 = vmatprep.subr.bf16.mxu0 0
  %384 = vmatpush1.bf16.msra.mxu0 0
  %385 = vmatprep.subr.bf16.mxu0 0
  %386 = vmatpush1.bf16.msra.mxu0 0
  %387 = vmatprep.subr.bf16.mxu0 0
  %388 = vmatpush1.bf16.msra.mxu0 0
  %389 = vmatprep.subr.bf16.mxu0 0
  %390 = vmatpush1.bf16.msra.mxu0 0
  %391 = vmatprep.subr.bf16.mxu0 0
  %392 = vmatpush1.bf16.msra.mxu0 0
  %393 = vmatprep.subr.bf16.mxu0 0
  %394 = vmatpush1.bf16.msra.mxu0 0
  %395 = vmatprep.subr.bf16.mxu0 0
  %396 = vmatpush1.bf16.msra.mxu0 0
  %397 = vmatprep.subr.bf16.mxu0 0
  %398 = vmatpush1.bf16.msra.mxu0 0
  %399 = vmatprep.mubr.bf16.mxu0 0
  %400 = vmatmul.mubr.bf16.gmra.mrb[0].mxu0 %v344
  %v401 = vpop.f32.mrb[0].mxu0
  %v402 = vadd.f32 %v330, %v401
  %v403 = vpop.f32.mrb[0].mxu0
  %v404 = vpop.f32.mrb[0].mxu0
  %v405 = vadd.f32 %v330, %v404
  %v406 = vpop.f32.mrb[0].mxu0
  %407 = vmatprep.mubr.bf16.mxu0 0
  %408 = vmatmul.mubr.bf16.gmra.mrb[0].mxu0 %v347
  %v409 = vpop.f32.mrb[0].mxu0
  %v410 = vadd.f32 %v330, %v409
  %v411 = vpop.f32.mrb[0].mxu0
  %v412 = vpop.f32.mrb[0].mxu0
  %v413 = vadd.f32 %v330, %v412
  %v414 = vpop.f32.mrb[0].mxu0
  %415 = vmatprep.mubr.bf16.mxu0 0
  %416 = vmatmul.mubr.bf16.gmra.mrb[0].mxu0 %v350
  %v417 = vpop.f32.mrb[0].mxu0
  %v418 = vadd.f32 %v330, %v417
  %v419 = vpop.f32.mrb[0].mxu0
  %v420 = vpop.f32.mrb[0].mxu0
  %v421 = vadd.f32 %v330, %v420
  %v422 = vpop.f32.mrb[0].mxu0
  %423 = vmatprep.mubr.bf16.mxu0 0
  %424 = vmatmul.mubr.bf16.gmra.mrb[0].mxu0 %v353
  %v425 = vpop.f32.mrb[0].mxu0
  %v426 = vadd.f32 %v330, %v425
  %v427 = vpop.f32.mrb[0].mxu0
  %v428 = vpop.f32.mrb[0].mxu0
  %v429 = vadd.f32 %v330, %v428
  %v430 = vpop.f32.mrb[0].mxu0
  %431 = vmatprep.mubr.bf16.mxu0 0
  %432 = vmatmul.mubr.bf16.gmra.mrb[0].mxu0 %v356
  %v433 = vpop.f32.mrb[0].mxu0
  %v434 = vadd.f32 %v330, %v433
  %v435 = vpop.f32.mrb[0].mxu0
  %v436 = vpop.f32.mrb[0].mxu0
  %v437 = vadd.f32 %v330, %v436
  %v438 = vpop.f32.mrb[0].mxu0
  %439 = vmatprep.mubr.bf16.mxu0 0
  %440 = vmatmul.mubr.bf16.gmra.mrb[0].mxu0 %v359
  %v441 = vpop.f32.mrb[0].mxu0
  %v442 = vadd.f32 %v330, %v441
  %v443 = vpop.f32.mrb[0].mxu0
  %v444 = vpop.f32.mrb[0].mxu0
  %v445 = vadd.f32 %v330, %v444
  %v446 = vpop.f32.mrb[0].mxu0
  %447 = vmatprep.mubr.bf16.mxu0 0
  %448 = vmatmul.mubr.bf16.gmra.mrb[0].mxu0 %v362
  %v449 = vpop.f32.mrb[0].mxu0
  %v450 = vadd.f32 %v330, %v449
  %v451 = vpop.f32.mrb[0].mxu0
  %v452 = vpop.f32.mrb[0].mxu0
  %v453 = vadd.f32 %v330, %v452
  %v454 = vpop.f32.mrb[0].mxu0
  %455 = vmatprep.mubr.bf16.mxu0 0
  %456 = vmatmul.mubr.bf16.gmra.mrb[0].mxu0 %v365
  %v457 = vpop.f32.mrb[0].mxu0
  %v458 = vadd.f32 %v330, %v457
  %v459 = vpop.f32.mrb[0].mxu0
  %v460 = vpop.f32.mrb[0].mxu0
  %v461 = vadd.f32 %v330, %v460
  %v462 = vpop.f32.mrb[0].mxu0
  %463 = vdwg.mxu0
  %v464 = vmul.f32 %v402, 0.5
  %v465 = vmul.f32 %v405, 0.5
  %v466 = vmul.f32 %v410, 0.5
  %v467 = vmul.f32 %v413, 0.5
  %v468 = vmul.f32 %v418, 0.5
  %v469 = vmul.f32 %v421, 0.5
  %v470 = vmul.f32 %v426, 0.5
  %v471 = vmul.f32 %v429, 0.5
  %v472 = vmul.f32 %v434, 0.5
  %v473 = vmul.f32 %v437, 0.5
  %v474 = vmul.f32 %v442, 0.5
  %v475 = vmul.f32 %v445, 0.5
  %v476 = vmul.f32 %v450, 0.5
  %v477 = vmul.f32 %v453, 0.5
  %v478 = vmul.f32 %v458, 0.5
  %v479 = vmul.f32 %v461, 0.5
  %v480 = vmul.f32 %v402, 0.70710677
  %v481 = vmul.f32 %v405, 0.70710677
  %v482 = vmul.f32 %v410, 0.70710677
  %v483 = vmul.f32 %v413, 0.70710677
  %v484 = vmul.f32 %v418, 0.70710677
  %v485 = vmul.f32 %v421, 0.70710677
  %v486 = vmul.f32 %v426, 0.70710677
  %v487 = vmul.f32 %v429, 0.70710677
  %v488 = vmul.f32 %v434, 0.70710677
  %v489 = vmul.f32 %v437, 0.70710677
  %v490 = vmul.f32 %v442, 0.70710677
  %v491 = vmul.f32 %v445, 0.70710677
  %v492 = vmul.f32 %v450, 0.70710677
  %v493 = vmul.f32 %v453, 0.70710677
  %v494 = vmul.f32 %v458, 0.70710677
  %v495 = vmul.f32 %v461, 0.70710677
  %v496 = verf.f32.pop %v480
  %v497 = verf.f32.pop %v481
  %v498 = verf.f32.pop %v482
  %v499 = verf.f32.pop %v483
  %v500 = verf.f32.pop %v484
  %v501 = verf.f32.pop %v485
  %v502 = verf.f32.pop %v486
  %v503 = verf.f32.pop %v487
  %v504 = verf.f32.pop %v488
  %v505 = verf.f32.pop %v489
  %v506 = verf.f32.pop %v490
  %v507 = verf.f32.pop %v491
  %v508 = verf.f32.pop %v492
  %v509 = verf.f32.pop %v493
  %v510 = verf.f32.pop %v494
  %v511 = verf.f32.pop %v495
  %v512 = vadd.f32 %v496, 1.0
  %v513 = vadd.f32 %v497, 1.0
  %v514 = vadd.f32 %v498, 1.0
  %v515 = vadd.f32 %v499, 1.0
  %v516 = vadd.f32 %v500, 1.0
  %v517 = vadd.f32 %v501, 1.0
  %v518 = vadd.f32 %v502, 1.0
  %v519 = vadd.f32 %v503, 1.0
  %v520 = vadd.f32 %v504, 1.0
  %v521 = vadd.f32 %v505, 1.0
  %v522 = vadd.f32 %v506, 1.0
  %v523 = vadd.f32 %v507, 1.0
  %v524 = vadd.f32 %v508, 1.0
  %v525 = vadd.f32 %v509, 1.0
  %v526 = vadd.f32 %v510, 1.0
  %v527 = vadd.f32 %v511, 1.0
  %v528 = vmul.f32 %v464, %v512
  %v529 = vmul.f32 %v465, %v513
  %v530 = vmul.f32 %v466, %v514
  %v531 = vmul.f32 %v467, %v515
  %v532 = vmul.f32 %v468, %v516
  %v533 = vmul.f32 %v469, %v517
  %v534 = vmul.f32 %v470, %v518
  %v535 = vmul.f32 %v471, %v519
  %v536 = vmul.f32 %v472, %v520
  %v537 = vmul.f32 %v473, %v521
  %v538 = vmul.f32 %v474, %v522
  %v539 = vmul.f32 %v475, %v523
  %v540 = vmul.f32 %v476, %v524
  %v541 = vmul.f32 %v477, %v525
  %v542 = vmul.f32 %v478, %v526
  %v543 = vmul.f32 %v479, %v527
  %v544 = vpack.c.bf16 %v529, %v528
  %v545 = vpack.c.bf16 %v531, %v530
  %v546 = vpack.c.bf16 %v533, %v532
  %v547 = vpack.c.bf16 %v535, %v534
  %v548 = vpack.c.bf16 %v537, %v536
  %v549 = vpack.c.bf16 %v539, %v538
  %v550 = vpack.c.bf16 %v541, %v540
  %v551 = vpack.c.bf16 %v543, %v542
  %v552 = vld [vmem:[%s5] sm:$0xf]
  %v553 = vld [vmem:[%s5 + $0x4] sm:$0xf]
  %v554 = vld [vmem:[%s5 + $0x8] sm:$0xf]
  %v555 = vld [vmem:[%s5 + $0xc] sm:$0xf]
  %v556 = vld [vmem:[%s5 + $0x10] sm:$0xf]
  %v557 = vld [vmem:[%s5 + $0x14] sm:$0xf]
  %v558 = vld [vmem:[%s5 + $0x18] sm:$0xf]
  %v559 = vld [vmem:[%s5 + $0x1c] sm:$0xf]
  %v560 = vld [vmem:[%s6] sm:$0x1]
  %v561 = vunpack.c.l.bf16 %v560
  %v562 = vlaneseq
  %v563 = vshrl.u32 %v562, 7
  %v564 = vsub.s32 0, %v563
  %v565 = vrot.slane %v561, %v564
  %v574 = vunpack.c.l.b16 %v552
  %v575 = vunpack.c.l.b16 %v553
  %v576 = vunpack.c.l.b16 %v554
  %v577 = vunpack.c.l.b16 %v555
  %v578 = vunpack.c.l.b16 %v556
  %v579 = vunpack.c.l.b16 %v557
  %v580 = vunpack.c.l.b16 %v558
  %v581 = vunpack.c.l.b16 %v559
  %v582 = vpack.c.b16 %v575, %v574
  %v583 = vpack.c.b16 %v577, %v576
  %v584 = vpack.c.b16 %v579, %v578
  %v585 = vpack.c.b16 %v581, %v580
  %vm590 = vcmask 523264
  %v592 = vsel %vm590, %v544, 0
  %v595 = vsel %vm590, %v545, 0
  %v598 = vsel %vm590, %v546, 0
  %v601 = vsel %vm590, %v547, 0
  %v604 = vsel %vm590, %v548, 0
  %v607 = vsel %vm590, %v549, 0
  %v610 = vsel %vm590, %v550, 0
  %v613 = vsel %vm590, %v551, 0
  %615 = vmatprep.subr.bf16.mxu0 0
  %616 = vmatpush1.bf16.msra.mxu0 %v582
  %617 = vmatprep.subr.bf16.mxu0 0
  %618 = vmatpush1.bf16.msra.mxu0 %v583
  %619 = vmatprep.subr.bf16.mxu0 0
  %620 = vmatpush1.bf16.msra.mxu0 %v584
  %621 = vmatprep.subr.bf16.mxu0 0
  %622 = vmatpush1.bf16.msra.mxu0 %v585
  %623 = vmatprep.subr.bf16.mxu0 0
  %624 = vmatpush1.bf16.msra.mxu0 0
  %625 = vmatprep.subr.bf16.mxu0 0
  %626 = vmatpush1.bf16.msra.mxu0 0
  %627 = vmatprep.subr.bf16.mxu0 0
  %628 = vmatpush1.bf16.msra.mxu0 0
  %629 = vmatprep.subr.bf16.mxu0 0
  %630 = vmatpush1.bf16.msra.mxu0 0
  %631 = vmatprep.subr.bf16.mxu0 0
  %632 = vmatpush1.bf16.msra.mxu0 0
  %633 = vmatprep.subr.bf16.mxu0 0
  %634 = vmatpush1.bf16.msra.mxu0 0
  %635 = vmatprep.subr.bf16.mxu0 0
  %636 = vmatpush1.bf16.msra.mxu0 0
  %637 = vmatprep.subr.bf16.mxu0 0
  %638 = vmatpush1.bf16.msra.mxu0 0
  %639 = vmatprep.subr.bf16.mxu0 0
  %640 = vmatpush1.bf16.msra.mxu0 0
  %641 = vmatprep.subr.bf16.mxu0 0
  %642 = vmatpush1.bf16.msra.mxu0 0
  %643 = vmatprep.subr.bf16.mxu0 0
  %644 = vmatpush1.bf16.msra.mxu0 0
  %645 = vmatprep.subr.bf16.mxu0 0
  %646 = vmatpush1.bf16.msra.mxu0 0
  %647 = vmatprep.mubr.bf16.mxu0 0
  %648 = vmatmul.mubr.bf16.gmra.mrb[0].mxu0 %v592
  %v649 = vpop.f32.mrb[0].mxu0
  %v650 = vadd.f32 %v565, %v649
  %v651 = vpop.f32.mrb[0].mxu0
  %v652 = vpop.f32.mrb[0].mxu0
  %v653 = vadd.f32 %v565, %v652
  %v654 = vpop.f32.mrb[0].mxu0
  %655 = vmatprep.mubr.bf16.mxu0 0
  %656 = vmatmul.mubr.bf16.gmra.mrb[0].mxu0 %v595
  %v657 = vpop.f32.mrb[0].mxu0
  %v658 = vadd.f32 %v565, %v657
  %v659 = vpop.f32.mrb[0].mxu0
  %v660 = vpop.f32.mrb[0].mxu0
  %v661 = vadd.f32 %v565, %v660
  %v662 = vpop.f32.mrb[0].mxu0
  %663 = vmatprep.mubr.bf16.mxu0 0
  %664 = vmatmul.mubr.bf16.gmra.mrb[0].mxu0 %v598
  %v665 = vpop.f32.mrb[0].mxu0
  %v666 = vadd.f32 %v565, %v665
  %v667 = vpop.f32.mrb[0].mxu0
  %v668 = vpop.f32.mrb[0].mxu0
  %v669 = vadd.f32 %v565, %v668
  %v670 = vpop.f32.mrb[0].mxu0
  %671 = vmatprep.mubr.bf16.mxu0 0
  %672 = vmatmul.mubr.bf16.gmra.mrb[0].mxu0 %v601
  %v673 = vpop.f32.mrb[0].mxu0
  %v674 = vadd.f32 %v565, %v673
  %v675 = vpop.f32.mrb[0].mxu0
  %v676 = vpop.f32.mrb[0].mxu0
  %v677 = vadd.f32 %v565, %v676
  %v678 = vpop.f32.mrb[0].mxu0
  %679 = vmatprep.mubr.bf16.mxu0 0
  %680 = vmatmul.mubr.bf16.gmra.mrb[0].mxu0 %v604
  %v681 = vpop.f32.mrb[0].mxu0
  %v682 = vadd.f32 %v565, %v681
  %v683 = vpop.f32.mrb[0].mxu0
  %v684 = vpop.f32.mrb[0].mxu0
  %v685 = vadd.f32 %v565, %v684
  %v686 = vpop.f32.mrb[0].mxu0
  %687 = vmatprep.mubr.bf16.mxu0 0
  %688 = vmatmul.mubr.bf16.gmra.mrb[0].mxu0 %v607
  %v689 = vpop.f32.mrb[0].mxu0
  %v690 = vadd.f32 %v565, %v689
  %v691 = vpop.f32.mrb[0].mxu0
  %v692 = vpop.f32.mrb[0].mxu0
  %v693 = vadd.f32 %v565, %v692
  %v694 = vpop.f32.mrb[0].mxu0
  %695 = vmatprep.mubr.bf16.mxu0 0
  %696 = vmatmul.mubr.bf16.gmra.mrb[0].mxu0 %v610
  %v697 = vpop.f32.mrb[0].mxu0
  %v698 = vadd.f32 %v565, %v697
  %v699 = vpop.f32.mrb[0].mxu0
  %v700 = vpop.f32.mrb[0].mxu0
  %v701 = vadd.f32 %v565, %v700
  %v702 = vpop.f32.mrb[0].mxu0
  %703 = vmatprep.mubr.bf16.mxu0 0
  %704 = vmatmul.mubr.bf16.gmra.mrb[0].mxu0 %v613
  %v705 = vpop.f32.mrb[0].mxu0
  %v706 = vadd.f32 %v565, %v705
  %v707 = vpop.f32.mrb[0].mxu0
  %v708 = vpop.f32.mrb[0].mxu0
  %v709 = vadd.f32 %v565, %v708
  %v710 = vpop.f32.mrb[0].mxu0
  %711 = vdwg.mxu0
  %v712 = vadd.f32 %v43, %v650
  %v713 = vadd.f32 %v44, %v653
  %v714 = vadd.f32 %v45, %v658
  %v715 = vadd.f32 %v46, %v661
  %v716 = vadd.f32 %v47, %v666
  %v717 = vadd.f32 %v48, %v669
  %v718 = vadd.f32 %v49, %v674
  %v719 = vadd.f32 %v50, %v677
  %v720 = vadd.f32 %v51, %v682
  %v721 = vadd.f32 %v52, %v685
  %v722 = vadd.f32 %v53, %v690
  %v723 = vadd.f32 %v54, %v693
  %v724 = vadd.f32 %v55, %v698
  %v725 = vadd.f32 %v56, %v701
  %v726 = vadd.f32 %v57, %v706
  %v727 = vadd.f32 %v58, %v709
  %v728 = vpack.c.bf16 %v713, %v712
  %v729 = vpack.c.bf16 %v715, %v714
  %v730 = vpack.c.bf16 %v717, %v716
  %v731 = vpack.c.bf16 %v719, %v718
  %v732 = vpack.c.bf16 %v721, %v720
  %v733 = vpack.c.bf16 %v723, %v722
  %v734 = vpack.c.bf16 %v725, %v724
  %v735 = vpack.c.bf16 %v727, %v726
  %v744 = vunpack.c.l.b16 %v728
  %v745 = vunpack.c.h.b16 %v728
  %v746 = vunpack.c.l.b16 %v729
  %v747 = vunpack.c.h.b16 %v729
  %v748 = vunpack.c.l.b16 %v730
  %v749 = vunpack.c.h.b16 %v730
  %v750 = vunpack.c.l.b16 %v731
  %v751 = vunpack.c.h.b16 %v731
  %v752 = vunpack.c.l.b16 %v732
  %v753 = vunpack.c.h.b16 %v732
  %v754 = vunpack.c.l.b16 %v733
  %v755 = vunpack.c.h.b16 %v733
  %v756 = vunpack.c.l.b16 %v734
  %v757 = vunpack.c.h.b16 %v734
  %v758 = vunpack.c.l.b16 %v735
  %v759 = vunpack.c.h.b16 %v735
  %v760 = vpack.c.b16 %v744, %v744
  %v761 = vpack.c.b16 %v745, %v745
  %v762 = vpack.c.b16 %v746, %v746
  %v763 = vpack.c.b16 %v747, %v747
  %v764 = vpack.c.b16 %v748, %v748
  %v765 = vpack.c.b16 %v749, %v749
  %v766 = vpack.c.b16 %v750, %v750
  %v767 = vpack.c.b16 %v751, %v751
  %v768 = vpack.c.b16 %v752, %v752
  %v769 = vpack.c.b16 %v753, %v753
  %v770 = vpack.c.b16 %v754, %v754
  %v771 = vpack.c.b16 %v755, %v755
  %v772 = vpack.c.b16 %v756, %v756
  %v773 = vpack.c.b16 %v757, %v757
  %v774 = vpack.c.b16 %v758, %v758
  %v775 = vpack.c.b16 %v759, %v759
  %vm792 = vcmask 257024
  %793 = vst.msk [vmem:[%s7] sm:$0xf] %vm792, %v760
  %794 = vst.msk [vmem:[%s7 + $0x4] sm:$0xf] %vm792, %v761
  %795 = vst.msk [vmem:[%s7 + $0x8] sm:$0xf] %vm792, %v762
  %796 = vst.msk [vmem:[%s7 + $0xc] sm:$0xf] %vm792, %v763
  %797 = vst.msk [vmem:[%s7 + $0x10] sm:$0xf] %vm792, %v764
  %798 = vst.msk [vmem:[%s7 + $0x14] sm:$0xf] %vm792, %v765
  %799 = vst.msk [vmem:[%s7 + $0x18] sm:$0xf] %vm792, %v766
  %800 = vst.msk [vmem:[%s7 + $0x1c] sm:$0xf] %vm792, %v767
  %801 = vst.msk [vmem:[%s7 + $0x20] sm:$0xf] %vm792, %v768
  %802 = vst.msk [vmem:[%s7 + $0x24] sm:$0xf] %vm792, %v769
  %803 = vst.msk [vmem:[%s7 + $0x28] sm:$0xf] %vm792, %v770
  %804 = vst.msk [vmem:[%s7 + $0x2c] sm:$0xf] %vm792, %v771
  %805 = vst.msk [vmem:[%s7 + $0x30] sm:$0xf] %vm792, %v772
  %806 = vst.msk [vmem:[%s7 + $0x34] sm:$0xf] %vm792, %v773
  %807 = vst.msk [vmem:[%s7 + $0x38] sm:$0xf] %vm792, %v774
  %808 = vst.msk [vmem:[%s7 + $0x3c] sm:$0xf] %vm792, %v775
  // Predicated region
  $region30: #{basic_layer.12} parent=0 // pred_check
    _
  $region31: #{basic_layer.12} parent=0 // pred_check_branch
    %810 = sbr.rel (0) target = $region33
  $region32: #{basic_layer.12} parent=0 // pred_region
    _
  $region33: #{basic_layer.12} parent=0 // pred_fallthru
    _
  // Predicated region
  $region34: #{basic_layer.12} parent=0 // pred_check
    _
  $region35: #{basic_layer.12} parent=0 // pred_check_branch
    %812 = sbr.rel (0) target = $region37
  $region36: #{basic_layer.12} parent=0 // pred_region
    _
  $region37: #{basic_layer.12} parent=0 // pred_fallthru
    _

// kernel: basic_layer.17
$region0: #{basic_layer.17}
  #allocation0 [shape = 'u32[]', space=smem, size = 0x4, offset = 0x4, fixed_abs, tag = 'smem constant byte address 0x4 - core index']
  #allocation1 [shape = 'u32[144,128]{1,0:T(1,128)}', space=vmem, size = 0x12000, scoped, tag = 'internal scratch']
  %s0 = inlined_call_operand.vmem [shape: bf16[32,128], index: 0, kind: input, shape index: {}]
  %s1 = inlined_call_operand.vmem [shape: bf16[1,128], index: 1, kind: input, shape index: {}]
  %s2 = inlined_call_operand.vmem [shape: bf16[1,128], index: 2, kind: input, shape index: {}]
  %s3 = inlined_call_operand.vmem [shape: bf16[128,64], index: 3, kind: input, shape index: {}]
  %s4 = inlined_call_operand.vmem [shape: bf16[1,64], index: 4, kind: input, shape index: {}]
  %s5 = inlined_call_operand.hbm [shape: bf16[32,64], index: 5, kind: output, shape index: {}]
  %s6 = sld [smem:[#allocation0]]
  $region30: #{basic_layer.17} parent=0
    _
  %s8 = ssub.s32 1, %s6
  %s9 = scalar_select 0, %s8, %s6
  $region1: #{basic_layer.17} parent=0
    #allocation2 [shape = 'u8[8192]{0}', space=vmem, size = 0x2000, scoped, tag = 'output window, operand 0, single buffered']
    #allocation3 [shape = 's32[1]{0}', space=sflag, size = 0x4, scoped, tag = 'scoped memory for basic_layer.17']
    %10 = vsyncpa [#allocation3], 0
    // Predicated region
    $region2: #{basic_layer.17} parent=1 // pred_check
      _
    $region3: #{basic_layer.17} parent=1 // pred_check_branch
      %12 = sbr.rel (0) target = $region5
    $region4: #{basic_layer.17} parent=1 // pred_region
      _
    $region5: #{basic_layer.17} parent=1 // pred_fallthru
      _
    // Predicated region
    $region6: #{basic_layer.17} parent=1 // pred_check
      _
    $region7: #{basic_layer.17} parent=1 // pred_check_branch
      %14 = sbr.rel (0) target = $region9
    $region8: #{basic_layer.17} parent=1 // pred_region
      _
    $region9: #{basic_layer.17} parent=1 // pred_fallthru
      _
    // Predicated region
    $region10: #{basic_layer.17} parent=1 // pred_check
      _
    $region11: #{basic_layer.17} parent=1 // pred_check_branch
      %16 = sbr.rel (0) target = $region13
    $region12: #{basic_layer.17} parent=1 // pred_region
      _
    $region13: #{basic_layer.17} parent=1 // pred_fallthru
      _
    // Predicated region
    $region14: #{basic_layer.17} parent=1 // pred_check
      _
    $region15: #{basic_layer.17} parent=1 // pred_check_branch
      %18 = sbr.rel (0) target = $region17
    $region16: #{basic_layer.17} parent=1 // pred_region
      _
    $region17: #{basic_layer.17} parent=1 // pred_fallthru
      _
    // Predicated region
    $region18: #{basic_layer.17} parent=1 // pred_check
      _
    $region19: #{basic_layer.17} parent=1 // pred_check_branch
      %20 = sbr.rel (0) target = $region21
    $region20: #{basic_layer.17} parent=1 // pred_region
      _
    $region21: #{basic_layer.17} parent=1 // pred_fallthru
      _
    %v22 = vld [vmem:[%s0] sm:$0xf]
    %v23 = vld [vmem:[%s0 + $0x4] sm:$0xf]
    %v24 = vld [vmem:[%s0 + $0x8] sm:$0xf]
    %v25 = vld [vmem:[%s0 + $0xc] sm:$0xf]
    %v26 = vunpack.c.l.bf16 %v22
    %v27 = vunpack.c.l.bf16 %v23
    %v28 = vunpack.c.l.bf16 %v24
    %v29 = vunpack.c.l.bf16 %v25
    %30 = vadd.xlane.f32.xlu0 %v26
    %v31 = vpop.xlane.xlu0 %30
    %32 = vadd.xlane.f32.xlu0 %v27
    %v33 = vpop.xlane.xlu0 %32
    %34 = vadd.xlane.f32.xlu0 %v28
    %v35 = vpop.xlane.xlu0 %34
    %36 = vadd.xlane.f32.xlu0 %v29
    %v37 = vpop.xlane.xlu0 %36
    %v38 = vrcp.pop 128.0
    %v39 = vmul.f32 %v31, %v38
    %v40 = vmul.f32 %v33, %v38
    %v41 = vmul.f32 %v35, %v38
    %v42 = vmul.f32 %v37, %v38
    %v43 = vsub.f32 %v26, %v39
    %v44 = vsub.f32 %v27, %v40
    %v45 = vsub.f32 %v28, %v41
    %v46 = vsub.f32 %v29, %v42
    %v47 = vmul.f32 %v43, %v43
    %v48 = vmul.f32 %v44, %v44
    %v49 = vmul.f32 %v45, %v45
    %v50 = vmul.f32 %v46, %v46
    %51 = vadd.xlane.f32.xlu0 %v47
    %v52 = vpop.xlane.xlu0 %51
    %53 = vadd.xlane.f32.xlu0 %v48
    %v54 = vpop.xlane.xlu0 %53
    %55 = vadd.xlane.f32.xlu0 %v49
    %v56 = vpop.xlane.xlu0 %55
    %57 = vadd.xlane.f32.xlu0 %v50
    %v58 = vpop.xlane.xlu0 %57
    %v59 = vmul.f32 %v52, %v38
    %v60 = vmul.f32 %v54, %v38
    %v61 = vmul.f32 %v56, %v38
    %v62 = vmul.f32 %v58, %v38
    %v63 = vadd.f32 %v59, 1e-05
    %v64 = vadd.f32 %v60, 1e-05
    %v65 = vadd.f32 %v61, 1e-05
    %v66 = vadd.f32 %v62, 1e-05
    %v67 = vrsqrt.pop %v63
    %v68 = vrsqrt.pop %v64
    %v69 = vrsqrt.pop %v65
    %v70 = vrsqrt.pop %v66
    %v71 = vmul.f32 %v43, %v67
    %v72 = vmul.f32 %v44, %v68
    %v73 = vmul.f32 %v45, %v69
    %v74 = vmul.f32 %v46, %v70
    %v75 = vld [vmem:[%s1] sm:$0x1]
    %v76 = vunpack.c.l.bf16 %v75
    %v77 = vlaneseq
    %v78 = vshrl.u32 %v77, 7
    %v79 = vsub.s32 0, %v78
    %v80 = vrot.slane %v76, %v79
    %v81 = vmul.f32 %v71, %v80
    %v82 = vmul.f32 %v72, %v80
    %v83 = vmul.f32 %v73, %v80
    %v84 = vmul.f32 %v74, %v80
    %v85 = vld [vmem:[%s2] sm:$0x1]
    %v86 = vunpack.c.l.bf16 %v85
    %v87 = vlaneseq
    %v88 = vshrl.u32 %v87, 7
    %v89 = vsub.s32 0, %v88
    %v90 = vrot.slane %v86, %v89
    %v91 = vadd.f32 %v81, %v90
    %v92 = vadd.f32 %v82, %v90
    %v93 = vadd.f32 %v83, %v90
    %v94 = vadd.f32 %v84, %v90
    %v95 = vpack.c.bf16 %v92, %v91
    %v96 = vpack.c.bf16 %v94, %v93
    %v97 = vld [vmem:[%s3] sm:$0xf]
    %v98 = vld [vmem:[%s3 + $0x4] sm:$0xf]
    %v99 = vld [vmem:[%s3 + $0x8] sm:$0xf]
    %v100 = vld [vmem:[%s3 + $0xc] sm:$0xf]
    %v101 = vld [vmem:[%s3 + $0x10] sm:$0xf]
    %v102 = vld [vmem:[%s3 + $0x14] sm:$0xf]
    %v103 = vld [vmem:[%s3 + $0x18] sm:$0xf]
    %v104 = vld [vmem:[%s3 + $0x1c] sm:$0xf]
    %v105 = vld [vmem:[%s3 + $0x20] sm:$0xf]
    %v106 = vld [vmem:[%s3 + $0x24] sm:$0xf]
    %v107 = vld [vmem:[%s3 + $0x28] sm:$0xf]
    %v108 = vld [vmem:[%s3 + $0x2c] sm:$0xf]
    %v109 = vld [vmem:[%s3 + $0x30] sm:$0xf]
    %v110 = vld [vmem:[%s3 + $0x34] sm:$0xf]
    %v111 = vld [vmem:[%s3 + $0x38] sm:$0xf]
    %v112 = vld [vmem:[%s3 + $0x3c] sm:$0xf]
    %v113 = vld [vmem:[%s4] sm:$0x1]
    %v114 = vunpack.c.l.bf16 %v113
    %v115 = vlaneseq
    %v116 = vshrl.u32 %v115, 7
    %v117 = vsub.s32 0, %v116
    %v118 = vrot.slane %v114, %v117
    %v135 = vunpack.c.l.b16 %v97
    %v136 = vunpack.c.l.b16 %v98
    %v137 = vunpack.c.l.b16 %v99
    %v138 = vunpack.c.l.b16 %v100
    %v139 = vunpack.c.l.b16 %v101
    %v140 = vunpack.c.l.b16 %v102
    %v141 = vunpack.c.l.b16 %v103
    %v142 = vunpack.c.l.b16 %v104
    %v143 = vunpack.c.l.b16 %v105
    %v144 = vunpack.c.l.b16 %v106
    %v145 = vunpack.c.l.b16 %v107
    %v146 = vunpack.c.l.b16 %v108
    %v147 = vunpack.c.l.b16 %v109
    %v148 = vunpack.c.l.b16 %v110
    %v149 = vunpack.c.l.b16 %v111
    %v150 = vunpack.c.l.b16 %v112
    %v151 = vpack.c.b16 %v136, %v135
    %v152 = vpack.c.b16 %v138, %v137
    %v153 = vpack.c.b16 %v140, %v139
    %v154 = vpack.c.b16 %v142, %v141
    %v155 = vpack.c.b16 %v144, %v143
    %v156 = vpack.c.b16 %v146, %v145
    %v157 = vpack.c.b16 %v148, %v147
    %v158 = vpack.c.b16 %v150, %v149
    %167 = vmatprep.subr.bf16.mxu0 0
    %168 = vmatpush1.bf16.msra.mxu0 %v151
    %169 = vmatprep.subr.bf16.mxu0 0
    %170 = vmatpush1.bf16.msra.mxu0 %v152
    %171 = vmatprep.subr.bf16.mxu0 0
    %172 = vmatpush1.bf16.msra.mxu0 %v153
    %173 = vmatprep.subr.bf16.mxu0 0
    %174 = vmatpush1.bf16.msra.mxu0 %v154
    %175 = vmatprep.subr.bf16.mxu0 0
    %176 = vmatpush1.bf16.msra.mxu0 %v155
    %177 = vmatprep.subr.bf16.mxu0 0
    %178 = vmatpush1.bf16.msra.mxu0 %v156
    %179 = vmatprep.subr.bf16.mxu0 0
    %180 = vmatpush1.bf16.msra.mxu0 %v157
    %181 = vmatprep.subr.bf16.mxu0 0
    %182 = vmatpush1.bf16.msra.mxu0 %v158
    %183 = vmatprep.subr.bf16.mxu0 0
    %184 = vmatpush1.bf16.msra.mxu0 0
    %185 = vmatprep.subr.bf16.mxu0 0
    %186 = vmatpush1.bf16.msra.mxu0 0
    %187 = vmatprep.subr.bf16.mxu0 0
    %188 = vmatpush1.bf16.msra.mxu0 0
    %189 = vmatprep.subr.bf16.mxu0 0
    %190 = vmatpush1.bf16.msra.mxu0 0
    %191 = vmatprep.subr.bf16.mxu0 0
    %192 = vmatpush1.bf16.msra.mxu0 0
    %193 = vmatprep.subr.bf16.mxu0 0
    %194 = vmatpush1.bf16.msra.mxu0 0
    %195 = vmatprep.subr.bf16.mxu0 0
    %196 = vmatpush1.bf16.msra.mxu0 0
    %197 = vmatprep.subr.bf16.mxu0 0
    %198 = vmatpush1.bf16.msra.mxu0 0
    %199 = vmatprep.mubr.bf16.mxu0 0
    %200 = vmatmul.mubr.bf16.gmra.mrb[0].mxu0 %v95
    %v201 = vpop.f32.mrb[0].mxu0
    %v202 = vadd.f32 %v118, %v201
    %v203 = vpop.f32.mrb[0].mxu0
    %v204 = vpop.f32.mrb[0].mxu0
    %v205 = vadd.f32 %v118, %v204
    %v206 = vpop.f32.mrb[0].mxu0
    %207 = vmatprep.mubr.bf16.mxu0 0
    %208 = vmatmul.mubr.bf16.gmra.mrb[0].mxu0 %v96
    %v209 = vpop.f32.mrb[0].mxu0
    %v210 = vadd.f32 %v118, %v209
    %v211 = vpop.f32.mrb[0].mxu0
    %v212 = vpop.f32.mrb[0].mxu0
    %v213 = vadd.f32 %v118, %v212
    %v214 = vpop.f32.mrb[0].mxu0
    %215 = vdwg.mxu0
    %v216 = vpack.c.bf16 %v205, %v202
    %v217 = vpack.c.bf16 %v213, %v210
    %v220 = vunpack.c.l.b16 %v216
    %v221 = vunpack.c.h.b16 %v216
    %v222 = vunpack.c.l.b16 %v217
    %v223 = vunpack.c.h.b16 %v217
    %v224 = vpack.c.b16 %v220, %v220
    %v225 = vpack.c.b16 %v221, %v221
    %v226 = vpack.c.b16 %v222, %v222
    %v227 = vpack.c.b16 %v223, %v223
    %vm232 = vcmask 519168
    %233 = vst.msk [vmem:[#allocation2] sm:$0xf] %vm232, %v224
    %234 = vst.msk [vmem:[#allocation2 + $0x4] sm:$0xf] %vm232, %v225
    %235 = vst.msk [vmem:[#allocation2 + $0x8] sm:$0xf] %vm232, %v226
    %236 = vst.msk [vmem:[#allocation2 + $0xc] sm:$0xf] %vm232, %v227
    // Predicated region
    $region22: #{basic_layer.17} parent=1 // pred_check
      _
    $region23: #{basic_layer.17} parent=1 // pred_check_branch
      %238 = sbr.rel (0) target = $region25
    $region24: #{basic_layer.17} parent=1 // pred_region
      %s240 = ssub.s32 256, 256
      %241 = vsyncadd [#allocation3], %s240
      %s242 = sshll.u32 [#allocation2], 4
      %s243 = int_to_ptr.vmem [resolvable:$true] %s242
      %248 = dma.vmem_to_hbm [thread:$0]  %s243, 256, %s5, [#allocation3], 64, 64, 4
    $region25: #{basic_layer.17} parent=1 // pred_fallthru
      _
    // Predicated region
    $region26: #{basic_layer.17} parent=1 // pred_check
      _
    $region27: #{basic_layer.17} parent=1 // pred_check_branch
      %250 = sbr.rel (0) target = $region29
    $region28: #{basic_layer.17} parent=1 // pred_region
      %251 = dma.done [#allocation3], 256
    $region29: #{basic_layer.17} parent=1 // pred_fallthru
      _
    %252 = vsyncpa [#allocation3], 1

// kernel: basic_layer.14
$region0: #{basic_layer.14}
  #allocation0 [shape = 'u32[]', space=smem, size = 0x4, offset = 0x4, fixed_abs, tag = 'smem constant byte address 0x4 - core index']
  #allocation1 [shape = 'u32[144,128]{1,0:T(1,128)}', space=vmem, size = 0x12000, scoped, tag = 'internal scratch']
  %s0 = inlined_call_operand.vmem [shape: bf16[8,16,96], index: 0, kind: input, shape index: {}]
  %s1 = inlined_call_operand.vmem [shape: f32[4,4,16,16], index: 1, kind: input, shape index: {}]
  %s2 = inlined_call_operand.vmem [shape: bf16[8,4,16,8], index: 2, kind: output, shape index: {}]
  %s3 = sld [smem:[#allocation0]]
  $region41: #{basic_layer.14} parent=0
    _
  %s5 = ssub.s32 1, %s3
  %s6 = scalar_select 0, %s5, %s3
  loop: start=0, step=1, limit=4
  $region2: #{basic_layer.14} parent=0 // loop_pre_header
    _
  $region3: #{basic_layer.14} parent=0 // loop_header
    %s8 = sphi 0, %s12
    %p9 = scmp.ge.s32.totalorder %s8, 4
    %s18 = sphi 0, %s20
    %s21 = sphi 0, %s18
    %s22 = sphi 0, %s21
    %s38 = sphi 0, %s22
    %s42 = sphi 0, %s42
    %s44 = sphi 0, %s42
    %s45 = sphi 0, %s44
    %s59 = sphi 0, %s45
    %s65 = sphi 0, %s67
    %s68 = sphi 0, %s65
    %s69 = sphi 0, %s68
    %s85 = sphi 0, %s69
  $region4: #{basic_layer.14} parent=0 // loop_header_branch
    %11 = sbr.rel (%p9) target = $region8
  $region5: #{basic_layer.14} parent=0 // loop_body
    %s13 = ssub.s32 %s8, 1
    %s14 = ssub.s32 %s8, 2
    %s15 = sadd.s32 %s8, 1
    %s16 = ssub.s32 %s8, %s15
    %p17 = scmp.eq.s32.totalorder %s16, 0
    %s19 = sadd.s32 %s18, 1
    %s20 = scalar_select %p17, %s18, %s19
    %p23 = pneg %p17
    %p24 = scmp.eq.s32.totalorder %s8, 1
    %p25 = por %p23, %p24
    %p26 = scmp.ne.s32.totalorder %s18, %s21
    %p27 = scmp.eq.s32.totalorder %s8, 0
    %p28 = por %p26, %p27
    %p29 = scmp.ne.s32.totalorder %s18, %s21
    %p30 = scmp.eq.s32.totalorder %s13, 1
    %p31 = por %p29, %p30
    %p32 = scmp.ne.s32.totalorder %s21, %s22
    %p33 = scmp.eq.s32.totalorder %s13, 0
    %p34 = por %p32, %p33
    %p35 = scmp.ne.s32.totalorder %s21, %s22
    %p36 = scmp.eq.s32.totalorder %s14, 1
    %p37 = por %p35, %p36
    %p39 = scmp.ne.s32.totalorder %s22, %s38
    %p40 = scmp.eq.s32.totalorder %s14, 0
    %p41 = por %p39, %p40
    %s43 = sadd.s32 %s42, 1
    %p46 = scmp.eq.s32.totalorder %s8, 1
    %p47 = scmp.ne.s32.totalorder %s42, %s44
    %p48 = scmp.eq.s32.totalorder %s8, 0
    %p49 = por %p47, %p48
    %p50 = scmp.ne.s32.totalorder %s42, %s44
    %p51 = scmp.eq.s32.totalorder %s13, 1
    %p52 = por %p50, %p51
    %p53 = scmp.ne.s32.totalorder %s44, %s45
    %p54 = scmp.eq.s32.totalorder %s13, 0
    %p55 = por %p53, %p54
    %p56 = scmp.ne.s32.totalorder %s44, %s45
    %p57 = scmp.eq.s32.totalorder %s14, 1
    %p58 = por %p56, %p57
    %p60 = scmp.ne.s32.totalorder %s45, %s59
    %p61 = scmp.eq.s32.totalorder %s14, 0
    %p62 = por %p60, %p61
    %s63 = ssub.s32 %s8, %s15
    %p64 = scmp.eq.s32.totalorder %s63, 0
    %s66 = sadd.s32 %s65, 1
    %s67 = scalar_select %p64, %s65, %s66
    %p70 = pneg %p64
    %p71 = scmp.eq.s32.totalorder %s8, 1
    %p72 = por %p70, %p71
    %p73 = scmp.ne.s32.totalorder %s65, %s68
    %p74 = scmp.eq.s32.totalorder %s8, 0
    %p75 = por %p73, %p74
    %p76 = scmp.ne.s32.totalorder %s65, %s68
    %p77 = scmp.eq.s32.totalorder %s13, 1
    %p78 = por %p76, %p77
    %p79 = scmp.ne.s32.totalorder %s68, %s69
    %p80 = scmp.eq.s32.totalorder %s13, 0
    %p81 = por %p79, %p80
    %p82 = scmp.ne.s32.totalorder %s68, %s69
    %p83 = scmp.eq.s32.totalorder %s14, 1
    %p84 = por %p82, %p83
    %p86 = scmp.ne.s32.totalorder %s69, %s85
    %p87 = scmp.eq.s32.totalorder %s14, 0
    %p88 = por %p86, %p87
    %p89 = scmp.le.s32.totalorder 1, %s8
    %p90 = scmp.lt.s32.totalorder %s8, 3
    %p91 = pnand %p89, %p90
    %p92 = pneg %p91
    // Predicated region
    $region9: #{basic_layer.14} parent=5 // pred_check
      _
    $region10: #{basic_layer.14} parent=5 // pred_check_branch
      %94 = sbr.rel (%p91) target = $region12
    $region11: #{basic_layer.14} parent=5 // pred_region
      %s95 = ssub.s32 %s8, 1
      // Predicated region
      $region13: #{basic_layer.14} parent=11 // pred_check
        %p96 = pneg %p55
      $region14: #{basic_layer.14} parent=11 // pred_check_branch
        %98 = sbr.rel (%p96) target = $region16
      $region15: #{basic_layer.14} parent=11 // pred_region
        _
      $region16: #{basic_layer.14} parent=11 // pred_fallthru
        _
    $region12: #{basic_layer.14} parent=5 // pred_fallthru
      _
    %p99 = scmp.lt.s32.totalorder %s8, 2
    // Predicated region
    $region17: #{basic_layer.14} parent=5 // pred_check
      %p100 = pneg %p99
    $region18: #{basic_layer.14} parent=5 // pred_check_branch
      %102 = sbr.rel (%p100) target = $region20
    $region19: #{basic_layer.14} parent=5 // pred_region
      // Predicated region
      $region21: #{basic_layer.14} parent=19 // pred_check
        %p103 = pneg %p28
      $region22: #{basic_layer.14} parent=19 // pred_check_branch
        %105 = sbr.rel (%p103) target = $region24
      $region23: #{basic_layer.14} parent=19 // pred_region
        %s106 = smul.u32 4, %s8
        %p107 = scmp.lt.s32.totalorder %s106, 7
        %s108 = scalar_select %p107, %s106, 7
        %s109 = smul.addr %s108, 2
        %s110 = smul.addr %s109, 4
        %s111 = scalar_lea.vmem %s0, %s110
        %s112 = smul.u32 4, %s8
      $region24: #{basic_layer.14} parent=19 // pred_fallthru
        _
    $region20: #{basic_layer.14} parent=5 // pred_fallthru
      _
    %p113 = scmp.le.s32.totalorder 1, %s8
    %p114 = scmp.lt.s32.totalorder %s8, 3
    %p115 = pnand %p113, %p114
    %p116 = pneg %p115
    // Predicated region
    $region25: #{basic_layer.14} parent=5 // pred_check
      _
    $region26: #{basic_layer.14} parent=5 // pred_check_branch
      %118 = sbr.rel (%p115) target = $region28
    $region27: #{basic_layer.14} parent=5 // pred_region
      %s119 = ssub.s32 %s8, 1
      %s120 = smul.u32 4, %s13
      %p121 = scmp.lt.s32.totalorder %s120, 7
      %s122 = scalar_select %p121, %s120, 7
      %s123 = smul.addr %s122, 2
      %s124 = smul.addr %s123, 4
      %s125 = scalar_lea.vmem %s0, %s124
      %p126 = pneg %p34
      %p127 = pneg %p31
      %p128 = pneg %p55
      %p129 = pneg %p52
      %p130 = pneg %p81
      %p131 = pneg %p78
      %s132 = smul.u32 4, %s13
      %p133 = scmp.lt.s32.totalorder %s132, 7
      %s134 = scalar_select %p133, %s132, 7
      %s135 = smul.addr %s134, 8
      %s136 = smul.addr %s135, 4
      %s137 = scalar_lea.vmem %s2, %s136
      %s138 = smul.u32 4, %s13
      %p139 = scmp.lt.s32.totalorder %s138, 7
      %s140 = scalar_select %p139, %s138, 7
      %s141 = smul.addr %s140, 2
      %s142 = smul.addr %s141, 4
      %s143 = scalar_lea.vmem %s0, %s142
      %s144 = smul.u32 4, %s13
      %s145 = smul.u32 4, %s13
      %p146 = scmp.lt.s32.totalorder %s145, 7
      %s147 = scalar_select %p146, %s145, 7
      %s148 = smul.addr %s147, 8
      %s149 = smul.addr %s148, 4
      %s150 = scalar_lea.vmem %s2, %s149
      %s151 = smul.u32 4, %s13
      %v153 = vld [vmem:[%s143] sm:$0xf]
      %v154 = vld [vmem:[%s143 + $0x4] sm:$0xf]
      %v155 = vld [vmem:[%s143 + $0x8] sm:$0xf]
      %v156 = vld [vmem:[%s143 + $0xc] sm:$0xf]
      %v157 = vld [vmem:[%s143 + $0x10] sm:$0xf]
      %v158 = vld [vmem:[%s143 + $0x14] sm:$0xf]
      %v159 = vld [vmem:[%s143 + $0x18] sm:$0xf]
      %v160 = vld [vmem:[%s143 + $0x1c] sm:$0xf]
      %v161 = vld [vmem:[%s1] sm:$0xff]
      %v162 = vld [vmem:[%s1 + $0x8] sm:$0xff]
      %v163 = vld [vmem:[%s1 + $0x10] sm:$0xff]
      %v164 = vld [vmem:[%s1 + $0x18] sm:$0xff]
      %v165 = vld [vmem:[%s1 + $0x20] sm:$0xff]
      %v166 = vld [vmem:[%s1 + $0x28] sm:$0xff]
      %v167 = vld [vmem:[%s1 + $0x30] sm:$0xff]
      %v168 = vld [vmem:[%s1 + $0x38] sm:$0xff]
      %v169 = vld [vmem:[%s1 + $0x40] sm:$0xff]
      %v170 = vld [vmem:[%s1 + $0x48] sm:$0xff]
      %v171 = vld [vmem:[%s1 + $0x50] sm:$0xff]
      %v172 = vld [vmem:[%s1 + $0x58] sm:$0xff]
      %v173 = vld [vmem:[%s1 + $0x60] sm:$0xff]
      %v174 = vld [vmem:[%s1 + $0x68] sm:$0xff]
      %v175 = vld [vmem:[%s1 + $0x70] sm:$0xff]
      %v176 = vld [vmem:[%s1 + $0x78] sm:$0xff]
      %v177 = vld [vmem:[%s1 + $0x80] sm:$0xff]
      %v178 = vld [vmem:[%s1 + $0x88] sm:$0xff]
      %v179 = vld [vmem:[%s1 + $0x90] sm:$0xff]
      %v180 = vld [vmem:[%s1 + $0x98] sm:$0xff]
      %v181 = vld [vmem:[%s1 + $0xa0] sm:$0xff]
      %v182 = vld [vmem:[%s1 + $0xa8] sm:$0xff]
      %v183 = vld [vmem:[%s1 + $0xb0] sm:$0xff]
      %v184 = vld [vmem:[%s1 + $0xb8] sm:$0xff]
      %v185 = vld [vmem:[%s1 + $0xc0] sm:$0xff]
      %v186 = vld [vmem:[%s1 + $0xc8] sm:$0xff]
      %v187 = vld [vmem:[%s1 + $0xd0] sm:$0xff]
      %v188 = vld [vmem:[%s1 + $0xd8] sm:$0xff]
      %v189 = vld [vmem:[%s1 + $0xe0] sm:$0xff]
      %v190 = vld [vmem:[%s1 + $0xe8] sm:$0xff]
      %v191 = vld [vmem:[%s1 + $0xf0] sm:$0xff]
      %v192 = vld [vmem:[%s1 + $0xf8] sm:$0xff]
      %v195 = vunpack.c.l.b16 %v153
      %v196 = vunpack.c.l.b16 %v154
      %v197 = vpack.c.b16 %v196, %v195
      %198 = vrot.lane.b32.xlu0 %v197, 96
      %v199 = vpop.permute.xlu0 %198
      %vm200 = vcmask 64512
      %v202 = vsel %vm200, %v197, 0
      %v205 = vsel %vm200, %v199, 0
      %207 = vmatprep.subr.bf16.mxu0 0
      %208 = vmatpush1.bf16.xpose.msra.mxu0 %v205
      %209 = vmatprep.subr.bf16.mxu0 0
      %210 = vmatpush1.bf16.xpose.msra.mxu0 0
      %211 = vmatprep.subr.bf16.mxu0 0
      %212 = vmatpush1.bf16.xpose.msra.mxu0 0
      %213 = vmatprep.subr.bf16.mxu0 0
      %214 = vmatpush1.bf16.xpose.msra.mxu0 0
      %215 = vmatprep.subr.bf16.mxu0 0
      %216 = vmatpush1.bf16.xpose.msra.mxu0 0
      %217 = vmatprep.subr.bf16.mxu0 0
      %218 = vmatpush1.bf16.xpose.msra.mxu0 0
      %219 = vmatprep.subr.bf16.mxu0 0
      %220 = vmatpush1.bf16.xpose.msra.mxu0 0
      %221 = vmatprep.subr.bf16.mxu0 0
      %222 = vmatpush1.bf16.xpose.msra.mxu0 0
      %223 = vmatprep.subr.bf16.mxu0 0
      %224 = vmatpush1.bf16.xpose.msra.mxu0 0
      %225 = vmatprep.subr.bf16.mxu0 0
      %226 = vmatpush1.bf16.xpose.msra.mxu0 0
      %227 = vmatprep.subr.bf16.mxu0 0
      %228 = vmatpush1.bf16.xpose.msra.mxu0 0
      %229 = vmatprep.subr.bf16.mxu0 0
      %230 = vmatpush1.bf16.xpose.msra.mxu0 0
      %231 = vmatprep.subr.bf16.mxu0 0
      %232 = vmatpush1.bf16.xpose.msra.mxu0 0
      %233 = vmatprep.subr.bf16.mxu0 0
      %234 = vmatpush1.bf16.xpose.msra.mxu0 0
      %235 = vmatprep.subr.bf16.mxu0 0
      %236 = vmatpush1.bf16.xpose.msra.mxu0 0
      %237 = vmatprep.subr.bf16.mxu0 0
      %238 = vmatpush1.bf16.xpose.msra.mxu0 0
      %239 = vmatprep.mubr.bf16.mxu0 0
      %240 = vmatmul.mubr.bf16.gmra.mrb[0].mxu0 %v202
      %v241 = vpop.f32.mrb[0].mxu0
      %v242 = vadd.f32 0.0, %v241
      %v243 = vpop.f32.mrb[0].mxu0
      %v244 = vpop.f32.mrb[0].mxu0
      %v245 = vadd.f32 0.0, %v244
      %v246 = vpop.f32.mrb[0].mxu0
      %247 = vdwg.mxu0
      %v250 = vunpack.c.l.b16 %v155
      %v251 = vunpack.c.l.b16 %v156
      %v252 = vpack.c.b16 %v251, %v250
      %253 = vrot.lane.b32.xlu0 %v252, 96
      %v254 = vpop.permute.xlu0 %253
      %v256 = vsel %vm200, %v252, 0
      %v259 = vsel %vm200, %v254, 0
      %261 = vmatprep.subr.bf16.mxu0 0
      %262 = vmatpush1.bf16.xpose.msra.mxu0 %v259
      %263 = vmatprep.subr.bf16.mxu0 0
      %264 = vmatpush1.bf16.xpose.msra.mxu0 0
      %265 = vmatprep.subr.bf16.mxu0 0
      %266 = vmatpush1.bf16.xpose.msra.mxu0 0
      %267 = vmatprep.subr.bf16.mxu0 0
      %268 = vmatpush1.bf16.xpose.msra.mxu0 0
      %269 = vmatprep.subr.bf16.mxu0 0
      %270 = vmatpush1.bf16.xpose.msra.mxu0 0
      %271 = vmatprep.subr.bf16.mxu0 0
      %272 = vmatpush1.bf16.xpose.msra.mxu0 0
      %273 = vmatprep.subr.bf16.mxu0 0
      %274 = vmatpush1.bf16.xpose.msra.mxu0 0
      %275 = vmatprep.subr.bf16.mxu0 0
      %276 = vmatpush1.bf16.xpose.msra.mxu0 0
      %277 = vmatprep.subr.bf16.mxu0 0
      %278 = vmatpush1.bf16.xpose.msra.mxu0 0
      %279 = vmatprep.subr.bf16.mxu0 0
      %280 = vmatpush1.bf16.xpose.msra.mxu0 0
      %281 = vmatprep.subr.bf16.mxu0 0
      %282 = vmatpush1.bf16.xpose.msra.mxu0 0
      %283 = vmatprep.subr.bf16.mxu0 0
      %284 = vmatpush1.bf16.xpose.msra.mxu0 0
      %285 = vmatprep.subr.bf16.mxu0 0
      %286 = vmatpush1.bf16.xpose.msra.mxu0 0
      %287 = vmatprep.subr.bf16.mxu0 0
      %288 = vmatpush1.bf16.xpose.msra.mxu0 0
      %289 = vmatprep.subr.bf16.mxu0 0
      %290 = vmatpush1.bf16.xpose.msra.mxu0 0
      %291 = vmatprep.subr.bf16.mxu0 0
      %292 = vmatpush1.bf16.xpose.msra.mxu0 0
      %293 = vmatprep.mubr.bf16.mxu0 0
      %294 = vmatmul.mubr.bf16.gmra.mrb[0].mxu0 %v256
      %v295 = vpop.f32.mrb[0].mxu0
      %v296 = vadd.f32 0.0, %v295
      %v297 = vpop.f32.mrb[0].mxu0
      %v298 = vpop.f32.mrb[0].mxu0
      %v299 = vadd.f32 0.0, %v298
      %v300 = vpop.f32.mrb[0].mxu0
      %301 = vdwg.mxu0
      %v304 = vunpack.c.l.b16 %v157
      %v305 = vunpack.c.l.b16 %v158
      %v306 = vpack.c.b16 %v305, %v304
      %307 = vrot.lane.b32.xlu0 %v306, 96
      %v308 = vpop.permute.xlu0 %307
      %v310 = vsel %vm200, %v306, 0
      %v313 = vsel %vm200, %v308, 0
      %315 = vmatprep.subr.bf16.mxu0 0
      %316 = vmatpush1.bf16.xpose.msra.mxu0 %v313
      %317 = vmatprep.subr.bf16.mxu0 0
      %318 = vmatpush1.bf16.xpose.msra.mxu0 0
      %319 = vmatprep.subr.bf16.mxu0 0
      %320 = vmatpush1.bf16.xpose.msra.mxu0 0
      %321 = vmatprep.subr.bf16.mxu0 0
      %322 = vmatpush1.bf16.xpose.msra.mxu0 0
      %323 = vmatprep.subr.bf16.mxu0 0
      %324 = vmatpush1.bf16.xpose.msra.mxu0 0
      %325 = vmatprep.subr.bf16.mxu0 0
      %326 = vmatpush1.bf16.xpose.msra.mxu0 0
      %327 = vmatprep.subr.bf16.mxu0 0
      %328 = vmatpush1.bf16.xpose.msra.mxu0 0
      %329 = vmatprep.subr.bf16.mxu0 0
      %330 = vmatpush1.bf16.xpose.msra.mxu0 0
      %331 = vmatprep.subr.bf16.mxu0 0
      %332 = vmatpush1.bf16.xpose.msra.mxu0 0
      %333 = vmatprep.subr.bf16.mxu0 0
      %334 = vmatpush1.bf16.xpose.msra.mxu0 0
      %335 = vmatprep.subr.bf16.mxu0 0
      %336 = vmatpush1.bf16.xpose.msra.mxu0 0
      %337 = vmatprep.subr.bf16.mxu0 0
      %338 = vmatpush1.bf16.xpose.msra.mxu0 0
      %339 = vmatprep.subr.bf16.mxu0 0
      %340 = vmatpush1.bf16.xpose.msra.mxu0 0
      %341 = vmatprep.subr.bf16.mxu0 0
      %342 = vmatpush1.bf16.xpose.msra.mxu0 0
      %343 = vmatprep.subr.bf16.mxu0 0
      %344 = vmatpush1.bf16.xpose.msra.mxu0 0
      %345 = vmatprep.subr.bf16.mxu0 0
      %346 = vmatpush1.bf16.xpose.msra.mxu0 0
      %347 = vmatprep.mubr.bf16.mxu0 0
      %348 = vmatmul.mubr.bf16.gmra.mrb[0].mxu0 %v310
      %v349 = vpop.f32.mrb[0].mxu0
      %v350 = vadd.f32 0.0, %v349
      %v351 = vpop.f32.mrb[0].mxu0
      %v352 = vpop.f32.mrb[0].mxu0
      %v353 = vadd.f32 0.0, %v352
      %v354 = vpop.f32.mrb[0].mxu0
      %355 = vdwg.mxu0
      %v358 = vunpack.c.l.b16 %v159
      %v359 = vunpack.c.l.b16 %v160
      %v360 = vpack.c.b16 %v359, %v358
      %361 = vrot.lane.b32.xlu0 %v360, 96
      %v362 = vpop.permute.xlu0 %361
      %v364 = vsel %vm200, %v360, 0
      %v367 = vsel %vm200, %v362, 0
      %369 = vmatprep.subr.bf16.mxu0 0
      %370 = vmatpush1.bf16.xpose.msra.mxu0 %v367
      %371 = vmatprep.subr.bf16.mxu0 0
      %372 = vmatpush1.bf16.xpose.msra.mxu0 0
      %373 = vmatprep.subr.bf16.mxu0 0
      %374 = vmatpush1.bf16.xpose.msra.mxu0 0
      %375 = vmatprep.subr.bf16.mxu0 0
      %376 = vmatpush1.bf16.xpose.msra.mxu0 0
      %377 = vmatprep.subr.bf16.mxu0 0
      %378 = vmatpush1.bf16.xpose.msra.mxu0 0
      %379 = vmatprep.subr.bf16.mxu0 0
      %380 = vmatpush1.bf16.xpose.msra.mxu0 0
      %381 = vmatprep.subr.bf16.mxu0 0
      %382 = vmatpush1.bf16.xpose.msra.mxu0 0
      %383 = vmatprep.subr.bf16.mxu0 0
      %384 = vmatpush1.bf16.xpose.msra.mxu0 0
      %385 = vmatprep.subr.bf16.mxu0 0
      %386 = vmatpush1.bf16.xpose.msra.mxu0 0
      %387 = vmatprep.subr.bf16.mxu0 0
      %388 = vmatpush1.bf16.xpose.msra.mxu0 0
      %389 = vmatprep.subr.bf16.mxu0 0
      %390 = vmatpush1.bf16.xpose.msra.mxu0 0
      %391 = vmatprep.subr.bf16.mxu0 0
      %392 = vmatpush1.bf16.xpose.msra.mxu0 0
      %393 = vmatprep.subr.bf16.mxu0 0
      %394 = vmatpush1.bf16.xpose.msra.mxu0 0
      %395 = vmatprep.subr.bf16.mxu0 0
      %396 = vmatpush1.bf16.xpose.msra.mxu0 0
      %397 = vmatprep.subr.bf16.mxu0 0
      %398 = vmatpush1.bf16.xpose.msra.mxu0 0
      %399 = vmatprep.subr.bf16.mxu0 0
      %400 = vmatpush1.bf16.xpose.msra.mxu0 0
      %401 = vmatprep.mubr.bf16.mxu0 0
      %402 = vmatmul.mubr.bf16.gmra.mrb[0].mxu0 %v364
      %v403 = vpop.f32.mrb[0].mxu0
      %v404 = vadd.f32 0.0, %v403
      %v405 = vpop.f32.mrb[0].mxu0
      %v406 = vpop.f32.mrb[0].mxu0
      %v407 = vadd.f32 0.0, %v406
      %v408 = vpop.f32.mrb[0].mxu0
      %409 = vdwg.mxu0
      %v410 = vmul.f32 %v242, 0.35355338
      %v411 = vmul.f32 %v245, 0.35355338
      %v412 = vmul.f32 %v296, 0.35355338
      %v413 = vmul.f32 %v299, 0.35355338
      %v414 = vmul.f32 %v350, 0.35355338
      %v415 = vmul.f32 %v353, 0.35355338
      %v416 = vmul.f32 %v404, 0.35355338
      %v417 = vmul.f32 %v407, 0.35355338
      %v418 = vadd.f32 %v410, %v161
      %v419 = vadd.f32 %v411, %v162
      %v420 = vadd.f32 %v412, %v169
      %v421 = vadd.f32 %v413, %v170
      %v422 = vadd.f32 %v414, %v177
      %v423 = vadd.f32 %v415, %v178
      %v424 = vadd.f32 %v416, %v185
      %v425 = vadd.f32 %v417, %v186
      %vm426 = vcmask 130048
      %v427 = vsel %vm426, %v418, -inf
      %428 = vmax.xlane.f32.xlu0 %v427
      %v429 = vpop.xlane.xlu0 %428
      %v430 = vsel %vm426, %v419, -inf
      %431 = vmax.xlane.f32.xlu0 %v430
      %v432 = vpop.xlane.xlu0 %431
      %v433 = vsel %vm426, %v420, -inf
      %434 = vmax.xlane.f32.xlu0 %v433
      %v435 = vpop.xlane.xlu0 %434
      %v436 = vsel %vm426, %v421, -inf
      %437 = vmax.xlane.f32.xlu0 %v436
      %v438 = vpop.xlane.xlu0 %437
      %v439 = vsel %vm426, %v422, -inf
      %440 = vmax.xlane.f32.xlu0 %v439
      %v441 = vpop.xlane.xlu0 %440
      %v442 = vsel %vm426, %v423, -inf
      %443 = vmax.xlane.f32.xlu0 %v442
      %v444 = vpop.xlane.xlu0 %443
      %v445 = vsel %vm426, %v424, -inf
      %446 = vmax.xlane.f32.xlu0 %v445
      %v447 = vpop.xlane.xlu0 %446
      %v448 = vsel %vm426, %v425, -inf
      %449 = vmax.xlane.f32.xlu0 %v448
      %v450 = vpop.xlane.xlu0 %449
      %v451 = vsub.f32 %v418, %v429
      %v452 = vsub.f32 %v419, %v432
      %v453 = vsub.f32 %v420, %v435
      %v454 = vsub.f32 %v421, %v438
      %v455 = vsub.f32 %v422, %v441
      %v456 = vsub.f32 %v423, %v444
      %v457 = vsub.f32 %v424, %v447
      %v458 = vsub.f32 %v425, %v450
      %v459 = vmul.f32 %v451, 1.442695
      %v460 = vpow.pop %v459
      %v461 = vmul.f32 %v452, 1.442695
      %v462 = vpow.pop %v461
      %v463 = vmul.f32 %v453, 1.442695
      %v464 = vpow.pop %v463
      %v465 = vmul.f32 %v454, 1.442695
      %v466 = vpow.pop %v465
      %v467 = vmul.f32 %v455, 1.442695
      %v468 = vpow.pop %v467
      %v469 = vmul.f32 %v456, 1.442695
      %v470 = vpow.pop %v469
      %v471 = vmul.f32 %v457, 1.442695
      %v472 = vpow.pop %v471
      %v473 = vmul.f32 %v458, 1.442695
      %v474 = vpow.pop %v473
      %v475 = vsel %vm426, %v460, 0.0
      %476 = vadd.xlane.f32.xlu0 %v475
      %v477 = vpop.xlane.xlu0 %476
      %v478 = vsel %vm426, %v462, 0.0
      %479 = vadd.xlane.f32.xlu0 %v478
      %v480 = vpop.xlane.xlu0 %479
      %v481 = vsel %vm426, %v464, 0.0
      %482 = vadd.xlane.f32.xlu0 %v481
      %v483 = vpop.xlane.xlu0 %482
      %v484 = vsel %vm426, %v466, 0.0
      %485 = vadd.xlane.f32.xlu0 %v484
      %v486 = vpop.xlane.xlu0 %485
      %v487 = vsel %vm426, %v468, 0.0
      %488 = vadd.xlane.f32.xlu0 %v487
      %v489 = vpop.xlane.xlu0 %488
      %v490 = vsel %vm426, %v470, 0.0
      %491 = vadd.xlane.f32.xlu0 %v490
      %v492 = vpop.xlane.xlu0 %491
      %v493 = vsel %vm426, %v472, 0.0
      %494 = vadd.xlane.f32.xlu0 %v493
      %v495 = vpop.xlane.xlu0 %494
      %v496 = vsel %vm426, %v474, 0.0
      %497 = vadd.xlane.f32.xlu0 %v496
      %v498 = vpop.xlane.xlu0 %497
      %v499 = vrcp.pop %v477
      %v500 = vrcp.pop %v480
      %v501 = vrcp.pop %v483
      %v502 = vrcp.pop %v486
      %v503 = vrcp.pop %v489
      %v504 = vrcp.pop %v492
      %v505 = vrcp.pop %v495
      %v506 = vrcp.pop %v498
      %v507 = vmul.f32 %v460, %v499
      %v508 = vmul.f32 %v462, %v500
      %v509 = vmul.f32 %v464, %v501
      %v510 = vmul.f32 %v466, %v502
      %v511 = vmul.f32 %v468, %v503
      %v512 = vmul.f32 %v470, %v504
      %v513 = vmul.f32 %v472, %v505
      %v514 = vmul.f32 %v474, %v506
      %v515 = vpack.c.bf16 %v508, %v507
      %v516 = vpack.c.bf16 %v510, %v509
      %v517 = vpack.c.bf16 %v512, %v511
      %v518 = vpack.c.bf16 %v514, %v513
      %519 = vrot.lane.b32.xlu0 %v197, 64
      %v520 = vpop.permute.xlu0 %519
      %v523 = vsel %vm426, %v515, 0
      %525 = vmatprep.subr.bf16.mxu0 0
      %526 = vmatpush1.bf16.msra.mxu0 %v520
      %527 = vmatprep.subr.bf16.mxu0 0
      %528 = vmatpush1.bf16.msra.mxu0 0
      %529 = vmatprep.subr.bf16.mxu0 0
      %530 = vmatpush1.bf16.msra.mxu0 0
      %531 = vmatprep.subr.bf16.mxu0 0
      %532 = vmatpush1.bf16.msra.mxu0 0
      %533 = vmatprep.subr.bf16.mxu0 0
      %534 = vmatpush1.bf16.msra.mxu0 0
      %535 = vmatprep.subr.bf16.mxu0 0
      %536 = vmatpush1.bf16.msra.mxu0 0
      %537 = vmatprep.subr.bf16.mxu0 0
      %538 = vmatpush1.bf16.msra.mxu0 0
      %539 = vmatprep.subr.bf16.mxu0 0
      %540 = vmatpush1.bf16.msra.mxu0 0
      %541 = vmatprep.subr.bf16.mxu0 0
      %542 = vmatpush1.bf16.msra.mxu0 0
      %543 = vmatprep.subr.bf16.mxu0 0
      %544 = vmatpush1.bf16.msra.mxu0 0
      %545 = vmatprep.subr.bf16.mxu0 0
      %546 = vmatpush1.bf16.msra.mxu0 0
      %547 = vmatprep.subr.bf16.mxu0 0
      %548 = vmatpush1.bf16.msra.mxu0 0
      %549 = vmatprep.subr.bf16.mxu0 0
      %550 = vmatpush1.bf16.msra.mxu0 0
      %551 = vmatprep.subr.bf16.mxu0 0
      %552 = vmatpush1.bf16.msra.mxu0 0
      %553 = vmatprep.subr.bf16.mxu0 0
      %554 = vmatpush1.bf16.msra.mxu0 0
      %555 = vmatprep.subr.bf16.mxu0 0
      %556 = vmatpush1.bf16.msra.mxu0 0
      %557 = vmatprep.mubr.bf16.mxu0 0
      %558 = vmatmul.mubr.bf16.gmra.mrb[0].mxu0 %v523
      %v559 = vpop.f32.mrb[0].mxu0
      %v560 = vadd.f32 0.0, %v559
      %v561 = vpop.f32.mrb[0].mxu0
      %v562 = vpop.f32.mrb[0].mxu0
      %v563 = vadd.f32 0.0, %v562
      %v564 = vpop.f32.mrb[0].mxu0
      %565 = vdwg.mxu0
      %566 = vrot.lane.b32.xlu0 %v252, 64
      %v567 = vpop.permute.xlu0 %566
      %v570 = vsel %vm426, %v516, 0
      %572 = vmatprep.subr.bf16.mxu0 0
      %573 = vmatpush1.bf16.msra.mxu0 %v567
      %574 = vmatprep.subr.bf16.mxu0 0
      %575 = vmatpush1.bf16.msra.mxu0 0
      %576 = vmatprep.subr.bf16.mxu0 0
      %577 = vmatpush1.bf16.msra.mxu0 0
      %578 = vmatprep.subr.bf16.mxu0 0
      %579 = vmatpush1.bf16.msra.mxu0 0
      %580 = vmatprep.subr.bf16.mxu0 0
      %581 = vmatpush1.bf16.msra.mxu0 0
      %582 = vmatprep.subr.bf16.mxu0 0
      %583 = vmatpush1.bf16.msra.mxu0 0
      %584 = vmatprep.subr.bf16.mxu0 0
      %585 = vmatpush1.bf16.msra.mxu0 0
      %586 = vmatprep.subr.bf16.mxu0 0
      %587 = vmatpush1.bf16.msra.mxu0 0
      %588 = vmatprep.subr.bf16.mxu0 0
      %589 = vmatpush1.bf16.msra.mxu0 0
      %590 = vmatprep.subr.bf16.mxu0 0
      %591 = vmatpush1.bf16.msra.mxu0 0
      %592 = vmatprep.subr.bf16.mxu0 0
      %593 = vmatpush1.bf16.msra.mxu0 0
      %594 = vmatprep.subr.bf16.mxu0 0
      %595 = vmatpush1.bf16.msra.mxu0 0
      %596 = vmatprep.subr.bf16.mxu0 0
      %597 = vmatpush1.bf16.msra.mxu0 0
      %598 = vmatprep.subr.bf16.mxu0 0
      %599 = vmatpush1.bf16.msra.mxu0 0
      %600 = vmatprep.subr.bf16.mxu0 0
      %601 = vmatpush1.bf16.msra.mxu0 0
      %602 = vmatprep.subr.bf16.mxu0 0
      %603 = vmatpush1.bf16.msra.mxu0 0
      %604 = vmatprep.mubr.bf16.mxu0 0
      %605 = vmatmul.mubr.bf16.gmra.mrb[0].mxu0 %v570
      %v606 = vpop.f32.mrb[0].mxu0
      %v607 = vadd.f32 0.0, %v606
      %v608 = vpop.f32.mrb[0].mxu0
      %v609 = vpop.f32.mrb[0].mxu0
      %v610 = vadd.f32 0.0, %v609
      %v611 = vpop.f32.mrb[0].mxu0
      %612 = vdwg.mxu0
      %613 = vrot.lane.b32.xlu0 %v306, 64
      %v614 = vpop.permute.xlu0 %613
      %v617 = vsel %vm426, %v517, 0
      %619 = vmatprep.subr.bf16.mxu0 0
      %620 = vmatpush1.bf16.msra.mxu0 %v614
      %621 = vmatprep.subr.bf16.mxu0 0
      %622 = vmatpush1.bf16.msra.mxu0 0
      %623 = vmatprep.subr.bf16.mxu0 0
      %624 = vmatpush1.bf16.msra.mxu0 0
      %625 = vmatprep.subr.bf16.mxu0 0
      %626 = vmatpush1.bf16.msra.mxu0 0
      %627 = vmatprep.subr.bf16.mxu0 0
      %628 = vmatpush1.bf16.msra.mxu0 0
      %629 = vmatprep.subr.bf16.mxu0 0
      %630 = vmatpush1.bf16.msra.mxu0 0
      %631 = vmatprep.subr.bf16.mxu0 0
      %632 = vmatpush1.bf16.msra.mxu0 0
      %633 = vmatprep.subr.bf16.mxu0 0
      %634 = vmatpush1.bf16.msra.mxu0 0
      %635 = vmatprep.subr.bf16.mxu0 0
      %636 = vmatpush1.bf16.msra.mxu0 0
      %637 = vmatprep.subr.bf16.mxu0 0
      %638 = vmatpush1.bf16.msra.mxu0 0
      %639 = vmatprep.subr.bf16.mxu0 0
      %640 = vmatpush1.bf16.msra.mxu0 0
      %641 = vmatprep.subr.bf16.mxu0 0
      %642 = vmatpush1.bf16.msra.mxu0 0
      %643 = vmatprep.subr.bf16.mxu0 0
      %644 = vmatpush1.bf16.msra.mxu0 0
      %645 = vmatprep.subr.bf16.mxu0 0
      %646 = vmatpush1.bf16.msra.mxu0 0
      %647 = vmatprep.subr.bf16.mxu0 0
      %648 = vmatpush1.bf16.msra.mxu0 0
      %649 = vmatprep.subr.bf16.mxu0 0
      %650 = vmatpush1.bf16.msra.mxu0 0
      %651 = vmatprep.mubr.bf16.mxu0 0
      %652 = vmatmul.mubr.bf16.gmra.mrb[0].mxu0 %v617
      %v653 = vpop.f32.mrb[0].mxu0
      %v654 = vadd.f32 0.0, %v653
      %v655 = vpop.f32.mrb[0].mxu0
      %v656 = vpop.f32.mrb[0].mxu0
      %v657 = vadd.f32 0.0, %v656
      %v658 = vpop.f32.mrb[0].mxu0
      %659 = vdwg.mxu0
      %660 = vrot.lane.b32.xlu0 %v360, 64
      %v661 = vpop.permute.xlu0 %660
      %v664 = vsel %vm426, %v518, 0
      %666 = vmatprep.subr.bf16.mxu0 0
      %667 = vmatpush1.bf16.msra.mxu0 %v661
      %668 = vmatprep.subr.bf16.mxu0 0
      %669 = vmatpush1.bf16.msra.mxu0 0
      %670 = vmatprep.subr.bf16.mxu0 0
      %671 = vmatpush1.bf16.msra.mxu0 0
      %672 = vmatprep.subr.bf16.mxu0 0
      %673 = vmatpush1.bf16.msra.mxu0 0
      %674 = vmatprep.subr.bf16.mxu0 0
      %675 = vmatpush1.bf16.msra.mxu0 0
      %676 = vmatprep.subr.bf16.mxu0 0
      %677 = vmatpush1.bf16.msra.mxu0 0
      %678 = vmatprep.subr.bf16.mxu0 0
      %679 = vmatpush1.bf16.msra.mxu0 0
      %680 = vmatprep.subr.bf16.mxu0 0
      %681 = vmatpush1.bf16.msra.mxu0 0
      %682 = vmatprep.subr.bf16.mxu0 0
      %683 = vmatpush1.bf16.msra.mxu0 0
      %684 = vmatprep.subr.bf16.mxu0 0
      %685 = vmatpush1.bf16.msra.mxu0 0
      %686 = vmatprep.subr.bf16.mxu0 0
      %687 = vmatpush1.bf16.msra.mxu0 0
      %688 = vmatprep.subr.bf16.mxu0 0
      %689 = vmatpush1.bf16.msra.mxu0 0
      %690 = vmatprep.subr.bf16.mxu0 0
      %691 = vmatpush1.bf16.msra.mxu0 0
      %692 = vmatprep.subr.bf16.mxu0 0
      %693 = vmatpush1.bf16.msra.mxu0 0
      %694 = vmatprep.subr.bf16.mxu0 0
      %695 = vmatpush1.bf16.msra.mxu0 0
      %696 = vmatprep.subr.bf16.mxu0 0
      %697 = vmatpush1.bf16.msra.mxu0 0
      %698 = vmatprep.mubr.bf16.mxu0 0
      %699 = vmatmul.mubr.bf16.gmra.mrb[0].mxu0 %v664
      %v700 = vpop.f32.mrb[0].mxu0
      %v701 = vadd.f32 0.0, %v700
      %v702 = vpop.f32.mrb[0].mxu0
      %v703 = vpop.f32.mrb[0].mxu0
      %v704 = vadd.f32 0.0, %v703
      %v705 = vpop.f32.mrb[0].mxu0
      %706 = vdwg.mxu0
      %v707 = vpack.c.bf16 %v563, %v560
      %v708 = vpack.c.bf16 %v610, %v607
      %v709 = vpack.c.bf16 %v657, %v654
      %v710 = vpack.c.bf16 %v704, %v701
      %v715 = vunpack.c.l.b16 %v707
      %v716 = vunpack.c.h.b16 %v707
      %v717 = vunpack.c.l.b16 %v708
      %v718 = vunpack.c.h.b16 %v708
      %v719 = vunpack.c.l.b16 %v709
      %v720 = vunpack.c.h.b16 %v709
      %v721 = vunpack.c.l.b16 %v710
      %v722 = vunpack.c.h.b16 %v710
      %v723 = vpack.c.b16 %v715, %v715
      %v724 = vpack.c.b16 %v716, %v716
      %v725 = vpack.c.b16 %v717, %v717
      %v726 = vpack.c.b16 %v718, %v718
      %v727 = vpack.c.b16 %v719, %v719
      %v728 = vpack.c.b16 %v720, %v720
      %v729 = vpack.c.b16 %v721, %v721
      %v730 = vpack.c.b16 %v722, %v722
      %vm739 = vcmask 60416
      %740 = vst.msk [vmem:[%s150] sm:$0xf] %vm739, %v723
      %741 = vst.msk [vmem:[%s150 + $0x4] sm:$0xf] %vm739, %v724
      %742 = vst.msk [vmem:[%s150 + $0x20] sm:$0xf] %vm739, %v725
      %743 = vst.msk [vmem:[%s150 + $0x24] sm:$0xf] %vm739, %v726
      %744 = vst.msk [vmem:[%s150 + $0x40] sm:$0xf] %vm739, %v727
      %745 = vst.msk [vmem:[%s150 + $0x44] sm:$0xf] %vm739, %v728
      %746 = vst.msk [vmem:[%s150 + $0x60] sm:$0xf] %vm739, %v729
      %747 = vst.msk [vmem:[%s150 + $0x64] sm:$0xf] %vm739, %v730
      %748 = vrot.lane.b32.xlu0 %v197, 120
      %v749 = vpop.permute.xlu0 %748
      %750 = vrot.lane.b32.xlu0 %v197, 88
      %v751 = vpop.permute.xlu0 %750
      %v753 = vsel %vm200, %v749, 0
      %v756 = vsel %vm200, %v751, 0
      %758 = vmatprep.subr.bf16.mxu0 0
      %759 = vmatpush1.bf16.xpose.msra.mxu0 %v756
      %760 = vmatprep.subr.bf16.mxu0 0
      %761 = vmatpush1.bf16.xpose.msra.mxu0 0
      %762 = vmatprep.subr.bf16.mxu0 0
      %763 = vmatpush1.bf16.xpose.msra.mxu0 0
      %764 = vmatprep.subr.bf16.mxu0 0
      %765 = vmatpush1.bf16.xpose.msra.mxu0 0
      %766 = vmatprep.subr.bf16.mxu0 0
      %767 = vmatpush1.bf16.xpose.msra.mxu0 0
      %768 = vmatprep.subr.bf16.mxu0 0
      %769 = vmatpush1.bf16.xpose.msra.mxu0 0
      %770 = vmatprep.subr.bf16.mxu0 0
      %771 = vmatpush1.bf16.xpose.msra.mxu0 0
      %772 = vmatprep.subr.bf16.mxu0 0
      %773 = vmatpush1.bf16.xpose.msra.mxu0 0
      %774 = vmatprep.subr.bf16.mxu0 0
      %775 = vmatpush1.bf16.xpose.msra.mxu0 0
      %776 = vmatprep.subr.bf16.mxu0 0
      %777 = vmatpush1.bf16.xpose.msra.mxu0 0
      %778 = vmatprep.subr.bf16.mxu0 0
      %779 = vmatpush1.bf16.xpose.msra.mxu0 0
      %780 = vmatprep.subr.bf16.mxu0 0
      %781 = vmatpush1.bf16.xpose.msra.mxu0 0
      %782 = vmatprep.subr.bf16.mxu0 0
      %783 = vmatpush1.bf16.xpose.msra.mxu0 0
      %784 = vmatprep.subr.bf16.mxu0 0
      %785 = vmatpush1.bf16.xpose.msra.mxu0 0
      %786 = vmatprep.subr.bf16.mxu0 0
      %787 = vmatpush1.bf16.xpose.msra.mxu0 0
      %788 = vmatprep.subr.bf16.mxu0 0
      %789 = vmatpush1.bf16.xpose.msra.mxu0 0
      %790 = vmatprep.mubr.bf16.mxu0 0
      %791 = vmatmul.mubr.bf16.gmra.mrb[0].mxu0 %v753
      %v792 = vpop.f32.mrb[0].mxu0
      %v793 = vadd.f32 0.0, %v792
      %v794 = vpop.f32.mrb[0].mxu0
      %v795 = vpop.f32.mrb[0].mxu0
      %v796 = vadd.f32 0.0, %v795
      %v797 = vpop.f32.mrb[0].mxu0
      %798 = vdwg.mxu0
      %799 = vrot.lane.b32.xlu0 %v252, 120
      %v800 = vpop.permute.xlu0 %799
      %801 = vrot.lane.b32.xlu0 %v252, 88
      %v802 = vpop.permute.xlu0 %801
      %v804 = vsel %vm200, %v800, 0
      %v807 = vsel %vm200, %v802, 0
      %809 = vmatprep.subr.bf16.mxu0 0
      %810 = vmatpush1.bf16.xpose.msra.mxu0 %v807
      %811 = vmatprep.subr.bf16.mxu0 0
      %812 = vmatpush1.bf16.xpose.msra.mxu0 0
      %813 = vmatprep.subr.bf16.mxu0 0
      %814 = vmatpush1.bf16.xpose.msra.mxu0 0
      %815 = vmatprep.subr.bf16.mxu0 0
      %816 = vmatpush1.bf16.xpose.msra.mxu0 0
      %817 = vmatprep.subr.bf16.mxu0 0
      %818 = vmatpush1.bf16.xpose.msra.mxu0 0
      %819 = vmatprep.subr.bf16.mxu0 0
      %820 = vmatpush1.bf16.xpose.msra.mxu0 0
      %821 = vmatprep.subr.bf16.mxu0 0
      %822 = vmatpush1.bf16.xpose.msra.mxu0 0
      %823 = vmatprep.subr.bf16.mxu0 0
      %824 = vmatpush1.bf16.xpose.msra.mxu0 0
      %825 = vmatprep.subr.bf16.mxu0 0
      %826 = vmatpush1.bf16.xpose.msra.mxu0 0
      %827 = vmatprep.subr.bf16.mxu0 0
      %828 = vmatpush1.bf16.xpose.msra.mxu0 0
      %829 = vmatprep.subr.bf16.mxu0 0
      %830 = vmatpush1.bf16.xpose.msra.mxu0 0
      %831 = vmatprep.subr.bf16.mxu0 0
      %832 = vmatpush1.bf16.xpose.msra.mxu0 0
      %833 = vmatprep.subr.bf16.mxu0 0
      %834 = vmatpush1.bf16.xpose.msra.mxu0 0
      %835 = vmatprep.subr.bf16.mxu0 0
      %836 = vmatpush1.bf16.xpose.msra.mxu0 0
      %837 = vmatprep.subr.bf16.mxu0 0
      %838 = vmatpush1.bf16.xpose.msra.mxu0 0
      %839 = vmatprep.subr.bf16.mxu0 0
      %840 = vmatpush1.bf16.xpose.msra.mxu0 0
      %841 = vmatprep.mubr.bf16.mxu0 0
      %842 = vmatmul.mubr.bf16.gmra.mrb[0].mxu0 %v804
      %v843 = vpop.f32.mrb[0].mxu0
      %v844 = vadd.f32 0.0, %v843
      %v845 = vpop.f32.mrb[0].mxu0
      %v846 = vpop.f32.mrb[0].mxu0
      %v847 = vadd.f32 0.0, %v846
      %v848 = vpop.f32.mrb[0].mxu0
      %849 = vdwg.mxu0
      %850 = vrot.lane.b32.xlu0 %v306, 120
      %v851 = vpop.permute.xlu0 %850
      %852 = vrot.lane.b32.xlu0 %v306, 88
      %v853 = vpop.permute.xlu0 %852
      %v855 = vsel %vm200, %v851, 0
      %v858 = vsel %vm200, %v853, 0
      %860 = vmatprep.subr.bf16.mxu0 0
      %861 = vmatpush1.bf16.xpose.msra.mxu0 %v858
      %862 = vmatprep.subr.bf16.mxu0 0
      %863 = vmatpush1.bf16.xpose.msra.mxu0 0
      %864 = vmatprep.subr.bf16.mxu0 0
      %865 = vmatpush1.bf16.xpose.msra.mxu0 0
      %866 = vmatprep.subr.bf16.mxu0 0
      %867 = vmatpush1.bf16.xpose.msra.mxu0 0
      %868 = vmatprep.subr.bf16.mxu0 0
      %869 = vmatpush1.bf16.xpose.msra.mxu0 0
      %870 = vmatprep.subr.bf16.mxu0 0
      %871 = vmatpush1.bf16.xpose.msra.mxu0 0
      %872 = vmatprep.subr.bf16.mxu0 0
      %873 = vmatpush1.bf16.xpose.msra.mxu0 0
      %874 = vmatprep.subr.bf16.mxu0 0
      %875 = vmatpush1.bf16.xpose.msra.mxu0 0
      %876 = vmatprep.subr.bf16.mxu0 0
      %877 = vmatpush1.bf16.xpose.msra.mxu0 0
      %878 = vmatprep.subr.bf16.mxu0 0
      %879 = vmatpush1.bf16.xpose.msra.mxu0 0
      %880 = vmatprep.subr.bf16.mxu0 0
      %881 = vmatpush1.bf16.xpose.msra.mxu0 0
      %882 = vmatprep.subr.bf16.mxu0 0
      %883 = vmatpush1.bf16.xpose.msra.mxu0 0
      %884 = vmatprep.subr.bf16.mxu0 0
      %885 = vmatpush1.bf16.xpose.msra.mxu0 0
      %886 = vmatprep.subr.bf16.mxu0 0
      %887 = vmatpush1.bf16.xpose.msra.mxu0 0
      %888 = vmatprep.subr.bf16.mxu0 0
      %889 = vmatpush1.bf16.xpose.msra.mxu0 0
      %890 = vmatprep.subr.bf16.mxu0 0
      %891 = vmatpush1.bf16.xpose.msra.mxu0 0
      %892 = vmatprep.mubr.bf16.mxu0 0
      %893 = vmatmul.mubr.bf16.gmra.mrb[0].mxu0 %v855
      %v894 = vpop.f32.mrb[0].mxu0
      %v895 = vadd.f32 0.0, %v894
      %v896 = vpop.f32.mrb[0].mxu0
      %v897 = vpop.f32.mrb[0].mxu0
      %v898 = vadd.f32 0.0, %v897
      %v899 = vpop.f32.mrb[0].mxu0
      %900 = vdwg.mxu0
      %901 = vrot.lane.b32.xlu0 %v360, 120
      %v902 = vpop.permute.xlu0 %901
      %903 = vrot.lane.b32.xlu0 %v360, 88
      %v904 = vpop.permute.xlu0 %903
      %v906 = vsel %vm200, %v902, 0
      %v909 = vsel %vm200, %v904, 0
      %911 = vmatprep.subr.bf16.mxu0 0
      %912 = vmatpush1.bf16.xpose.msra.mxu0 %v909
      %913 = vmatprep.subr.bf16.mxu0 0
      %914 = vmatpush1.bf16.xpose.msra.mxu0 0
      %915 = vmatprep.subr.bf16.mxu0 0
      %916 = vmatpush1.bf16.xpose.msra.mxu0 0
      %917 = vmatprep.subr.bf16.mxu0 0
      %918 = vmatpush1.bf16.xpose.msra.mxu0 0
      %919 = vmatprep.subr.bf16.mxu0 0
      %920 = vmatpush1.bf16.xpose.msra.mxu0 0
      %921 = vmatprep.subr.bf16.mxu0 0
      %922 = vmatpush1.bf16.xpose.msra.mxu0 0
      %923 = vmatprep.subr.bf16.mxu0 0
      %924 = vmatpush1.bf16.xpose.msra.mxu0 0
      %925 = vmatprep.subr.bf16.mxu0 0
      %926 = vmatpush1.bf16.xpose.msra.mxu0 0
      %927 = vmatprep.subr.bf16.mxu0 0
      %928 = vmatpush1.bf16.xpose.msra.mxu0 0
      %929 = vmatprep.subr.bf16.mxu0 0
      %930 = vmatpush1.bf16.xpose.msra.mxu0 0
      %931 = vmatprep.subr.bf16.mxu0 0
      %932 = vmatpush1.bf16.xpose.msra.mxu0 0
      %933 = vmatprep.subr.bf16.mxu0 0
      %934 = vmatpush1.bf16.xpose.msra.mxu0 0
      %935 = vmatprep.subr.bf16.mxu0 0
      %936 = vmatpush1.bf16.xpose.msra.mxu0 0
      %937 = vmatprep.subr.bf16.mxu0 0
      %938 = vmatpush1.bf16.xpose.msra.mxu0 0
      %939 = vmatprep.subr.bf16.mxu0 0
      %940 = vmatpush1.bf16.xpose.msra.mxu0 0
      %941 = vmatprep.subr.bf16.mxu0 0
      %942 = vmatpush1.bf16.xpose.msra.mxu0 0
      %943 = vmatprep.mubr.bf16.mxu0 0
      %944 = vmatmul.mubr.bf16.gmra.mrb[0].mxu0 %v906
      %v945 = vpop.f32.mrb[0].mxu0
      %v946 = vadd.f32 0.0, %v945
      %v947 = vpop.f32.mrb[0].mxu0
      %v948 = vpop.f32.mrb[0].mxu0
      %v949 = vadd.f32 0.0, %v948
      %v950 = vpop.f32.mrb[0].mxu0
      %951 = vdwg.mxu0
      %v952 = vmul.f32 %v793, 0.35355338
      %v953 = vmul.f32 %v796, 0.35355338
      %v954 = vmul.f32 %v844, 0.35355338
      %v955 = vmul.f32 %v847, 0.35355338
      %v956 = vmul.f32 %v895, 0.35355338
      %v957 = vmul.f32 %v898, 0.35355338
      %v958 = vmul.f32 %v946, 0.35355338
      %v959 = vmul.f32 %v949, 0.35355338
      %v960 = vadd.f32 %v952, %v163
      %v961 = vadd.f32 %v953, %v164
      %v962 = vadd.f32 %v954, %v171
      %v963 = vadd.f32 %v955, %v172
      %v964 = vadd.f32 %v956, %v179
      %v965 = vadd.f32 %v957, %v180
      %v966 = vadd.f32 %v958, %v187
      %v967 = vadd.f32 %v959, %v188
      %v968 = vsel %vm426, %v960, -inf
      %969 = vmax.xlane.f32.xlu0 %v968
      %v970 = vpop.xlane.xlu0 %969
      %v971 = vsel %vm426, %v961, -inf
      %972 = vmax.xlane.f32.xlu0 %v971
      %v973 = vpop.xlane.xlu0 %972
      %v974 = vsel %vm426, %v962, -inf
      %975 = vmax.xlane.f32.xlu0 %v974
      %v976 = vpop.xlane.xlu0 %975
      %v977 = vsel %vm426, %v963, -inf
      %978 = vmax.xlane.f32.xlu0 %v977
      %v979 = vpop.xlane.xlu0 %978
      %v980 = vsel %vm426, %v964, -inf
      %981 = vmax.xlane.f32.xlu0 %v980
      %v982 = vpop.xlane.xlu0 %981
      %v983 = vsel %vm426, %v965, -inf
      %984 = vmax.xlane.f32.xlu0 %v983
      %v985 = vpop.xlane.xlu0 %984
      %v986 = vsel %vm426, %v966, -inf
      %987 = vmax.xlane.f32.xlu0 %v986
      %v988 = vpop.xlane.xlu0 %987
      %v989 = vsel %vm426, %v967, -inf
      %990 = vmax.xlane.f32.xlu0 %v989
      %v991 = vpop.xlane.xlu0 %990
      %v992 = vsub.f32 %v960, %v970
      %v993 = vsub.f32 %v961, %v973
      %v994 = vsub.f32 %v962, %v976
      %v995 = vsub.f32 %v963, %v979
      %v996 = vsub.f32 %v964, %v982
      %v997 = vsub.f32 %v965, %v985
      %v998 = vsub.f32 %v966, %v988
      %v999 = vsub.f32 %v967, %v991
      %v1000 = vmul.f32 %v992, 1.442695
      %v1001 = vpow.pop %v1000
      %v1002 = vmul.f32 %v993, 1.442695
      %v1003 = vpow.pop %v1002
      %v1004 = vmul.f32 %v994, 1.442695
      %v1005 = vpow.pop %v1004
      %v1006 = vmul.f32 %v995, 1.442695
      %v1007 = vpow.pop %v1006
      %v1008 = vmul.f32 %v996, 1.442695
      %v1009 = vpow.pop %v1008
      %v1010 = vmul.f32 %v997, 1.442695
      %v1011 = vpow.pop %v1010
      %v1012 = vmul.f32 %v998, 1.442695
      %v1013 = vpow.pop %v1012
      %v1014 = vmul.f32 %v999, 1.442695
      %v1015 = vpow.pop %v1014
      %v1016 = vsel %vm426, %v1001, 0.0
      %1017 = vadd.xlane.f32.xlu0 %v1016
      %v1018 = vpop.xlane.xlu0 %1017
      %v1019 = vsel %vm426, %v1003, 0.0
      %1020 = vadd.xlane.f32.xlu0 %v1019
      %v1021 = vpop.xlane.xlu0 %1020
      %v1022 = vsel %vm426, %v1005, 0.0
      %1023 = vadd.xlane.f32.xlu0 %v1022
      %v1024 = vpop.xlane.xlu0 %1023
      %v1025 = vsel %vm426, %v1007, 0.0
      %1026 = vadd.xlane.f32.xlu0 %v1025
      %v1027 = vpop.xlane.xlu0 %1026
      %v1028 = vsel %vm426, %v1009, 0.0
      %1029 = vadd.xlane.f32.xlu0 %v1028
      %v1030 = vpop.xlane.xlu0 %1029
      %v1031 = vsel %vm426, %v1011, 0.0
      %1032 = vadd.xlane.f32.xlu0 %v1031
      %v1033 = vpop.xlane.xlu0 %1032
      %v1034 = vsel %vm426, %v1013, 0.0
      %1035 = vadd.xlane.f32.xlu0 %v1034
      %v1036 = vpop.xlane.xlu0 %1035
      %v1037 = vsel %vm426, %v1015, 0.0
      %1038 = vadd.xlane.f32.xlu0 %v1037
      %v1039 = vpop.xlane.xlu0 %1038
      %v1040 = vrcp.pop %v1018
      %v1041 = vrcp.pop %v1021
      %v1042 = vrcp.pop %v1024
      %v1043 = vrcp.pop %v1027
      %v1044 = vrcp.pop %v1030
      %v1045 = vrcp.pop %v1033
      %v1046 = vrcp.pop %v1036
      %v1047 = vrcp.pop %v1039
      %v1048 = vmul.f32 %v1001, %v1040
      %v1049 = vmul.f32 %v1003, %v1041
      %v1050 = vmul.f32 %v1005, %v1042
      %v1051 = vmul.f32 %v1007, %v1043
      %v1052 = vmul.f32 %v1009, %v1044
      %v1053 = vmul.f32 %v1011, %v1045
      %v1054 = vmul.f32 %v1013, %v1046
      %v1055 = vmul.f32 %v1015, %v1047
      %v1056 = vpack.c.bf16 %v1049, %v1048
      %v1057 = vpack.c.bf16 %v1051, %v1050
      %v1058 = vpack.c.bf16 %v1053, %v1052
      %v1059 = vpack.c.bf16 %v1055, %v1054
      %1060 = vrot.lane.b32.xlu0 %v197, 56
      %v1061 = vpop.permute.xlu0 %1060
      %v1064 = vsel %vm426, %v1056, 0
      %1066 = vmatprep.subr.bf16.mxu0 0
      %1067 = vmatpush1.bf16.msra.mxu0 %v1061
      %1068 = vmatprep.subr.bf16.mxu0 0
      %1069 = vmatpush1.bf16.msra.mxu0 0
      %1070 = vmatprep.subr.bf16.mxu0 0
      %1071 = vmatpush1.bf16.msra.mxu0 0
      %1072 = vmatprep.subr.bf16.mxu0 0
      %1073 = vmatpush1.bf16.msra.mxu0 0
      %1074 = vmatprep.subr.bf16.mxu0 0
      %1075 = vmatpush1.bf16.msra.mxu0 0
      %1076 = vmatprep.subr.bf16.mxu0 0
      %1077 = vmatpush1.bf16.msra.mxu0 0
      %1078 = vmatprep.subr.bf16.mxu0 0
      %1079 = vmatpush1.bf16.msra.mxu0 0
      %1080 = vmatprep.subr.bf16.mxu0 0
      %1081 = vmatpush1.bf16.msra.mxu0 0
      %1082 = vmatprep.subr.bf16.mxu0 0
      %1083 = vmatpush1.bf16.msra.mxu0 0
      %1084 = vmatprep.subr.bf16.mxu0 0
      %1085 = vmatpush1.bf16.msra.mxu0 0
      %1086 = vmatprep.subr.bf16.mxu0 0
      %1087 = vmatpush1.bf16.msra.mxu0 0
      %1088 = vmatprep.subr.bf16.mxu0 0
      %1089 = vmatpush1.bf16.msra.mxu0 0
      %1090 = vmatprep.subr.bf16.mxu0 0
      %1091 = vmatpush1.bf16.msra.mxu0 0
      %1092 = vmatprep.subr.bf16.mxu0 0
      %1093 = vmatpush1.bf16.msra.mxu0 0
      %1094 = vmatprep.subr.bf16.mxu0 0
      %1095 = vmatpush1.bf16.msra.mxu0 0
      %1096 = vmatprep.subr.bf16.mxu0 0
      %1097 = vmatpush1.bf16.msra.mxu0 0
      %1098 = vmatprep.mubr.bf16.mxu0 0
      %1099 = vmatmul.mubr.bf16.gmra.mrb[0].mxu0 %v1064
      %v1100 = vpop.f32.mrb[0].mxu0
      %v1101 = vadd.f32 0.0, %v1100
      %v1102 = vpop.f32.mrb[0].mxu0
      %v1103 = vpop.f32.mrb[0].mxu0
      %v1104 = vadd.f32 0.0, %v1103
      %v1105 = vpop.f32.mrb[0].mxu0
      %1106 = vdwg.mxu0
      %1107 = vrot.lane.b32.xlu0 %v252, 56
      %v1108 = vpop.permute.xlu0 %1107
      %v1111 = vsel %vm426, %v1057, 0
      %1113 = vmatprep.subr.bf16.mxu0 0
      %1114 = vmatpush1.bf16.msra.mxu0 %v1108
      %1115 = vmatprep.subr.bf16.mxu0 0
      %1116 = vmatpush1.bf16.msra.mxu0 0
      %1117 = vmatprep.subr.bf16.mxu0 0
      %1118 = vmatpush1.bf16.msra.mxu0 0
      %1119 = vmatprep.subr.bf16.mxu0 0
      %1120 = vmatpush1.bf16.msra.mxu0 0
      %1121 = vmatprep.subr.bf16.mxu0 0
      %1122 = vmatpush1.bf16.msra.mxu0 0
      %1123 = vmatprep.subr.bf16.mxu0 0
      %1124 = vmatpush1.bf16.msra.mxu0 0
      %1125 = vmatprep.subr.bf16.mxu0 0
      %1126 = vmatpush1.bf16.msra.mxu0 0
      %1127 = vmatprep.subr.bf16.mxu0 0
      %1128 = vmatpush1.bf16.msra.mxu0 0
      %1129 = vmatprep.subr.bf16.mxu0 0
      %1130 = vmatpush1.bf16.msra.mxu0 0
      %1131 = vmatprep.subr.bf16.mxu0 0
      %1132 = vmatpush1.bf16.msra.mxu0 0
      %1133 = vmatprep.subr.bf16.mxu0 0
      %1134 = vmatpush1.bf16.msra.mxu0 0
      %1135 = vmatprep.subr.bf16.mxu0 0
      %1136 = vmatpush1.bf16.msra.mxu0 0
      %1137 = vmatprep.subr.bf16.mxu0 0
      %1138 = vmatpush1.bf16.msra.mxu0 0
      %1139 = vmatprep.subr.bf16.mxu0 0
      %1140 = vmatpush1.bf16.msra.mxu0 0
      %1141 = vmatprep.subr.bf16.mxu0 0
      %1142 = vmatpush1.bf16.msra.mxu0 0
      %1143 = vmatprep.subr.bf16.mxu0 0
      %1144 = vmatpush1.bf16.msra.mxu0 0
      %1145 = vmatprep.mubr.bf16.mxu0 0
      %1146 = vmatmul.mubr.bf16.gmra.mrb[0].mxu0 %v1111
      %v1147 = vpop.f32.mrb[0].mxu0
      %v1148 = vadd.f32 0.0, %v1147
      %v1149 = vpop.f32.mrb[0].mxu0
      %v1150 = vpop.f32.mrb[0].mxu0
      %v1151 = vadd.f32 0.0, %v1150
      %v1152 = vpop.f32.mrb[0].mxu0
      %1153 = vdwg.mxu0
      %1154 = vrot.lane.b32.xlu0 %v306, 56
      %v1155 = vpop.permute.xlu0 %1154
      %v1158 = vsel %vm426, %v1058, 0
      %1160 = vmatprep.subr.bf16.mxu0 0
      %1161 = vmatpush1.bf16.msra.mxu0 %v1155
      %1162 = vmatprep.subr.bf16.mxu0 0
      %1163 = vmatpush1.bf16.msra.mxu0 0
      %1164 = vmatprep.subr.bf16.mxu0 0
      %1165 = vmatpush1.bf16.msra.mxu0 0
      %1166 = vmatprep.subr.bf16.mxu0 0
      %1167 = vmatpush1.bf16.msra.mxu0 0
      %1168 = vmatprep.subr.bf16.mxu0 0
      %1169 = vmatpush1.bf16.msra.mxu0 0
      %1170 = vmatprep.subr.bf16.mxu0 0
      %1171 = vmatpush1.bf16.msra.mxu0 0
      %1172 = vmatprep.subr.bf16.mxu0 0
      %1173 = vmatpush1.bf16.msra.mxu0 0
      %1174 = vmatprep.subr.bf16.mxu0 0
      %1175 = vmatpush1.bf16.msra.mxu0 0
      %1176 = vmatprep.subr.bf16.mxu0 0
      %1177 = vmatpush1.bf16.msra.mxu0 0
      %1178 = vmatprep.subr.bf16.mxu0 0
      %1179 = vmatpush1.bf16.msra.mxu0 0
      %1180 = vmatprep.subr.bf16.mxu0 0
      %1181 = vmatpush1.bf16.msra.mxu0 0
      %1182 = vmatprep.subr.bf16.mxu0 0
      %1183 = vmatpush1.bf16.msra.mxu0 0
      %1184 = vmatprep.subr.bf16.mxu0 0
      %1185 = vmatpush1.bf16.msra.mxu0 0
      %1186 = vmatprep.subr.bf16.mxu0 0
      %1187 = vmatpush1.bf16.msra.mxu0 0
      %1188 = vmatprep.subr.bf16.mxu0 0
      %1189 = vmatpush1.bf16.msra.mxu0 0
      %1190 = vmatprep.subr.bf16.mxu0 0
      %1191 = vmatpush1.bf16.msra.mxu0 0
      %1192 = vmatprep.mubr.bf16.mxu0 0
      %1193 = vmatmul.mubr.bf16.gmra.mrb[0].mxu0 %v1158
      %v1194 = vpop.f32.mrb[0].mxu0
      %v1195 = vadd.f32 0.0, %v1194
      %v1196 = vpop.f32.mrb[0].mxu0
      %v1197 = vpop.f32.mrb[0].mxu0
      %v1198 = vadd.f32 0.0, %v1197
      %v1199 = vpop.f32.mrb[0].mxu0
      %1200 = vdwg.mxu0
      %1201 = vrot.lane.b32.xlu0 %v360, 56
      %v1202 = vpop.permute.xlu0 %1201
      %v1205 = vsel %vm426, %v1059, 0
      %1207 = vmatprep.subr.bf16.mxu0 0
      %1208 = vmatpush1.bf16.msra.mxu0 %v1202
      %1209 = vmatprep.subr.bf16.mxu0 0
      %1210 = vmatpush1.bf16.msra.mxu0 0
      %1211 = vmatprep.subr.bf16.mxu0 0
      %1212 = vmatpush1.bf16.msra.mxu0 0
      %1213 = vmatprep.subr.bf16.mxu0 0
      %1214 = vmatpush1.bf16.msra.mxu0 0
      %1215 = vmatprep.subr.bf16.mxu0 0
      %1216 = vmatpush1.bf16.msra.mxu0 0
      %1217 = vmatprep.subr.bf16.mxu0 0
      %1218 = vmatpush1.bf16.msra.mxu0 0
      %1219 = vmatprep.subr.bf16.mxu0 0
      %1220 = vmatpush1.bf16.msra.mxu0 0
      %1221 = vmatprep.subr.bf16.mxu0 0
      %1222 = vmatpush1.bf16.msra.mxu0 0
      %1223 = vmatprep.subr.bf16.mxu0 0
      %1224 = vmatpush1.bf16.msra.mxu0 0
      %1225 = vmatprep.subr.bf16.mxu0 0
      %1226 = vmatpush1.bf16.msra.mxu0 0
      %1227 = vmatprep.subr.bf16.mxu0 0
      %1228 = vmatpush1.bf16.msra.mxu0 0
      %1229 = vmatprep.subr.bf16.mxu0 0
      %1230 = vmatpush1.bf16.msra.mxu0 0
      %1231 = vmatprep.subr.bf16.mxu0 0
      %1232 = vmatpush1.bf16.msra.mxu0 0
      %1233 = vmatprep.subr.bf16.mxu0 0
      %1234 = vmatpush1.bf16.msra.mxu0 0
      %1235 = vmatprep.subr.bf16.mxu0 0
      %1236 = vmatpush1.bf16.msra.mxu0 0
      %1237 = vmatprep.subr.bf16.mxu0 0
      %1238 = vmatpush1.bf16.msra.mxu0 0
      %1239 = vmatprep.mubr.bf16.mxu0 0
      %1240 = vmatmul.mubr.bf16.gmra.mrb[0].mxu0 %v1205
      %v1241 = vpop.f32.mrb[0].mxu0
      %v1242 = vadd.f32 0.0, %v1241
      %v1243 = vpop.f32.mrb[0].mxu0
      %v1244 = vpop.f32.mrb[0].mxu0
      %v1245 = vadd.f32 0.0, %v1244
      %v1246 = vpop.f32.mrb[0].mxu0
      %1247 = vdwg.mxu0
      %v1248 = vpack.c.bf16 %v1104, %v1101
      %v1249 = vpack.c.bf16 %v1151, %v1148
      %v1250 = vpack.c.bf16 %v1198, %v1195
      %v1251 = vpack.c.bf16 %v1245, %v1242
      %v1256 = vunpack.c.l.b16 %v1248
      %v1257 = vunpack.c.h.b16 %v1248
      %v1258 = vunpack.c.l.b16 %v1249
      %v1259 = vunpack.c.h.b16 %v1249
      %v1260 = vunpack.c.l.b16 %v1250
      %v1261 = vunpack.c.h.b16 %v1250
      %v1262 = vunpack.c.l.b16 %v1251
      %v1263 = vunpack.c.h.b16 %v1251
      %v1264 = vpack.c.b16 %v1256, %v1256
      %v1265 = vpack.c.b16 %v1257, %v1257
      %v1266 = vpack.c.b16 %v1258, %v1258
      %v1267 = vpack.c.b16 %v1259, %v1259
      %v1268 = vpack.c.b16 %v1260, %v1260
      %v1269 = vpack.c.b16 %v1261, %v1261
      %v1270 = vpack.c.b16 %v1262, %v1262
      %v1271 = vpack.c.b16 %v1263, %v1263
      %s1280 = scalar_lea.vmem %s150, 8
      %1281 = vst.msk [vmem:[%s1280] sm:$0xf] %vm739, %v1264
      %1282 = vst.msk [vmem:[%s1280 + $0x4] sm:$0xf] %vm739, %v1265
      %1283 = vst.msk [vmem:[%s1280 + $0x20] sm:$0xf] %vm739, %v1266
      %1284 = vst.msk [vmem:[%s1280 + $0x24] sm:$0xf] %vm739, %v1267
      %1285 = vst.msk [vmem:[%s1280 + $0x40] sm:$0xf] %vm739, %v1268
      %1286 = vst.msk [vmem:[%s1280 + $0x44] sm:$0xf] %vm739, %v1269
      %1287 = vst.msk [vmem:[%s1280 + $0x60] sm:$0xf] %vm739, %v1270
      %1288 = vst.msk [vmem:[%s1280 + $0x64] sm:$0xf] %vm739, %v1271
      %1289 = vrot.lane.b32.xlu0 %v197, 112
      %v1290 = vpop.permute.xlu0 %1289
      %1291 = vrot.lane.b32.xlu0 %v197, 80
      %v1292 = vpop.permute.xlu0 %1291
      %v1294 = vsel %vm200, %v1290, 0
      %v1297 = vsel %vm200, %v1292, 0
      %1299 = vmatprep.subr.bf16.mxu0 0
      %1300 = vmatpush1.bf16.xpose.msra.mxu0 %v1297
      %1301 = vmatprep.subr.bf16.mxu0 0
      %1302 = vmatpush1.bf16.xpose.msra.mxu0 0
      %1303 = vmatprep.subr.bf16.mxu0 0
      %1304 = vmatpush1.bf16.xpose.msra.mxu0 0
      %1305 = vmatprep.subr.bf16.mxu0 0
      %1306 = vmatpush1.bf16.xpose.msra.mxu0 0
      %1307 = vmatprep.subr.bf16.mxu0 0
      %1308 = vmatpush1.bf16.xpose.msra.mxu0 0
      %1309 = vmatprep.subr.bf16.mxu0 0
      %1310 = vmatpush1.bf16.xpose.msra.mxu0 0
      %1311 = vmatprep.subr.bf16.mxu0 0
      %1312 = vmatpush1.bf16.xpose.msra.mxu0 0
      %1313 = vmatprep.subr.bf16.mxu0 0
      %1314 = vmatpush1.bf16.xpose.msra.mxu0 0
      %1315 = vmatprep.subr.bf16.mxu0 0
      %1316 = vmatpush1.bf16.xpose.msra.mxu0 0
      %1317 = vmatprep.subr.bf16.mxu0 0
      %1318 = vmatpush1.bf16.xpose.msra.mxu0 0
      %1319 = vmatprep.subr.bf16.mxu0 0
      %1320 = vmatpush1.bf16.xpose.msra.mxu0 0
      %1321 = vmatprep.subr.bf16.mxu0 0
      %1322 = vmatpush1.bf16.xpose.msra.mxu0 0
      %1323 = vmatprep.subr.bf16.mxu0 0
      %1324 = vmatpush1.bf16.xpose.msra.mxu0 0
      %1325 = vmatprep.subr.bf16.mxu0 0
      %1326 = vmatpush1.bf16.xpose.msra.mxu0 0
      %1327 = vmatprep.subr.bf16.mxu0 0
      %1328 = vmatpush1.bf16.xpose.msra.mxu0 0
      %1329 = vmatprep.subr.bf16.mxu0 0
      %1330 = vmatpush1.bf16.xpose.msra.mxu0 0
      %1331 = vmatprep.mubr.bf16.mxu0 0
      %1332 = vmatmul.mubr.bf16.gmra.mrb[0].mxu0 %v1294
      %v1333 = vpop.f32.mrb[0].mxu0
      %v1334 = vadd.f32 0.0, %v1333
      %v1335 = vpop.f32.mrb[0].mxu0
      %v1336 = vpop.f32.mrb[0].mxu0
      %v1337 = vadd.f32 0.0, %v1336
      %v1338 = vpop.f32.mrb[0].mxu0
      %1339 = vdwg.mxu0
      %1340 = vrot.lane.b32.xlu0 %v252, 112
      %v1341 = vpop.permute.xlu0 %1340
      %1342 = vrot.lane.b32.xlu0 %v252, 80
      %v1343 = vpop.permute.xlu0 %1342
      %v1345 = vsel %vm200, %v1341, 0
      %v1348 = vsel %vm200, %v1343, 0
      %1350 = vmatprep.subr.bf16.mxu0 0
      %1351 = vmatpush1.bf16.xpose.msra.mxu0 %v1348
      %1352 = vmatprep.subr.bf16.mxu0 0
      %1353 = vmatpush1.bf16.xpose.msra.mxu0 0
      %1354 = vmatprep.subr.bf16.mxu0 0
      %1355 = vmatpush1.bf16.xpose.msra.mxu0 0
      %1356 = vmatprep.subr.bf16.mxu0 0
      %1357 = vmatpush1.bf16.xpose.msra.mxu0 0
      %1358 = vmatprep.subr.bf16.mxu0 0
      %1359 = vmatpush1.bf16.xpose.msra.mxu0 0
      %1360 = vmatprep.subr.bf16.mxu0 0
      %1361 = vmatpush1.bf16.xpose.msra.mxu0 0
      %1362 = vmatprep.subr.bf16.mxu0 0
      %1363 = vmatpush1.bf16.xpose.msra.mxu0 0
      %1364 = vmatprep.subr.bf16.mxu0 0
      %1365 = vmatpush1.bf16.xpose.msra.mxu0 0
      %1366 = vmatprep.subr.bf16.mxu0 0
      %1367 = vmatpush1.bf16.xpose.msra.mxu0 0
      %1368 = vmatprep.subr.bf16.mxu0 0
      %1369 = vmatpush1.bf16.xpose.msra.mxu0 0
      %1370 = vmatprep.subr.bf16.mxu0 0
      %1371 = vmatpush1.bf16.xpose.msra.mxu0 0
      %1372 = vmatprep.subr.bf16.mxu0 0
      %1373 = vmatpush1.bf16.xpose.msra.mxu0 0
      %1374 = vmatprep.subr.bf16.mxu0 0
      %1375 = vmatpush1.bf16.xpose.msra.mxu0 0
      %1376 = vmatprep.subr.bf16.mxu0 0
      %1377 = vmatpush1.bf16.xpose.msra.mxu0 0
      %1378 = vmatprep.subr.bf16.mxu0 0
      %1379 = vmatpush1.bf16.xpose.msra.mxu0 0
      %1380 = vmatprep.subr.bf16.mxu0 0
      %1381 = vmatpush1.bf16.xpose.msra.mxu0 0
      %1382 = vmatprep.mubr.bf16.mxu0 0
      %1383 = vmatmul.mubr.bf16.gmra.mrb[0].mxu0 %v1345
      %v1384 = vpop.f32.mrb[0].mxu0
      %v1385 = vadd.f32 0.0, %v1384
      %v1386 = vpop.f32.mrb[0].mxu0
      %v1387 = vpop.f32.mrb[0].mxu0
      %v1388 = vadd.f32 0.0, %v1387
      %v1389 = vpop.f32.mrb[0].mxu0
      %1390 = vdwg.mxu0
      %1391 = vrot.lane.b32.xlu0 %v306, 112
      %v1392 = vpop.permute.xlu0 %1391
      %1393 = vrot.lane.b32.xlu0 %v306, 80
      %v1394 = vpop.permute.xlu0 %1393
      %v1396 = vsel %vm200, %v1392, 0
      %v1399 = vsel %vm200, %v1394, 0
      %1401 = vmatprep.subr.bf16.mxu0 0
      %1402 = vmatpush1.bf16.xpose.msra.mxu0 %v1399
      %1403 = vmatprep.subr.bf16.mxu0 0
      %1404 = vmatpush1.bf16.xpose.msra.mxu0 0
      %1405 = vmatprep.subr.bf16.mxu0 0
      %1406 = vmatpush1.bf16.xpose.msra.mxu0 0
      %1407 = vmatprep.subr.bf16.mxu0 0
      %1408 = vmatpush1.bf16.xpose.msra.mxu0 0
      %1409 = vmatprep.subr.bf16.mxu0 0
      %1410 = vmatpush1.bf16.xpose.msra.mxu0 0
      %1411 = vmatprep.subr.bf16.mxu0 0
      %1412 = vmatpush1.bf16.xpose.msra.mxu0 0
      %1413 = vmatprep.subr.bf16.mxu0 0
      %1414 = vmatpush1.bf16.xpose.msra.mxu0 0
      %1415 = vmatprep.subr.bf16.mxu0 0
      %1416 = vmatpush1.bf16.xpose.msra.mxu0 0
      %1417 = vmatprep.subr.bf16.mxu0 0
      %1418 = vmatpush1.bf16.xpose.msra.mxu0 0
      %1419 = vmatprep.subr.bf16.mxu0 0
      %1420 = vmatpush1.bf16.xpose.msra.mxu0 0
      %1421 = vmatprep.subr.bf16.mxu0 0
      %1422 = vmatpush1.bf16.xpose.msra.mxu0 0
      %1423 = vmatprep.subr.bf16.mxu0 0
      %1424 = vmatpush1.bf16.xpose.msra.mxu0 0
      %1425 = vmatprep.subr.bf16.mxu0 0
      %1426 = vmatpush1.bf16.xpose.msra.mxu0 0
      %1427 = vmatprep.subr.bf16.mxu0 0
      %1428 = vmatpush1.bf16.xpose.msra.mxu0 0
      %1429 = vmatprep.subr.bf16.mxu0 0
      %1430 = vmatpush1.bf16.xpose.msra.mxu0 0
      %1431 = vmatprep.subr.bf16.mxu0 0
      %1432 = vmatpush1.bf16.xpose.msra.mxu0 0
      %1433 = vmatprep.mubr.bf16.mxu0 0
      %1434 = vmatmul.mubr.bf16.gmra.mrb[0].mxu0 %v1396
      %v1435 = vpop.f32.mrb[0].mxu0
      %v1436 = vadd.f32 0.0, %v1435
      %v1437 = vpop.f32.mrb[0].mxu0
      %v1438 = vpop.f32.mrb[0].mxu0
      %v1439 = vadd.f32 0.0, %v1438
      %v1440 = vpop.f32.mrb[0].mxu0
      %1441 = vdwg.mxu0
      %1442 = vrot.lane.b32.xlu0 %v360, 112
      %v1443 = vpop.permute.xlu0 %1442
      %1444 = vrot.lane.b32.xlu0 %v360, 80
      %v1445 = vpop.permute.xlu0 %1444
      %v1447 = vsel %vm200, %v1443, 0
      %v1450 = vsel %vm200, %v1445, 0
      %1452 = vmatprep.subr.bf16.mxu0 0
      %1453 = vmatpush1.bf16.xpose.msra.mxu0 %v1450
      %1454 = vmatprep.subr.bf16.mxu0 0
      %1455 = vmatpush1.bf16.xpose.msra.mxu0 0
      %1456 = vmatprep.subr.bf16.mxu0 0
      %1457 = vmatpush1.bf16.xpose.msra.mxu0 0
      %1458 = vmatprep.subr.bf16.mxu0 0
      %1459 = vmatpush1.bf16.xpose.msra.mxu0 0
      %1460 = vmatprep.subr.bf16.mxu0 0
      %1461 = vmatpush1.bf16.xpose.msra.mxu0 0
      %1462 = vmatprep.subr.bf16.mxu0 0
      %1463 = vmatpush1.bf16.xpose.msra.mxu0 0
      %1464 = vmatprep.subr.bf16.mxu0 0
      %1465 = vmatpush1.bf16.xpose.msra.mxu0 0
      %1466 = vmatprep.subr.bf16.mxu0 0
      %1467 = vmatpush1.bf16.xpose.msra.mxu0 0
      %1468 = vmatprep.subr.bf16.mxu0 0
      %1469 = vmatpush1.bf16.xpose.msra.mxu0 0
      %1470 = vmatprep.subr.bf16.mxu0 0
      %1471 = vmatpush1.bf16.xpose.msra.mxu0 0
      %1472 = vmatprep.subr.bf16.mxu0 0
      %1473 = vmatpush1.bf16.xpose.msra.mxu0 0
      %1474 = vmatprep.subr.bf16.mxu0 0
      %1475 = vmatpush1.bf16.xpose.msra.mxu0 0
      %1476 = vmatprep.subr.bf16.mxu0 0
      %1477 = vmatpush1.bf16.xpose.msra.mxu0 0
      %1478 = vmatprep.subr.bf16.mxu0 0
      %1479 = vmatpush1.bf16.xpose.msra.mxu0 0
      %1480 = vmatprep.subr.bf16.mxu0 0
      %1481 = vmatpush1.bf16.xpose.msra.mxu0 0
      %1482 = vmatprep.subr.bf16.mxu0 0
      %1483 = vmatpush1.bf16.xpose.msra.mxu0 0
      %1484 = vmatprep.mubr.bf16.mxu0 0
      %1485 = vmatmul.mubr.bf16.gmra.mrb[0].mxu0 %v1447
      %v1486 = vpop.f32.mrb[0].mxu0
      %v1487 = vadd.f32 0.0, %v1486
      %v1488 = vpop.f32.mrb[0].mxu0
      %v1489 = vpop.f32.mrb[0].mxu0
      %v1490 = vadd.f32 0.0, %v1489
      %v1491 = vpop.f32.mrb[0].mxu0
      %1492 = vdwg.mxu0
      %v1493 = vmul.f32 %v1334, 0.35355338
      %v1494 = vmul.f32 %v1337, 0.35355338
      %v1495 = vmul.f32 %v1385, 0.35355338
      %v1496 = vmul.f32 %v1388, 0.35355338
      %v1497 = vmul.f32 %v1436, 0.35355338
      %v1498 = vmul.f32 %v1439, 0.35355338
      %v1499 = vmul.f32 %v1487, 0.35355338
      %v1500 = vmul.f32 %v1490, 0.35355338
      %v1501 = vadd.f32 %v1493, %v165
      %v1502 = vadd.f32 %v1494, %v166
      %v1503 = vadd.f32 %v1495, %v173
      %v1504 = vadd.f32 %v1496, %v174
      %v1505 = vadd.f32 %v1497, %v181
      %v1506 = vadd.f32 %v1498, %v182
      %v1507 = vadd.f32 %v1499, %v189
      %v1508 = vadd.f32 %v1500, %v190
      %v1509 = vsel %vm426, %v1501, -inf
      %1510 = vmax.xlane.f32.xlu0 %v1509
      %v1511 = vpop.xlane.xlu0 %1510
      %v1512 = vsel %vm426, %v1502, -inf
      %1513 = vmax.xlane.f32.xlu0 %v1512
      %v1514 = vpop.xlane.xlu0 %1513
      %v1515 = vsel %vm426, %v1503, -inf
      %1516 = vmax.xlane.f32.xlu0 %v1515
      %v1517 = vpop.xlane.xlu0 %1516
      %v1518 = vsel %vm426, %v1504, -inf
      %1519 = vmax.xlane.f32.xlu0 %v1518
      %v1520 = vpop.xlane.xlu0 %1519
      %v1521 = vsel %vm426, %v1505, -inf
      %1522 = vmax.xlane.f32.xlu0 %v1521
      %v1523 = vpop.xlane.xlu0 %1522
      %v1524 = vsel %vm426, %v1506, -inf
      %1525 = vmax.xlane.f32.xlu0 %v1524
      %v1526 = vpop.xlane.xlu0 %1525
      %v1527 = vsel %vm426, %v1507, -inf
      %1528 = vmax.xlane.f32.xlu0 %v1527
      %v1529 = vpop.xlane.xlu0 %1528
      %v1530 = vsel %vm426, %v1508, -inf
      %1531 = vmax.xlane.f32.xlu0 %v1530
      %v1532 = vpop.xlane.xlu0 %1531
      %v1533 = vsub.f32 %v1501, %v1511
      %v1534 = vsub.f32 %v1502, %v1514
      %v1535 = vsub.f32 %v1503, %v1517
      %v1536 = vsub.f32 %v1504, %v1520
      %v1537 = vsub.f32 %v1505, %v1523
      %v1538 = vsub.f32 %v1506, %v1526
      %v1539 = vsub.f32 %v1507, %v1529
      %v1540 = vsub.f32 %v1508, %v1532
      %v1541 = vmul.f32 %v1533, 1.442695
      %v1542 = vpow.pop %v1541
      %v1543 = vmul.f32 %v1534, 1.442695
      %v1544 = vpow.pop %v1543
      %v1545 = vmul.f32 %v1535, 1.442695
      %v1546 = vpow.pop %v1545
      %v1547 = vmul.f32 %v1536, 1.442695
      %v1548 = vpow.pop %v1547
      %v1549 = vmul.f32 %v1537, 1.442695
      %v1550 = vpow.pop %v1549
      %v1551 = vmul.f32 %v1538, 1.442695
      %v1552 = vpow.pop %v1551
      %v1553 = vmul.f32 %v1539, 1.442695
      %v1554 = vpow.pop %v1553
      %v1555 = vmul.f32 %v1540, 1.442695
      %v1556 = vpow.pop %v1555
      %v1557 = vsel %vm426, %v1542, 0.0
      %1558 = vadd.xlane.f32.xlu0 %v1557
      %v1559 = vpop.xlane.xlu0 %1558
      %v1560 = vsel %vm426, %v1544, 0.0
      %1561 = vadd.xlane.f32.xlu0 %v1560
      %v1562 = vpop.xlane.xlu0 %1561
      %v1563 = vsel %vm426, %v1546, 0.0
      %1564 = vadd.xlane.f32.xlu0 %v1563
      %v1565 = vpop.xlane.xlu0 %1564
      %v1566 = vsel %vm426, %v1548, 0.0
      %1567 = vadd.xlane.f32.xlu0 %v1566
      %v1568 = vpop.xlane.xlu0 %1567
      %v1569 = vsel %vm426, %v1550, 0.0
      %1570 = vadd.xlane.f32.xlu0 %v1569
      %v1571 = vpop.xlane.xlu0 %1570
      %v1572 = vsel %vm426, %v1552, 0.0
      %1573 = vadd.xlane.f32.xlu0 %v1572
      %v1574 = vpop.xlane.xlu0 %1573
      %v1575 = vsel %vm426, %v1554, 0.0
      %1576 = vadd.xlane.f32.xlu0 %v1575
      %v1577 = vpop.xlane.xlu0 %1576
      %v1578 = vsel %vm426, %v1556, 0.0
      %1579 = vadd.xlane.f32.xlu0 %v1578
      %v1580 = vpop.xlane.xlu0 %1579
      %v1581 = vrcp.pop %v1559
      %v1582 = vrcp.pop %v1562
      %v1583 = vrcp.pop %v1565
      %v1584 = vrcp.pop %v1568
      %v1585 = vrcp.pop %v1571
      %v1586 = vrcp.pop %v1574
      %v1587 = vrcp.pop %v1577
      %v1588 = vrcp.pop %v1580
      %v1589 = vmul.f32 %v1542, %v1581
      %v1590 = vmul.f32 %v1544, %v1582
      %v1591 = vmul.f32 %v1546, %v1583
      %v1592 = vmul.f32 %v1548, %v1584
      %v1593 = vmul.f32 %v1550, %v1585
      %v1594 = vmul.f32 %v1552, %v1586
      %v1595 = vmul.f32 %v1554, %v1587
      %v1596 = vmul.f32 %v1556, %v1588
      %v1597 = vpack.c.bf16 %v1590, %v1589
      %v1598 = vpack.c.bf16 %v1592, %v1591
      %v1599 = vpack.c.bf16 %v1594, %v1593
      %v1600 = vpack.c.bf16 %v1596, %v1595
      %1601 = vrot.lane.b32.xlu0 %v197, 48
      %v1602 = vpop.permute.xlu0 %1601
      %v1605 = vsel %vm426, %v1597, 0
      %1607 = vmatprep.subr.bf16.mxu0 0
      %1608 = vmatpush1.bf16.msra.mxu0 %v1602
      %1609 = vmatprep.subr.bf16.mxu0 0
      %1610 = vmatpush1.bf16.msra.mxu0 0
      %1611 = vmatprep.subr.bf16.mxu0 0
      %1612 = vmatpush1.bf16.msra.mxu0 0
      %1613 = vmatprep.subr.bf16.mxu0 0
      %1614 = vmatpush1.bf16.msra.mxu0 0
      %1615 = vmatprep.subr.bf16.mxu0 0
      %1616 = vmatpush1.bf16.msra.mxu0 0
      %1617 = vmatprep.subr.bf16.mxu0 0
      %1618 = vmatpush1.bf16.msra.mxu0 0
      %1619 = vmatprep.subr.bf16.mxu0 0
      %1620 = vmatpush1.bf16.msra.mxu0 0
      %1621 = vmatprep.subr.bf16.mxu0 0
      %1622 = vmatpush1.bf16.msra.mxu0 0
      %1623 = vmatprep.subr.bf16.mxu0 0
      %1624 = vmatpush1.bf16.msra.mxu0 0
      %1625 = vmatprep.subr.bf16.mxu0 0
      %1626 = vmatpush1.bf16.msra.mxu0 0
      %1627 = vmatprep.subr.bf16.mxu0 0
      %1628 = vmatpush1.bf16.msra.mxu0 0
      %1629 = vmatprep.subr.bf16.mxu0 0
      %1630 = vmatpush1.bf16.msra.mxu0 0
      %1631 = vmatprep.subr.bf16.mxu0 0
      %1632 = vmatpush1.bf16.msra.mxu0 0
      %1633 = vmatprep.subr.bf16.mxu0 0
      %1634 = vmatpush1.bf16.msra.mxu0 0
      %1635 = vmatprep.subr.bf16.mxu0 0
      %1636 = vmatpush1.bf16.msra.mxu0 0
      %1637 = vmatprep.subr.bf16.mxu0 0
      %1638 = vmatpush1.bf16.msra.mxu0 0
      %1639 = vmatprep.mubr.bf16.mxu0 0
      %1640 = vmatmul.mubr.bf16.gmra.mrb[0].mxu0 %v1605
      %v1641 = vpop.f32.mrb[0].mxu0
      %v1642 = vadd.f32 0.0, %v1641
      %v1643 = vpop.f32.mrb[0].mxu0
      %v1644 = vpop.f32.mrb[0].mxu0
      %v1645 = vadd.f32 0.0, %v1644
      %v1646 = vpop.f32.mrb[0].mxu0
      %1647 = vdwg.mxu0
      %1648 = vrot.lane.b32.xlu0 %v252, 48
      %v1649 = vpop.permute.xlu0 %1648
      %v1652 = vsel %vm426, %v1598, 0
      %1654 = vmatprep.subr.bf16.mxu0 0
      %1655 = vmatpush1.bf16.msra.mxu0 %v1649
      %1656 = vmatprep.subr.bf16.mxu0 0
      %1657 = vmatpush1.bf16.msra.mxu0 0
      %1658 = vmatprep.subr.bf16.mxu0 0
      %1659 = vmatpush1.bf16.msra.mxu0 0
      %1660 = vmatprep.subr.bf16.mxu0 0
      %1661 = vmatpush1.bf16.msra.mxu0 0
      %1662 = vmatprep.subr.bf16.mxu0 0
      %1663 = vmatpush1.bf16.msra.mxu0 0
      %1664 = vmatprep.subr.bf16.mxu0 0
      %1665 = vmatpush1.bf16.msra.mxu0 0
      %1666 = vmatprep.subr.bf16.mxu0 0
      %1667 = vmatpush1.bf16.msra.mxu0 0
      %1668 = vmatprep.subr.bf16.mxu0 0
      %1669 = vmatpush1.bf16.msra.mxu0 0
      %1670 = vmatprep.subr.bf16.mxu0 0
      %1671 = vmatpush1.bf16.msra.mxu0 0
      %1672 = vmatprep.subr.bf16.mxu0 0
      %1673 = vmatpush1.bf16.msra.mxu0 0
      %1674 = vmatprep.subr.bf16.mxu0 0
      %1675 = vmatpush1.bf16.msra.mxu0 0
      %1676 = vmatprep.subr.bf16.mxu0 0
      %1677 = vmatpush1.bf16.msra.mxu0 0
      %1678 = vmatprep.subr.bf16.mxu0 0
      %1679 = vmatpush1.bf16.msra.mxu0 0
      %1680 = vmatprep.subr.bf16.mxu0 0
      %1681 = vmatpush1.bf16.msra.mxu0 0
      %1682 = vmatprep.subr.bf16.mxu0 0
      %1683 = vmatpush1.bf16.msra.mxu0 0
      %1684 = vmatprep.subr.bf16.mxu0 0
      %1685 = vmatpush1.bf16.msra.mxu0 0
      %1686 = vmatprep.mubr.bf16.mxu0 0
      %1687 = vmatmul.mubr.bf16.gmra.mrb[0].mxu0 %v1652
      %v1688 = vpop.f32.mrb[0].mxu0
      %v1689 = vadd.f32 0.0, %v1688
      %v1690 = vpop.f32.mrb[0].mxu0
      %v1691 = vpop.f32.mrb[0].mxu0
      %v1692 = vadd.f32 0.0, %v1691
      %v1693 = vpop.f32.mrb[0].mxu0
      %1694 = vdwg.mxu0
      %1695 = vrot.lane.b32.xlu0 %v306, 48
      %v1696 = vpop.permute.xlu0 %1695
      %v1699 = vsel %vm426, %v1599, 0
      %1701 = vmatprep.subr.bf16.mxu0 0
      %1702 = vmatpush1.bf16.msra.mxu0 %v1696
      %1703 = vmatprep.subr.bf16.mxu0 0
      %1704 = vmatpush1.bf16.msra.mxu0 0
      %1705 = vmatprep.subr.bf16.mxu0 0
      %1706 = vmatpush1.bf16.msra.mxu0 0
      %1707 = vmatprep.subr.bf16.mxu0 0
      %1708 = vmatpush1.bf16.msra.mxu0 0
      %1709 = vmatprep.subr.bf16.mxu0 0
      %1710 = vmatpush1.bf16.msra.mxu0 0
      %1711 = vmatprep.subr.bf16.mxu0 0
      %1712 = vmatpush1.bf16.msra.mxu0 0
      %1713 = vmatprep.subr.bf16.mxu0 0
      %1714 = vmatpush1.bf16.msra.mxu0 0
      %1715 = vmatprep.subr.bf16.mxu0 0
      %1716 = vmatpush1.bf16.msra.mxu0 0
      %1717 = vmatprep.subr.bf16.mxu0 0
      %1718 = vmatpush1.bf16.msra.mxu0 0
      %1719 = vmatprep.subr.bf16.mxu0 0
      %1720 = vmatpush1.bf16.msra.mxu0 0
      %1721 = vmatprep.subr.bf16.mxu0 0
      %1722 = vmatpush1.bf16.msra.mxu0 0
      %1723 = vmatprep.subr.bf16.mxu0 0
      %1724 = vmatpush1.bf16.msra.mxu0 0
      %1725 = vmatprep.subr.bf16.mxu0 0
      %1726 = vmatpush1.bf16.msra.mxu0 0
      %1727 = vmatprep.subr.bf16.mxu0 0
      %1728 = vmatpush1.bf16.msra.mxu0 0
      %1729 = vmatprep.subr.bf16.mxu0 0
      %1730 = vmatpush1.bf16.msra.mxu0 0
      %1731 = vmatprep.subr.bf16.mxu0 0
      %1732 = vmatpush1.bf16.msra.mxu0 0
      %1733 = vmatprep.mubr.bf16.mxu0 0
      %1734 = vmatmul.mubr.bf16.gmra.mrb[0].mxu0 %v1699
      %v1735 = vpop.f32.mrb[0].mxu0
      %v1736 = vadd.f32 0.0, %v1735
      %v1737 = vpop.f32.mrb[0].mxu0
      %v1738 = vpop.f32.mrb[0].mxu0
      %v1739 = vadd.f32 0.0, %v1738
      %v1740 = vpop.f32.mrb[0].mxu0
      %1741 = vdwg.mxu0
      %1742 = vrot.lane.b32.xlu0 %v360, 48
      %v1743 = vpop.permute.xlu0 %1742
      %v1746 = vsel %vm426, %v1600, 0
      %1748 = vmatprep.subr.bf16.mxu0 0
      %1749 = vmatpush1.bf16.msra.mxu0 %v1743
      %1750 = vmatprep.subr.bf16.mxu0 0
      %1751 = vmatpush1.bf16.msra.mxu0 0
      %1752 = vmatprep.subr.bf16.mxu0 0
      %1753 = vmatpush1.bf16.msra.mxu0 0
      %1754 = vmatprep.subr.bf16.mxu0 0
      %1755 = vmatpush1.bf16.msra.mxu0 0
      %1756 = vmatprep.subr.bf16.mxu0 0
      %1757 = vmatpush1.bf16.msra.mxu0 0
      %1758 = vmatprep.subr.bf16.mxu0 0
      %1759 = vmatpush1.bf16.msra.mxu0 0
      %1760 = vmatprep.subr.bf16.mxu0 0
      %1761 = vmatpush1.bf16.msra.mxu0 0
      %1762 = vmatprep.subr.bf16.mxu0 0
      %1763 = vmatpush1.bf16.msra.mxu0 0
      %1764 = vmatprep.subr.bf16.mxu0 0
      %1765 = vmatpush1.bf16.msra.mxu0 0
      %1766 = vmatprep.subr.bf16.mxu0 0
      %1767 = vmatpush1.bf16.msra.mxu0 0
      %1768 = vmatprep.subr.bf16.mxu0 0
      %1769 = vmatpush1.bf16.msra.mxu0 0
      %1770 = vmatprep.subr.bf16.mxu0 0
      %1771 = vmatpush1.bf16.msra.mxu0 0
      %1772 = vmatprep.subr.bf16.mxu0 0
      %1773 = vmatpush1.bf16.msra.mxu0 0
      %1774 = vmatprep.subr.bf16.mxu0 0
      %1775 = vmatpush1.bf16.msra.mxu0 0
      %1776 = vmatprep.subr.bf16.mxu0 0
      %1777 = vmatpush1.bf16.msra.mxu0 0
      %1778 = vmatprep.subr.bf16.mxu0 0
      %1779 = vmatpush1.bf16.msra.mxu0 0
      %1780 = vmatprep.mubr.bf16.mxu0 0
      %1781 = vmatmul.mubr.bf16.gmra.mrb[0].mxu0 %v1746
      %v1782 = vpop.f32.mrb[0].mxu0
      %v1783 = vadd.f32 0.0, %v1782
      %v1784 = vpop.f32.mrb[0].mxu0
      %v1785 = vpop.f32.mrb[0].mxu0
      %v1786 = vadd.f32 0.0, %v1785
      %v1787 = vpop.f32.mrb[0].mxu0
      %1788 = vdwg.mxu0
      %v1789 = vpack.c.bf16 %v1645, %v1642
      %v1790 = vpack.c.bf16 %v1692, %v1689
      %v1791 = vpack.c.bf16 %v1739, %v1736
      %v1792 = vpack.c.bf16 %v1786, %v1783
      %v1797 = vunpack.c.l.b16 %v1789
      %v1798 = vunpack.c.h.b16 %v1789
      %v1799 = vunpack.c.l.b16 %v1790
      %v1800 = vunpack.c.h.b16 %v1790
      %v1801 = vunpack.c.l.b16 %v1791
      %v1802 = vunpack.c.h.b16 %v1791
      %v1803 = vunpack.c.l.b16 %v1792
      %v1804 = vunpack.c.h.b16 %v1792
      %v1805 = vpack.c.b16 %v1797, %v1797
      %v1806 = vpack.c.b16 %v1798, %v1798
      %v1807 = vpack.c.b16 %v1799, %v1799
      %v1808 = vpack.c.b16 %v1800, %v1800
      %v1809 = vpack.c.b16 %v1801, %v1801
      %v1810 = vpack.c.b16 %v1802, %v1802
      %v1811 = vpack.c.b16 %v1803, %v1803
      %v1812 = vpack.c.b16 %v1804, %v1804
      %s1821 = scalar_lea.vmem %s150, 16
      %1822 = vst.msk [vmem:[%s1821] sm:$0xf] %vm739, %v1805
      %1823 = vst.msk [vmem:[%s1821 + $0x4] sm:$0xf] %vm739, %v1806
      %1824 = vst.msk [vmem:[%s1821 + $0x20] sm:$0xf] %vm739, %v1807
      %1825 = vst.msk [vmem:[%s1821 + $0x24] sm:$0xf] %vm739, %v1808
      %1826 = vst.msk [vmem:[%s1821 + $0x40] sm:$0xf] %vm739, %v1809
      %1827 = vst.msk [vmem:[%s1821 + $0x44] sm:$0xf] %vm739, %v1810
      %1828 = vst.msk [vmem:[%s1821 + $0x60] sm:$0xf] %vm739, %v1811
      %1829 = vst.msk [vmem:[%s1821 + $0x64] sm:$0xf] %vm739, %v1812
      %1830 = vrot.lane.b32.xlu0 %v197, 104
      %v1831 = vpop.permute.xlu0 %1830
      %1832 = vrot.lane.b32.xlu0 %v197, 72
      %v1833 = vpop.permute.xlu0 %1832
      %v1835 = vsel %vm200, %v1831, 0
      %v1838 = vsel %vm200, %v1833, 0
      %1840 = vmatprep.subr.bf16.mxu0 0
      %1841 = vmatpush1.bf16.xpose.msra.mxu0 %v1838
      %1842 = vmatprep.subr.bf16.mxu0 0
      %1843 = vmatpush1.bf16.xpose.msra.mxu0 0
      %1844 = vmatprep.subr.bf16.mxu0 0
      %1845 = vmatpush1.bf16.xpose.msra.mxu0 0
      %1846 = vmatprep.subr.bf16.mxu0 0
      %1847 = vmatpush1.bf16.xpose.msra.mxu0 0
      %1848 = vmatprep.subr.bf16.mxu0 0
      %1849 = vmatpush1.bf16.xpose.msra.mxu0 0
      %1850 = vmatprep.subr.bf16.mxu0 0
      %1851 = vmatpush1.bf16.xpose.msra.mxu0 0
      %1852 = vmatprep.subr.bf16.mxu0 0
      %1853 = vmatpush1.bf16.xpose.msra.mxu0 0
      %1854 = vmatprep.subr.bf16.mxu0 0
      %1855 = vmatpush1.bf16.xpose.msra.mxu0 0
      %1856 = vmatprep.subr.bf16.mxu0 0
      %1857 = vmatpush1.bf16.xpose.msra.mxu0 0
      %1858 = vmatprep.subr.bf16.mxu0 0
      %1859 = vmatpush1.bf16.xpose.msra.mxu0 0
      %1860 = vmatprep.subr.bf16.mxu0 0
      %1861 = vmatpush1.bf16.xpose.msra.mxu0 0
      %1862 = vmatprep.subr.bf16.mxu0 0
      %1863 = vmatpush1.bf16.xpose.msra.mxu0 0
      %1864 = vmatprep.subr.bf16.mxu0 0
      %1865 = vmatpush1.bf16.xpose.msra.mxu0 0
      %1866 = vmatprep.subr.bf16.mxu0 0
      %1867 = vmatpush1.bf16.xpose.msra.mxu0 0
      %1868 = vmatprep.subr.bf16.mxu0 0
      %1869 = vmatpush1.bf16.xpose.msra.mxu0 0
      %1870 = vmatprep.subr.bf16.mxu0 0
      %1871 = vmatpush1.bf16.xpose.msra.mxu0 0
      %1872 = vmatprep.mubr.bf16.mxu0 0
      %1873 = vmatmul.mubr.bf16.gmra.mrb[0].mxu0 %v1835
      %v1874 = vpop.f32.mrb[0].mxu0
      %v1875 = vadd.f32 0.0, %v1874
      %v1876 = vpop.f32.mrb[0].mxu0
      %v1877 = vpop.f32.mrb[0].mxu0
      %v1878 = vadd.f32 0.0, %v1877
      %v1879 = vpop.f32.mrb[0].mxu0
      %1880 = vdwg.mxu0
      %1881 = vrot.lane.b32.xlu0 %v252, 104
      %v1882 = vpop.permute.xlu0 %1881
      %1883 = vrot.lane.b32.xlu0 %v252, 72
      %v1884 = vpop.permute.xlu0 %1883
      %v1886 = vsel %vm200, %v1882, 0
      %v1889 = vsel %vm200, %v1884, 0
      %1891 = vmatprep.subr.bf16.mxu0 0
      %1892 = vmatpush1.bf16.xpose.msra.mxu0 %v1889
      %1893 = vmatprep.subr.bf16.mxu0 0
      %1894 = vmatpush1.bf16.xpose.msra.mxu0 0
      %1895 = vmatprep.subr.bf16.mxu0 0
      %1896 = vmatpush1.bf16.xpose.msra.mxu0 0
      %1897 = vmatprep.subr.bf16.mxu0 0
      %1898 = vmatpush1.bf16.xpose.msra.mxu0 0
      %1899 = vmatprep.subr.bf16.mxu0 0
      %1900 = vmatpush1.bf16.xpose.msra.mxu0 0
      %1901 = vmatprep.subr.bf16.mxu0 0
      %1902 = vmatpush1.bf16.xpose.msra.mxu0 0
      %1903 = vmatprep.subr.bf16.mxu0 0
      %1904 = vmatpush1.bf16.xpose.msra.mxu0 0
      %1905 = vmatprep.subr.bf16.mxu0 0
      %1906 = vmatpush1.bf16.xpose.msra.mxu0 0
      %1907 = vmatprep.subr.bf16.mxu0 0
      %1908 = vmatpush1.bf16.xpose.msra.mxu0 0
      %1909 = vmatprep.subr.bf16.mxu0 0
      %1910 = vmatpush1.bf16.xpose.msra.mxu0 0
      %1911 = vmatprep.subr.bf16.mxu0 0
      %1912 = vmatpush1.bf16.xpose.msra.mxu0 0
      %1913 = vmatprep.subr.bf16.mxu0 0
      %1914 = vmatpush1.bf16.xpose.msra.mxu0 0
      %1915 = vmatprep.subr.bf16.mxu0 0
      %1916 = vmatpush1.bf16.xpose.msra.mxu0 0
      %1917 = vmatprep.subr.bf16.mxu0 0
      %1918 = vmatpush1.bf16.xpose.msra.mxu0 0
      %1919 = vmatprep.subr.bf16.mxu0 0
      %1920 = vmatpush1.bf16.xpose.msra.mxu0 0
      %1921 = vmatprep.subr.bf16.mxu0 0
      %1922 = vmatpush1.bf16.xpose.msra.mxu0 0
      %1923 = vmatprep.mubr.bf16.mxu0 0
      %1924 = vmatmul.mubr.bf16.gmra.mrb[0].mxu0 %v1886
      %v1925 = vpop.f32.mrb[0].mxu0
      %v1926 = vadd.f32 0.0, %v1925
      %v1927 = vpop.f32.mrb[0].mxu0
      %v1928 = vpop.f32.mrb[0].mxu0
      %v1929 = vadd.f32 0.0, %v1928
      %v1930 = vpop.f32.mrb[0].mxu0
      %1931 = vdwg.mxu0
      %1932 = vrot.lane.b32.xlu0 %v306, 104
      %v1933 = vpop.permute.xlu0 %1932
      %1934 = vrot.lane.b32.xlu0 %v306, 72
      %v1935 = vpop.permute.xlu0 %1934
      %v1937 = vsel %vm200, %v1933, 0
      %v1940 = vsel %vm200, %v1935, 0
      %1942 = vmatprep.subr.bf16.mxu0 0
      %1943 = vmatpush1.bf16.xpose.msra.mxu0 %v1940
      %1944 = vmatprep.subr.bf16.mxu0 0
      %1945 = vmatpush1.bf16.xpose.msra.mxu0 0
      %1946 = vmatprep.subr.bf16.mxu0 0
      %1947 = vmatpush1.bf16.xpose.msra.mxu0 0
      %1948 = vmatprep.subr.bf16.mxu0 0
      %1949 = vmatpush1.bf16.xpose.msra.mxu0 0
      %1950 = vmatprep.subr.bf16.mxu0 0
      %1951 = vmatpush1.bf16.xpose.msra.mxu0 0
      %1952 = vmatprep.subr.bf16.mxu0 0
      %1953 = vmatpush1.bf16.xpose.msra.mxu0 0
      %1954 = vmatprep.subr.bf16.mxu0 0
      %1955 = vmatpush1.bf16.xpose.msra.mxu0 0
      %1956 = vmatprep.subr.bf16.mxu0 0
      %1957 = vmatpush1.bf16.xpose.msra.mxu0 0
      %1958 = vmatprep.subr.bf16.mxu0 0
      %1959 = vmatpush1.bf16.xpose.msra.mxu0 0
      %1960 = vmatprep.subr.bf16.mxu0 0
      %1961 = vmatpush1.bf16.xpose.msra.mxu0 0
      %1962 = vmatprep.subr.bf16.mxu0 0
      %1963 = vmatpush1.bf16.xpose.msra.mxu0 0
      %1964 = vmatprep.subr.bf16.mxu0 0
      %1965 = vmatpush1.bf16.xpose.msra.mxu0 0
      %1966 = vmatprep.subr.bf16.mxu0 0
      %1967 = vmatpush1.bf16.xpose.msra.mxu0 0
      %1968 = vmatprep.subr.bf16.mxu0 0
      %1969 = vmatpush1.bf16.xpose.msra.mxu0 0
      %1970 = vmatprep.subr.bf16.mxu0 0
      %1971 = vmatpush1.bf16.xpose.msra.mxu0 0
      %1972 = vmatprep.subr.bf16.mxu0 0
      %1973 = vmatpush1.bf16.xpose.msra.mxu0 0
      %1974 = vmatprep.mubr.bf16.mxu0 0
      %1975 = vmatmul.mubr.bf16.gmra.mrb[0].mxu0 %v1937
      %v1976 = vpop.f32.mrb[0].mxu0
      %v1977 = vadd.f32 0.0, %v1976
      %v1978 = vpop.f32.mrb[0].mxu0
      %v1979 = vpop.f32.mrb[0].mxu0
      %v1980 = vadd.f32 0.0, %v1979
      %v1981 = vpop.f32.mrb[0].mxu0
      %1982 = vdwg.mxu0
      %1983 = vrot.lane.b32.xlu0 %v360, 104
      %v1984 = vpop.permute.xlu0 %1983
      %1985 = vrot.lane.b32.xlu0 %v360, 72
      %v1986 = vpop.permute.xlu0 %1985
      %v1988 = vsel %vm200, %v1984, 0
      %v1991 = vsel %vm200, %v1986, 0
      %1993 = vmatprep.subr.bf16.mxu0 0
      %1994 = vmatpush1.bf16.xpose.msra.mxu0 %v1991
      %1995 = vmatprep.subr.bf16.mxu0 0
      %1996 = vmatpush1.bf16.xpose.msra.mxu0 0
      %1997 = vmatprep.subr.bf16.mxu0 0
      %1998 = vmatpush1.bf16.xpose.msra.mxu0 0
      %1999 = vmatprep.subr.bf16.mxu0 0
      %2000 = vmatpush1.bf16.xpose.msra.mxu0 0
      %2001 = vmatprep.subr.bf16.mxu0 0
      %2002 = vmatpush1.bf16.xpose.msra.mxu0 0
      %2003 = vmatprep.subr.bf16.mxu0 0
      %2004 = vmatpush1.bf16.xpose.msra.mxu0 0
      %2005 = vmatprep.subr.bf16.mxu0 0
      %2006 = vmatpush1.bf16.xpose.msra.mxu0 0
      %2007 = vmatprep.subr.bf16.mxu0 0
      %2008 = vmatpush1.bf16.xpose.msra.mxu0 0
      %2009 = vmatprep.subr.bf16.mxu0 0
      %2010 = vmatpush1.bf16.xpose.msra.mxu0 0
      %2011 = vmatprep.subr.bf16.mxu0 0
      %2012 = vmatpush1.bf16.xpose.msra.mxu0 0
      %2013 = vmatprep.subr.bf16.mxu0 0
      %2014 = vmatpush1.bf16.xpose.msra.mxu0 0
      %2015 = vmatprep.subr.bf16.mxu0 0
      %2016 = vmatpush1.bf16.xpose.msra.mxu0 0
      %2017 = vmatprep.subr.bf16.mxu0 0
      %2018 = vmatpush1.bf16.xpose.msra.mxu0 0
      %2019 = vmatprep.subr.bf16.mxu0 0
      %2020 = vmatpush1.bf16.xpose.msra.mxu0 0
      %2021 = vmatprep.subr.bf16.mxu0 0
      %2022 = vmatpush1.bf16.xpose.msra.mxu0 0
      %2023 = vmatprep.subr.bf16.mxu0 0
      %2024 = vmatpush1.bf16.xpose.msra.mxu0 0
      %2025 = vmatprep.mubr.bf16.mxu0 0
      %2026 = vmatmul.mubr.bf16.gmra.mrb[0].mxu0 %v1988
      %v2027 = vpop.f32.mrb[0].mxu0
      %v2028 = vadd.f32 0.0, %v2027
      %v2029 = vpop.f32.mrb[0].mxu0
      %v2030 = vpop.f32.mrb[0].mxu0
      %v2031 = vadd.f32 0.0, %v2030
      %v2032 = vpop.f32.mrb[0].mxu0
      %2033 = vdwg.mxu0
      %v2034 = vmul.f32 %v1875, 0.35355338
      %v2035 = vmul.f32 %v1878, 0.35355338
      %v2036 = vmul.f32 %v1926, 0.35355338
      %v2037 = vmul.f32 %v1929, 0.35355338
      %v2038 = vmul.f32 %v1977, 0.35355338
      %v2039 = vmul.f32 %v1980, 0.35355338
      %v2040 = vmul.f32 %v2028, 0.35355338
      %v2041 = vmul.f32 %v2031, 0.35355338
      %v2042 = vadd.f32 %v2034, %v167
      %v2043 = vadd.f32 %v2035, %v168
      %v2044 = vadd.f32 %v2036, %v175
      %v2045 = vadd.f32 %v2037, %v176
      %v2046 = vadd.f32 %v2038, %v183
      %v2047 = vadd.f32 %v2039, %v184
      %v2048 = vadd.f32 %v2040, %v191
      %v2049 = vadd.f32 %v2041, %v192
      %v2050 = vsel %vm426, %v2042, -inf
      %2051 = vmax.xlane.f32.xlu0 %v2050
      %v2052 = vpop.xlane.xlu0 %2051
      %v2053 = vsel %vm426, %v2043, -inf
      %2054 = vmax.xlane.f32.xlu0 %v2053
      %v2055 = vpop.xlane.xlu0 %2054
      %v2056 = vsel %vm426, %v2044, -inf
      %2057 = vmax.xlane.f32.xlu0 %v2056
      %v2058 = vpop.xlane.xlu0 %2057
      %v2059 = vsel %vm426, %v2045, -inf
      %2060 = vmax.xlane.f32.xlu0 %v2059
      %v2061 = vpop.xlane.xlu0 %2060
      %v2062 = vsel %vm426, %v2046, -inf
      %2063 = vmax.xlane.f32.xlu0 %v2062
      %v2064 = vpop.xlane.xlu0 %2063
      %v2065 = vsel %vm426, %v2047, -inf
      %2066 = vmax.xlane.f32.xlu0 %v2065
      %v2067 = vpop.xlane.xlu0 %2066
      %v2068 = vsel %vm426, %v2048, -inf
      %2069 = vmax.xlane.f32.xlu0 %v2068
      %v2070 = vpop.xlane.xlu0 %2069
      %v2071 = vsel %vm426, %v2049, -inf
      %2072 = vmax.xlane.f32.xlu0 %v2071
      %v2073 = vpop.xlane.xlu0 %2072
      %v2074 = vsub.f32 %v2042, %v2052
      %v2075 = vsub.f32 %v2043, %v2055
      %v2076 = vsub.f32 %v2044, %v2058
      %v2077 = vsub.f32 %v2045, %v2061
      %v2078 = vsub.f32 %v2046, %v2064
      %v2079 = vsub.f32 %v2047, %v2067
      %v2080 = vsub.f32 %v2048, %v2070
      %v2081 = vsub.f32 %v2049, %v2073
      %v2082 = vmul.f32 %v2074, 1.442695
      %v2083 = vpow.pop %v2082
      %v2084 = vmul.f32 %v2075, 1.442695
      %v2085 = vpow.pop %v2084
      %v2086 = vmul.f32 %v2076, 1.442695
      %v2087 = vpow.pop %v2086
      %v2088 = vmul.f32 %v2077, 1.442695
      %v2089 = vpow.pop %v2088
      %v2090 = vmul.f32 %v2078, 1.442695
      %v2091 = vpow.pop %v2090
      %v2092 = vmul.f32 %v2079, 1.442695
      %v2093 = vpow.pop %v2092
      %v2094 = vmul.f32 %v2080, 1.442695
      %v2095 = vpow.pop %v2094
      %v2096 = vmul.f32 %v2081, 1.442695
      %v2097 = vpow.pop %v2096
      %v2098 = vsel %vm426, %v2083, 0.0
      %2099 = vadd.xlane.f32.xlu0 %v2098
      %v2100 = vpop.xlane.xlu0 %2099
      %v2101 = vsel %vm426, %v2085, 0.0
      %2102 = vadd.xlane.f32.xlu0 %v2101
      %v2103 = vpop.xlane.xlu0 %2102
      %v2104 = vsel %vm426, %v2087, 0.0
      %2105 = vadd.xlane.f32.xlu0 %v2104
      %v2106 = vpop.xlane.xlu0 %2105
      %v2107 = vsel %vm426, %v2089, 0.0
      %2108 = vadd.xlane.f32.xlu0 %v2107
      %v2109 = vpop.xlane.xlu0 %2108
      %v2110 = vsel %vm426, %v2091, 0.0
      %2111 = vadd.xlane.f32.xlu0 %v2110
      %v2112 = vpop.xlane.xlu0 %2111
      %v2113 = vsel %vm426, %v2093, 0.0
      %2114 = vadd.xlane.f32.xlu0 %v2113
      %v2115 = vpop.xlane.xlu0 %2114
      %v2116 = vsel %vm426, %v2095, 0.0
      %2117 = vadd.xlane.f32.xlu0 %v2116
      %v2118 = vpop.xlane.xlu0 %2117
      %v2119 = vsel %vm426, %v2097, 0.0
      %2120 = vadd.xlane.f32.xlu0 %v2119
      %v2121 = vpop.xlane.xlu0 %2120
      %v2122 = vrcp.pop %v2100
      %v2123 = vrcp.pop %v2103
      %v2124 = vrcp.pop %v2106
      %v2125 = vrcp.pop %v2109
      %v2126 = vrcp.pop %v2112
      %v2127 = vrcp.pop %v2115
      %v2128 = vrcp.pop %v2118
      %v2129 = vrcp.pop %v2121
      %v2130 = vmul.f32 %v2083, %v2122
      %v2131 = vmul.f32 %v2085, %v2123
      %v2132 = vmul.f32 %v2087, %v2124
      %v2133 = vmul.f32 %v2089, %v2125
      %v2134 = vmul.f32 %v2091, %v2126
      %v2135 = vmul.f32 %v2093, %v2127
      %v2136 = vmul.f32 %v2095, %v2128
      %v2137 = vmul.f32 %v2097, %v2129
      %v2138 = vpack.c.bf16 %v2131, %v2130
      %v2139 = vpack.c.bf16 %v2133, %v2132
      %v2140 = vpack.c.bf16 %v2135, %v2134
      %v2141 = vpack.c.bf16 %v2137, %v2136
      %2142 = vrot.lane.b32.xlu0 %v197, 40
      %v2143 = vpop.permute.xlu0 %2142
      %v2146 = vsel %vm426, %v2138, 0
      %2148 = vmatprep.subr.bf16.mxu0 0
      %2149 = vmatpush1.bf16.msra.mxu0 %v2143
      %2150 = vmatprep.subr.bf16.mxu0 0
      %2151 = vmatpush1.bf16.msra.mxu0 0
      %2152 = vmatprep.subr.bf16.mxu0 0
      %2153 = vmatpush1.bf16.msra.mxu0 0
      %2154 = vmatprep.subr.bf16.mxu0 0
      %2155 = vmatpush1.bf16.msra.mxu0 0
      %2156 = vmatprep.subr.bf16.mxu0 0
      %2157 = vmatpush1.bf16.msra.mxu0 0
      %2158 = vmatprep.subr.bf16.mxu0 0
      %2159 = vmatpush1.bf16.msra.mxu0 0
      %2160 = vmatprep.subr.bf16.mxu0 0
      %2161 = vmatpush1.bf16.msra.mxu0 0
      %2162 = vmatprep.subr.bf16.mxu0 0
      %2163 = vmatpush1.bf16.msra.mxu0 0
      %2164 = vmatprep.subr.bf16.mxu0 0
      %2165 = vmatpush1.bf16.msra.mxu0 0
      %2166 = vmatprep.subr.bf16.mxu0 0
      %2167 = vmatpush1.bf16.msra.mxu0 0
      %2168 = vmatprep.subr.bf16.mxu0 0
      %2169 = vmatpush1.bf16.msra.mxu0 0
      %2170 = vmatprep.subr.bf16.mxu0 0
      %2171 = vmatpush1.bf16.msra.mxu0 0
      %2172 = vmatprep.subr.bf16.mxu0 0
      %2173 = vmatpush1.bf16.msra.mxu0 0
      %2174 = vmatprep.subr.bf16.mxu0 0
      %2175 = vmatpush1.bf16.msra.mxu0 0
      %2176 = vmatprep.subr.bf16.mxu0 0
      %2177 = vmatpush1.bf16.msra.mxu0 0
      %2178 = vmatprep.subr.bf16.mxu0 0
      %2179 = vmatpush1.bf16.msra.mxu0 0
      %2180 = vmatprep.mubr.bf16.mxu0 0
      %2181 = vmatmul.mubr.bf16.gmra.mrb[0].mxu0 %v2146
      %v2182 = vpop.f32.mrb[0].mxu0
      %v2183 = vadd.f32 0.0, %v2182
      %v2184 = vpop.f32.mrb[0].mxu0
      %v2185 = vpop.f32.mrb[0].mxu0
      %v2186 = vadd.f32 0.0, %v2185
      %v2187 = vpop.f32.mrb[0].mxu0
      %2188 = vdwg.mxu0
      %2189 = vrot.lane.b32.xlu0 %v252, 40
      %v2190 = vpop.permute.xlu0 %2189
      %v2193 = vsel %vm426, %v2139, 0
      %2195 = vmatprep.subr.bf16.mxu0 0
      %2196 = vmatpush1.bf16.msra.mxu0 %v2190
      %2197 = vmatprep.subr.bf16.mxu0 0
      %2198 = vmatpush1.bf16.msra.mxu0 0
      %2199 = vmatprep.subr.bf16.mxu0 0
      %2200 = vmatpush1.bf16.msra.mxu0 0
      %2201 = vmatprep.subr.bf16.mxu0 0
      %2202 = vmatpush1.bf16.msra.mxu0 0
      %2203 = vmatprep.subr.bf16.mxu0 0
      %2204 = vmatpush1.bf16.msra.mxu0 0
      %2205 = vmatprep.subr.bf16.mxu0 0
      %2206 = vmatpush1.bf16.msra.mxu0 0
      %2207 = vmatprep.subr.bf16.mxu0 0
      %2208 = vmatpush1.bf16.msra.mxu0 0
      %2209 = vmatprep.subr.bf16.mxu0 0
      %2210 = vmatpush1.bf16.msra.mxu0 0
      %2211 = vmatprep.subr.bf16.mxu0 0
      %2212 = vmatpush1.bf16.msra.mxu0 0
      %2213 = vmatprep.subr.bf16.mxu0 0
      %2214 = vmatpush1.bf16.msra.mxu0 0
      %2215 = vmatprep.subr.bf16.mxu0 0
      %2216 = vmatpush1.bf16.msra.mxu0 0
      %2217 = vmatprep.subr.bf16.mxu0 0
      %2218 = vmatpush1.bf16.msra.mxu0 0
      %2219 = vmatprep.subr.bf16.mxu0 0
      %2220 = vmatpush1.bf16.msra.mxu0 0
      %2221 = vmatprep.subr.bf16.mxu0 0
      %2222 = vmatpush1.bf16.msra.mxu0 0
      %2223 = vmatprep.subr.bf16.mxu0 0
      %2224 = vmatpush1.bf16.msra.mxu0 0
      %2225 = vmatprep.subr.bf16.mxu0 0
      %2226 = vmatpush1.bf16.msra.mxu0 0
      %2227 = vmatprep.mubr.bf16.mxu0 0
      %2228 = vmatmul.mubr.bf16.gmra.mrb[0].mxu0 %v2193
      %v2229 = vpop.f32.mrb[0].mxu0
      %v2230 = vadd.f32 0.0, %v2229
      %v2231 = vpop.f32.mrb[0].mxu0
      %v2232 = vpop.f32.mrb[0].mxu0
      %v2233 = vadd.f32 0.0, %v2232
      %v2234 = vpop.f32.mrb[0].mxu0
      %2235 = vdwg.mxu0
      %2236 = vrot.lane.b32.xlu0 %v306, 40
      %v2237 = vpop.permute.xlu0 %2236
      %v2240 = vsel %vm426, %v2140, 0
      %2242 = vmatprep.subr.bf16.mxu0 0
      %2243 = vmatpush1.bf16.msra.mxu0 %v2237
      %2244 = vmatprep.subr.bf16.mxu0 0
      %2245 = vmatpush1.bf16.msra.mxu0 0
      %2246 = vmatprep.subr.bf16.mxu0 0
      %2247 = vmatpush1.bf16.msra.mxu0 0
      %2248 = vmatprep.subr.bf16.mxu0 0
      %2249 = vmatpush1.bf16.msra.mxu0 0
      %2250 = vmatprep.subr.bf16.mxu0 0
      %2251 = vmatpush1.bf16.msra.mxu0 0
      %2252 = vmatprep.subr.bf16.mxu0 0
      %2253 = vmatpush1.bf16.msra.mxu0 0
      %2254 = vmatprep.subr.bf16.mxu0 0
      %2255 = vmatpush1.bf16.msra.mxu0 0
      %2256 = vmatprep.subr.bf16.mxu0 0
      %2257 = vmatpush1.bf16.msra.mxu0 0
      %2258 = vmatprep.subr.bf16.mxu0 0
      %2259 = vmatpush1.bf16.msra.mxu0 0
      %2260 = vmatprep.subr.bf16.mxu0 0
      %2261 = vmatpush1.bf16.msra.mxu0 0
      %2262 = vmatprep.subr.bf16.mxu0 0
      %2263 = vmatpush1.bf16.msra.mxu0 0
      %2264 = vmatprep.subr.bf16.mxu0 0
      %2265 = vmatpush1.bf16.msra.mxu0 0
      %2266 = vmatprep.subr.bf16.mxu0 0
      %2267 = vmatpush1.bf16.msra.mxu0 0
      %2268 = vmatprep.subr.bf16.mxu0 0
      %2269 = vmatpush1.bf16.msra.mxu0 0
      %2270 = vmatprep.subr.bf16.mxu0 0
      %2271 = vmatpush1.bf16.msra.mxu0 0
      %2272 = vmatprep.subr.bf16.mxu0 0
      %2273 = vmatpush1.bf16.msra.mxu0 0
      %2274 = vmatprep.mubr.bf16.mxu0 0
      %2275 = vmatmul.mubr.bf16.gmra.mrb[0].mxu0 %v2240
      %v2276 = vpop.f32.mrb[0].mxu0
      %v2277 = vadd.f32 0.0, %v2276
      %v2278 = vpop.f32.mrb[0].mxu0
      %v2279 = vpop.f32.mrb[0].mxu0
      %v2280 = vadd.f32 0.0, %v2279
      %v2281 = vpop.f32.mrb[0].mxu0
      %2282 = vdwg.mxu0
      %2283 = vrot.lane.b32.xlu0 %v360, 40
      %v2284 = vpop.permute.xlu0 %2283
      %v2287 = vsel %vm426, %v2141, 0
      %2289 = vmatprep.subr.bf16.mxu0 0
      %2290 = vmatpush1.bf16.msra.mxu0 %v2284
      %2291 = vmatprep.subr.bf16.mxu0 0
      %2292 = vmatpush1.bf16.msra.mxu0 0
      %2293 = vmatprep.subr.bf16.mxu0 0
      %2294 = vmatpush1.bf16.msra.mxu0 0
      %2295 = vmatprep.subr.bf16.mxu0 0
      %2296 = vmatpush1.bf16.msra.mxu0 0
      %2297 = vmatprep.subr.bf16.mxu0 0
      %2298 = vmatpush1.bf16.msra.mxu0 0
      %2299 = vmatprep.subr.bf16.mxu0 0
      %2300 = vmatpush1.bf16.msra.mxu0 0
      %2301 = vmatprep.subr.bf16.mxu0 0
      %2302 = vmatpush1.bf16.msra.mxu0 0
      %2303 = vmatprep.subr.bf16.mxu0 0
      %2304 = vmatpush1.bf16.msra.mxu0 0
      %2305 = vmatprep.subr.bf16.mxu0 0
      %2306 = vmatpush1.bf16.msra.mxu0 0
      %2307 = vmatprep.subr.bf16.mxu0 0
      %2308 = vmatpush1.bf16.msra.mxu0 0
      %2309 = vmatprep.subr.bf16.mxu0 0
      %2310 = vmatpush1.bf16.msra.mxu0 0
      %2311 = vmatprep.subr.bf16.mxu0 0
      %2312 = vmatpush1.bf16.msra.mxu0 0
      %2313 = vmatprep.subr.bf16.mxu0 0
      %2314 = vmatpush1.bf16.msra.mxu0 0
      %2315 = vmatprep.subr.bf16.mxu0 0
      %2316 = vmatpush1.bf16.msra.mxu0 0
      %2317 = vmatprep.subr.bf16.mxu0 0
      %2318 = vmatpush1.bf16.msra.mxu0 0
      %2319 = vmatprep.subr.bf16.mxu0 0
      %2320 = vmatpush1.bf16.msra.mxu0 0
      %2321 = vmatprep.mubr.bf16.mxu0 0
      %2322 = vmatmul.mubr.bf16.gmra.mrb[0].mxu0 %v2287
      %v2323 = vpop.f32.mrb[0].mxu0
      %v2324 = vadd.f32 0.0, %v2323
      %v2325 = vpop.f32.mrb[0].mxu0
      %v2326 = vpop.f32.mrb[0].mxu0
      %v2327 = vadd.f32 0.0, %v2326
      %v2328 = vpop.f32.mrb[0].mxu0
      %2329 = vdwg.mxu0
      %v2330 = vpack.c.bf16 %v2186, %v2183
      %v2331 = vpack.c.bf16 %v2233, %v2230
      %v2332 = vpack.c.bf16 %v2280, %v2277
      %v2333 = vpack.c.bf16 %v2327, %v2324
      %v2338 = vunpack.c.l.b16 %v2330
      %v2339 = vunpack.c.h.b16 %v2330
      %v2340 = vunpack.c.l.b16 %v2331
      %v2341 = vunpack.c.h.b16 %v2331
      %v2342 = vunpack.c.l.b16 %v2332
      %v2343 = vunpack.c.h.b16 %v2332
      %v2344 = vunpack.c.l.b16 %v2333
      %v2345 = vunpack.c.h.b16 %v2333
      %v2346 = vpack.c.b16 %v2338, %v2338
      %v2347 = vpack.c.b16 %v2339, %v2339
      %v2348 = vpack.c.b16 %v2340, %v2340
      %v2349 = vpack.c.b16 %v2341, %v2341
      %v2350 = vpack.c.b16 %v2342, %v2342
      %v2351 = vpack.c.b16 %v2343, %v2343
      %v2352 = vpack.c.b16 %v2344, %v2344
      %v2353 = vpack.c.b16 %v2345, %v2345
      %s2362 = scalar_lea.vmem %s150, 24
      %2363 = vst.msk [vmem:[%s2362] sm:$0xf] %vm739, %v2346
      %2364 = vst.msk [vmem:[%s2362 + $0x4] sm:$0xf] %vm739, %v2347
      %2365 = vst.msk [vmem:[%s2362 + $0x20] sm:$0xf] %vm739, %v2348
      %2366 = vst.msk [vmem:[%s2362 + $0x24] sm:$0xf] %vm739, %v2349
      %2367 = vst.msk [vmem:[%s2362 + $0x40] sm:$0xf] %vm739, %v2350
      %2368 = vst.msk [vmem:[%s2362 + $0x44] sm:$0xf] %vm739, %v2351
      %2369 = vst.msk [vmem:[%s2362 + $0x60] sm:$0xf] %vm739, %v2352
      %2370 = vst.msk [vmem:[%s2362 + $0x64] sm:$0xf] %vm739, %v2353
      %s2371 = smul.u32 4, %s13
      %p2372 = scmp.lt.s32.totalorder %s2371, 7
      %s2373 = scalar_select %p2372, %s2371, 7
      %s2374 = smul.addr %s2373, 8
      %s2375 = smul.addr %s2374, 4
      %s2376 = scalar_lea.vmem %s2, %s2375
      // Predicated region
      $region29: #{basic_layer.14} parent=27 // pred_check
        %p2377 = pneg %p78
      $region30: #{basic_layer.14} parent=27 // pred_check_branch
        %2379 = sbr.rel (%p2377) target = $region32
      $region31: #{basic_layer.14} parent=27 // pred_region
        %s2380 = smul.u32 4, %s13
      $region32: #{basic_layer.14} parent=27 // pred_fallthru
        _
    $region28: #{basic_layer.14} parent=5 // pred_fallthru
      _
    %p2381 = scmp.le.s32.totalorder 2, %s8
    // Predicated region
    $region33: #{basic_layer.14} parent=5 // pred_check
      %p2382 = pneg %p2381
    $region34: #{basic_layer.14} parent=5 // pred_check_branch
      %2384 = sbr.rel (%p2382) target = $region36
    $region35: #{basic_layer.14} parent=5 // pred_region
      %s2385 = ssub.s32 %s8, 2
      // Predicated region
      $region37: #{basic_layer.14} parent=35 // pred_check
        %p2386 = pneg %p84
      $region38: #{basic_layer.14} parent=35 // pred_check_branch
        %2388 = sbr.rel (%p2386) target = $region40
      $region39: #{basic_layer.14} parent=35 // pred_region
        %s2389 = smul.u32 4, %s14
        %p2390 = scmp.lt.s32.totalorder %s2389, 7
        %s2391 = scalar_select %p2390, %s2389, 7
        %s2392 = smul.addr %s2391, 8
        %s2393 = smul.addr %s2392, 4
        %s2394 = scalar_lea.vmem %s2, %s2393
      $region40: #{basic_layer.14} parent=35 // pred_fallthru
        _
    $region36: #{basic_layer.14} parent=5 // pred_fallthru
      _
  $region6: #{basic_layer.14} parent=0 // loop_footer
    %s12 = sadd.s32 1, %s8
  $region7: #{basic_layer.14} parent=0 // loop_footer_branch
    %7 = sbr.rel target = $region3
  $region8: #{basic_layer.14} parent=0 // loop_exit
    _

</llo_original>
